<compile_context>
chip_gen: v7x
topology: tpu7x:2x2x1
jax: 0.10.0
libtpu: 0.0.40
codegen_flags: <defaults>
</compile_context>

<pallas_src>
import functools

import numpy as np

import jax
import jax.numpy as jnp
from jax import lax
from jax.experimental import pallas as pl
from jax.experimental.pallas import tpu as pltpu

GB = 32  # guard lanes on each side of every flattened canvas (>= max wp + 1 = 31)
assert GB >= 31, "guard band must cover the largest im2col / pool lane shift"

# (name, cin, cout, padded-canvas side hp(=wp), activation, mask-output?)
_CONV_CFG = (
    ("e1", 1, 16, 30, "relu", True),
    ("e2", 16, 8, 17, "relu", True),
    ("e3", 8, 8, 10, "relu", True),
    ("d1", 8, 8, 7, "relu", False),
    ("d2", 8, 8, 10, "relu", False),
    ("d3", 8, 16, 18, "relu", False),   # valid conv, computed on padded canvas
    ("d4", 16, 1, 30, "sigmoid", False),
)


# ----------------------------------------------------------------------------
# Fused Pallas kernel (one image per grid step)
# ----------------------------------------------------------------------------
def _fused_kernel(x_ref,
                  w_e1, w_e2, w_e3, w_d1, w_d2, w_d3, w_d4,
                  b_e1, b_e2, b_e3, b_d1, b_d2, b_d3, b_d4,
                  m_e1, m_e2, m_e3,
                  s_p1, s_p2, s_p3, s_u1, s_u2, s_u3,
                  out_ref,
                  a1, a2, a3, a4, a5, a6, a7, a8, a9, a10, a11, a12,
                  p_ref):
    # Zero only the guard bands; every canvas interior (incl. halo columns of
    # remap destinations) is fully overwritten by a GEMM store before reads.
    for a in (a1, a2, a3, a4, a5, a6, a7, a8, a9, a10, a11, a12):
        c = a.shape[0]
        a[:, :GB] = jnp.zeros((c, GB), jnp.float32)
        a[:, a.shape[1] - GB:] = jnp.zeros((c, GB), jnp.float32)

    def conv(src, w_ref, b_ref, mask_ref, cin, hp, act):
        """3x3 conv on a zero-padded (hp, hp) canvas -> (cout, hp*hp) value."""
        wp = hp
        lf = hp * wp
        # In-kernel im2col: 9 lane-shifted bf16 copies into the patch scratch.
        for kh in range(3):
            for kw in range(3):
                k = kh * 3 + kw
                dk = (kh - 1) * wp + (kw - 1)
                p_ref[k * cin:(k + 1) * cin, :lf] = (
                    src[:, GB + dk:GB + dk + lf].astype(jnp.bfloat16))
        # One MXU GEMM per conv: (cout, 9cin)bf16 @ (9cin, hp*wp)bf16 -> f32.
        y = jnp.dot(w_ref[...], p_ref[:9 * cin, :lf],
                    preferred_element_type=jnp.float32)
        y = y + b_ref[...]
        if act == "relu":
            y = jnp.maximum(y, 0.0)
        else:  # exact sigmoid keeps the output inside [0, 1]
            y = 1.0 / (1.0 + jnp.exp(-y))
        if mask_ref is not None:
            # Zero the canvas halo: with ReLU >= 0 this makes zero padding
            # equivalent to MaxPool2d's -inf padding.
            y = y * mask_ref[...]
        return y

    def pool(src, dst, s_ref, hp_in):
        """MaxPool2d((2,2), pad=1): shifted 2x2-max canvas + one selection GEMM."""
        wp = hp_in
        l_in = hp_in * wp
        l_out = s_ref.shape[1]
        x00 = src[:, GB:GB + l_in]
        x01 = src[:, GB + 1:GB + 1 + l_in]
        x10 = src[:, GB + wp:GB + wp + l_in]
        x11 = src[:, GB + wp + 1:GB + wp + 1 + l_in]
        m = jnp.maximum(jnp.maximum(x00, x01), jnp.maximum(x10, x11))
        dst[:, GB:GB + l_out] = jnp.dot(m.astype(jnp.bfloat16), s_ref[...],
                                        preferred_element_type=jnp.float32)

    def upsample(src, dst, s_ref, hp_in):
        """Nearest upsample (incl. halo placement) as one 0/1 selection GEMM."""
        l_in = hp_in * hp_in
        l_out = s_ref.shape[1]
        dst[:, GB:GB + l_out] = jnp.dot(
            src[:, GB:GB + l_in].astype(jnp.bfloat16), s_ref[...],
            preferred_element_type=jnp.float32)

    # ------------------------------- encoder --------------------------------
    a1[:, GB:GB + 900] = conv(x_ref, w_e1, b_e1, m_e1, 1, 30, "relu")   # 28->28
    pool(a1, a2, s_p1, 30)                                              # 28->15
    a3[:, GB:GB + 289] = conv(a2, w_e2, b_e2, m_e2, 16, 17, "relu")     # 15->15
    pool(a3, a4, s_p2, 17)                                              # 15->8
    a5[:, GB:GB + 100] = conv(a4, w_e3, b_e3, m_e3, 8, 10, "relu")      # 8->8
    pool(a5, a6, s_p3, 10)                                              # 8->5

    # ------------------------------- decoder --------------------------------
    a7[:, GB:GB + 49] = conv(a6, w_d1, b_d1, None, 8, 7, "relu")        # 5->5
    upsample(a7, a8, s_u1, 7)                                           # 5->8
    a9[:, GB:GB + 100] = conv(a8, w_d2, b_d2, None, 8, 10, "relu")      # 8->8
    upsample(a9, a10, s_u2, 10)                                         # 8->16
    a11[:, GB:GB + 324] = conv(a10, w_d3, b_d3, None, 8, 18, "relu")    # 16->14 (valid)
    upsample(a11, a12, s_u3, 18)                                        # 14->28
    # Final conv: one lane-dense store of the full flat 30x30 canvas.
    out_ref[...] = conv(a12, w_d4, b_d4, None, 16, 30, "sigmoid")       # 28->28


# ----------------------------------------------------------------------------
# Static (data-independent) kernel inputs — per image
# ----------------------------------------------------------------------------
@functools.lru_cache(maxsize=None)
def _static_inputs():
    # Interior masks for conv outputs that feed a maxpool (zero the halo).
    masks = []
    for hp in (30, 17, 10):
        m = np.zeros((hp, hp), np.float32)
        m[1:hp - 1, 1:hp - 1] = 1.0
        masks.append(m.reshape(1, hp * hp))

    def pool_s(hp_in, hp_out):
        # src = 2x2-max canvas position (2h, 2w); dst = interior (h+1, w+1).
        s = np.zeros((hp_in * hp_in, hp_out * hp_out), np.float32)
        for h in range(hp_out - 2):
            for w in range(hp_out - 2):
                s[(2 * h) * hp_in + 2 * w, (h + 1) * hp_out + (w + 1)] = 1.0
        return s

    def up_s(hp_in, hp_out, src_idx):
        # Nearest-neighbour replication; dst halo rows/cols stay zero.
        s = np.zeros((hp_in * hp_in, hp_out * hp_out), np.float32)
        for h, sr in enumerate(src_idx):
            for w, sc in enumerate(src_idx):
                s[sr * hp_in + sc, (h + 1) * hp_out + (w + 1)] = 1.0
        return s

    s_mats = [
        pool_s(30, 17), pool_s(17, 10), pool_s(10, 7),
        up_s(7, 10, [i * 5 // 8 + 1 for i in range(8)]),
        up_s(10, 18, [i // 2 + 1 for i in range(16)]),
        up_s(18, 30, [i // 2 + 2 for i in range(28)]),  # d3 valid region starts at 2
    ]
    return tuple(masks), tuple(s_mats)


# ----------------------------------------------------------------------------
# Parameters
# ----------------------------------------------------------------------------
def init_params(key):
    """Deterministic Conv2d params (PyTorch-default-style uniform init)."""
    params = {}
    for name, cin, cout, _, _, _ in _CONV_CFG:
        key, kw, kb = jax.random.split(key, 3)
        bound = 1.0 / float(np.sqrt(cin * 9.0))
        params[name + "_w"] = jax.random.uniform(
            kw, (cout, cin, 3, 3), jnp.float32, -bound, bound)
        params[name + "_b"] = jax.random.uniform(
            kb, (cout,), jnp.float32, -bound, bound)
    return params


def pack_params(params):
    """GEMM-layout bf16 weights / f32 biases, computed once."""
    packed = {}
    for name, cin, cout, _, _, _ in _CONV_CFG:
        w = params[name + "_w"]                               # (cout, cin, 3, 3)
        packed[name + "_w"] = (jnp.transpose(w, (0, 2, 3, 1))
                               .reshape(cout, 9 * cin).astype(jnp.bfloat16))
        packed[name + "_b"] = params[name + "_b"].reshape(cout, 1)
    return packed


# ----------------------------------------------------------------------------
# Forward pass (single fused pallas_call, batch on the grid)
# ----------------------------------------------------------------------------
@jax.jit
def autoencoder_forward(x_nchw, packed):
    n = x_nchw.shape[0]
    x = x_nchw.astype(jnp.float32)[:, 0]                      # (n, 28, 28)
    xpad = jnp.pad(x, ((0, 0), (1, 1), (1, 1)))               # zero halo -> 30x30
    x_canvas = jnp.pad(xpad.reshape(n, 1, 900), ((0, 0), (0, 0), (GB, GB)))

    masks_np, smats_np = _static_inputs()
    masks = [jnp.asarray(m) for m in masks_np]
    smats = [jnp.asarray(s).astype(jnp.bfloat16) for s in smats_np]
    weights = [packed[name + "_w"] for name, *_ in _CONV_CFG]
    biases = [packed[name + "_b"] for name, *_ in _CONV_CFG]

    # Per-image activation canvases (channels, hp*hp + 2*GB), resident in VMEM.
    canvases = [(16, 30), (16, 17), (8, 17), (8, 10), (8, 10), (8, 7), (8, 7),
                (8, 10), (8, 10), (8, 18), (16, 18), (16, 30)]
    scratch_shapes = [pltpu.VMEM((c, hp * hp + 2 * GB), jnp.float32)
                      for c, hp in canvases]
    scratch_shapes.append(pltpu.VMEM((144, 900), jnp.bfloat16))  # im2col patches

    def bcast(arr):  # whole array, same block every grid step (DMA'd once)
        nd = len(arr.shape)
        return pl.BlockSpec(arr.shape, lambda i: (0,) * nd)

    in_specs = [pl.BlockSpec((None, 1, 900 + 2 * GB), lambda i: (i, 0, 0))]
    in_specs += [bcast(w) for w in weights]
    in_specs += [bcast(b) for b in biases]
    in_specs += [bcast(m) for m in masks]
    in_specs += [bcast(s) for s in smats]

    out = pl.pallas_call(
        _fused_kernel,
        out_shape=jax.ShapeDtypeStruct((n, 1, 900), jnp.float32),
        grid=(n,),
        in_specs=in_specs,
        out_specs=pl.BlockSpec((None, 1, 900), lambda i: (i, 0, 0)),
        scratch_shapes=scratch_shapes,
        compiler_params=pltpu.CompilerParams(
            dimension_semantics=("parallel",)),
    )(x_canvas, *weights, *biases, *masks, *smats)

    # Lane-dense kernel output: crop the 30x30 canvas halo here in the wrapper.
    out = out.reshape(n, 30, 30)[:, 1:29, 1:29]
    return out[:, None, :, :]


# ----------------------------------------------------------------------------
# Pure-JAX reference (same semantics as the PyTorch module), for self-check
# ----------------------------------------------------------------------------
def _reference_forward(x_nchw, params):
    x = jnp.transpose(x_nchw, (0, 2, 3, 1)).astype(jnp.float32)

    def conv(x, w, b, pad, act):
        dn = lax.conv_dimension_numbers(x.shape, w.shape, ("NHWC", "OIHW", "NHWC"))
        y = lax.conv_general_dilated(
            x, w, (1, 1), [(1, 1), (1, 1)] if pad else [(0, 0), (0, 0)],
            dimension_numbers=dn)
        y = y + b
        return jnp.maximum(y, 0.0) if act == "relu" else jax.nn.sigmoid(y)

    def pool(x):
        return lax.reduce_window(x, -jnp.inf, lax.max, (1, 2, 2, 1),
                                 (1, 2, 2, 1), [(0, 0), (1, 1), (1, 1), (0, 0)])

    def up(x, oh, ow):
        _, h, w, _ = x.shape
        ih = (jnp.arange(oh) * h) // oh
        iw = (jnp.arange(ow) * w) // ow
        return x[:, ih][:, :, iw]

    p = params
    x = conv(x, p["e1_w"], p["e1_b"], True, "relu"); x = pool(x)
    x = conv(x, p["e2_w"], p["e2_b"], True, "relu"); x = pool(x)
    x = conv(x, p["e3_w"], p["e3_b"], True, "relu"); x = pool(x)
    x = conv(x, p["d1_w"], p["d1_b"], True, "relu"); x = up(x, 8, 8)
    x = conv(x, p["d2_w"], p["d2_b"], True, "relu"); x = up(x, 16, 16)
    x = conv(x, p["d3_w"], p["d3_b"], False, "relu"); x = up(x, 28, 28)
    x = conv(x, p["d4_w"], p["d4_b"], True, "sigmoid")
    return jnp.transpose(x, (0, 3, 1, 2))


if __name__ == "__main__":
    key = jax.random.PRNGKey(0)
    k_params, k_x = jax.random.split(key)
    params = init_params(k_params)
    packed = pack_params(params)

    # MNIST-style input, batch=2 (decoder hardcodes a 28x28 reconstruction).
    x = jax.random.uniform(k_x, (2, 1, 28, 28), jnp.float32)

    y = autoencoder_forward(x, packed)
    y = jax.block_until_ready(y)

    assert y.shape == (2, 1, 28, 28), y.shape
    assert y.dtype == jnp.float32
    assert bool(jnp.all(jnp.isfinite(y)))
    assert bool(jnp.all((y >= 0.0) & (y <= 1.0)))  # sigmoid output range

    # Cross-check against a plain-XLA f32 implementation.  The kernel runs its
    # GEMMs with bf16 operands (f32 accumulation), which contributes a few
    # 1e-3 of absolute error at the sigmoid output; 4e-2 keeps a comfortable
    # margin while still catching any indexing / remap bug (O(1) error).
    y_ref = jax.jit(_reference_forward)(x, params)
    max_err = float(jnp.max(jnp.abs(y - y_ref)))
    assert max_err < 4e-2, f"kernel deviates from reference (max err {max_err})"

    print("KERNEL_OK")
</pallas_src>

<mosaic_0001>
module attributes {stable_mosaic.version = 11 : i64} {
  func.func @_fused_kernel(%arg0: i32, %arg1: memref<1x1x964xf32, #tpu.memory_space<vmem>>, %arg2: memref<16x9xbf16, #tpu.memory_space<vmem>>, %arg3: memref<8x144xbf16, #tpu.memory_space<vmem>>, %arg4: memref<8x72xbf16, #tpu.memory_space<vmem>>, %arg5: memref<8x72xbf16, #tpu.memory_space<vmem>>, %arg6: memref<8x72xbf16, #tpu.memory_space<vmem>>, %arg7: memref<16x72xbf16, #tpu.memory_space<vmem>>, %arg8: memref<1x144xbf16, #tpu.memory_space<vmem>>, %arg9: memref<16x1xf32, #tpu.memory_space<vmem>>, %arg10: memref<8x1xf32, #tpu.memory_space<vmem>>, %arg11: memref<8x1xf32, #tpu.memory_space<vmem>>, %arg12: memref<8x1xf32, #tpu.memory_space<vmem>>, %arg13: memref<8x1xf32, #tpu.memory_space<vmem>>, %arg14: memref<16x1xf32, #tpu.memory_space<vmem>>, %arg15: memref<1x1xf32, #tpu.memory_space<vmem>>, %arg16: memref<1x900xf32, #tpu.memory_space<vmem>>, %arg17: memref<1x289xf32, #tpu.memory_space<vmem>>, %arg18: memref<1x100xf32, #tpu.memory_space<vmem>>, %arg19: memref<900x289xbf16, #tpu.memory_space<vmem>>, %arg20: memref<289x100xbf16, #tpu.memory_space<vmem>>, %arg21: memref<100x49xbf16, #tpu.memory_space<vmem>>, %arg22: memref<49x100xbf16, #tpu.memory_space<vmem>>, %arg23: memref<100x324xbf16, #tpu.memory_space<vmem>>, %arg24: memref<324x900xbf16, #tpu.memory_space<vmem>>, %arg25: memref<1x1x900xf32, #tpu.memory_space<vmem>>, %arg26: memref<16x964xf32, #tpu.memory_space<vmem>>, %arg27: memref<16x353xf32, #tpu.memory_space<vmem>>, %arg28: memref<8x353xf32, #tpu.memory_space<vmem>>, %arg29: memref<8x164xf32, #tpu.memory_space<vmem>>, %arg30: memref<8x164xf32, #tpu.memory_space<vmem>>, %arg31: memref<8x113xf32, #tpu.memory_space<vmem>>, %arg32: memref<8x113xf32, #tpu.memory_space<vmem>>, %arg33: memref<8x164xf32, #tpu.memory_space<vmem>>, %arg34: memref<8x164xf32, #tpu.memory_space<vmem>>, %arg35: memref<8x388xf32, #tpu.memory_space<vmem>>, %arg36: memref<16x388xf32, #tpu.memory_space<vmem>>, %arg37: memref<16x964xf32, #tpu.memory_space<vmem>>, %arg38: memref<144x900xbf16, #tpu.memory_space<vmem>>) attributes {dimension_semantics = [#tpu.dimension_semantics<parallel>], iteration_bounds = array<i64: 2>, scalar_prefetch = 0 : i64, scratch_operands = 13 : i64, tpu.core_type = #tpu.core_type<tc>, window_params = [{transform_indices = @transform_0, window_bounds = array<i64: 1, 1, 964>}, {pipeline_mode = #tpu.pipeline_mode<synchronous>, transform_indices = @transform_1, window_bounds = array<i64: 16, 9>}, {pipeline_mode = #tpu.pipeline_mode<synchronous>, transform_indices = @transform_2, window_bounds = array<i64: 8, 144>}, {pipeline_mode = #tpu.pipeline_mode<synchronous>, transform_indices = @transform_3, window_bounds = array<i64: 8, 72>}, {pipeline_mode = #tpu.pipeline_mode<synchronous>, transform_indices = @transform_4, window_bounds = array<i64: 8, 72>}, {pipeline_mode = #tpu.pipeline_mode<synchronous>, transform_indices = @transform_5, window_bounds = array<i64: 8, 72>}, {pipeline_mode = #tpu.pipeline_mode<synchronous>, transform_indices = @transform_6, window_bounds = array<i64: 16, 72>}, {pipeline_mode = #tpu.pipeline_mode<synchronous>, transform_indices = @transform_7, window_bounds = array<i64: 1, 144>}, {pipeline_mode = #tpu.pipeline_mode<synchronous>, transform_indices = @transform_8, window_bounds = array<i64: 16, 1>}, {pipeline_mode = #tpu.pipeline_mode<synchronous>, transform_indices = @transform_9, window_bounds = array<i64: 8, 1>}, {pipeline_mode = #tpu.pipeline_mode<synchronous>, transform_indices = @transform_10, window_bounds = array<i64: 8, 1>}, {pipeline_mode = #tpu.pipeline_mode<synchronous>, transform_indices = @transform_11, window_bounds = array<i64: 8, 1>}, {pipeline_mode = #tpu.pipeline_mode<synchronous>, transform_indices = @transform_12, window_bounds = array<i64: 8, 1>}, {pipeline_mode = #tpu.pipeline_mode<synchronous>, transform_indices = @transform_13, window_bounds = array<i64: 16, 1>}, {pipeline_mode = #tpu.pipeline_mode<synchronous>, transform_indices = @transform_14, window_bounds = array<i64: 1, 1>}, {pipeline_mode = #tpu.pipeline_mode<synchronous>, transform_indices = @transform_15, window_bounds = array<i64: 1, 900>}, {pipeline_mode = #tpu.pipeline_mode<synchronous>, transform_indices = @transform_16, window_bounds = array<i64: 1, 289>}, {pipeline_mode = #tpu.pipeline_mode<synchronous>, transform_indices = @transform_17, window_bounds = array<i64: 1, 100>}, {pipeline_mode = #tpu.pipeline_mode<synchronous>, transform_indices = @transform_18, window_bounds = array<i64: 900, 289>}, {pipeline_mode = #tpu.pipeline_mode<synchronous>, transform_indices = @transform_19, window_bounds = array<i64: 289, 100>}, {pipeline_mode = #tpu.pipeline_mode<synchronous>, transform_indices = @transform_20, window_bounds = array<i64: 100, 49>}, {pipeline_mode = #tpu.pipeline_mode<synchronous>, transform_indices = @transform_21, window_bounds = array<i64: 49, 100>}, {pipeline_mode = #tpu.pipeline_mode<synchronous>, transform_indices = @transform_22, window_bounds = array<i64: 100, 324>}, {pipeline_mode = #tpu.pipeline_mode<synchronous>, transform_indices = @transform_23, window_bounds = array<i64: 324, 900>}, {transform_indices = @transform_24, window_bounds = array<i64: 1, 1, 900>}]} {
    %cst = arith.constant 0.000000e+00 : f32
    %0 = vector.broadcast %cst : f32 to vector<16x32xf32>
    %c0 = arith.constant 0 : index
    %c0_0 = arith.constant 0 : index
    %1 = vector.load %arg26[%c0, %c0_0] : memref<16x964xf32, #tpu.memory_space<vmem>>, vector<16x32xf32>
    tpu.vector_store %arg26[%c0, %c0_0], %0 {strides = array<i32>} : memref<16x964xf32, #tpu.memory_space<vmem>>, vector<16x32xf32>,
    %cst_1 = arith.constant 0.000000e+00 : f32
    %2 = vector.broadcast %cst_1 : f32 to vector<16x32xf32>
    %c0_2 = arith.constant 0 : index
    %c932 = arith.constant 932 : index
    %3 = vector.load %arg26[%c0_2, %c932] : memref<16x964xf32, #tpu.memory_space<vmem>>, vector<16x32xf32>
    tpu.vector_store %arg26[%c0_2, %c932], %2 {strides = array<i32>} : memref<16x964xf32, #tpu.memory_space<vmem>>, vector<16x32xf32>,
    %cst_3 = arith.constant 0.000000e+00 : f32
    %4 = vector.broadcast %cst_3 : f32 to vector<16x32xf32>
    %c0_4 = arith.constant 0 : index
    %c0_5 = arith.constant 0 : index
    %5 = vector.load %arg27[%c0_4, %c0_5] : memref<16x353xf32, #tpu.memory_space<vmem>>, vector<16x32xf32>
    tpu.vector_store %arg27[%c0_4, %c0_5], %4 {strides = array<i32>} : memref<16x353xf32, #tpu.memory_space<vmem>>, vector<16x32xf32>,
    %cst_6 = arith.constant 0.000000e+00 : f32
    %6 = vector.broadcast %cst_6 : f32 to vector<16x32xf32>
    %c0_7 = arith.constant 0 : index
    %c321 = arith.constant 321 : index
    %7 = vector.load %arg27[%c0_7, %c321] : memref<16x353xf32, #tpu.memory_space<vmem>>, vector<16x32xf32>
    tpu.vector_store %arg27[%c0_7, %c321], %6 {strides = array<i32>} : memref<16x353xf32, #tpu.memory_space<vmem>>, vector<16x32xf32>,
    %cst_8 = arith.constant 0.000000e+00 : f32
    %8 = vector.broadcast %cst_8 : f32 to vector<8x32xf32>
    %c0_9 = arith.constant 0 : index
    %c0_10 = arith.constant 0 : index
    %9 = vector.load %arg28[%c0_9, %c0_10] : memref<8x353xf32, #tpu.memory_space<vmem>>, vector<8x32xf32>
    tpu.vector_store %arg28[%c0_9, %c0_10], %8 {strides = array<i32>} : memref<8x353xf32, #tpu.memory_space<vmem>>, vector<8x32xf32>,
    %cst_11 = arith.constant 0.000000e+00 : f32
    %10 = vector.broadcast %cst_11 : f32 to vector<8x32xf32>
    %c0_12 = arith.constant 0 : index
    %c321_13 = arith.constant 321 : index
    %11 = vector.load %arg28[%c0_12, %c321_13] : memref<8x353xf32, #tpu.memory_space<vmem>>, vector<8x32xf32>
    tpu.vector_store %arg28[%c0_12, %c321_13], %10 {strides = array<i32>} : memref<8x353xf32, #tpu.memory_space<vmem>>, vector<8x32xf32>,
    %cst_14 = arith.constant 0.000000e+00 : f32
    %12 = vector.broadcast %cst_14 : f32 to vector<8x32xf32>
    %c0_15 = arith.constant 0 : index
    %c0_16 = arith.constant 0 : index
    %13 = vector.load %arg29[%c0_15, %c0_16] : memref<8x164xf32, #tpu.memory_space<vmem>>, vector<8x32xf32>
    tpu.vector_store %arg29[%c0_15, %c0_16], %12 {strides = array<i32>} : memref<8x164xf32, #tpu.memory_space<vmem>>, vector<8x32xf32>,
    %cst_17 = arith.constant 0.000000e+00 : f32
    %14 = vector.broadcast %cst_17 : f32 to vector<8x32xf32>
    %c0_18 = arith.constant 0 : index
    %c132 = arith.constant 132 : index
    %15 = vector.load %arg29[%c0_18, %c132] : memref<8x164xf32, #tpu.memory_space<vmem>>, vector<8x32xf32>
    tpu.vector_store %arg29[%c0_18, %c132], %14 {strides = array<i32>} : memref<8x164xf32, #tpu.memory_space<vmem>>, vector<8x32xf32>,
    %cst_19 = arith.constant 0.000000e+00 : f32
    %16 = vector.broadcast %cst_19 : f32 to vector<8x32xf32>
    %c0_20 = arith.constant 0 : index
    %c0_21 = arith.constant 0 : index
    %17 = vector.load %arg30[%c0_20, %c0_21] : memref<8x164xf32, #tpu.memory_space<vmem>>, vector<8x32xf32>
    tpu.vector_store %arg30[%c0_20, %c0_21], %16 {strides = array<i32>} : memref<8x164xf32, #tpu.memory_space<vmem>>, vector<8x32xf32>,
    %cst_22 = arith.constant 0.000000e+00 : f32
    %18 = vector.broadcast %cst_22 : f32 to vector<8x32xf32>
    %c0_23 = arith.constant 0 : index
    %c132_24 = arith.constant 132 : index
    %19 = vector.load %arg30[%c0_23, %c132_24] : memref<8x164xf32, #tpu.memory_space<vmem>>, vector<8x32xf32>
    tpu.vector_store %arg30[%c0_23, %c132_24], %18 {strides = array<i32>} : memref<8x164xf32, #tpu.memory_space<vmem>>, vector<8x32xf32>,
    %cst_25 = arith.constant 0.000000e+00 : f32
    %20 = vector.broadcast %cst_25 : f32 to vector<8x32xf32>
    %c0_26 = arith.constant 0 : index
    %c0_27 = arith.constant 0 : index
    %21 = vector.load %arg31[%c0_26, %c0_27] : memref<8x113xf32, #tpu.memory_space<vmem>>, vector<8x32xf32>
    tpu.vector_store %arg31[%c0_26, %c0_27], %20 {strides = array<i32>} : memref<8x113xf32, #tpu.memory_space<vmem>>, vector<8x32xf32>,
    %cst_28 = arith.constant 0.000000e+00 : f32
    %22 = vector.broadcast %cst_28 : f32 to vector<8x32xf32>
    %c0_29 = arith.constant 0 : index
    %c81 = arith.constant 81 : index
    %23 = vector.load %arg31[%c0_29, %c81] : memref<8x113xf32, #tpu.memory_space<vmem>>, vector<8x32xf32>
    tpu.vector_store %arg31[%c0_29, %c81], %22 {strides = array<i32>} : memref<8x113xf32, #tpu.memory_space<vmem>>, vector<8x32xf32>,
    %cst_30 = arith.constant 0.000000e+00 : f32
    %24 = vector.broadcast %cst_30 : f32 to vector<8x32xf32>
    %c0_31 = arith.constant 0 : index
    %c0_32 = arith.constant 0 : index
    %25 = vector.load %arg32[%c0_31, %c0_32] : memref<8x113xf32, #tpu.memory_space<vmem>>, vector<8x32xf32>
    tpu.vector_store %arg32[%c0_31, %c0_32], %24 {strides = array<i32>} : memref<8x113xf32, #tpu.memory_space<vmem>>, vector<8x32xf32>,
    %cst_33 = arith.constant 0.000000e+00 : f32
    %26 = vector.broadcast %cst_33 : f32 to vector<8x32xf32>
    %c0_34 = arith.constant 0 : index
    %c81_35 = arith.constant 81 : index
    %27 = vector.load %arg32[%c0_34, %c81_35] : memref<8x113xf32, #tpu.memory_space<vmem>>, vector<8x32xf32>
    tpu.vector_store %arg32[%c0_34, %c81_35], %26 {strides = array<i32>} : memref<8x113xf32, #tpu.memory_space<vmem>>, vector<8x32xf32>,
    %cst_36 = arith.constant 0.000000e+00 : f32
    %28 = vector.broadcast %cst_36 : f32 to vector<8x32xf32>
    %c0_37 = arith.constant 0 : index
    %c0_38 = arith.constant 0 : index
    %29 = vector.load %arg33[%c0_37, %c0_38] : memref<8x164xf32, #tpu.memory_space<vmem>>, vector<8x32xf32>
    tpu.vector_store %arg33[%c0_37, %c0_38], %28 {strides = array<i32>} : memref<8x164xf32, #tpu.memory_space<vmem>>, vector<8x32xf32>,
    %cst_39 = arith.constant 0.000000e+00 : f32
    %30 = vector.broadcast %cst_39 : f32 to vector<8x32xf32>
    %c0_40 = arith.constant 0 : index
    %c132_41 = arith.constant 132 : index
    %31 = vector.load %arg33[%c0_40, %c132_41] : memref<8x164xf32, #tpu.memory_space<vmem>>, vector<8x32xf32>
    tpu.vector_store %arg33[%c0_40, %c132_41], %30 {strides = array<i32>} : memref<8x164xf32, #tpu.memory_space<vmem>>, vector<8x32xf32>,
    %cst_42 = arith.constant 0.000000e+00 : f32
    %32 = vector.broadcast %cst_42 : f32 to vector<8x32xf32>
    %c0_43 = arith.constant 0 : index
    %c0_44 = arith.constant 0 : index
    %33 = vector.load %arg34[%c0_43, %c0_44] : memref<8x164xf32, #tpu.memory_space<vmem>>, vector<8x32xf32>
    tpu.vector_store %arg34[%c0_43, %c0_44], %32 {strides = array<i32>} : memref<8x164xf32, #tpu.memory_space<vmem>>, vector<8x32xf32>,
    %cst_45 = arith.constant 0.000000e+00 : f32
    %34 = vector.broadcast %cst_45 : f32 to vector<8x32xf32>
    %c0_46 = arith.constant 0 : index
    %c132_47 = arith.constant 132 : index
    %35 = vector.load %arg34[%c0_46, %c132_47] : memref<8x164xf32, #tpu.memory_space<vmem>>, vector<8x32xf32>
    tpu.vector_store %arg34[%c0_46, %c132_47], %34 {strides = array<i32>} : memref<8x164xf32, #tpu.memory_space<vmem>>, vector<8x32xf32>,
    %cst_48 = arith.constant 0.000000e+00 : f32
    %36 = vector.broadcast %cst_48 : f32 to vector<8x32xf32>
    %c0_49 = arith.constant 0 : index
    %c0_50 = arith.constant 0 : index
    %37 = vector.load %arg35[%c0_49, %c0_50] : memref<8x388xf32, #tpu.memory_space<vmem>>, vector<8x32xf32>
    tpu.vector_store %arg35[%c0_49, %c0_50], %36 {strides = array<i32>} : memref<8x388xf32, #tpu.memory_space<vmem>>, vector<8x32xf32>,
    %cst_51 = arith.constant 0.000000e+00 : f32
    %38 = vector.broadcast %cst_51 : f32 to vector<8x32xf32>
    %c0_52 = arith.constant 0 : index
    %c356 = arith.constant 356 : index
    %39 = vector.load %arg35[%c0_52, %c356] : memref<8x388xf32, #tpu.memory_space<vmem>>, vector<8x32xf32>
    tpu.vector_store %arg35[%c0_52, %c356], %38 {strides = array<i32>} : memref<8x388xf32, #tpu.memory_space<vmem>>, vector<8x32xf32>,
    %cst_53 = arith.constant 0.000000e+00 : f32
    %40 = vector.broadcast %cst_53 : f32 to vector<16x32xf32>
    %c0_54 = arith.constant 0 : index
    %c0_55 = arith.constant 0 : index
    %41 = vector.load %arg36[%c0_54, %c0_55] : memref<16x388xf32, #tpu.memory_space<vmem>>, vector<16x32xf32>
    tpu.vector_store %arg36[%c0_54, %c0_55], %40 {strides = array<i32>} : memref<16x388xf32, #tpu.memory_space<vmem>>, vector<16x32xf32>,
    %cst_56 = arith.constant 0.000000e+00 : f32
    %42 = vector.broadcast %cst_56 : f32 to vector<16x32xf32>
    %c0_57 = arith.constant 0 : index
    %c356_58 = arith.constant 356 : index
    %43 = vector.load %arg36[%c0_57, %c356_58] : memref<16x388xf32, #tpu.memory_space<vmem>>, vector<16x32xf32>
    tpu.vector_store %arg36[%c0_57, %c356_58], %42 {strides = array<i32>} : memref<16x388xf32, #tpu.memory_space<vmem>>, vector<16x32xf32>,
    %cst_59 = arith.constant 0.000000e+00 : f32
    %44 = vector.broadcast %cst_59 : f32 to vector<16x32xf32>
    %c0_60 = arith.constant 0 : index
    %c0_61 = arith.constant 0 : index
    %45 = vector.load %arg37[%c0_60, %c0_61] : memref<16x964xf32, #tpu.memory_space<vmem>>, vector<16x32xf32>
    tpu.vector_store %arg37[%c0_60, %c0_61], %44 {strides = array<i32>} : memref<16x964xf32, #tpu.memory_space<vmem>>, vector<16x32xf32>,
    %cst_62 = arith.constant 0.000000e+00 : f32
    %46 = vector.broadcast %cst_62 : f32 to vector<16x32xf32>
    %c0_63 = arith.constant 0 : index
    %c932_64 = arith.constant 932 : index
    %47 = vector.load %arg37[%c0_63, %c932_64] : memref<16x964xf32, #tpu.memory_space<vmem>>, vector<16x32xf32>
    tpu.vector_store %arg37[%c0_63, %c932_64], %46 {strides = array<i32>} : memref<16x964xf32, #tpu.memory_space<vmem>>, vector<16x32xf32>,
    %c0_65 = arith.constant 0 : index
    %c0_66 = arith.constant 0 : index
    %c1 = arith.constant 1 : index
    %48 = vector.load %arg1[%c0_65, %c0_66, %c1] : memref<1x1x964xf32, #tpu.memory_space<vmem>>, vector<1x1x900xf32>
    %49 = vector.shape_cast %48 : vector<1x1x900xf32> to vector<1x900xf32>
    %50 = arith.truncf %49 : vector<1x900xf32> to vector<1x900xbf16>
    %c0_67 = arith.constant 0 : index
    %c0_68 = arith.constant 0 : index
    %51 = vector.load %arg38[%c0_67, %c0_68] : memref<144x900xbf16, #tpu.memory_space<vmem>>, vector<1x900xbf16>
    tpu.vector_store %arg38[%c0_67, %c0_68], %50 {strides = array<i32>} : memref<144x900xbf16, #tpu.memory_space<vmem>>, vector<1x900xbf16>,
    %c0_69 = arith.constant 0 : index
    %c0_70 = arith.constant 0 : index
    %c2 = arith.constant 2 : index
    %52 = vector.load %arg1[%c0_69, %c0_70, %c2] : memref<1x1x964xf32, #tpu.memory_space<vmem>>, vector<1x1x900xf32>
    %53 = vector.shape_cast %52 : vector<1x1x900xf32> to vector<1x900xf32>
    %54 = arith.truncf %53 : vector<1x900xf32> to vector<1x900xbf16>
    %c1_71 = arith.constant 1 : index
    %c0_72 = arith.constant 0 : index
    %55 = vector.load %arg38[%c1_71, %c0_72] : memref<144x900xbf16, #tpu.memory_space<vmem>>, vector<1x900xbf16>
    tpu.vector_store %arg38[%c1_71, %c0_72], %54 {strides = array<i32>} : memref<144x900xbf16, #tpu.memory_space<vmem>>, vector<1x900xbf16>,
    %c0_73 = arith.constant 0 : index
    %c0_74 = arith.constant 0 : index
    %c3 = arith.constant 3 : index
    %56 = vector.load %arg1[%c0_73, %c0_74, %c3] : memref<1x1x964xf32, #tpu.memory_space<vmem>>, vector<1x1x900xf32>
    %57 = vector.shape_cast %56 : vector<1x1x900xf32> to vector<1x900xf32>
    %58 = arith.truncf %57 : vector<1x900xf32> to vector<1x900xbf16>
    %c2_75 = arith.constant 2 : index
    %c0_76 = arith.constant 0 : index
    %59 = vector.load %arg38[%c2_75, %c0_76] : memref<144x900xbf16, #tpu.memory_space<vmem>>, vector<1x900xbf16>
    tpu.vector_store %arg38[%c2_75, %c0_76], %58 {strides = array<i32>} : memref<144x900xbf16, #tpu.memory_space<vmem>>, vector<1x900xbf16>,
    %c0_77 = arith.constant 0 : index
    %c0_78 = arith.constant 0 : index
    %c31 = arith.constant 31 : index
    %60 = vector.load %arg1[%c0_77, %c0_78, %c31] : memref<1x1x964xf32, #tpu.memory_space<vmem>>, vector<1x1x900xf32>
    %61 = vector.shape_cast %60 : vector<1x1x900xf32> to vector<1x900xf32>
    %62 = arith.truncf %61 : vector<1x900xf32> to vector<1x900xbf16>
    %c3_79 = arith.constant 3 : index
    %c0_80 = arith.constant 0 : index
    %63 = vector.load %arg38[%c3_79, %c0_80] : memref<144x900xbf16, #tpu.memory_space<vmem>>, vector<1x900xbf16>
    tpu.vector_store %arg38[%c3_79, %c0_80], %62 {strides = array<i32>} : memref<144x900xbf16, #tpu.memory_space<vmem>>, vector<1x900xbf16>,
    %c0_81 = arith.constant 0 : index
    %c0_82 = arith.constant 0 : index
    %c32 = arith.constant 32 : index
    %64 = vector.load %arg1[%c0_81, %c0_82, %c32] : memref<1x1x964xf32, #tpu.memory_space<vmem>>, vector<1x1x900xf32>
    %65 = vector.shape_cast %64 : vector<1x1x900xf32> to vector<1x900xf32>
    %66 = arith.truncf %65 : vector<1x900xf32> to vector<1x900xbf16>
    %c4 = arith.constant 4 : index
    %c0_83 = arith.constant 0 : index
    %67 = vector.load %arg38[%c4, %c0_83] : memref<144x900xbf16, #tpu.memory_space<vmem>>, vector<1x900xbf16>
    tpu.vector_store %arg38[%c4, %c0_83], %66 {strides = array<i32>} : memref<144x900xbf16, #tpu.memory_space<vmem>>, vector<1x900xbf16>,
    %c0_84 = arith.constant 0 : index
    %c0_85 = arith.constant 0 : index
    %c33 = arith.constant 33 : index
    %68 = vector.load %arg1[%c0_84, %c0_85, %c33] : memref<1x1x964xf32, #tpu.memory_space<vmem>>, vector<1x1x900xf32>
    %69 = vector.shape_cast %68 : vector<1x1x900xf32> to vector<1x900xf32>
    %70 = arith.truncf %69 : vector<1x900xf32> to vector<1x900xbf16>
    %c5 = arith.constant 5 : index
    %c0_86 = arith.constant 0 : index
    %71 = vector.load %arg38[%c5, %c0_86] : memref<144x900xbf16, #tpu.memory_space<vmem>>, vector<1x900xbf16>
    tpu.vector_store %arg38[%c5, %c0_86], %70 {strides = array<i32>} : memref<144x900xbf16, #tpu.memory_space<vmem>>, vector<1x900xbf16>,
    %c0_87 = arith.constant 0 : index
    %c0_88 = arith.constant 0 : index
    %c61 = arith.constant 61 : index
    %72 = vector.load %arg1[%c0_87, %c0_88, %c61] : memref<1x1x964xf32, #tpu.memory_space<vmem>>, vector<1x1x900xf32>
    %73 = vector.shape_cast %72 : vector<1x1x900xf32> to vector<1x900xf32>
    %74 = arith.truncf %73 : vector<1x900xf32> to vector<1x900xbf16>
    %c6 = arith.constant 6 : index
    %c0_89 = arith.constant 0 : index
    %75 = vector.load %arg38[%c6, %c0_89] : memref<144x900xbf16, #tpu.memory_space<vmem>>, vector<1x900xbf16>
    tpu.vector_store %arg38[%c6, %c0_89], %74 {strides = array<i32>} : memref<144x900xbf16, #tpu.memory_space<vmem>>, vector<1x900xbf16>,
    %c0_90 = arith.constant 0 : index
    %c0_91 = arith.constant 0 : index
    %c62 = arith.constant 62 : index
    %76 = vector.load %arg1[%c0_90, %c0_91, %c62] : memref<1x1x964xf32, #tpu.memory_space<vmem>>, vector<1x1x900xf32>
    %77 = vector.shape_cast %76 : vector<1x1x900xf32> to vector<1x900xf32>
    %78 = arith.truncf %77 : vector<1x900xf32> to vector<1x900xbf16>
    %c7 = arith.constant 7 : index
    %c0_92 = arith.constant 0 : index
    %79 = vector.load %arg38[%c7, %c0_92] : memref<144x900xbf16, #tpu.memory_space<vmem>>, vector<1x900xbf16>
    tpu.vector_store %arg38[%c7, %c0_92], %78 {strides = array<i32>} : memref<144x900xbf16, #tpu.memory_space<vmem>>, vector<1x900xbf16>,
    %c0_93 = arith.constant 0 : index
    %c0_94 = arith.constant 0 : index
    %c63 = arith.constant 63 : index
    %80 = vector.load %arg1[%c0_93, %c0_94, %c63] : memref<1x1x964xf32, #tpu.memory_space<vmem>>, vector<1x1x900xf32>
    %81 = vector.shape_cast %80 : vector<1x1x900xf32> to vector<1x900xf32>
    %82 = arith.truncf %81 : vector<1x900xf32> to vector<1x900xbf16>
    %c8 = arith.constant 8 : index
    %c0_95 = arith.constant 0 : index
    %83 = vector.load %arg38[%c8, %c0_95] : memref<144x900xbf16, #tpu.memory_space<vmem>>, vector<1x900xbf16>
    tpu.vector_store %arg38[%c8, %c0_95], %82 {strides = array<i32>} : memref<144x900xbf16, #tpu.memory_space<vmem>>, vector<1x900xbf16>,
    %c0_96 = arith.constant 0 : index
    %c0_97 = arith.constant 0 : index
    %84 = vector.load %arg2[%c0_96, %c0_97] : memref<16x9xbf16, #tpu.memory_space<vmem>>, vector<16x9xbf16>
    %c0_98 = arith.constant 0 : index
    %c0_99 = arith.constant 0 : index
    %85 = vector.load %arg38[%c0_98, %c0_99] : memref<144x900xbf16, #tpu.memory_space<vmem>>, vector<9x900xbf16>
    %cst_100 = arith.constant dense<0.000000e+00> : vector<16x900xf32>
    %86 = tpu.matmul %84, %85, %cst_100 {dimension_numbers = #tpu.dot_dimension_numbers<[1], [0], [0], [1], [0, 0, 1, 1], [], []>} : vector<16x9xbf16>, vector<9x900xbf16>, vector<16x900xf32> -> vector<16x900xf32>
    %c0_101 = arith.constant 0 : index
    %c0_102 = arith.constant 0 : index
    %87 = vector.load %arg9[%c0_101, %c0_102] : memref<16x1xf32, #tpu.memory_space<vmem>>, vector<16x1xf32>
    %88 = vector.broadcast %87 : vector<16x1xf32> to vector<16x900xf32>
    %89 = arith.addf %86, %88 : vector<16x900xf32>
    %cst_103 = arith.constant 0.000000e+00 : f32
    %90 = vector.broadcast %cst_103 : f32 to vector<16x900xf32>
    %91 = arith.maximumf %89, %90 : vector<16x900xf32>
    %c0_104 = arith.constant 0 : index
    %c0_105 = arith.constant 0 : index
    %92 = vector.load %arg16[%c0_104, %c0_105] : memref<1x900xf32, #tpu.memory_space<vmem>>, vector<1x900xf32>
    %93 = vector.broadcast %92 : vector<1x900xf32> to vector<16x900xf32>
    %94 = arith.mulf %91, %93 : vector<16x900xf32>
    %c0_106 = arith.constant 0 : index
    %c32_107 = arith.constant 32 : index
    %95 = vector.load %arg26[%c0_106, %c32_107] : memref<16x964xf32, #tpu.memory_space<vmem>>, vector<16x900xf32>
    tpu.vector_store %arg26[%c0_106, %c32_107], %94 {strides = array<i32>} : memref<16x964xf32, #tpu.memory_space<vmem>>, vector<16x900xf32>,
    %c0_108 = arith.constant 0 : index
    %c32_109 = arith.constant 32 : index
    %96 = vector.load %arg26[%c0_108, %c32_109] : memref<16x964xf32, #tpu.memory_space<vmem>>, vector<16x900xf32>
    %c0_110 = arith.constant 0 : index
    %c33_111 = arith.constant 33 : index
    %97 = vector.load %arg26[%c0_110, %c33_111] : memref<16x964xf32, #tpu.memory_space<vmem>>, vector<16x900xf32>
    %c0_112 = arith.constant 0 : index
    %c62_113 = arith.constant 62 : index
    %98 = vector.load %arg26[%c0_112, %c62_113] : memref<16x964xf32, #tpu.memory_space<vmem>>, vector<16x900xf32>
    %c0_114 = arith.constant 0 : index
    %c63_115 = arith.constant 63 : index
    %99 = vector.load %arg26[%c0_114, %c63_115] : memref<16x964xf32, #tpu.memory_space<vmem>>, vector<16x900xf32>
    %100 = arith.maximumf %96, %97 : vector<16x900xf32>
    %101 = arith.maximumf %98, %99 : vector<16x900xf32>
    %102 = arith.maximumf %100, %101 : vector<16x900xf32>
    %103 = arith.truncf %102 : vector<16x900xf32> to vector<16x900xbf16>
    %c0_116 = arith.constant 0 : index
    %c0_117 = arith.constant 0 : index
    %104 = vector.load %arg19[%c0_116, %c0_117] : memref<900x289xbf16, #tpu.memory_space<vmem>>, vector<900x289xbf16>
    %cst_118 = arith.constant dense<0.000000e+00> : vector<16x289xf32>
    %105 = tpu.matmul %103, %104, %cst_118 {dimension_numbers = #tpu.dot_dimension_numbers<[1], [0], [0], [1], [0, 0, 1, 1], [], []>} : vector<16x900xbf16>, vector<900x289xbf16>, vector<16x289xf32> -> vector<16x289xf32>
    %c0_119 = arith.constant 0 : index
    %c32_120 = arith.constant 32 : index
    %106 = vector.load %arg27[%c0_119, %c32_120] : memref<16x353xf32, #tpu.memory_space<vmem>>, vector<16x289xf32>
    tpu.vector_store %arg27[%c0_119, %c32_120], %105 {strides = array<i32>} : memref<16x353xf32, #tpu.memory_space<vmem>>, vector<16x289xf32>,
    %c0_121 = arith.constant 0 : index
    %c14 = arith.constant 14 : index
    %107 = vector.load %arg27[%c0_121, %c14] : memref<16x353xf32, #tpu.memory_space<vmem>>, vector<16x289xf32>
    %108 = arith.truncf %107 : vector<16x289xf32> to vector<16x289xbf16>
    %c0_122 = arith.constant 0 : index
    %c0_123 = arith.constant 0 : index
    %109 = vector.load %arg38[%c0_122, %c0_123] : memref<144x900xbf16, #tpu.memory_space<vmem>>, vector<16x289xbf16>
    tpu.vector_store %arg38[%c0_122, %c0_123], %108 {strides = array<i32>} : memref<144x900xbf16, #tpu.memory_space<vmem>>, vector<16x289xbf16>,
    %c0_124 = arith.constant 0 : index
    %c15 = arith.constant 15 : index
    %110 = vector.load %arg27[%c0_124, %c15] : memref<16x353xf32, #tpu.memory_space<vmem>>, vector<16x289xf32>
    %111 = arith.truncf %110 : vector<16x289xf32> to vector<16x289xbf16>
    %c16 = arith.constant 16 : index
    %c0_125 = arith.constant 0 : index
    %112 = vector.load %arg38[%c16, %c0_125] : memref<144x900xbf16, #tpu.memory_space<vmem>>, vector<16x289xbf16>
    tpu.vector_store %arg38[%c16, %c0_125], %111 {strides = array<i32>} : memref<144x900xbf16, #tpu.memory_space<vmem>>, vector<16x289xbf16>,
    %c0_126 = arith.constant 0 : index
    %c16_127 = arith.constant 16 : index
    %113 = vector.load %arg27[%c0_126, %c16_127] : memref<16x353xf32, #tpu.memory_space<vmem>>, vector<16x289xf32>
    %114 = arith.truncf %113 : vector<16x289xf32> to vector<16x289xbf16>
    %c32_128 = arith.constant 32 : index
    %c0_129 = arith.constant 0 : index
    %115 = vector.load %arg38[%c32_128, %c0_129] : memref<144x900xbf16, #tpu.memory_space<vmem>>, vector<16x289xbf16>
    tpu.vector_store %arg38[%c32_128, %c0_129], %114 {strides = array<i32>} : memref<144x900xbf16, #tpu.memory_space<vmem>>, vector<16x289xbf16>,
    %c0_130 = arith.constant 0 : index
    %c31_131 = arith.constant 31 : index
    %116 = vector.load %arg27[%c0_130, %c31_131] : memref<16x353xf32, #tpu.memory_space<vmem>>, vector<16x289xf32>
    %117 = arith.truncf %116 : vector<16x289xf32> to vector<16x289xbf16>
    %c48 = arith.constant 48 : index
    %c0_132 = arith.constant 0 : index
    %118 = vector.load %arg38[%c48, %c0_132] : memref<144x900xbf16, #tpu.memory_space<vmem>>, vector<16x289xbf16>
    tpu.vector_store %arg38[%c48, %c0_132], %117 {strides = array<i32>} : memref<144x900xbf16, #tpu.memory_space<vmem>>, vector<16x289xbf16>,
    %c0_133 = arith.constant 0 : index
    %c32_134 = arith.constant 32 : index
    %119 = vector.load %arg27[%c0_133, %c32_134] : memref<16x353xf32, #tpu.memory_space<vmem>>, vector<16x289xf32>
    %120 = arith.truncf %119 : vector<16x289xf32> to vector<16x289xbf16>
    %c64 = arith.constant 64 : index
    %c0_135 = arith.constant 0 : index
    %121 = vector.load %arg38[%c64, %c0_135] : memref<144x900xbf16, #tpu.memory_space<vmem>>, vector<16x289xbf16>
    tpu.vector_store %arg38[%c64, %c0_135], %120 {strides = array<i32>} : memref<144x900xbf16, #tpu.memory_space<vmem>>, vector<16x289xbf16>,
    %c0_136 = arith.constant 0 : index
    %c33_137 = arith.constant 33 : index
    %122 = vector.load %arg27[%c0_136, %c33_137] : memref<16x353xf32, #tpu.memory_space<vmem>>, vector<16x289xf32>
    %123 = arith.truncf %122 : vector<16x289xf32> to vector<16x289xbf16>
    %c80 = arith.constant 80 : index
    %c0_138 = arith.constant 0 : index
    %124 = vector.load %arg38[%c80, %c0_138] : memref<144x900xbf16, #tpu.memory_space<vmem>>, vector<16x289xbf16>
    tpu.vector_store %arg38[%c80, %c0_138], %123 {strides = array<i32>} : memref<144x900xbf16, #tpu.memory_space<vmem>>, vector<16x289xbf16>,
    %c0_139 = arith.constant 0 : index
    %c48_140 = arith.constant 48 : index
    %125 = vector.load %arg27[%c0_139, %c48_140] : memref<16x353xf32, #tpu.memory_space<vmem>>, vector<16x289xf32>
    %126 = arith.truncf %125 : vector<16x289xf32> to vector<16x289xbf16>
    %c96 = arith.constant 96 : index
    %c0_141 = arith.constant 0 : index
    %127 = vector.load %arg38[%c96, %c0_141] : memref<144x900xbf16, #tpu.memory_space<vmem>>, vector<16x289xbf16>
    tpu.vector_store %arg38[%c96, %c0_141], %126 {strides = array<i32>} : memref<144x900xbf16, #tpu.memory_space<vmem>>, vector<16x289xbf16>,
    %c0_142 = arith.constant 0 : index
    %c49 = arith.constant 49 : index
    %128 = vector.load %arg27[%c0_142, %c49] : memref<16x353xf32, #tpu.memory_space<vmem>>, vector<16x289xf32>
    %129 = arith.truncf %128 : vector<16x289xf32> to vector<16x289xbf16>
    %c112 = arith.constant 112 : index
    %c0_143 = arith.constant 0 : index
    %130 = vector.load %arg38[%c112, %c0_143] : memref<144x900xbf16, #tpu.memory_space<vmem>>, vector<16x289xbf16>
    tpu.vector_store %arg38[%c112, %c0_143], %129 {strides = array<i32>} : memref<144x900xbf16, #tpu.memory_space<vmem>>, vector<16x289xbf16>,
    %c0_144 = arith.constant 0 : index
    %c50 = arith.constant 50 : index
    %131 = vector.load %arg27[%c0_144, %c50] : memref<16x353xf32, #tpu.memory_space<vmem>>, vector<16x289xf32>
    %132 = arith.truncf %131 : vector<16x289xf32> to vector<16x289xbf16>
    %c128 = arith.constant 128 : index
    %c0_145 = arith.constant 0 : index
    %133 = vector.load %arg38[%c128, %c0_145] : memref<144x900xbf16, #tpu.memory_space<vmem>>, vector<16x289xbf16>
    tpu.vector_store %arg38[%c128, %c0_145], %132 {strides = array<i32>} : memref<144x900xbf16, #tpu.memory_space<vmem>>, vector<16x289xbf16>,
    %c0_146 = arith.constant 0 : index
    %c0_147 = arith.constant 0 : index
    %134 = vector.load %arg3[%c0_146, %c0_147] : memref<8x144xbf16, #tpu.memory_space<vmem>>, vector<8x144xbf16>
    %c0_148 = arith.constant 0 : index
    %c0_149 = arith.constant 0 : index
    %135 = vector.load %arg38[%c0_148, %c0_149] : memref<144x900xbf16, #tpu.memory_space<vmem>>, vector<144x289xbf16>
    %cst_150 = arith.constant dense<0.000000e+00> : vector<8x289xf32>
    %136 = tpu.matmul %134, %135, %cst_150 {dimension_numbers = #tpu.dot_dimension_numbers<[1], [0], [0], [1], [0, 0, 1, 1], [], []>} : vector<8x144xbf16>, vector<144x289xbf16>, vector<8x289xf32> -> vector<8x289xf32>
    %c0_151 = arith.constant 0 : index
    %c0_152 = arith.constant 0 : index
    %137 = vector.load %arg10[%c0_151, %c0_152] : memref<8x1xf32, #tpu.memory_space<vmem>>, vector<8x1xf32>
    %138 = vector.broadcast %137 : vector<8x1xf32> to vector<8x289xf32>
    %139 = arith.addf %136, %138 : vector<8x289xf32>
    %cst_153 = arith.constant 0.000000e+00 : f32
    %140 = vector.broadcast %cst_153 : f32 to vector<8x289xf32>
    %141 = arith.maximumf %139, %140 : vector<8x289xf32>
    %c0_154 = arith.constant 0 : index
    %c0_155 = arith.constant 0 : index
    %142 = vector.load %arg17[%c0_154, %c0_155] : memref<1x289xf32, #tpu.memory_space<vmem>>, vector<1x289xf32>
    %143 = vector.broadcast %142 : vector<1x289xf32> to vector<8x289xf32>
    %144 = arith.mulf %141, %143 : vector<8x289xf32>
    %c0_156 = arith.constant 0 : index
    %c32_157 = arith.constant 32 : index
    %145 = vector.load %arg28[%c0_156, %c32_157] : memref<8x353xf32, #tpu.memory_space<vmem>>, vector<8x289xf32>
    tpu.vector_store %arg28[%c0_156, %c32_157], %144 {strides = array<i32>} : memref<8x353xf32, #tpu.memory_space<vmem>>, vector<8x289xf32>,
    %c0_158 = arith.constant 0 : index
    %c32_159 = arith.constant 32 : index
    %146 = vector.load %arg28[%c0_158, %c32_159] : memref<8x353xf32, #tpu.memory_space<vmem>>, vector<8x289xf32>
    %c0_160 = arith.constant 0 : index
    %c33_161 = arith.constant 33 : index
    %147 = vector.load %arg28[%c0_160, %c33_161] : memref<8x353xf32, #tpu.memory_space<vmem>>, vector<8x289xf32>
    %c0_162 = arith.constant 0 : index
    %c49_163 = arith.constant 49 : index
    %148 = vector.load %arg28[%c0_162, %c49_163] : memref<8x353xf32, #tpu.memory_space<vmem>>, vector<8x289xf32>
    %c0_164 = arith.constant 0 : index
    %c50_165 = arith.constant 50 : index
    %149 = vector.load %arg28[%c0_164, %c50_165] : memref<8x353xf32, #tpu.memory_space<vmem>>, vector<8x289xf32>
    %150 = arith.maximumf %146, %147 : vector<8x289xf32>
    %151 = arith.maximumf %148, %149 : vector<8x289xf32>
    %152 = arith.maximumf %150, %151 : vector<8x289xf32>
    %153 = arith.truncf %152 : vector<8x289xf32> to vector<8x289xbf16>
    %c0_166 = arith.constant 0 : index
    %c0_167 = arith.constant 0 : index
    %154 = vector.load %arg20[%c0_166, %c0_167] : memref<289x100xbf16, #tpu.memory_space<vmem>>, vector<289x100xbf16>
    %cst_168 = arith.constant dense<0.000000e+00> : vector<8x100xf32>
    %155 = tpu.matmul %153, %154, %cst_168 {dimension_numbers = #tpu.dot_dimension_numbers<[1], [0], [0], [1], [0, 0, 1, 1], [], []>} : vector<8x289xbf16>, vector<289x100xbf16>, vector<8x100xf32> -> vector<8x100xf32>
    %c0_169 = arith.constant 0 : index
    %c32_170 = arith.constant 32 : index
    %156 = vector.load %arg29[%c0_169, %c32_170] : memref<8x164xf32, #tpu.memory_space<vmem>>, vector<8x100xf32>
    tpu.vector_store %arg29[%c0_169, %c32_170], %155 {strides = array<i32>} : memref<8x164xf32, #tpu.memory_space<vmem>>, vector<8x100xf32>,
    %c0_171 = arith.constant 0 : index
    %c21 = arith.constant 21 : index
    %157 = vector.load %arg29[%c0_171, %c21] : memref<8x164xf32, #tpu.memory_space<vmem>>, vector<8x100xf32>
    %158 = arith.truncf %157 : vector<8x100xf32> to vector<8x100xbf16>
    %c0_172 = arith.constant 0 : index
    %c0_173 = arith.constant 0 : index
    %159 = vector.load %arg38[%c0_172, %c0_173] : memref<144x900xbf16, #tpu.memory_space<vmem>>, vector<8x100xbf16>
    tpu.vector_store %arg38[%c0_172, %c0_173], %158 {strides = array<i32>} : memref<144x900xbf16, #tpu.memory_space<vmem>>, vector<8x100xbf16>,
    %c0_174 = arith.constant 0 : index
    %c22 = arith.constant 22 : index
    %160 = vector.load %arg29[%c0_174, %c22] : memref<8x164xf32, #tpu.memory_space<vmem>>, vector<8x100xf32>
    %161 = arith.truncf %160 : vector<8x100xf32> to vector<8x100xbf16>
    %c8_175 = arith.constant 8 : index
    %c0_176 = arith.constant 0 : index
    %162 = vector.load %arg38[%c8_175, %c0_176] : memref<144x900xbf16, #tpu.memory_space<vmem>>, vector<8x100xbf16>
    tpu.vector_store %arg38[%c8_175, %c0_176], %161 {strides = array<i32>} : memref<144x900xbf16, #tpu.memory_space<vmem>>, vector<8x100xbf16>,
    %c0_177 = arith.constant 0 : index
    %c23 = arith.constant 23 : index
    %163 = vector.load %arg29[%c0_177, %c23] : memref<8x164xf32, #tpu.memory_space<vmem>>, vector<8x100xf32>
    %164 = arith.truncf %163 : vector<8x100xf32> to vector<8x100xbf16>
    %c16_178 = arith.constant 16 : index
    %c0_179 = arith.constant 0 : index
    %165 = vector.load %arg38[%c16_178, %c0_179] : memref<144x900xbf16, #tpu.memory_space<vmem>>, vector<8x100xbf16>
    tpu.vector_store %arg38[%c16_178, %c0_179], %164 {strides = array<i32>} : memref<144x900xbf16, #tpu.memory_space<vmem>>, vector<8x100xbf16>,
    %c0_180 = arith.constant 0 : index
    %c31_181 = arith.constant 31 : index
    %166 = vector.load %arg29[%c0_180, %c31_181] : memref<8x164xf32, #tpu.memory_space<vmem>>, vector<8x100xf32>
    %167 = arith.truncf %166 : vector<8x100xf32> to vector<8x100xbf16>
    %c24 = arith.constant 24 : index
    %c0_182 = arith.constant 0 : index
    %168 = vector.load %arg38[%c24, %c0_182] : memref<144x900xbf16, #tpu.memory_space<vmem>>, vector<8x100xbf16>
    tpu.vector_store %arg38[%c24, %c0_182], %167 {strides = array<i32>} : memref<144x900xbf16, #tpu.memory_space<vmem>>, vector<8x100xbf16>,
    %c0_183 = arith.constant 0 : index
    %c32_184 = arith.constant 32 : index
    %169 = vector.load %arg29[%c0_183, %c32_184] : memref<8x164xf32, #tpu.memory_space<vmem>>, vector<8x100xf32>
    %170 = arith.truncf %169 : vector<8x100xf32> to vector<8x100xbf16>
    %c32_185 = arith.constant 32 : index
    %c0_186 = arith.constant 0 : index
    %171 = vector.load %arg38[%c32_185, %c0_186] : memref<144x900xbf16, #tpu.memory_space<vmem>>, vector<8x100xbf16>
    tpu.vector_store %arg38[%c32_185, %c0_186], %170 {strides = array<i32>} : memref<144x900xbf16, #tpu.memory_space<vmem>>, vector<8x100xbf16>,
    %c0_187 = arith.constant 0 : index
    %c33_188 = arith.constant 33 : index
    %172 = vector.load %arg29[%c0_187, %c33_188] : memref<8x164xf32, #tpu.memory_space<vmem>>, vector<8x100xf32>
    %173 = arith.truncf %172 : vector<8x100xf32> to vector<8x100xbf16>
    %c40 = arith.constant 40 : index
    %c0_189 = arith.constant 0 : index
    %174 = vector.load %arg38[%c40, %c0_189] : memref<144x900xbf16, #tpu.memory_space<vmem>>, vector<8x100xbf16>
    tpu.vector_store %arg38[%c40, %c0_189], %173 {strides = array<i32>} : memref<144x900xbf16, #tpu.memory_space<vmem>>, vector<8x100xbf16>,
    %c0_190 = arith.constant 0 : index
    %c41 = arith.constant 41 : index
    %175 = vector.load %arg29[%c0_190, %c41] : memref<8x164xf32, #tpu.memory_space<vmem>>, vector<8x100xf32>
    %176 = arith.truncf %175 : vector<8x100xf32> to vector<8x100xbf16>
    %c48_191 = arith.constant 48 : index
    %c0_192 = arith.constant 0 : index
    %177 = vector.load %arg38[%c48_191, %c0_192] : memref<144x900xbf16, #tpu.memory_space<vmem>>, vector<8x100xbf16>
    tpu.vector_store %arg38[%c48_191, %c0_192], %176 {strides = array<i32>} : memref<144x900xbf16, #tpu.memory_space<vmem>>, vector<8x100xbf16>,
    %c0_193 = arith.constant 0 : index
    %c42 = arith.constant 42 : index
    %178 = vector.load %arg29[%c0_193, %c42] : memref<8x164xf32, #tpu.memory_space<vmem>>, vector<8x100xf32>
    %179 = arith.truncf %178 : vector<8x100xf32> to vector<8x100xbf16>
    %c56 = arith.constant 56 : index
    %c0_194 = arith.constant 0 : index
    %180 = vector.load %arg38[%c56, %c0_194] : memref<144x900xbf16, #tpu.memory_space<vmem>>, vector<8x100xbf16>
    tpu.vector_store %arg38[%c56, %c0_194], %179 {strides = array<i32>} : memref<144x900xbf16, #tpu.memory_space<vmem>>, vector<8x100xbf16>,
    %c0_195 = arith.constant 0 : index
    %c43 = arith.constant 43 : index
    %181 = vector.load %arg29[%c0_195, %c43] : memref<8x164xf32, #tpu.memory_space<vmem>>, vector<8x100xf32>
    %182 = arith.truncf %181 : vector<8x100xf32> to vector<8x100xbf16>
    %c64_196 = arith.constant 64 : index
    %c0_197 = arith.constant 0 : index
    %183 = vector.load %arg38[%c64_196, %c0_197] : memref<144x900xbf16, #tpu.memory_space<vmem>>, vector<8x100xbf16>
    tpu.vector_store %arg38[%c64_196, %c0_197], %182 {strides = array<i32>} : memref<144x900xbf16, #tpu.memory_space<vmem>>, vector<8x100xbf16>,
    %c0_198 = arith.constant 0 : index
    %c0_199 = arith.constant 0 : index
    %184 = vector.load %arg4[%c0_198, %c0_199] : memref<8x72xbf16, #tpu.memory_space<vmem>>, vector<8x72xbf16>
    %c0_200 = arith.constant 0 : index
    %c0_201 = arith.constant 0 : index
    %185 = vector.load %arg38[%c0_200, %c0_201] : memref<144x900xbf16, #tpu.memory_space<vmem>>, vector<72x100xbf16>
    %cst_202 = arith.constant dense<0.000000e+00> : vector<8x100xf32>
    %186 = tpu.matmul %184, %185, %cst_202 {dimension_numbers = #tpu.dot_dimension_numbers<[1], [0], [0], [1], [0, 0, 1, 1], [], []>} : vector<8x72xbf16>, vector<72x100xbf16>, vector<8x100xf32> -> vector<8x100xf32>
    %c0_203 = arith.constant 0 : index
    %c0_204 = arith.constant 0 : index
    %187 = vector.load %arg11[%c0_203, %c0_204] : memref<8x1xf32, #tpu.memory_space<vmem>>, vector<8x1xf32>
    %188 = vector.broadcast %187 : vector<8x1xf32> to vector<8x100xf32>
    %189 = arith.addf %186, %188 : vector<8x100xf32>
    %cst_205 = arith.constant 0.000000e+00 : f32
    %190 = vector.broadcast %cst_205 : f32 to vector<8x100xf32>
    %191 = arith.maximumf %189, %190 : vector<8x100xf32>
    %c0_206 = arith.constant 0 : index
    %c0_207 = arith.constant 0 : index
    %192 = vector.load %arg18[%c0_206, %c0_207] : memref<1x100xf32, #tpu.memory_space<vmem>>, vector<1x100xf32>
    %193 = vector.broadcast %192 : vector<1x100xf32> to vector<8x100xf32>
    %194 = arith.mulf %191, %193 : vector<8x100xf32>
    %c0_208 = arith.constant 0 : index
    %c32_209 = arith.constant 32 : index
    %195 = vector.load %arg30[%c0_208, %c32_209] : memref<8x164xf32, #tpu.memory_space<vmem>>, vector<8x100xf32>
    tpu.vector_store %arg30[%c0_208, %c32_209], %194 {strides = array<i32>} : memref<8x164xf32, #tpu.memory_space<vmem>>, vector<8x100xf32>,
    %c0_210 = arith.constant 0 : index
    %c32_211 = arith.constant 32 : index
    %196 = vector.load %arg30[%c0_210, %c32_211] : memref<8x164xf32, #tpu.memory_space<vmem>>, vector<8x100xf32>
    %c0_212 = arith.constant 0 : index
    %c33_213 = arith.constant 33 : index
    %197 = vector.load %arg30[%c0_212, %c33_213] : memref<8x164xf32, #tpu.memory_space<vmem>>, vector<8x100xf32>
    %c0_214 = arith.constant 0 : index
    %c42_215 = arith.constant 42 : index
    %198 = vector.load %arg30[%c0_214, %c42_215] : memref<8x164xf32, #tpu.memory_space<vmem>>, vector<8x100xf32>
    %c0_216 = arith.constant 0 : index
    %c43_217 = arith.constant 43 : index
    %199 = vector.load %arg30[%c0_216, %c43_217] : memref<8x164xf32, #tpu.memory_space<vmem>>, vector<8x100xf32>
    %200 = arith.maximumf %196, %197 : vector<8x100xf32>
    %201 = arith.maximumf %198, %199 : vector<8x100xf32>
    %202 = arith.maximumf %200, %201 : vector<8x100xf32>
    %203 = arith.truncf %202 : vector<8x100xf32> to vector<8x100xbf16>
    %c0_218 = arith.constant 0 : index
    %c0_219 = arith.constant 0 : index
    %204 = vector.load %arg21[%c0_218, %c0_219] : memref<100x49xbf16, #tpu.memory_space<vmem>>, vector<100x49xbf16>
    %cst_220 = arith.constant dense<0.000000e+00> : vector<8x49xf32>
    %205 = tpu.matmul %203, %204, %cst_220 {dimension_numbers = #tpu.dot_dimension_numbers<[1], [0], [0], [1], [0, 0, 1, 1], [], []>} : vector<8x100xbf16>, vector<100x49xbf16>, vector<8x49xf32> -> vector<8x49xf32>
    %c0_221 = arith.constant 0 : index
    %c32_222 = arith.constant 32 : index
    %206 = vector.load %arg31[%c0_221, %c32_222] : memref<8x113xf32, #tpu.memory_space<vmem>>, vector<8x49xf32>
    tpu.vector_store %arg31[%c0_221, %c32_222], %205 {strides = array<i32>} : memref<8x113xf32, #tpu.memory_space<vmem>>, vector<8x49xf32>,
    %c0_223 = arith.constant 0 : index
    %c24_224 = arith.constant 24 : index
    %207 = vector.load %arg31[%c0_223, %c24_224] : memref<8x113xf32, #tpu.memory_space<vmem>>, vector<8x49xf32>
    %208 = arith.truncf %207 : vector<8x49xf32> to vector<8x49xbf16>
    %c0_225 = arith.constant 0 : index
    %c0_226 = arith.constant 0 : index
    %209 = vector.load %arg38[%c0_225, %c0_226] : memref<144x900xbf16, #tpu.memory_space<vmem>>, vector<8x49xbf16>
    tpu.vector_store %arg38[%c0_225, %c0_226], %208 {strides = array<i32>} : memref<144x900xbf16, #tpu.memory_space<vmem>>, vector<8x49xbf16>,
    %c0_227 = arith.constant 0 : index
    %c25 = arith.constant 25 : index
    %210 = vector.load %arg31[%c0_227, %c25] : memref<8x113xf32, #tpu.memory_space<vmem>>, vector<8x49xf32>
    %211 = arith.truncf %210 : vector<8x49xf32> to vector<8x49xbf16>
    %c8_228 = arith.constant 8 : index
    %c0_229 = arith.constant 0 : index
    %212 = vector.load %arg38[%c8_228, %c0_229] : memref<144x900xbf16, #tpu.memory_space<vmem>>, vector<8x49xbf16>
    tpu.vector_store %arg38[%c8_228, %c0_229], %211 {strides = array<i32>} : memref<144x900xbf16, #tpu.memory_space<vmem>>, vector<8x49xbf16>,
    %c0_230 = arith.constant 0 : index
    %c26 = arith.constant 26 : index
    %213 = vector.load %arg31[%c0_230, %c26] : memref<8x113xf32, #tpu.memory_space<vmem>>, vector<8x49xf32>
    %214 = arith.truncf %213 : vector<8x49xf32> to vector<8x49xbf16>
    %c16_231 = arith.constant 16 : index
    %c0_232 = arith.constant 0 : index
    %215 = vector.load %arg38[%c16_231, %c0_232] : memref<144x900xbf16, #tpu.memory_space<vmem>>, vector<8x49xbf16>
    tpu.vector_store %arg38[%c16_231, %c0_232], %214 {strides = array<i32>} : memref<144x900xbf16, #tpu.memory_space<vmem>>, vector<8x49xbf16>,
    %c0_233 = arith.constant 0 : index
    %c31_234 = arith.constant 31 : index
    %216 = vector.load %arg31[%c0_233, %c31_234] : memref<8x113xf32, #tpu.memory_space<vmem>>, vector<8x49xf32>
    %217 = arith.truncf %216 : vector<8x49xf32> to vector<8x49xbf16>
    %c24_235 = arith.constant 24 : index
    %c0_236 = arith.constant 0 : index
    %218 = vector.load %arg38[%c24_235, %c0_236] : memref<144x900xbf16, #tpu.memory_space<vmem>>, vector<8x49xbf16>
    tpu.vector_store %arg38[%c24_235, %c0_236], %217 {strides = array<i32>} : memref<144x900xbf16, #tpu.memory_space<vmem>>, vector<8x49xbf16>,
    %c0_237 = arith.constant 0 : index
    %c32_238 = arith.constant 32 : index
    %219 = vector.load %arg31[%c0_237, %c32_238] : memref<8x113xf32, #tpu.memory_space<vmem>>, vector<8x49xf32>
    %220 = arith.truncf %219 : vector<8x49xf32> to vector<8x49xbf16>
    %c32_239 = arith.constant 32 : index
    %c0_240 = arith.constant 0 : index
    %221 = vector.load %arg38[%c32_239, %c0_240] : memref<144x900xbf16, #tpu.memory_space<vmem>>, vector<8x49xbf16>
    tpu.vector_store %arg38[%c32_239, %c0_240], %220 {strides = array<i32>} : memref<144x900xbf16, #tpu.memory_space<vmem>>, vector<8x49xbf16>,
    %c0_241 = arith.constant 0 : index
    %c33_242 = arith.constant 33 : index
    %222 = vector.load %arg31[%c0_241, %c33_242] : memref<8x113xf32, #tpu.memory_space<vmem>>, vector<8x49xf32>
    %223 = arith.truncf %222 : vector<8x49xf32> to vector<8x49xbf16>
    %c40_243 = arith.constant 40 : index
    %c0_244 = arith.constant 0 : index
    %224 = vector.load %arg38[%c40_243, %c0_244] : memref<144x900xbf16, #tpu.memory_space<vmem>>, vector<8x49xbf16>
    tpu.vector_store %arg38[%c40_243, %c0_244], %223 {strides = array<i32>} : memref<144x900xbf16, #tpu.memory_space<vmem>>, vector<8x49xbf16>,
    %c0_245 = arith.constant 0 : index
    %c38 = arith.constant 38 : index
    %225 = vector.load %arg31[%c0_245, %c38] : memref<8x113xf32, #tpu.memory_space<vmem>>, vector<8x49xf32>
    %226 = arith.truncf %225 : vector<8x49xf32> to vector<8x49xbf16>
    %c48_246 = arith.constant 48 : index
    %c0_247 = arith.constant 0 : index
    %227 = vector.load %arg38[%c48_246, %c0_247] : memref<144x900xbf16, #tpu.memory_space<vmem>>, vector<8x49xbf16>
    tpu.vector_store %arg38[%c48_246, %c0_247], %226 {strides = array<i32>} : memref<144x900xbf16, #tpu.memory_space<vmem>>, vector<8x49xbf16>,
    %c0_248 = arith.constant 0 : index
    %c39 = arith.constant 39 : index
    %228 = vector.load %arg31[%c0_248, %c39] : memref<8x113xf32, #tpu.memory_space<vmem>>, vector<8x49xf32>
    %229 = arith.truncf %228 : vector<8x49xf32> to vector<8x49xbf16>
    %c56_249 = arith.constant 56 : index
    %c0_250 = arith.constant 0 : index
    %230 = vector.load %arg38[%c56_249, %c0_250] : memref<144x900xbf16, #tpu.memory_space<vmem>>, vector<8x49xbf16>
    tpu.vector_store %arg38[%c56_249, %c0_250], %229 {strides = array<i32>} : memref<144x900xbf16, #tpu.memory_space<vmem>>, vector<8x49xbf16>,
    %c0_251 = arith.constant 0 : index
    %c40_252 = arith.constant 40 : index
    %231 = vector.load %arg31[%c0_251, %c40_252] : memref<8x113xf32, #tpu.memory_space<vmem>>, vector<8x49xf32>
    %232 = arith.truncf %231 : vector<8x49xf32> to vector<8x49xbf16>
    %c64_253 = arith.constant 64 : index
    %c0_254 = arith.constant 0 : index
    %233 = vector.load %arg38[%c64_253, %c0_254] : memref<144x900xbf16, #tpu.memory_space<vmem>>, vector<8x49xbf16>
    tpu.vector_store %arg38[%c64_253, %c0_254], %232 {strides = array<i32>} : memref<144x900xbf16, #tpu.memory_space<vmem>>, vector<8x49xbf16>,
    %c0_255 = arith.constant 0 : index
    %c0_256 = arith.constant 0 : index
    %234 = vector.load %arg5[%c0_255, %c0_256] : memref<8x72xbf16, #tpu.memory_space<vmem>>, vector<8x72xbf16>
    %c0_257 = arith.constant 0 : index
    %c0_258 = arith.constant 0 : index
    %235 = vector.load %arg38[%c0_257, %c0_258] : memref<144x900xbf16, #tpu.memory_space<vmem>>, vector<72x49xbf16>
    %cst_259 = arith.constant dense<0.000000e+00> : vector<8x49xf32>
    %236 = tpu.matmul %234, %235, %cst_259 {dimension_numbers = #tpu.dot_dimension_numbers<[1], [0], [0], [1], [0, 0, 1, 1], [], []>} : vector<8x72xbf16>, vector<72x49xbf16>, vector<8x49xf32> -> vector<8x49xf32>
    %c0_260 = arith.constant 0 : index
    %c0_261 = arith.constant 0 : index
    %237 = vector.load %arg12[%c0_260, %c0_261] : memref<8x1xf32, #tpu.memory_space<vmem>>, vector<8x1xf32>
    %238 = vector.broadcast %237 : vector<8x1xf32> to vector<8x49xf32>
    %239 = arith.addf %236, %238 : vector<8x49xf32>
    %cst_262 = arith.constant 0.000000e+00 : f32
    %240 = vector.broadcast %cst_262 : f32 to vector<8x49xf32>
    %241 = arith.maximumf %239, %240 : vector<8x49xf32>
    %c0_263 = arith.constant 0 : index
    %c32_264 = arith.constant 32 : index
    %242 = vector.load %arg32[%c0_263, %c32_264] : memref<8x113xf32, #tpu.memory_space<vmem>>, vector<8x49xf32>
    tpu.vector_store %arg32[%c0_263, %c32_264], %241 {strides = array<i32>} : memref<8x113xf32, #tpu.memory_space<vmem>>, vector<8x49xf32>,
    %c0_265 = arith.constant 0 : index
    %c32_266 = arith.constant 32 : index
    %243 = vector.load %arg32[%c0_265, %c32_266] : memref<8x113xf32, #tpu.memory_space<vmem>>, vector<8x49xf32>
    %244 = arith.truncf %243 : vector<8x49xf32> to vector<8x49xbf16>
    %c0_267 = arith.constant 0 : index
    %c0_268 = arith.constant 0 : index
    %245 = vector.load %arg22[%c0_267, %c0_268] : memref<49x100xbf16, #tpu.memory_space<vmem>>, vector<49x100xbf16>
    %cst_269 = arith.constant dense<0.000000e+00> : vector<8x100xf32>
    %246 = tpu.matmul %244, %245, %cst_269 {dimension_numbers = #tpu.dot_dimension_numbers<[1], [0], [0], [1], [0, 0, 1, 1], [], []>} : vector<8x49xbf16>, vector<49x100xbf16>, vector<8x100xf32> -> vector<8x100xf32>
    %c0_270 = arith.constant 0 : index
    %c32_271 = arith.constant 32 : index
    %247 = vector.load %arg33[%c0_270, %c32_271] : memref<8x164xf32, #tpu.memory_space<vmem>>, vector<8x100xf32>
    tpu.vector_store %arg33[%c0_270, %c32_271], %246 {strides = array<i32>} : memref<8x164xf32, #tpu.memory_space<vmem>>, vector<8x100xf32>,
    %c0_272 = arith.constant 0 : index
    %c21_273 = arith.constant 21 : index
    %248 = vector.load %arg33[%c0_272, %c21_273] : memref<8x164xf32, #tpu.memory_space<vmem>>, vector<8x100xf32>
    %249 = arith.truncf %248 : vector<8x100xf32> to vector<8x100xbf16>
    %c0_274 = arith.constant 0 : index
    %c0_275 = arith.constant 0 : index
    %250 = vector.load %arg38[%c0_274, %c0_275] : memref<144x900xbf16, #tpu.memory_space<vmem>>, vector<8x100xbf16>
    tpu.vector_store %arg38[%c0_274, %c0_275], %249 {strides = array<i32>} : memref<144x900xbf16, #tpu.memory_space<vmem>>, vector<8x100xbf16>,
    %c0_276 = arith.constant 0 : index
    %c22_277 = arith.constant 22 : index
    %251 = vector.load %arg33[%c0_276, %c22_277] : memref<8x164xf32, #tpu.memory_space<vmem>>, vector<8x100xf32>
    %252 = arith.truncf %251 : vector<8x100xf32> to vector<8x100xbf16>
    %c8_278 = arith.constant 8 : index
    %c0_279 = arith.constant 0 : index
    %253 = vector.load %arg38[%c8_278, %c0_279] : memref<144x900xbf16, #tpu.memory_space<vmem>>, vector<8x100xbf16>
    tpu.vector_store %arg38[%c8_278, %c0_279], %252 {strides = array<i32>} : memref<144x900xbf16, #tpu.memory_space<vmem>>, vector<8x100xbf16>,
    %c0_280 = arith.constant 0 : index
    %c23_281 = arith.constant 23 : index
    %254 = vector.load %arg33[%c0_280, %c23_281] : memref<8x164xf32, #tpu.memory_space<vmem>>, vector<8x100xf32>
    %255 = arith.truncf %254 : vector<8x100xf32> to vector<8x100xbf16>
    %c16_282 = arith.constant 16 : index
    %c0_283 = arith.constant 0 : index
    %256 = vector.load %arg38[%c16_282, %c0_283] : memref<144x900xbf16, #tpu.memory_space<vmem>>, vector<8x100xbf16>
    tpu.vector_store %arg38[%c16_282, %c0_283], %255 {strides = array<i32>} : memref<144x900xbf16, #tpu.memory_space<vmem>>, vector<8x100xbf16>,
    %c0_284 = arith.constant 0 : index
    %c31_285 = arith.constant 31 : index
    %257 = vector.load %arg33[%c0_284, %c31_285] : memref<8x164xf32, #tpu.memory_space<vmem>>, vector<8x100xf32>
    %258 = arith.truncf %257 : vector<8x100xf32> to vector<8x100xbf16>
    %c24_286 = arith.constant 24 : index
    %c0_287 = arith.constant 0 : index
    %259 = vector.load %arg38[%c24_286, %c0_287] : memref<144x900xbf16, #tpu.memory_space<vmem>>, vector<8x100xbf16>
    tpu.vector_store %arg38[%c24_286, %c0_287], %258 {strides = array<i32>} : memref<144x900xbf16, #tpu.memory_space<vmem>>, vector<8x100xbf16>,
    %c0_288 = arith.constant 0 : index
    %c32_289 = arith.constant 32 : index
    %260 = vector.load %arg33[%c0_288, %c32_289] : memref<8x164xf32, #tpu.memory_space<vmem>>, vector<8x100xf32>
    %261 = arith.truncf %260 : vector<8x100xf32> to vector<8x100xbf16>
    %c32_290 = arith.constant 32 : index
    %c0_291 = arith.constant 0 : index
    %262 = vector.load %arg38[%c32_290, %c0_291] : memref<144x900xbf16, #tpu.memory_space<vmem>>, vector<8x100xbf16>
    tpu.vector_store %arg38[%c32_290, %c0_291], %261 {strides = array<i32>} : memref<144x900xbf16, #tpu.memory_space<vmem>>, vector<8x100xbf16>,
    %c0_292 = arith.constant 0 : index
    %c33_293 = arith.constant 33 : index
    %263 = vector.load %arg33[%c0_292, %c33_293] : memref<8x164xf32, #tpu.memory_space<vmem>>, vector<8x100xf32>
    %264 = arith.truncf %263 : vector<8x100xf32> to vector<8x100xbf16>
    %c40_294 = arith.constant 40 : index
    %c0_295 = arith.constant 0 : index
    %265 = vector.load %arg38[%c40_294, %c0_295] : memref<144x900xbf16, #tpu.memory_space<vmem>>, vector<8x100xbf16>
    tpu.vector_store %arg38[%c40_294, %c0_295], %264 {strides = array<i32>} : memref<144x900xbf16, #tpu.memory_space<vmem>>, vector<8x100xbf16>,
    %c0_296 = arith.constant 0 : index
    %c41_297 = arith.constant 41 : index
    %266 = vector.load %arg33[%c0_296, %c41_297] : memref<8x164xf32, #tpu.memory_space<vmem>>, vector<8x100xf32>
    %267 = arith.truncf %266 : vector<8x100xf32> to vector<8x100xbf16>
    %c48_298 = arith.constant 48 : index
    %c0_299 = arith.constant 0 : index
    %268 = vector.load %arg38[%c48_298, %c0_299] : memref<144x900xbf16, #tpu.memory_space<vmem>>, vector<8x100xbf16>
    tpu.vector_store %arg38[%c48_298, %c0_299], %267 {strides = array<i32>} : memref<144x900xbf16, #tpu.memory_space<vmem>>, vector<8x100xbf16>,
    %c0_300 = arith.constant 0 : index
    %c42_301 = arith.constant 42 : index
    %269 = vector.load %arg33[%c0_300, %c42_301] : memref<8x164xf32, #tpu.memory_space<vmem>>, vector<8x100xf32>
    %270 = arith.truncf %269 : vector<8x100xf32> to vector<8x100xbf16>
    %c56_302 = arith.constant 56 : index
    %c0_303 = arith.constant 0 : index
    %271 = vector.load %arg38[%c56_302, %c0_303] : memref<144x900xbf16, #tpu.memory_space<vmem>>, vector<8x100xbf16>
    tpu.vector_store %arg38[%c56_302, %c0_303], %270 {strides = array<i32>} : memref<144x900xbf16, #tpu.memory_space<vmem>>, vector<8x100xbf16>,
    %c0_304 = arith.constant 0 : index
    %c43_305 = arith.constant 43 : index
    %272 = vector.load %arg33[%c0_304, %c43_305] : memref<8x164xf32, #tpu.memory_space<vmem>>, vector<8x100xf32>
    %273 = arith.truncf %272 : vector<8x100xf32> to vector<8x100xbf16>
    %c64_306 = arith.constant 64 : index
    %c0_307 = arith.constant 0 : index
    %274 = vector.load %arg38[%c64_306, %c0_307] : memref<144x900xbf16, #tpu.memory_space<vmem>>, vector<8x100xbf16>
    tpu.vector_store %arg38[%c64_306, %c0_307], %273 {strides = array<i32>} : memref<144x900xbf16, #tpu.memory_space<vmem>>, vector<8x100xbf16>,
    %c0_308 = arith.constant 0 : index
    %c0_309 = arith.constant 0 : index
    %275 = vector.load %arg6[%c0_308, %c0_309] : memref<8x72xbf16, #tpu.memory_space<vmem>>, vector<8x72xbf16>
    %c0_310 = arith.constant 0 : index
    %c0_311 = arith.constant 0 : index
    %276 = vector.load %arg38[%c0_310, %c0_311] : memref<144x900xbf16, #tpu.memory_space<vmem>>, vector<72x100xbf16>
    %cst_312 = arith.constant dense<0.000000e+00> : vector<8x100xf32>
    %277 = tpu.matmul %275, %276, %cst_312 {dimension_numbers = #tpu.dot_dimension_numbers<[1], [0], [0], [1], [0, 0, 1, 1], [], []>} : vector<8x72xbf16>, vector<72x100xbf16>, vector<8x100xf32> -> vector<8x100xf32>
    %c0_313 = arith.constant 0 : index
    %c0_314 = arith.constant 0 : index
    %278 = vector.load %arg13[%c0_313, %c0_314] : memref<8x1xf32, #tpu.memory_space<vmem>>, vector<8x1xf32>
    %279 = vector.broadcast %278 : vector<8x1xf32> to vector<8x100xf32>
    %280 = arith.addf %277, %279 : vector<8x100xf32>
    %cst_315 = arith.constant 0.000000e+00 : f32
    %281 = vector.broadcast %cst_315 : f32 to vector<8x100xf32>
    %282 = arith.maximumf %280, %281 : vector<8x100xf32>
    %c0_316 = arith.constant 0 : index
    %c32_317 = arith.constant 32 : index
    %283 = vector.load %arg34[%c0_316, %c32_317] : memref<8x164xf32, #tpu.memory_space<vmem>>, vector<8x100xf32>
    tpu.vector_store %arg34[%c0_316, %c32_317], %282 {strides = array<i32>} : memref<8x164xf32, #tpu.memory_space<vmem>>, vector<8x100xf32>,
    %c0_318 = arith.constant 0 : index
    %c32_319 = arith.constant 32 : index
    %284 = vector.load %arg34[%c0_318, %c32_319] : memref<8x164xf32, #tpu.memory_space<vmem>>, vector<8x100xf32>
    %285 = arith.truncf %284 : vector<8x100xf32> to vector<8x100xbf16>
    %c0_320 = arith.constant 0 : index
    %c0_321 = arith.constant 0 : index
    %286 = vector.load %arg23[%c0_320, %c0_321] : memref<100x324xbf16, #tpu.memory_space<vmem>>, vector<100x324xbf16>
    %cst_322 = arith.constant dense<0.000000e+00> : vector<8x324xf32>
    %287 = tpu.matmul %285, %286, %cst_322 {dimension_numbers = #tpu.dot_dimension_numbers<[1], [0], [0], [1], [0, 0, 1, 1], [], []>} : vector<8x100xbf16>, vector<100x324xbf16>, vector<8x324xf32> -> vector<8x324xf32>
    %c0_323 = arith.constant 0 : index
    %c32_324 = arith.constant 32 : index
    %288 = vector.load %arg35[%c0_323, %c32_324] : memref<8x388xf32, #tpu.memory_space<vmem>>, vector<8x324xf32>
    tpu.vector_store %arg35[%c0_323, %c32_324], %287 {strides = array<i32>} : memref<8x388xf32, #tpu.memory_space<vmem>>, vector<8x324xf32>,
    %c0_325 = arith.constant 0 : index
    %c13 = arith.constant 13 : index
    %289 = vector.load %arg35[%c0_325, %c13] : memref<8x388xf32, #tpu.memory_space<vmem>>, vector<8x324xf32>
    %290 = arith.truncf %289 : vector<8x324xf32> to vector<8x324xbf16>
    %c0_326 = arith.constant 0 : index
    %c0_327 = arith.constant 0 : index
    %291 = vector.load %arg38[%c0_326, %c0_327] : memref<144x900xbf16, #tpu.memory_space<vmem>>, vector<8x324xbf16>
    tpu.vector_store %arg38[%c0_326, %c0_327], %290 {strides = array<i32>} : memref<144x900xbf16, #tpu.memory_space<vmem>>, vector<8x324xbf16>,
    %c0_328 = arith.constant 0 : index
    %c14_329 = arith.constant 14 : index
    %292 = vector.load %arg35[%c0_328, %c14_329] : memref<8x388xf32, #tpu.memory_space<vmem>>, vector<8x324xf32>
    %293 = arith.truncf %292 : vector<8x324xf32> to vector<8x324xbf16>
    %c8_330 = arith.constant 8 : index
    %c0_331 = arith.constant 0 : index
    %294 = vector.load %arg38[%c8_330, %c0_331] : memref<144x900xbf16, #tpu.memory_space<vmem>>, vector<8x324xbf16>
    tpu.vector_store %arg38[%c8_330, %c0_331], %293 {strides = array<i32>} : memref<144x900xbf16, #tpu.memory_space<vmem>>, vector<8x324xbf16>,
    %c0_332 = arith.constant 0 : index
    %c15_333 = arith.constant 15 : index
    %295 = vector.load %arg35[%c0_332, %c15_333] : memref<8x388xf32, #tpu.memory_space<vmem>>, vector<8x324xf32>
    %296 = arith.truncf %295 : vector<8x324xf32> to vector<8x324xbf16>
    %c16_334 = arith.constant 16 : index
    %c0_335 = arith.constant 0 : index
    %297 = vector.load %arg38[%c16_334, %c0_335] : memref<144x900xbf16, #tpu.memory_space<vmem>>, vector<8x324xbf16>
    tpu.vector_store %arg38[%c16_334, %c0_335], %296 {strides = array<i32>} : memref<144x900xbf16, #tpu.memory_space<vmem>>, vector<8x324xbf16>,
    %c0_336 = arith.constant 0 : index
    %c31_337 = arith.constant 31 : index
    %298 = vector.load %arg35[%c0_336, %c31_337] : memref<8x388xf32, #tpu.memory_space<vmem>>, vector<8x324xf32>
    %299 = arith.truncf %298 : vector<8x324xf32> to vector<8x324xbf16>
    %c24_338 = arith.constant 24 : index
    %c0_339 = arith.constant 0 : index
    %300 = vector.load %arg38[%c24_338, %c0_339] : memref<144x900xbf16, #tpu.memory_space<vmem>>, vector<8x324xbf16>
    tpu.vector_store %arg38[%c24_338, %c0_339], %299 {strides = array<i32>} : memref<144x900xbf16, #tpu.memory_space<vmem>>, vector<8x324xbf16>,
    %c0_340 = arith.constant 0 : index
    %c32_341 = arith.constant 32 : index
    %301 = vector.load %arg35[%c0_340, %c32_341] : memref<8x388xf32, #tpu.memory_space<vmem>>, vector<8x324xf32>
    %302 = arith.truncf %301 : vector<8x324xf32> to vector<8x324xbf16>
    %c32_342 = arith.constant 32 : index
    %c0_343 = arith.constant 0 : index
    %303 = vector.load %arg38[%c32_342, %c0_343] : memref<144x900xbf16, #tpu.memory_space<vmem>>, vector<8x324xbf16>
    tpu.vector_store %arg38[%c32_342, %c0_343], %302 {strides = array<i32>} : memref<144x900xbf16, #tpu.memory_space<vmem>>, vector<8x324xbf16>,
    %c0_344 = arith.constant 0 : index
    %c33_345 = arith.constant 33 : index
    %304 = vector.load %arg35[%c0_344, %c33_345] : memref<8x388xf32, #tpu.memory_space<vmem>>, vector<8x324xf32>
    %305 = arith.truncf %304 : vector<8x324xf32> to vector<8x324xbf16>
    %c40_346 = arith.constant 40 : index
    %c0_347 = arith.constant 0 : index
    %306 = vector.load %arg38[%c40_346, %c0_347] : memref<144x900xbf16, #tpu.memory_space<vmem>>, vector<8x324xbf16>
    tpu.vector_store %arg38[%c40_346, %c0_347], %305 {strides = array<i32>} : memref<144x900xbf16, #tpu.memory_space<vmem>>, vector<8x324xbf16>,
    %c0_348 = arith.constant 0 : index
    %c49_349 = arith.constant 49 : index
    %307 = vector.load %arg35[%c0_348, %c49_349] : memref<8x388xf32, #tpu.memory_space<vmem>>, vector<8x324xf32>
    %308 = arith.truncf %307 : vector<8x324xf32> to vector<8x324xbf16>
    %c48_350 = arith.constant 48 : index
    %c0_351 = arith.constant 0 : index
    %309 = vector.load %arg38[%c48_350, %c0_351] : memref<144x900xbf16, #tpu.memory_space<vmem>>, vector<8x324xbf16>
    tpu.vector_store %arg38[%c48_350, %c0_351], %308 {strides = array<i32>} : memref<144x900xbf16, #tpu.memory_space<vmem>>, vector<8x324xbf16>,
    %c0_352 = arith.constant 0 : index
    %c50_353 = arith.constant 50 : index
    %310 = vector.load %arg35[%c0_352, %c50_353] : memref<8x388xf32, #tpu.memory_space<vmem>>, vector<8x324xf32>
    %311 = arith.truncf %310 : vector<8x324xf32> to vector<8x324xbf16>
    %c56_354 = arith.constant 56 : index
    %c0_355 = arith.constant 0 : index
    %312 = vector.load %arg38[%c56_354, %c0_355] : memref<144x900xbf16, #tpu.memory_space<vmem>>, vector<8x324xbf16>
    tpu.vector_store %arg38[%c56_354, %c0_355], %311 {strides = array<i32>} : memref<144x900xbf16, #tpu.memory_space<vmem>>, vector<8x324xbf16>,
    %c0_356 = arith.constant 0 : index
    %c51 = arith.constant 51 : index
    %313 = vector.load %arg35[%c0_356, %c51] : memref<8x388xf32, #tpu.memory_space<vmem>>, vector<8x324xf32>
    %314 = arith.truncf %313 : vector<8x324xf32> to vector<8x324xbf16>
    %c64_357 = arith.constant 64 : index
    %c0_358 = arith.constant 0 : index
    %315 = vector.load %arg38[%c64_357, %c0_358] : memref<144x900xbf16, #tpu.memory_space<vmem>>, vector<8x324xbf16>
    tpu.vector_store %arg38[%c64_357, %c0_358], %314 {strides = array<i32>} : memref<144x900xbf16, #tpu.memory_space<vmem>>, vector<8x324xbf16>,
    %c0_359 = arith.constant 0 : index
    %c0_360 = arith.constant 0 : index
    %316 = vector.load %arg7[%c0_359, %c0_360] : memref<16x72xbf16, #tpu.memory_space<vmem>>, vector<16x72xbf16>
    %c0_361 = arith.constant 0 : index
    %c0_362 = arith.constant 0 : index
    %317 = vector.load %arg38[%c0_361, %c0_362] : memref<144x900xbf16, #tpu.memory_space<vmem>>, vector<72x324xbf16>
    %cst_363 = arith.constant dense<0.000000e+00> : vector<16x324xf32>
    %318 = tpu.matmul %316, %317, %cst_363 {dimension_numbers = #tpu.dot_dimension_numbers<[1], [0], [0], [1], [0, 0, 1, 1], [], []>} : vector<16x72xbf16>, vector<72x324xbf16>, vector<16x324xf32> -> vector<16x324xf32>
    %c0_364 = arith.constant 0 : index
    %c0_365 = arith.constant 0 : index
    %319 = vector.load %arg14[%c0_364, %c0_365] : memref<16x1xf32, #tpu.memory_space<vmem>>, vector<16x1xf32>
    %320 = vector.broadcast %319 : vector<16x1xf32> to vector<16x324xf32>
    %321 = arith.addf %318, %320 : vector<16x324xf32>
    %cst_366 = arith.constant 0.000000e+00 : f32
    %322 = vector.broadcast %cst_366 : f32 to vector<16x324xf32>
    %323 = arith.maximumf %321, %322 : vector<16x324xf32>
    %c0_367 = arith.constant 0 : index
    %c32_368 = arith.constant 32 : index
    %324 = vector.load %arg36[%c0_367, %c32_368] : memref<16x388xf32, #tpu.memory_space<vmem>>, vector<16x324xf32>
    tpu.vector_store %arg36[%c0_367, %c32_368], %323 {strides = array<i32>} : memref<16x388xf32, #tpu.memory_space<vmem>>, vector<16x324xf32>,
    %c0_369 = arith.constant 0 : index
    %c32_370 = arith.constant 32 : index
    %325 = vector.load %arg36[%c0_369, %c32_370] : memref<16x388xf32, #tpu.memory_space<vmem>>, vector<16x324xf32>
    %326 = arith.truncf %325 : vector<16x324xf32> to vector<16x324xbf16>
    %c0_371 = arith.constant 0 : index
    %c0_372 = arith.constant 0 : index
    %327 = vector.load %arg24[%c0_371, %c0_372] : memref<324x900xbf16, #tpu.memory_space<vmem>>, vector<324x900xbf16>
    %cst_373 = arith.constant dense<0.000000e+00> : vector<16x900xf32>
    %328 = tpu.matmul %326, %327, %cst_373 {dimension_numbers = #tpu.dot_dimension_numbers<[1], [0], [0], [1], [0, 0, 1, 1], [], []>} : vector<16x324xbf16>, vector<324x900xbf16>, vector<16x900xf32> -> vector<16x900xf32>
    %c0_374 = arith.constant 0 : index
    %c32_375 = arith.constant 32 : index
    %329 = vector.load %arg37[%c0_374, %c32_375] : memref<16x964xf32, #tpu.memory_space<vmem>>, vector<16x900xf32>
    tpu.vector_store %arg37[%c0_374, %c32_375], %328 {strides = array<i32>} : memref<16x964xf32, #tpu.memory_space<vmem>>, vector<16x900xf32>,
    %c0_376 = arith.constant 0 : index
    %c1_377 = arith.constant 1 : index
    %330 = vector.load %arg37[%c0_376, %c1_377] : memref<16x964xf32, #tpu.memory_space<vmem>>, vector<16x900xf32>
    %331 = arith.truncf %330 : vector<16x900xf32> to vector<16x900xbf16>
    %c0_378 = arith.constant 0 : index
    %c0_379 = arith.constant 0 : index
    %332 = vector.load %arg38[%c0_378, %c0_379] : memref<144x900xbf16, #tpu.memory_space<vmem>>, vector<16x900xbf16>
    tpu.vector_store %arg38[%c0_378, %c0_379], %331 {strides = array<i32>} : memref<144x900xbf16, #tpu.memory_space<vmem>>, vector<16x900xbf16>,
    %c0_380 = arith.constant 0 : index
    %c2_381 = arith.constant 2 : index
    %333 = vector.load %arg37[%c0_380, %c2_381] : memref<16x964xf32, #tpu.memory_space<vmem>>, vector<16x900xf32>
    %334 = arith.truncf %333 : vector<16x900xf32> to vector<16x900xbf16>
    %c16_382 = arith.constant 16 : index
    %c0_383 = arith.constant 0 : index
    %335 = vector.load %arg38[%c16_382, %c0_383] : memref<144x900xbf16, #tpu.memory_space<vmem>>, vector<16x900xbf16>
    tpu.vector_store %arg38[%c16_382, %c0_383], %334 {strides = array<i32>} : memref<144x900xbf16, #tpu.memory_space<vmem>>, vector<16x900xbf16>,
    %c0_384 = arith.constant 0 : index
    %c3_385 = arith.constant 3 : index
    %336 = vector.load %arg37[%c0_384, %c3_385] : memref<16x964xf32, #tpu.memory_space<vmem>>, vector<16x900xf32>
    %337 = arith.truncf %336 : vector<16x900xf32> to vector<16x900xbf16>
    %c32_386 = arith.constant 32 : index
    %c0_387 = arith.constant 0 : index
    %338 = vector.load %arg38[%c32_386, %c0_387] : memref<144x900xbf16, #tpu.memory_space<vmem>>, vector<16x900xbf16>
    tpu.vector_store %arg38[%c32_386, %c0_387], %337 {strides = array<i32>} : memref<144x900xbf16, #tpu.memory_space<vmem>>, vector<16x900xbf16>,
    %c0_388 = arith.constant 0 : index
    %c31_389 = arith.constant 31 : index
    %339 = vector.load %arg37[%c0_388, %c31_389] : memref<16x964xf32, #tpu.memory_space<vmem>>, vector<16x900xf32>
    %340 = arith.truncf %339 : vector<16x900xf32> to vector<16x900xbf16>
    %c48_390 = arith.constant 48 : index
    %c0_391 = arith.constant 0 : index
    %341 = vector.load %arg38[%c48_390, %c0_391] : memref<144x900xbf16, #tpu.memory_space<vmem>>, vector<16x900xbf16>
    tpu.vector_store %arg38[%c48_390, %c0_391], %340 {strides = array<i32>} : memref<144x900xbf16, #tpu.memory_space<vmem>>, vector<16x900xbf16>,
    %c0_392 = arith.constant 0 : index
    %c32_393 = arith.constant 32 : index
    %342 = vector.load %arg37[%c0_392, %c32_393] : memref<16x964xf32, #tpu.memory_space<vmem>>, vector<16x900xf32>
    %343 = arith.truncf %342 : vector<16x900xf32> to vector<16x900xbf16>
    %c64_394 = arith.constant 64 : index
    %c0_395 = arith.constant 0 : index
    %344 = vector.load %arg38[%c64_394, %c0_395] : memref<144x900xbf16, #tpu.memory_space<vmem>>, vector<16x900xbf16>
    tpu.vector_store %arg38[%c64_394, %c0_395], %343 {strides = array<i32>} : memref<144x900xbf16, #tpu.memory_space<vmem>>, vector<16x900xbf16>,
    %c0_396 = arith.constant 0 : index
    %c33_397 = arith.constant 33 : index
    %345 = vector.load %arg37[%c0_396, %c33_397] : memref<16x964xf32, #tpu.memory_space<vmem>>, vector<16x900xf32>
    %346 = arith.truncf %345 : vector<16x900xf32> to vector<16x900xbf16>
    %c80_398 = arith.constant 80 : index
    %c0_399 = arith.constant 0 : index
    %347 = vector.load %arg38[%c80_398, %c0_399] : memref<144x900xbf16, #tpu.memory_space<vmem>>, vector<16x900xbf16>
    tpu.vector_store %arg38[%c80_398, %c0_399], %346 {strides = array<i32>} : memref<144x900xbf16, #tpu.memory_space<vmem>>, vector<16x900xbf16>,
    %c0_400 = arith.constant 0 : index
    %c61_401 = arith.constant 61 : index
    %348 = vector.load %arg37[%c0_400, %c61_401] : memref<16x964xf32, #tpu.memory_space<vmem>>, vector<16x900xf32>
    %349 = arith.truncf %348 : vector<16x900xf32> to vector<16x900xbf16>
    %c96_402 = arith.constant 96 : index
    %c0_403 = arith.constant 0 : index
    %350 = vector.load %arg38[%c96_402, %c0_403] : memref<144x900xbf16, #tpu.memory_space<vmem>>, vector<16x900xbf16>
    tpu.vector_store %arg38[%c96_402, %c0_403], %349 {strides = array<i32>} : memref<144x900xbf16, #tpu.memory_space<vmem>>, vector<16x900xbf16>,
    %c0_404 = arith.constant 0 : index
    %c62_405 = arith.constant 62 : index
    %351 = vector.load %arg37[%c0_404, %c62_405] : memref<16x964xf32, #tpu.memory_space<vmem>>, vector<16x900xf32>
    %352 = arith.truncf %351 : vector<16x900xf32> to vector<16x900xbf16>
    %c112_406 = arith.constant 112 : index
    %c0_407 = arith.constant 0 : index
    %353 = vector.load %arg38[%c112_406, %c0_407] : memref<144x900xbf16, #tpu.memory_space<vmem>>, vector<16x900xbf16>
    tpu.vector_store %arg38[%c112_406, %c0_407], %352 {strides = array<i32>} : memref<144x900xbf16, #tpu.memory_space<vmem>>, vector<16x900xbf16>,
    %c0_408 = arith.constant 0 : index
    %c63_409 = arith.constant 63 : index
    %354 = vector.load %arg37[%c0_408, %c63_409] : memref<16x964xf32, #tpu.memory_space<vmem>>, vector<16x900xf32>
    %355 = arith.truncf %354 : vector<16x900xf32> to vector<16x900xbf16>
    %c128_410 = arith.constant 128 : index
    %c0_411 = arith.constant 0 : index
    %356 = vector.load %arg38[%c128_410, %c0_411] : memref<144x900xbf16, #tpu.memory_space<vmem>>, vector<16x900xbf16>
    tpu.vector_store %arg38[%c128_410, %c0_411], %355 {strides = array<i32>} : memref<144x900xbf16, #tpu.memory_space<vmem>>, vector<16x900xbf16>,
    %c0_412 = arith.constant 0 : index
    %c0_413 = arith.constant 0 : index
    %357 = vector.load %arg8[%c0_412, %c0_413] : memref<1x144xbf16, #tpu.memory_space<vmem>>, vector<1x144xbf16>
    %c0_414 = arith.constant 0 : index
    %c0_415 = arith.constant 0 : index
    %358 = vector.load %arg38[%c0_414, %c0_415] : memref<144x900xbf16, #tpu.memory_space<vmem>>, vector<144x900xbf16>
    %cst_416 = arith.constant dense<0.000000e+00> : vector<1x900xf32>
    %359 = tpu.matmul %357, %358, %cst_416 {dimension_numbers = #tpu.dot_dimension_numbers<[1], [0], [0], [1], [0, 0, 1, 1], [], []>} : vector<1x144xbf16>, vector<144x900xbf16>, vector<1x900xf32> -> vector<1x900xf32>
    %c0_417 = arith.constant 0 : index
    %c0_418 = arith.constant 0 : index
    %360 = vector.load %arg15[%c0_417, %c0_418] : memref<1x1xf32, #tpu.memory_space<vmem>>, vector<1x1xf32>
    %361 = vector.broadcast %360 : vector<1x1xf32> to vector<1x900xf32>
    %362 = arith.addf %359, %361 : vector<1x900xf32>
    %cst_419 = arith.constant 0.000000e+00 : f32
    %363 = vector.broadcast %cst_419 : f32 to vector<1x900xf32>
    %364 = arith.subf %363, %362 : vector<1x900xf32>
    %365 = math.exp %364 : vector<1x900xf32>
    %cst_420 = arith.constant 1.000000e+00 : f32
    %366 = vector.broadcast %cst_420 : f32 to vector<1x900xf32>
    %367 = arith.addf %366, %365 : vector<1x900xf32>
    %cst_421 = arith.constant 1.000000e+00 : f32
    %368 = vector.broadcast %cst_421 : f32 to vector<1x900xf32>
    %369 = arith.divf %368, %367 : vector<1x900xf32>
    %c0_422 = arith.constant 0 : index
    %c0_423 = arith.constant 0 : index
    %c0_424 = arith.constant 0 : index
    %370 = vector.load %arg25[%c0_422, %c0_423, %c0_424] : memref<1x1x900xf32, #tpu.memory_space<vmem>>, vector<1x1x900xf32>
    %371 = vector.shape_cast %370 : vector<1x1x900xf32> to vector<1x900xf32>
    %372 = vector.shape_cast %369 : vector<1x900xf32> to vector<1x1x900xf32>
    tpu.vector_store %arg25[%c0_422, %c0_423, %c0_424], %372 {strides = array<i32>} : memref<1x1x900xf32, #tpu.memory_space<vmem>>, vector<1x1x900xf32>,
    return
  }
  func.func @transform_0(%arg0: i32) -> (i32, i32, i32) {
    %c0_i32 = arith.constant 0 : i32
    %c0_i32_0 = arith.constant 0 : i32
    %c0_i32_1 = arith.constant 0 : i32
    return %arg0, %c0_i32, %c0_i32_0 : i32, i32, i32
  }
  func.func @transform_1(%arg0: i32) -> (i32, i32) {
    %c0_i32 = arith.constant 0 : i32
    %c0_i32_0 = arith.constant 0 : i32
    %c0_i32_1 = arith.constant 0 : i32
    return %c0_i32, %c0_i32_0 : i32, i32
  }
  func.func @transform_2(%arg0: i32) -> (i32, i32) {
    %c0_i32 = arith.constant 0 : i32
    %c0_i32_0 = arith.constant 0 : i32
    %c0_i32_1 = arith.constant 0 : i32
    return %c0_i32, %c0_i32_0 : i32, i32
  }
  func.func @transform_3(%arg0: i32) -> (i32, i32) {
    %c0_i32 = arith.constant 0 : i32
    %c0_i32_0 = arith.constant 0 : i32
    %c0_i32_1 = arith.constant 0 : i32
    return %c0_i32, %c0_i32_0 : i32, i32
  }
  func.func @transform_4(%arg0: i32) -> (i32, i32) {
    %c0_i32 = arith.constant 0 : i32
    %c0_i32_0 = arith.constant 0 : i32
    %c0_i32_1 = arith.constant 0 : i32
    return %c0_i32, %c0_i32_0 : i32, i32
  }
  func.func @transform_5(%arg0: i32) -> (i32, i32) {
    %c0_i32 = arith.constant 0 : i32
    %c0_i32_0 = arith.constant 0 : i32
    %c0_i32_1 = arith.constant 0 : i32
    return %c0_i32, %c0_i32_0 : i32, i32
  }
  func.func @transform_6(%arg0: i32) -> (i32, i32) {
    %c0_i32 = arith.constant 0 : i32
    %c0_i32_0 = arith.constant 0 : i32
    %c0_i32_1 = arith.constant 0 : i32
    return %c0_i32, %c0_i32_0 : i32, i32
  }
  func.func @transform_7(%arg0: i32) -> (i32, i32) {
    %c0_i32 = arith.constant 0 : i32
    %c0_i32_0 = arith.constant 0 : i32
    %c0_i32_1 = arith.constant 0 : i32
    return %c0_i32, %c0_i32_0 : i32, i32
  }
  func.func @transform_8(%arg0: i32) -> (i32, i32) {
    %c0_i32 = arith.constant 0 : i32
    %c0_i32_0 = arith.constant 0 : i32
    %c0_i32_1 = arith.constant 0 : i32
    return %c0_i32, %c0_i32_0 : i32, i32
  }
  func.func @transform_9(%arg0: i32) -> (i32, i32) {
    %c0_i32 = arith.constant 0 : i32
    %c0_i32_0 = arith.constant 0 : i32
    %c0_i32_1 = arith.constant 0 : i32
    return %c0_i32, %c0_i32_0 : i32, i32
  }
  func.func @transform_10(%arg0: i32) -> (i32, i32) {
    %c0_i32 = arith.constant 0 : i32
    %c0_i32_0 = arith.constant 0 : i32
    %c0_i32_1 = arith.constant 0 : i32
    return %c0_i32, %c0_i32_0 : i32, i32
  }
  func.func @transform_11(%arg0: i32) -> (i32, i32) {
    %c0_i32 = arith.constant 0 : i32
    %c0_i32_0 = arith.constant 0 : i32
    %c0_i32_1 = arith.constant 0 : i32
    return %c0_i32, %c0_i32_0 : i32, i32
  }
  func.func @transform_12(%arg0: i32) -> (i32, i32) {
    %c0_i32 = arith.constant 0 : i32
    %c0_i32_0 = arith.constant 0 : i32
    %c0_i32_1 = arith.constant 0 : i32
    return %c0_i32, %c0_i32_0 : i32, i32
  }
  func.func @transform_13(%arg0: i32) -> (i32, i32) {
    %c0_i32 = arith.constant 0 : i32
    %c0_i32_0 = arith.constant 0 : i32
    %c0_i32_1 = arith.constant 0 : i32
    return %c0_i32, %c0_i32_0 : i32, i32
  }
  func.func @transform_14(%arg0: i32) -> (i32, i32) {
    %c0_i32 = arith.constant 0 : i32
    %c0_i32_0 = arith.constant 0 : i32
    %c0_i32_1 = arith.constant 0 : i32
    return %c0_i32, %c0_i32_0 : i32, i32
  }
  func.func @transform_15(%arg0: i32) -> (i32, i32) {
    %c0_i32 = arith.constant 0 : i32
    %c0_i32_0 = arith.constant 0 : i32
    %c0_i32_1 = arith.constant 0 : i32
    return %c0_i32, %c0_i32_0 : i32, i32
  }
  func.func @transform_16(%arg0: i32) -> (i32, i32) {
    %c0_i32 = arith.constant 0 : i32
    %c0_i32_0 = arith.constant 0 : i32
    %c0_i32_1 = arith.constant 0 : i32
    return %c0_i32, %c0_i32_0 : i32, i32
  }
  func.func @transform_17(%arg0: i32) -> (i32, i32) {
    %c0_i32 = arith.constant 0 : i32
    %c0_i32_0 = arith.constant 0 : i32
    %c0_i32_1 = arith.constant 0 : i32
    return %c0_i32, %c0_i32_0 : i32, i32
  }
  func.func @transform_18(%arg0: i32) -> (i32, i32) {
    %c0_i32 = arith.constant 0 : i32
    %c0_i32_0 = arith.constant 0 : i32
    %c0_i32_1 = arith.constant 0 : i32
    return %c0_i32, %c0_i32_0 : i32, i32
  }
  func.func @transform_19(%arg0: i32) -> (i32, i32) {
    %c0_i32 = arith.constant 0 : i32
    %c0_i32_0 = arith.constant 0 : i32
    %c0_i32_1 = arith.constant 0 : i32
    return %c0_i32, %c0_i32_0 : i32, i32
  }
  func.func @transform_20(%arg0: i32) -> (i32, i32) {
    %c0_i32 = arith.constant 0 : i32
    %c0_i32_0 = arith.constant 0 : i32
    %c0_i32_1 = arith.constant 0 : i32
    return %c0_i32, %c0_i32_0 : i32, i32
  }
  func.func @transform_21(%arg0: i32) -> (i32, i32) {
    %c0_i32 = arith.constant 0 : i32
    %c0_i32_0 = arith.constant 0 : i32
    %c0_i32_1 = arith.constant 0 : i32
    return %c0_i32, %c0_i32_0 : i32, i32
  }
  func.func @transform_22(%arg0: i32) -> (i32, i32) {
    %c0_i32 = arith.constant 0 : i32
    %c0_i32_0 = arith.constant 0 : i32
    %c0_i32_1 = arith.constant 0 : i32
    return %c0_i32, %c0_i32_0 : i32, i32
  }
  func.func @transform_23(%arg0: i32) -> (i32, i32) {
    %c0_i32 = arith.constant 0 : i32
    %c0_i32_0 = arith.constant 0 : i32
    %c0_i32_1 = arith.constant 0 : i32
    return %c0_i32, %c0_i32_0 : i32, i32
  }
  func.func @transform_24(%arg0: i32) -> (i32, i32, i32) {
    %c0_i32 = arith.constant 0 : i32
    %c0_i32_0 = arith.constant 0 : i32
    %c0_i32_1 = arith.constant 0 : i32
    return %arg0, %c0_i32, %c0_i32_0 : i32, i32, i32
  }
}

</mosaic_0001>

<llo_original>
// kernel: autoencoder_forward.1
$region0: #{autoencoder_forward.1}
  #allocation0 [shape = 'u32[]', space=smem, size = 0x4, offset = 0x4, fixed_abs, tag = 'smem constant byte address 0x4 - core index']
  #allocation1 [shape = 'u32[144,128]{1,0:T(1,128)}', space=vmem, size = 0x12000, scoped, tag = 'internal scratch']
  #allocation2 [shape = 'f32[16,964]{1,0:T(8,128)}', space=vmem, size = 0x10000, scoped, tag = 'scratch operand']
  #allocation3 [shape = 'f32[16,353]{1,0:T(8,128)}', space=vmem, size = 0x6000, scoped, tag = 'scratch operand']
  #allocation4 [shape = 'f32[8,353]{1,0:T(8,128)}', space=vmem, size = 0x3000, scoped, tag = 'scratch operand']
  #allocation5 [shape = 'f32[8,164]{1,0:T(8,128)}', space=vmem, size = 0x2000, scoped, tag = 'scratch operand']
  #allocation6 [shape = 'f32[8,164]{1,0:T(8,128)}', space=vmem, size = 0x2000, scoped, tag = 'scratch operand']
  #allocation7 [shape = 'f32[8,113]{1,0:T(8,128)}', space=vmem, size = 0x1000, scoped, tag = 'scratch operand']
  #allocation8 [shape = 'f32[8,113]{1,0:T(8,128)}', space=vmem, size = 0x1000, scoped, tag = 'scratch operand']
  #allocation9 [shape = 'f32[8,164]{1,0:T(8,128)}', space=vmem, size = 0x2000, scoped, tag = 'scratch operand']
  #allocation10 [shape = 'f32[8,164]{1,0:T(8,128)}', space=vmem, size = 0x2000, scoped, tag = 'scratch operand']
  #allocation11 [shape = 'f32[8,388]{1,0:T(8,128)}', space=vmem, size = 0x4000, scoped, tag = 'scratch operand']
  #allocation12 [shape = 'f32[16,388]{1,0:T(8,128)}', space=vmem, size = 0x8000, scoped, tag = 'scratch operand']
  #allocation13 [shape = 'f32[16,964]{1,0:T(8,128)}', space=vmem, size = 0x10000, scoped, tag = 'scratch operand']
  #allocation14 [shape = 'bf16[144,900]{1,0:T(16,128)(2,1)}', space=vmem, size = 0x48000, scoped, tag = 'scratch operand']
  #allocation15 [shape = 'f32[1,1]{1,0:T(1,128)S(1)}', space=vmem, size = 0x200, scoped, tag = 'scoped memory for autoencoder_forward.1']
  %s0 = inlined_call_operand.vmem [shape: f32[2,1,964], index: 0, kind: input, shape index: {}]
  %s1 = inlined_call_operand.vmem [shape: bf16[16,9], index: 1, kind: input, shape index: {}]
  %s2 = inlined_call_operand.vmem [shape: bf16[8,144], index: 2, kind: input, shape index: {}]
  %s3 = inlined_call_operand.vmem [shape: bf16[8,72], index: 3, kind: input, shape index: {}]
  %s4 = inlined_call_operand.vmem [shape: bf16[8,72], index: 4, kind: input, shape index: {}]
  %s5 = inlined_call_operand.vmem [shape: bf16[8,72], index: 5, kind: input, shape index: {}]
  %s6 = inlined_call_operand.vmem [shape: bf16[16,72], index: 6, kind: input, shape index: {}]
  %s7 = inlined_call_operand.vmem [shape: bf16[1,144], index: 7, kind: input, shape index: {}]
  %s8 = inlined_call_operand.vmem [shape: f32[16,1], index: 8, kind: input, shape index: {}]
  %s9 = inlined_call_operand.vmem [shape: f32[8,1], index: 9, kind: input, shape index: {}]
  %s10 = inlined_call_operand.vmem [shape: f32[8,1], index: 10, kind: input, shape index: {}]
  %s11 = inlined_call_operand.vmem [shape: f32[8,1], index: 11, kind: input, shape index: {}]
  %s12 = inlined_call_operand.vmem [shape: f32[8,1], index: 12, kind: input, shape index: {}]
  %s13 = inlined_call_operand.vmem [shape: f32[16,1], index: 13, kind: input, shape index: {}]
  %s14 = inlined_call_operand.<no memory space> [shape: f32[1,1], index: 14, kind: input, shape index: {}]
  %s15 = inlined_call_operand.vmem [shape: f32[1,900], index: 15, kind: input, shape index: {}]
  %s16 = inlined_call_operand.vmem [shape: f32[1,289], index: 16, kind: input, shape index: {}]
  %s17 = inlined_call_operand.vmem [shape: f32[1,100], index: 17, kind: input, shape index: {}]
  %s18 = inlined_call_operand.hbm [shape: bf16[900,289], index: 18, kind: input, shape index: {}]
  %s19 = inlined_call_operand.vmem [shape: bf16[289,100], index: 19, kind: input, shape index: {}]
  %s20 = inlined_call_operand.vmem [shape: bf16[100,49], index: 20, kind: input, shape index: {}]
  %s21 = inlined_call_operand.vmem [shape: bf16[49,100], index: 21, kind: input, shape index: {}]
  %s22 = inlined_call_operand.vmem [shape: bf16[100,324], index: 22, kind: input, shape index: {}]
  %s23 = inlined_call_operand.hbm [shape: bf16[324,900], index: 23, kind: input, shape index: {}]
  %s24 = inlined_call_operand.vmem [shape: f32[2,1,900], index: 24, kind: output, shape index: {}]
  %s25 = sld [smem:[#allocation0]]
  $region137: #{autoencoder_forward.1} parent=0
    _
  %s27 = ssub.s32 1, %s25
  %s28 = scalar_select 0, %s27, %s25
  %v29 = vstv %s14
  %30 = vst [vmem:[#allocation15] sm:$0x1] %v29
  $region1: #{autoencoder_forward.1} parent=0
    #allocation16 [shape = 'u8[694272]{0}', space=vmem, size = 0xa9800, scoped, tag = 'input window, operand 18, single buffered']
    #allocation17 [shape = 's32[2]{0}', space=sflag, size = 0x8, scoped, tag = 'scoped memory for autoencoder_forward.1']
    #allocation18 [shape = 'u8[671744]{0}', space=vmem, size = 0xa4000, scoped, tag = 'input window, operand 23, single buffered']
    #allocation19 [shape = 's32[1]{0}', space=sflag, size = 0x4, scoped, tag = 'scoped memory for autoencoder_forward.1']
    %31 = vsyncpa [#allocation17], 0
    %32 = vsyncpa [#allocation19], 0
    loop: start=0, step=1, limit=4
    $region2: #{autoencoder_forward.1} parent=1 // loop_pre_header
      _
    $region3: #{autoencoder_forward.1} parent=1 // loop_header
      %s34 = sphi 0, %s38
      %p35 = scmp.ge.s32.totalorder %s34, 4
      %s44 = sphi 0, %s46
      %s47 = sphi 0, %s44
      %s48 = sphi 0, %s47
      %s64 = sphi 0, %s48
      %s68 = sphi 0, %s68
      %s70 = sphi 0, %s68
      %s71 = sphi 0, %s70
      %s85 = sphi 0, %s71
      %s89 = sphi 0, %s89
      %s91 = sphi 0, %s89
      %s92 = sphi 0, %s91
      %s106 = sphi 0, %s92
      %s110 = sphi 0, %s110
      %s112 = sphi 0, %s110
      %s113 = sphi 0, %s112
      %s127 = sphi 0, %s113
      %s131 = sphi 0, %s131
      %s133 = sphi 0, %s131
      %s134 = sphi 0, %s133
      %s148 = sphi 0, %s134
      %s152 = sphi 0, %s152
      %s154 = sphi 0, %s152
      %s155 = sphi 0, %s154
      %s169 = sphi 0, %s155
      %s173 = sphi 0, %s173
      %s175 = sphi 0, %s173
      %s176 = sphi 0, %s175
      %s190 = sphi 0, %s176
      %s194 = sphi 0, %s194
      %s196 = sphi 0, %s194
      %s197 = sphi 0, %s196
      %s211 = sphi 0, %s197
      %s215 = sphi 0, %s215
      %s217 = sphi 0, %s215
      %s218 = sphi 0, %s217
      %s232 = sphi 0, %s218
      %s236 = sphi 0, %s236
      %s238 = sphi 0, %s236
      %s239 = sphi 0, %s238
      %s253 = sphi 0, %s239
      %s257 = sphi 0, %s257
      %s259 = sphi 0, %s257
      %s260 = sphi 0, %s259
      %s274 = sphi 0, %s260
      %s278 = sphi 0, %s278
      %s280 = sphi 0, %s278
      %s281 = sphi 0, %s280
      %s295 = sphi 0, %s281
      %s299 = sphi 0, %s299
      %s301 = sphi 0, %s299
      %s302 = sphi 0, %s301
      %s316 = sphi 0, %s302
      %s320 = sphi 0, %s320
      %s322 = sphi 0, %s320
      %s323 = sphi 0, %s322
      %s337 = sphi 0, %s323
      %s341 = sphi 0, %s341
      %s343 = sphi 0, %s341
      %s344 = sphi 0, %s343
      %s358 = sphi 0, %s344
      %s362 = sphi 0, %s362
      %s364 = sphi 0, %s362
      %s365 = sphi 0, %s364
      %s379 = sphi 0, %s365
      %s383 = sphi 0, %s383
      %s385 = sphi 0, %s383
      %s386 = sphi 0, %s385
      %s400 = sphi 0, %s386
      %s404 = sphi 0, %s404
      %s406 = sphi 0, %s404
      %s407 = sphi 0, %s406
      %s421 = sphi 0, %s407
      %s425 = sphi 0, %s425
      %s427 = sphi 0, %s425
      %s428 = sphi 0, %s427
      %s442 = sphi 0, %s428
      %s446 = sphi 0, %s446
      %s448 = sphi 0, %s446
      %s449 = sphi 0, %s448
      %s463 = sphi 0, %s449
      %s467 = sphi 0, %s467
      %s469 = sphi 0, %s467
      %s470 = sphi 0, %s469
      %s484 = sphi 0, %s470
      %s488 = sphi 0, %s488
      %s490 = sphi 0, %s488
      %s491 = sphi 0, %s490
      %s505 = sphi 0, %s491
      %s509 = sphi 0, %s509
      %s511 = sphi 0, %s509
      %s512 = sphi 0, %s511
      %s526 = sphi 0, %s512
      %s530 = sphi 0, %s530
      %s532 = sphi 0, %s530
      %s533 = sphi 0, %s532
      %s547 = sphi 0, %s533
      %s553 = sphi 0, %s555
      %s556 = sphi 0, %s553
      %s557 = sphi 0, %s556
      %s573 = sphi 0, %s557
    $region4: #{autoencoder_forward.1} parent=1 // loop_header_branch
      %37 = sbr.rel (%p35) target = $region8
    $region5: #{autoencoder_forward.1} parent=1 // loop_body
      %s39 = ssub.s32 %s34, 1
      %s40 = ssub.s32 %s34, 2
      %s41 = sadd.s32 %s34, 1
      %s42 = ssub.s32 %s34, %s41
      %p43 = scmp.eq.s32.totalorder %s42, 0
      %s45 = sadd.s32 %s44, 1
      %s46 = scalar_select %p43, %s44, %s45
      %p49 = pneg %p43
      %p50 = scmp.eq.s32.totalorder %s34, 1
      %p51 = por %p49, %p50
      %p52 = scmp.ne.s32.totalorder %s44, %s47
      %p53 = scmp.eq.s32.totalorder %s34, 0
      %p54 = por %p52, %p53
      %p55 = scmp.ne.s32.totalorder %s44, %s47
      %p56 = scmp.eq.s32.totalorder %s39, 1
      %p57 = por %p55, %p56
      %p58 = scmp.ne.s32.totalorder %s47, %s48
      %p59 = scmp.eq.s32.totalorder %s39, 0
      %p60 = por %p58, %p59
      %p61 = scmp.ne.s32.totalorder %s47, %s48
      %p62 = scmp.eq.s32.totalorder %s40, 1
      %p63 = por %p61, %p62
      %p65 = scmp.ne.s32.totalorder %s48, %s64
      %p66 = scmp.eq.s32.totalorder %s40, 0
      %p67 = por %p65, %p66
      %s69 = sadd.s32 %s68, 1
      %p72 = scmp.eq.s32.totalorder %s34, 1
      %p73 = scmp.ne.s32.totalorder %s68, %s70
      %p74 = scmp.eq.s32.totalorder %s34, 0
      %p75 = por %p73, %p74
      %p76 = scmp.ne.s32.totalorder %s68, %s70
      %p77 = scmp.eq.s32.totalorder %s39, 1
      %p78 = por %p76, %p77
      %p79 = scmp.ne.s32.totalorder %s70, %s71
      %p80 = scmp.eq.s32.totalorder %s39, 0
      %p81 = por %p79, %p80
      %p82 = scmp.ne.s32.totalorder %s70, %s71
      %p83 = scmp.eq.s32.totalorder %s40, 1
      %p84 = por %p82, %p83
      %p86 = scmp.ne.s32.totalorder %s71, %s85
      %p87 = scmp.eq.s32.totalorder %s40, 0
      %p88 = por %p86, %p87
      %s90 = sadd.s32 %s89, 1
      %p93 = scmp.eq.s32.totalorder %s34, 1
      %p94 = scmp.ne.s32.totalorder %s89, %s91
      %p95 = scmp.eq.s32.totalorder %s34, 0
      %p96 = por %p94, %p95
      %p97 = scmp.ne.s32.totalorder %s89, %s91
      %p98 = scmp.eq.s32.totalorder %s39, 1
      %p99 = por %p97, %p98
      %p100 = scmp.ne.s32.totalorder %s91, %s92
      %p101 = scmp.eq.s32.totalorder %s39, 0
      %p102 = por %p100, %p101
      %p103 = scmp.ne.s32.totalorder %s91, %s92
      %p104 = scmp.eq.s32.totalorder %s40, 1
      %p105 = por %p103, %p104
      %p107 = scmp.ne.s32.totalorder %s92, %s106
      %p108 = scmp.eq.s32.totalorder %s40, 0
      %p109 = por %p107, %p108
      %s111 = sadd.s32 %s110, 1
      %p114 = scmp.eq.s32.totalorder %s34, 1
      %p115 = scmp.ne.s32.totalorder %s110, %s112
      %p116 = scmp.eq.s32.totalorder %s34, 0
      %p117 = por %p115, %p116
      %p118 = scmp.ne.s32.totalorder %s110, %s112
      %p119 = scmp.eq.s32.totalorder %s39, 1
      %p120 = por %p118, %p119
      %p121 = scmp.ne.s32.totalorder %s112, %s113
      %p122 = scmp.eq.s32.totalorder %s39, 0
      %p123 = por %p121, %p122
      %p124 = scmp.ne.s32.totalorder %s112, %s113
      %p125 = scmp.eq.s32.totalorder %s40, 1
      %p126 = por %p124, %p125
      %p128 = scmp.ne.s32.totalorder %s113, %s127
      %p129 = scmp.eq.s32.totalorder %s40, 0
      %p130 = por %p128, %p129
      %s132 = sadd.s32 %s131, 1
      %p135 = scmp.eq.s32.totalorder %s34, 1
      %p136 = scmp.ne.s32.totalorder %s131, %s133
      %p137 = scmp.eq.s32.totalorder %s34, 0
      %p138 = por %p136, %p137
      %p139 = scmp.ne.s32.totalorder %s131, %s133
      %p140 = scmp.eq.s32.totalorder %s39, 1
      %p141 = por %p139, %p140
      %p142 = scmp.ne.s32.totalorder %s133, %s134
      %p143 = scmp.eq.s32.totalorder %s39, 0
      %p144 = por %p142, %p143
      %p145 = scmp.ne.s32.totalorder %s133, %s134
      %p146 = scmp.eq.s32.totalorder %s40, 1
      %p147 = por %p145, %p146
      %p149 = scmp.ne.s32.totalorder %s134, %s148
      %p150 = scmp.eq.s32.totalorder %s40, 0
      %p151 = por %p149, %p150
      %s153 = sadd.s32 %s152, 1
      %p156 = scmp.eq.s32.totalorder %s34, 1
      %p157 = scmp.ne.s32.totalorder %s152, %s154
      %p158 = scmp.eq.s32.totalorder %s34, 0
      %p159 = por %p157, %p158
      %p160 = scmp.ne.s32.totalorder %s152, %s154
      %p161 = scmp.eq.s32.totalorder %s39, 1
      %p162 = por %p160, %p161
      %p163 = scmp.ne.s32.totalorder %s154, %s155
      %p164 = scmp.eq.s32.totalorder %s39, 0
      %p165 = por %p163, %p164
      %p166 = scmp.ne.s32.totalorder %s154, %s155
      %p167 = scmp.eq.s32.totalorder %s40, 1
      %p168 = por %p166, %p167
      %p170 = scmp.ne.s32.totalorder %s155, %s169
      %p171 = scmp.eq.s32.totalorder %s40, 0
      %p172 = por %p170, %p171
      %s174 = sadd.s32 %s173, 1
      %p177 = scmp.eq.s32.totalorder %s34, 1
      %p178 = scmp.ne.s32.totalorder %s173, %s175
      %p179 = scmp.eq.s32.totalorder %s34, 0
      %p180 = por %p178, %p179
      %p181 = scmp.ne.s32.totalorder %s173, %s175
      %p182 = scmp.eq.s32.totalorder %s39, 1
      %p183 = por %p181, %p182
      %p184 = scmp.ne.s32.totalorder %s175, %s176
      %p185 = scmp.eq.s32.totalorder %s39, 0
      %p186 = por %p184, %p185
      %p187 = scmp.ne.s32.totalorder %s175, %s176
      %p188 = scmp.eq.s32.totalorder %s40, 1
      %p189 = por %p187, %p188
      %p191 = scmp.ne.s32.totalorder %s176, %s190
      %p192 = scmp.eq.s32.totalorder %s40, 0
      %p193 = por %p191, %p192
      %s195 = sadd.s32 %s194, 1
      %p198 = scmp.eq.s32.totalorder %s34, 1
      %p199 = scmp.ne.s32.totalorder %s194, %s196
      %p200 = scmp.eq.s32.totalorder %s34, 0
      %p201 = por %p199, %p200
      %p202 = scmp.ne.s32.totalorder %s194, %s196
      %p203 = scmp.eq.s32.totalorder %s39, 1
      %p204 = por %p202, %p203
      %p205 = scmp.ne.s32.totalorder %s196, %s197
      %p206 = scmp.eq.s32.totalorder %s39, 0
      %p207 = por %p205, %p206
      %p208 = scmp.ne.s32.totalorder %s196, %s197
      %p209 = scmp.eq.s32.totalorder %s40, 1
      %p210 = por %p208, %p209
      %p212 = scmp.ne.s32.totalorder %s197, %s211
      %p213 = scmp.eq.s32.totalorder %s40, 0
      %p214 = por %p212, %p213
      %s216 = sadd.s32 %s215, 1
      %p219 = scmp.eq.s32.totalorder %s34, 1
      %p220 = scmp.ne.s32.totalorder %s215, %s217
      %p221 = scmp.eq.s32.totalorder %s34, 0
      %p222 = por %p220, %p221
      %p223 = scmp.ne.s32.totalorder %s215, %s217
      %p224 = scmp.eq.s32.totalorder %s39, 1
      %p225 = por %p223, %p224
      %p226 = scmp.ne.s32.totalorder %s217, %s218
      %p227 = scmp.eq.s32.totalorder %s39, 0
      %p228 = por %p226, %p227
      %p229 = scmp.ne.s32.totalorder %s217, %s218
      %p230 = scmp.eq.s32.totalorder %s40, 1
      %p231 = por %p229, %p230
      %p233 = scmp.ne.s32.totalorder %s218, %s232
      %p234 = scmp.eq.s32.totalorder %s40, 0
      %p235 = por %p233, %p234
      %s237 = sadd.s32 %s236, 1
      %p240 = scmp.eq.s32.totalorder %s34, 1
      %p241 = scmp.ne.s32.totalorder %s236, %s238
      %p242 = scmp.eq.s32.totalorder %s34, 0
      %p243 = por %p241, %p242
      %p244 = scmp.ne.s32.totalorder %s236, %s238
      %p245 = scmp.eq.s32.totalorder %s39, 1
      %p246 = por %p244, %p245
      %p247 = scmp.ne.s32.totalorder %s238, %s239
      %p248 = scmp.eq.s32.totalorder %s39, 0
      %p249 = por %p247, %p248
      %p250 = scmp.ne.s32.totalorder %s238, %s239
      %p251 = scmp.eq.s32.totalorder %s40, 1
      %p252 = por %p250, %p251
      %p254 = scmp.ne.s32.totalorder %s239, %s253
      %p255 = scmp.eq.s32.totalorder %s40, 0
      %p256 = por %p254, %p255
      %s258 = sadd.s32 %s257, 1
      %p261 = scmp.eq.s32.totalorder %s34, 1
      %p262 = scmp.ne.s32.totalorder %s257, %s259
      %p263 = scmp.eq.s32.totalorder %s34, 0
      %p264 = por %p262, %p263
      %p265 = scmp.ne.s32.totalorder %s257, %s259
      %p266 = scmp.eq.s32.totalorder %s39, 1
      %p267 = por %p265, %p266
      %p268 = scmp.ne.s32.totalorder %s259, %s260
      %p269 = scmp.eq.s32.totalorder %s39, 0
      %p270 = por %p268, %p269
      %p271 = scmp.ne.s32.totalorder %s259, %s260
      %p272 = scmp.eq.s32.totalorder %s40, 1
      %p273 = por %p271, %p272
      %p275 = scmp.ne.s32.totalorder %s260, %s274
      %p276 = scmp.eq.s32.totalorder %s40, 0
      %p277 = por %p275, %p276
      %s279 = sadd.s32 %s278, 1
      %p282 = scmp.eq.s32.totalorder %s34, 1
      %p283 = scmp.ne.s32.totalorder %s278, %s280
      %p284 = scmp.eq.s32.totalorder %s34, 0
      %p285 = por %p283, %p284
      %p286 = scmp.ne.s32.totalorder %s278, %s280
      %p287 = scmp.eq.s32.totalorder %s39, 1
      %p288 = por %p286, %p287
      %p289 = scmp.ne.s32.totalorder %s280, %s281
      %p290 = scmp.eq.s32.totalorder %s39, 0
      %p291 = por %p289, %p290
      %p292 = scmp.ne.s32.totalorder %s280, %s281
      %p293 = scmp.eq.s32.totalorder %s40, 1
      %p294 = por %p292, %p293
      %p296 = scmp.ne.s32.totalorder %s281, %s295
      %p297 = scmp.eq.s32.totalorder %s40, 0
      %p298 = por %p296, %p297
      %s300 = sadd.s32 %s299, 1
      %p303 = scmp.eq.s32.totalorder %s34, 1
      %p304 = scmp.ne.s32.totalorder %s299, %s301
      %p305 = scmp.eq.s32.totalorder %s34, 0
      %p306 = por %p304, %p305
      %p307 = scmp.ne.s32.totalorder %s299, %s301
      %p308 = scmp.eq.s32.totalorder %s39, 1
      %p309 = por %p307, %p308
      %p310 = scmp.ne.s32.totalorder %s301, %s302
      %p311 = scmp.eq.s32.totalorder %s39, 0
      %p312 = por %p310, %p311
      %p313 = scmp.ne.s32.totalorder %s301, %s302
      %p314 = scmp.eq.s32.totalorder %s40, 1
      %p315 = por %p313, %p314
      %p317 = scmp.ne.s32.totalorder %s302, %s316
      %p318 = scmp.eq.s32.totalorder %s40, 0
      %p319 = por %p317, %p318
      %s321 = sadd.s32 %s320, 1
      %p324 = scmp.eq.s32.totalorder %s34, 1
      %p325 = scmp.ne.s32.totalorder %s320, %s322
      %p326 = scmp.eq.s32.totalorder %s34, 0
      %p327 = por %p325, %p326
      %p328 = scmp.ne.s32.totalorder %s320, %s322
      %p329 = scmp.eq.s32.totalorder %s39, 1
      %p330 = por %p328, %p329
      %p331 = scmp.ne.s32.totalorder %s322, %s323
      %p332 = scmp.eq.s32.totalorder %s39, 0
      %p333 = por %p331, %p332
      %p334 = scmp.ne.s32.totalorder %s322, %s323
      %p335 = scmp.eq.s32.totalorder %s40, 1
      %p336 = por %p334, %p335
      %p338 = scmp.ne.s32.totalorder %s323, %s337
      %p339 = scmp.eq.s32.totalorder %s40, 0
      %p340 = por %p338, %p339
      %s342 = sadd.s32 %s341, 1
      %p345 = scmp.eq.s32.totalorder %s34, 1
      %p346 = scmp.ne.s32.totalorder %s341, %s343
      %p347 = scmp.eq.s32.totalorder %s34, 0
      %p348 = por %p346, %p347
      %p349 = scmp.ne.s32.totalorder %s341, %s343
      %p350 = scmp.eq.s32.totalorder %s39, 1
      %p351 = por %p349, %p350
      %p352 = scmp.ne.s32.totalorder %s343, %s344
      %p353 = scmp.eq.s32.totalorder %s39, 0
      %p354 = por %p352, %p353
      %p355 = scmp.ne.s32.totalorder %s343, %s344
      %p356 = scmp.eq.s32.totalorder %s40, 1
      %p357 = por %p355, %p356
      %p359 = scmp.ne.s32.totalorder %s344, %s358
      %p360 = scmp.eq.s32.totalorder %s40, 0
      %p361 = por %p359, %p360
      %s363 = sadd.s32 %s362, 1
      %p366 = scmp.eq.s32.totalorder %s34, 1
      %p367 = scmp.ne.s32.totalorder %s362, %s364
      %p368 = scmp.eq.s32.totalorder %s34, 0
      %p369 = por %p367, %p368
      %p370 = scmp.ne.s32.totalorder %s362, %s364
      %p371 = scmp.eq.s32.totalorder %s39, 1
      %p372 = por %p370, %p371
      %p373 = scmp.ne.s32.totalorder %s364, %s365
      %p374 = scmp.eq.s32.totalorder %s39, 0
      %p375 = por %p373, %p374
      %p376 = scmp.ne.s32.totalorder %s364, %s365
      %p377 = scmp.eq.s32.totalorder %s40, 1
      %p378 = por %p376, %p377
      %p380 = scmp.ne.s32.totalorder %s365, %s379
      %p381 = scmp.eq.s32.totalorder %s40, 0
      %p382 = por %p380, %p381
      %s384 = sadd.s32 %s383, 1
      %p387 = scmp.eq.s32.totalorder %s34, 1
      %p388 = scmp.ne.s32.totalorder %s383, %s385
      %p389 = scmp.eq.s32.totalorder %s34, 0
      %p390 = por %p388, %p389
      %p391 = scmp.ne.s32.totalorder %s383, %s385
      %p392 = scmp.eq.s32.totalorder %s39, 1
      %p393 = por %p391, %p392
      %p394 = scmp.ne.s32.totalorder %s385, %s386
      %p395 = scmp.eq.s32.totalorder %s39, 0
      %p396 = por %p394, %p395
      %p397 = scmp.ne.s32.totalorder %s385, %s386
      %p398 = scmp.eq.s32.totalorder %s40, 1
      %p399 = por %p397, %p398
      %p401 = scmp.ne.s32.totalorder %s386, %s400
      %p402 = scmp.eq.s32.totalorder %s40, 0
      %p403 = por %p401, %p402
      %s405 = sadd.s32 %s404, 1
      %p408 = scmp.eq.s32.totalorder %s34, 1
      %p409 = scmp.ne.s32.totalorder %s404, %s406
      %p410 = scmp.eq.s32.totalorder %s34, 0
      %p411 = por %p409, %p410
      %p412 = scmp.ne.s32.totalorder %s404, %s406
      %p413 = scmp.eq.s32.totalorder %s39, 1
      %p414 = por %p412, %p413
      %p415 = scmp.ne.s32.totalorder %s406, %s407
      %p416 = scmp.eq.s32.totalorder %s39, 0
      %p417 = por %p415, %p416
      %p418 = scmp.ne.s32.totalorder %s406, %s407
      %p419 = scmp.eq.s32.totalorder %s40, 1
      %p420 = por %p418, %p419
      %p422 = scmp.ne.s32.totalorder %s407, %s421
      %p423 = scmp.eq.s32.totalorder %s40, 0
      %p424 = por %p422, %p423
      %s426 = sadd.s32 %s425, 1
      %p429 = scmp.eq.s32.totalorder %s34, 1
      %p430 = scmp.ne.s32.totalorder %s425, %s427
      %p431 = scmp.eq.s32.totalorder %s34, 0
      %p432 = por %p430, %p431
      %p433 = scmp.ne.s32.totalorder %s425, %s427
      %p434 = scmp.eq.s32.totalorder %s39, 1
      %p435 = por %p433, %p434
      %p436 = scmp.ne.s32.totalorder %s427, %s428
      %p437 = scmp.eq.s32.totalorder %s39, 0
      %p438 = por %p436, %p437
      %p439 = scmp.ne.s32.totalorder %s427, %s428
      %p440 = scmp.eq.s32.totalorder %s40, 1
      %p441 = por %p439, %p440
      %p443 = scmp.ne.s32.totalorder %s428, %s442
      %p444 = scmp.eq.s32.totalorder %s40, 0
      %p445 = por %p443, %p444
      %s447 = sadd.s32 %s446, 1
      %p450 = scmp.eq.s32.totalorder %s34, 1
      %p451 = scmp.ne.s32.totalorder %s446, %s448
      %p452 = scmp.eq.s32.totalorder %s34, 0
      %p453 = por %p451, %p452
      %p454 = scmp.ne.s32.totalorder %s446, %s448
      %p455 = scmp.eq.s32.totalorder %s39, 1
      %p456 = por %p454, %p455
      %p457 = scmp.ne.s32.totalorder %s448, %s449
      %p458 = scmp.eq.s32.totalorder %s39, 0
      %p459 = por %p457, %p458
      %p460 = scmp.ne.s32.totalorder %s448, %s449
      %p461 = scmp.eq.s32.totalorder %s40, 1
      %p462 = por %p460, %p461
      %p464 = scmp.ne.s32.totalorder %s449, %s463
      %p465 = scmp.eq.s32.totalorder %s40, 0
      %p466 = por %p464, %p465
      %s468 = sadd.s32 %s467, 1
      %p471 = scmp.eq.s32.totalorder %s34, 1
      %p472 = scmp.ne.s32.totalorder %s467, %s469
      %p473 = scmp.eq.s32.totalorder %s34, 0
      %p474 = por %p472, %p473
      %p475 = scmp.ne.s32.totalorder %s467, %s469
      %p476 = scmp.eq.s32.totalorder %s39, 1
      %p477 = por %p475, %p476
      %p478 = scmp.ne.s32.totalorder %s469, %s470
      %p479 = scmp.eq.s32.totalorder %s39, 0
      %p480 = por %p478, %p479
      %p481 = scmp.ne.s32.totalorder %s469, %s470
      %p482 = scmp.eq.s32.totalorder %s40, 1
      %p483 = por %p481, %p482
      %p485 = scmp.ne.s32.totalorder %s470, %s484
      %p486 = scmp.eq.s32.totalorder %s40, 0
      %p487 = por %p485, %p486
      %s489 = sadd.s32 %s488, 1
      %p492 = scmp.eq.s32.totalorder %s34, 1
      %p493 = scmp.ne.s32.totalorder %s488, %s490
      %p494 = scmp.eq.s32.totalorder %s34, 0
      %p495 = por %p493, %p494
      %p496 = scmp.ne.s32.totalorder %s488, %s490
      %p497 = scmp.eq.s32.totalorder %s39, 1
      %p498 = por %p496, %p497
      %p499 = scmp.ne.s32.totalorder %s490, %s491
      %p500 = scmp.eq.s32.totalorder %s39, 0
      %p501 = por %p499, %p500
      %p502 = scmp.ne.s32.totalorder %s490, %s491
      %p503 = scmp.eq.s32.totalorder %s40, 1
      %p504 = por %p502, %p503
      %p506 = scmp.ne.s32.totalorder %s491, %s505
      %p507 = scmp.eq.s32.totalorder %s40, 0
      %p508 = por %p506, %p507
      %s510 = sadd.s32 %s509, 1
      %p513 = scmp.eq.s32.totalorder %s34, 1
      %p514 = scmp.ne.s32.totalorder %s509, %s511
      %p515 = scmp.eq.s32.totalorder %s34, 0
      %p516 = por %p514, %p515
      %p517 = scmp.ne.s32.totalorder %s509, %s511
      %p518 = scmp.eq.s32.totalorder %s39, 1
      %p519 = por %p517, %p518
      %p520 = scmp.ne.s32.totalorder %s511, %s512
      %p521 = scmp.eq.s32.totalorder %s39, 0
      %p522 = por %p520, %p521
      %p523 = scmp.ne.s32.totalorder %s511, %s512
      %p524 = scmp.eq.s32.totalorder %s40, 1
      %p525 = por %p523, %p524
      %p527 = scmp.ne.s32.totalorder %s512, %s526
      %p528 = scmp.eq.s32.totalorder %s40, 0
      %p529 = por %p527, %p528
      %s531 = sadd.s32 %s530, 1
      %p534 = scmp.eq.s32.totalorder %s34, 1
      %p535 = scmp.ne.s32.totalorder %s530, %s532
      %p536 = scmp.eq.s32.totalorder %s34, 0
      %p537 = por %p535, %p536
      %p538 = scmp.ne.s32.totalorder %s530, %s532
      %p539 = scmp.eq.s32.totalorder %s39, 1
      %p540 = por %p538, %p539
      %p541 = scmp.ne.s32.totalorder %s532, %s533
      %p542 = scmp.eq.s32.totalorder %s39, 0
      %p543 = por %p541, %p542
      %p544 = scmp.ne.s32.totalorder %s532, %s533
      %p545 = scmp.eq.s32.totalorder %s40, 1
      %p546 = por %p544, %p545
      %p548 = scmp.ne.s32.totalorder %s533, %s547
      %p549 = scmp.eq.s32.totalorder %s40, 0
      %p550 = por %p548, %p549
      %s551 = ssub.s32 %s34, %s41
      %p552 = scmp.eq.s32.totalorder %s551, 0
      %s554 = sadd.s32 %s553, 1
      %s555 = scalar_select %p552, %s553, %s554
      %p558 = pneg %p552
      %p559 = scmp.eq.s32.totalorder %s34, 1
      %p560 = por %p558, %p559
      %p561 = scmp.ne.s32.totalorder %s553, %s556
      %p562 = scmp.eq.s32.totalorder %s34, 0
      %p563 = por %p561, %p562
      %p564 = scmp.ne.s32.totalorder %s553, %s556
      %p565 = scmp.eq.s32.totalorder %s39, 1
      %p566 = por %p564, %p565
      %p567 = scmp.ne.s32.totalorder %s556, %s557
      %p568 = scmp.eq.s32.totalorder %s39, 0
      %p569 = por %p567, %p568
      %p570 = scmp.ne.s32.totalorder %s556, %s557
      %p571 = scmp.eq.s32.totalorder %s40, 1
      %p572 = por %p570, %p571
      %p574 = scmp.ne.s32.totalorder %s557, %s573
      %p575 = scmp.eq.s32.totalorder %s40, 0
      %p576 = por %p574, %p575
      %p577 = scmp.le.s32.totalorder 1, %s34
      %p578 = scmp.lt.s32.totalorder %s34, 3
      %p579 = pnand %p577, %p578
      %p580 = pneg %p579
      // Predicated region
      $region9: #{autoencoder_forward.1} parent=5 // pred_check
        _
      $region10: #{autoencoder_forward.1} parent=5 // pred_check_branch
        %582 = sbr.rel (%p579) target = $region12
      $region11: #{autoencoder_forward.1} parent=5 // pred_region
        %s583 = ssub.s32 %s34, 1
        // Predicated region
        $region13: #{autoencoder_forward.1} parent=11 // pred_check
          %p584 = pneg %p81
        $region14: #{autoencoder_forward.1} parent=11 // pred_check_branch
          %586 = sbr.rel (%p584) target = $region16
        $region15: #{autoencoder_forward.1} parent=11 // pred_region
          _
        $region16: #{autoencoder_forward.1} parent=11 // pred_fallthru
          _
        // Predicated region
        $region17: #{autoencoder_forward.1} parent=11 // pred_check
          %p587 = pneg %p102
        $region18: #{autoencoder_forward.1} parent=11 // pred_check_branch
          %589 = sbr.rel (%p587) target = $region20
        $region19: #{autoencoder_forward.1} parent=11 // pred_region
          _
        $region20: #{autoencoder_forward.1} parent=11 // pred_fallthru
          _
        // Predicated region
        $region21: #{autoencoder_forward.1} parent=11 // pred_check
          %p590 = pneg %p123
        $region22: #{autoencoder_forward.1} parent=11 // pred_check_branch
          %592 = sbr.rel (%p590) target = $region24
        $region23: #{autoencoder_forward.1} parent=11 // pred_region
          _
        $region24: #{autoencoder_forward.1} parent=11 // pred_fallthru
          _
        // Predicated region
        $region25: #{autoencoder_forward.1} parent=11 // pred_check
          %p593 = pneg %p144
        $region26: #{autoencoder_forward.1} parent=11 // pred_check_branch
          %595 = sbr.rel (%p593) target = $region28
        $region27: #{autoencoder_forward.1} parent=11 // pred_region
          _
        $region28: #{autoencoder_forward.1} parent=11 // pred_fallthru
          _
        // Predicated region
        $region29: #{autoencoder_forward.1} parent=11 // pred_check
          %p596 = pneg %p165
        $region30: #{autoencoder_forward.1} parent=11 // pred_check_branch
          %598 = sbr.rel (%p596) target = $region32
        $region31: #{autoencoder_forward.1} parent=11 // pred_region
          _
        $region32: #{autoencoder_forward.1} parent=11 // pred_fallthru
          _
        // Predicated region
        $region33: #{autoencoder_forward.1} parent=11 // pred_check
          %p599 = pneg %p186
        $region34: #{autoencoder_forward.1} parent=11 // pred_check_branch
          %601 = sbr.rel (%p599) target = $region36
        $region35: #{autoencoder_forward.1} parent=11 // pred_region
          _
        $region36: #{autoencoder_forward.1} parent=11 // pred_fallthru
          _
        // Predicated region
        $region37: #{autoencoder_forward.1} parent=11 // pred_check
          %p602 = pneg %p207
        $region38: #{autoencoder_forward.1} parent=11 // pred_check_branch
          %604 = sbr.rel (%p602) target = $region40
        $region39: #{autoencoder_forward.1} parent=11 // pred_region
          _
        $region40: #{autoencoder_forward.1} parent=11 // pred_fallthru
          _
        // Predicated region
        $region41: #{autoencoder_forward.1} parent=11 // pred_check
          %p605 = pneg %p228
        $region42: #{autoencoder_forward.1} parent=11 // pred_check_branch
          %607 = sbr.rel (%p605) target = $region44
        $region43: #{autoencoder_forward.1} parent=11 // pred_region
          _
        $region44: #{autoencoder_forward.1} parent=11 // pred_fallthru
          _
        // Predicated region
        $region45: #{autoencoder_forward.1} parent=11 // pred_check
          %p608 = pneg %p249
        $region46: #{autoencoder_forward.1} parent=11 // pred_check_branch
          %610 = sbr.rel (%p608) target = $region48
        $region47: #{autoencoder_forward.1} parent=11 // pred_region
          _
        $region48: #{autoencoder_forward.1} parent=11 // pred_fallthru
          _
        // Predicated region
        $region49: #{autoencoder_forward.1} parent=11 // pred_check
          %p611 = pneg %p270
        $region50: #{autoencoder_forward.1} parent=11 // pred_check_branch
          %613 = sbr.rel (%p611) target = $region52
        $region51: #{autoencoder_forward.1} parent=11 // pred_region
          _
        $region52: #{autoencoder_forward.1} parent=11 // pred_fallthru
          _
        // Predicated region
        $region53: #{autoencoder_forward.1} parent=11 // pred_check
          %p614 = pneg %p291
        $region54: #{autoencoder_forward.1} parent=11 // pred_check_branch
          %616 = sbr.rel (%p614) target = $region56
        $region55: #{autoencoder_forward.1} parent=11 // pred_region
          _
        $region56: #{autoencoder_forward.1} parent=11 // pred_fallthru
          _
        // Predicated region
        $region57: #{autoencoder_forward.1} parent=11 // pred_check
          %p617 = pneg %p312
        $region58: #{autoencoder_forward.1} parent=11 // pred_check_branch
          %619 = sbr.rel (%p617) target = $region60
        $region59: #{autoencoder_forward.1} parent=11 // pred_region
          _
        $region60: #{autoencoder_forward.1} parent=11 // pred_fallthru
          _
        // Predicated region
        $region61: #{autoencoder_forward.1} parent=11 // pred_check
          %p620 = pneg %p333
        $region62: #{autoencoder_forward.1} parent=11 // pred_check_branch
          %622 = sbr.rel (%p620) target = $region64
        $region63: #{autoencoder_forward.1} parent=11 // pred_region
          _
        $region64: #{autoencoder_forward.1} parent=11 // pred_fallthru
          _
        // Predicated region
        $region65: #{autoencoder_forward.1} parent=11 // pred_check
          %p623 = pneg %p354
        $region66: #{autoencoder_forward.1} parent=11 // pred_check_branch
          %625 = sbr.rel (%p623) target = $region68
        $region67: #{autoencoder_forward.1} parent=11 // pred_region
          _
        $region68: #{autoencoder_forward.1} parent=11 // pred_fallthru
          _
        // Predicated region
        $region69: #{autoencoder_forward.1} parent=11 // pred_check
          %p626 = pneg %p375
        $region70: #{autoencoder_forward.1} parent=11 // pred_check_branch
          %628 = sbr.rel (%p626) target = $region72
        $region71: #{autoencoder_forward.1} parent=11 // pred_region
          _
        $region72: #{autoencoder_forward.1} parent=11 // pred_fallthru
          _
        // Predicated region
        $region73: #{autoencoder_forward.1} parent=11 // pred_check
          %p629 = pneg %p396
        $region74: #{autoencoder_forward.1} parent=11 // pred_check_branch
          %631 = sbr.rel (%p629) target = $region76
        $region75: #{autoencoder_forward.1} parent=11 // pred_region
          _
        $region76: #{autoencoder_forward.1} parent=11 // pred_fallthru
          _
        // Predicated region
        $region77: #{autoencoder_forward.1} parent=11 // pred_check
          %p632 = pneg %p417
        $region78: #{autoencoder_forward.1} parent=11 // pred_check_branch
          %634 = sbr.rel (%p632) target = $region80
        $region79: #{autoencoder_forward.1} parent=11 // pred_region
          _
        $region80: #{autoencoder_forward.1} parent=11 // pred_fallthru
          _
        // Predicated region
        $region81: #{autoencoder_forward.1} parent=11 // pred_check
          %p635 = pneg %p438
        $region82: #{autoencoder_forward.1} parent=11 // pred_check_branch
          %637 = sbr.rel (%p635) target = $region84
        $region83: #{autoencoder_forward.1} parent=11 // pred_region
          %s639 = ssub.s32 21696, 21696
          %640 = vsyncadd [#allocation17], %s639
          %s641 = sshll.u32 [#allocation16], 4
          %s642 = int_to_ptr.vmem [resolvable:$true] %s641
          %647 = dma.hbm_to_vmem [thread:$0]  %s18, 21696, %s642, [#allocation17], 192, 192, 12
        $region84: #{autoencoder_forward.1} parent=11 // pred_fallthru
          _
        // Predicated region
        $region85: #{autoencoder_forward.1} parent=11 // pred_check
          %p648 = pneg %p459
        $region86: #{autoencoder_forward.1} parent=11 // pred_check_branch
          %650 = sbr.rel (%p648) target = $region88
        $region87: #{autoencoder_forward.1} parent=11 // pred_region
          _
        $region88: #{autoencoder_forward.1} parent=11 // pred_fallthru
          _
        // Predicated region
        $region89: #{autoencoder_forward.1} parent=11 // pred_check
          %p651 = pneg %p480
        $region90: #{autoencoder_forward.1} parent=11 // pred_check_branch
          %653 = sbr.rel (%p651) target = $region92
        $region91: #{autoencoder_forward.1} parent=11 // pred_region
          _
        $region92: #{autoencoder_forward.1} parent=11 // pred_fallthru
          _
        // Predicated region
        $region93: #{autoencoder_forward.1} parent=11 // pred_check
          %p654 = pneg %p501
        $region94: #{autoencoder_forward.1} parent=11 // pred_check_branch
          %656 = sbr.rel (%p654) target = $region96
        $region95: #{autoencoder_forward.1} parent=11 // pred_region
          _
        $region96: #{autoencoder_forward.1} parent=11 // pred_fallthru
          _
        // Predicated region
        $region97: #{autoencoder_forward.1} parent=11 // pred_check
          %p657 = pneg %p522
        $region98: #{autoencoder_forward.1} parent=11 // pred_check_branch
          %659 = sbr.rel (%p657) target = $region100
        $region99: #{autoencoder_forward.1} parent=11 // pred_region
          _
        $region100: #{autoencoder_forward.1} parent=11 // pred_fallthru
          _
        // Predicated region
        $region101: #{autoencoder_forward.1} parent=11 // pred_check
          %p660 = pneg %p543
        $region102: #{autoencoder_forward.1} parent=11 // pred_check_branch
          %662 = sbr.rel (%p660) target = $region104
        $region103: #{autoencoder_forward.1} parent=11 // pred_region
          %s664 = ssub.s32 20992, 20992
          %665 = vsyncadd [#allocation19], %s664
          %s666 = sshll.u32 [#allocation18], 4
          %s667 = int_to_ptr.vmem [resolvable:$true] %s666
          %672 = dma.hbm_to_vmem [thread:$0]  %s23, 20992, %s667, [#allocation19], 512, 512, 32
        $region104: #{autoencoder_forward.1} parent=11 // pred_fallthru
          _
      $region12: #{autoencoder_forward.1} parent=5 // pred_fallthru
        _
      %p673 = scmp.lt.s32.totalorder %s34, 2
      // Predicated region
      $region105: #{autoencoder_forward.1} parent=5 // pred_check
        %p674 = pneg %p673
      $region106: #{autoencoder_forward.1} parent=5 // pred_check_branch
        %676 = sbr.rel (%p674) target = $region108
      $region107: #{autoencoder_forward.1} parent=5 // pred_region
        // Predicated region
        $region109: #{autoencoder_forward.1} parent=107 // pred_check
          %p677 = pneg %p54
        $region110: #{autoencoder_forward.1} parent=107 // pred_check_branch
          %679 = sbr.rel (%p677) target = $region112
        $region111: #{autoencoder_forward.1} parent=107 // pred_region
          %p680 = scmp.lt.s32.totalorder %s34, 1
          %s681 = scalar_select %p680, %s34, 1
          %s682 = smul.addr %s681, 8
          %s683 = scalar_lea.vmem %s0, %s682
        $region112: #{autoencoder_forward.1} parent=107 // pred_fallthru
          _
      $region108: #{autoencoder_forward.1} parent=5 // pred_fallthru
        _
      %p684 = scmp.le.s32.totalorder 1, %s34
      %p685 = scmp.lt.s32.totalorder %s34, 3
      %p686 = pnand %p684, %p685
      %p687 = pneg %p686
      // Predicated region
      $region113: #{autoencoder_forward.1} parent=5 // pred_check
        _
      $region114: #{autoencoder_forward.1} parent=5 // pred_check_branch
        %689 = sbr.rel (%p686) target = $region116
      $region115: #{autoencoder_forward.1} parent=5 // pred_region
        %s690 = ssub.s32 %s34, 1
        // Predicated region
        $region117: #{autoencoder_forward.1} parent=115 // pred_check
          %p691 = pneg %p438
        $region118: #{autoencoder_forward.1} parent=115 // pred_check_branch
          %693 = sbr.rel (%p691) target = $region120
        $region119: #{autoencoder_forward.1} parent=115 // pred_region
          %694 = dma.done [#allocation17], 21696
        $region120: #{autoencoder_forward.1} parent=115 // pred_fallthru
          _
        // Predicated region
        $region121: #{autoencoder_forward.1} parent=115 // pred_check
          %p695 = pneg %p543
        $region122: #{autoencoder_forward.1} parent=115 // pred_check_branch
          %697 = sbr.rel (%p695) target = $region124
        $region123: #{autoencoder_forward.1} parent=115 // pred_region
          %698 = dma.done [#allocation19], 20992
        $region124: #{autoencoder_forward.1} parent=115 // pred_fallthru
          _
        %p699 = scmp.lt.s32.totalorder %s39, 1
        %s700 = scalar_select %p699, %s39, 1
        %s701 = smul.addr %s700, 8
        %s702 = scalar_lea.vmem %s0, %s701
        %p703 = pneg %p60
        %p704 = pneg %p57
        %p705 = pneg %p81
        %p706 = pneg %p78
        %p707 = pneg %p102
        %p708 = pneg %p99
        %p709 = pneg %p123
        %p710 = pneg %p120
        %p711 = pneg %p144
        %p712 = pneg %p141
        %p713 = pneg %p165
        %p714 = pneg %p162
        %p715 = pneg %p186
        %p716 = pneg %p183
        %p717 = pneg %p207
        %p718 = pneg %p204
        %p719 = pneg %p228
        %p720 = pneg %p225
        %p721 = pneg %p249
        %p722 = pneg %p246
        %p723 = pneg %p270
        %p724 = pneg %p267
        %p725 = pneg %p291
        %p726 = pneg %p288
        %p727 = pneg %p312
        %p728 = pneg %p309
        %p729 = pneg %p333
        %p730 = pneg %p330
        %p731 = pneg %p354
        %p732 = pneg %p351
        %p733 = pneg %p375
        %p734 = pneg %p372
        %p735 = pneg %p396
        %p736 = pneg %p393
        %p737 = pneg %p417
        %p738 = pneg %p414
        %p739 = pneg %p438
        %p740 = pneg %p435
        %p741 = pneg %p459
        %p742 = pneg %p456
        %p743 = pneg %p480
        %p744 = pneg %p477
        %p745 = pneg %p501
        %p746 = pneg %p498
        %p747 = pneg %p522
        %p748 = pneg %p519
        %p749 = pneg %p543
        %p750 = pneg %p540
        %p751 = pneg %p569
        %p752 = pneg %p566
        %p753 = scmp.lt.s32.totalorder %s39, 1
        %s754 = scalar_select %p753, %s39, 1
        %s755 = smul.addr %s754, 8
        %s756 = scalar_lea.vmem %s24, %s755
        %p757 = scmp.lt.s32.totalorder %s39, 1
        %s758 = scalar_select %p757, %s39, 1
        %s759 = smul.addr %s758, 8
        %s760 = scalar_lea.vmem %s0, %s759
        %p761 = scmp.lt.s32.totalorder %s39, 1
        %s762 = scalar_select %p761, %s39, 1
        %s763 = smul.addr %s762, 8
        %s764 = scalar_lea.vmem %s24, %s763
        %vm766 = vcmask 261120
        %767 = vst.msk [vmem:[#allocation2] sm:$0xff] %vm766, 0.0
        %768 = vst.msk [vmem:[#allocation2 + $0x40] sm:$0xff] %vm766, 0.0
        %vm769 = vcmask 556320
        %770 = vst.msk [vmem:[#allocation2 + $0x38] sm:$0xff] %vm769, 0.0
        %771 = vst.msk [vmem:[#allocation2 + $0x78] sm:$0xff] %vm769, 0.0
        %772 = vst.msk [vmem:[#allocation3] sm:$0xff] %vm766, 0.0
        %773 = vst.msk [vmem:[#allocation3 + $0x18] sm:$0xff] %vm766, 0.0
        %vm774 = vcmask 794120
        %775 = vst.msk [vmem:[#allocation3 + $0x10] sm:$0xff] %vm774, 0.0
        %776 = vst.msk [vmem:[#allocation3 + $0x28] sm:$0xff] %vm774, 0.0
        %777 = vst.msk [vmem:[#allocation4] sm:$0xff] %vm766, 0.0
        %778 = vst.msk [vmem:[#allocation4 + $0x10] sm:$0xff] %vm774, 0.0
        %779 = vst.msk [vmem:[#allocation5] sm:$0xff] %vm766, 0.0
        %vm780 = vcmask 293920
        %781 = vst.msk [vmem:[#allocation5 + $0x8] sm:$0xff] %vm780, 0.0
        %782 = vst.msk [vmem:[#allocation6] sm:$0xff] %vm766, 0.0
        %783 = vst.msk [vmem:[#allocation6 + $0x8] sm:$0xff] %vm780, 0.0
        %784 = vst.msk [vmem:[#allocation7] sm:$0xff] %vm766, 0.0
        %vm785 = vcmask 925320
        %786 = vst.msk [vmem:[#allocation7] sm:$0xff] %vm785, 0.0
        %787 = vst.msk [vmem:[#allocation8] sm:$0xff] %vm766, 0.0
        %788 = vst.msk [vmem:[#allocation8] sm:$0xff] %vm785, 0.0
        %789 = vst.msk [vmem:[#allocation9] sm:$0xff] %vm766, 0.0
        %790 = vst.msk [vmem:[#allocation9 + $0x8] sm:$0xff] %vm780, 0.0
        %791 = vst.msk [vmem:[#allocation10] sm:$0xff] %vm766, 0.0
        %792 = vst.msk [vmem:[#allocation10 + $0x8] sm:$0xff] %vm780, 0.0
        %793 = vst.msk [vmem:[#allocation11] sm:$0xff] %vm766, 0.0
        %vm794 = vcmask 1048352
        %795 = vst.msk [vmem:[#allocation11 + $0x10] sm:$0xff] %vm794, 0.0
        %vm796 = vcmask 31744
        %797 = vst.msk [vmem:[#allocation11 + $0x18] sm:$0xff] %vm796, 0.0
        %798 = vst.msk [vmem:[#allocation12] sm:$0xff] %vm766, 0.0
        %799 = vst.msk [vmem:[#allocation12 + $0x20] sm:$0xff] %vm766, 0.0
        %800 = vst.msk [vmem:[#allocation12 + $0x10] sm:$0xff] %vm794, 0.0
        %801 = vst.msk [vmem:[#allocation12 + $0x18] sm:$0xff] %vm796, 0.0
        %802 = vst.msk [vmem:[#allocation12 + $0x30] sm:$0xff] %vm794, 0.0
        %803 = vst.msk [vmem:[#allocation12 + $0x38] sm:$0xff] %vm796, 0.0
        %804 = vst.msk [vmem:[#allocation13] sm:$0xff] %vm766, 0.0
        %805 = vst.msk [vmem:[#allocation13 + $0x40] sm:$0xff] %vm766, 0.0
        %806 = vst.msk [vmem:[#allocation13 + $0x38] sm:$0xff] %vm769, 0.0
        %807 = vst.msk [vmem:[#allocation13 + $0x78] sm:$0xff] %vm769, 0.0
        %v808 = vld [vmem:[%s760] sm:$0xff]
        %v810 = vlaneseq
        %v811 = vshrl.u32 %v810, 7
        %v812 = vsub.s32 0, %v811
        %v813 = vrot.slane %v808, %v812
        %v814 = vlaneseq
        %v815 = vshrl.u32 %v814, 7
        %v816 = vsub.s32 1, %v815
        %v817 = vrot.slane %v808, %v816
        %v818 = vlaneseq
        %v819 = vshrl.u32 %v818, 7
        %v820 = vsub.s32 2, %v819
        %v821 = vrot.slane %v808, %v820
        %v822 = vlaneseq
        %v823 = vshrl.u32 %v822, 7
        %v824 = vsub.s32 3, %v823
        %v825 = vrot.slane %v808, %v824
        %v826 = vlaneseq
        %v827 = vshrl.u32 %v826, 7
        %v828 = vsub.s32 4, %v827
        %v829 = vrot.slane %v808, %v828
        %v830 = vlaneseq
        %v831 = vshrl.u32 %v830, 7
        %v832 = vsub.s32 5, %v831
        %v833 = vrot.slane %v808, %v832
        %v834 = vlaneseq
        %v835 = vshrl.u32 %v834, 7
        %v836 = vsub.s32 6, %v835
        %v837 = vrot.slane %v808, %v836
        %v838 = vlaneseq
        %v839 = vshrl.u32 %v838, 7
        %v840 = vsub.s32 7, %v839
        %v841 = vrot.slane %v808, %v840
        %v850 = vpack.c.bf16 %v813, %v813
        %v851 = vpack.c.bf16 %v817, %v817
        %v852 = vpack.c.bf16 %v821, %v821
        %v853 = vpack.c.bf16 %v825, %v825
        %v854 = vpack.c.bf16 %v829, %v829
        %v855 = vpack.c.bf16 %v833, %v833
        %v856 = vpack.c.bf16 %v837, %v837
        %v857 = vpack.c.bf16 %v841, %v841
        %866 = vrot.lane.b32.xlu0 %v850, 127
        %v867 = vpop.permute.xlu0 %866
        %868 = vrot.lane.b32.xlu0 %v851, 127
        %v869 = vpop.permute.xlu0 %868
        %870 = vrot.lane.b32.xlu0 %v852, 127
        %v871 = vpop.permute.xlu0 %870
        %872 = vrot.lane.b32.xlu0 %v853, 127
        %v873 = vpop.permute.xlu0 %872
        %874 = vrot.lane.b32.xlu0 %v854, 127
        %v875 = vpop.permute.xlu0 %874
        %876 = vrot.lane.b32.xlu0 %v855, 127
        %v877 = vpop.permute.xlu0 %876
        %878 = vrot.lane.b32.xlu0 %v856, 127
        %v879 = vpop.permute.xlu0 %878
        %880 = vrot.lane.b32.xlu0 %v857, 127
        %v881 = vpop.permute.xlu0 %880
        %vm882 = vcmask 1039360
        %v883 = vsel %vm882, %v867, %v869
        %v884 = vsel %vm882, %v869, %v871
        %v885 = vsel %vm882, %v871, %v873
        %v886 = vsel %vm882, %v873, %v875
        %v887 = vsel %vm882, %v875, %v877
        %v888 = vsel %vm882, %v877, %v879
        %v889 = vsel %vm882, %v879, %v881
        %vm898 = vcmask 1040384
        %vm899 = vsmask.f32 256
        %vm900 = vmand %vm898, %vm899
        %v901 = vld [vmem:[#allocation14] sm:$0x1]
        %v902 = vsel %vm900, %v883, %v901
        %903 = vst [vmem:[#allocation14] sm:$0x1] %v902
        %v904 = vld [vmem:[#allocation14 + $0x8] sm:$0x1]
        %v905 = vsel %vm900, %v884, %v904
        %906 = vst [vmem:[#allocation14 + $0x8] sm:$0x1] %v905
        %v907 = vld [vmem:[#allocation14 + $0x10] sm:$0x1]
        %v908 = vsel %vm900, %v885, %v907
        %909 = vst [vmem:[#allocation14 + $0x10] sm:$0x1] %v908
        %v910 = vld [vmem:[#allocation14 + $0x18] sm:$0x1]
        %v911 = vsel %vm900, %v886, %v910
        %912 = vst [vmem:[#allocation14 + $0x18] sm:$0x1] %v911
        %v913 = vld [vmem:[#allocation14 + $0x20] sm:$0x1]
        %v914 = vsel %vm900, %v887, %v913
        %915 = vst [vmem:[#allocation14 + $0x20] sm:$0x1] %v914
        %v916 = vld [vmem:[#allocation14 + $0x28] sm:$0x1]
        %v917 = vsel %vm900, %v888, %v916
        %918 = vst [vmem:[#allocation14 + $0x28] sm:$0x1] %v917
        %v919 = vld [vmem:[#allocation14 + $0x30] sm:$0x1]
        %v920 = vsel %vm900, %v889, %v919
        %921 = vst [vmem:[#allocation14 + $0x30] sm:$0x1] %v920
        %vm922 = vcmask 24576
        %vm923 = vmand %vm922, %vm899
        %v924 = vld [vmem:[#allocation14 + $0x38] sm:$0x1]
        %v925 = vsel %vm923, %v881, %v924
        %926 = vst [vmem:[#allocation14 + $0x38] sm:$0x1] %v925
        %v927 = vld [vmem:[%s760] sm:$0xff]
        %v929 = vlaneseq
        %v930 = vshrl.u32 %v929, 7
        %v931 = vsub.s32 0, %v930
        %v932 = vrot.slane %v927, %v931
        %v933 = vlaneseq
        %v934 = vshrl.u32 %v933, 7
        %v935 = vsub.s32 1, %v934
        %v936 = vrot.slane %v927, %v935
        %v937 = vlaneseq
        %v938 = vshrl.u32 %v937, 7
        %v939 = vsub.s32 2, %v938
        %v940 = vrot.slane %v927, %v939
        %v941 = vlaneseq
        %v942 = vshrl.u32 %v941, 7
        %v943 = vsub.s32 3, %v942
        %v944 = vrot.slane %v927, %v943
        %v945 = vlaneseq
        %v946 = vshrl.u32 %v945, 7
        %v947 = vsub.s32 4, %v946
        %v948 = vrot.slane %v927, %v947
        %v949 = vlaneseq
        %v950 = vshrl.u32 %v949, 7
        %v951 = vsub.s32 5, %v950
        %v952 = vrot.slane %v927, %v951
        %v953 = vlaneseq
        %v954 = vshrl.u32 %v953, 7
        %v955 = vsub.s32 6, %v954
        %v956 = vrot.slane %v927, %v955
        %v957 = vlaneseq
        %v958 = vshrl.u32 %v957, 7
        %v959 = vsub.s32 7, %v958
        %v960 = vrot.slane %v927, %v959
        %v969 = vpack.c.bf16 %v932, %v932
        %v970 = vpack.c.bf16 %v936, %v936
        %v971 = vpack.c.bf16 %v940, %v940
        %v972 = vpack.c.bf16 %v944, %v944
        %v973 = vpack.c.bf16 %v948, %v948
        %v974 = vpack.c.bf16 %v952, %v952
        %v975 = vpack.c.bf16 %v956, %v956
        %v976 = vpack.c.bf16 %v960, %v960
        %v978 = vshll.u32 %v969, 16
        %v981 = vshll.u32 %v970, 16
        %v984 = vshll.u32 %v971, 16
        %v987 = vshll.u32 %v972, 16
        %v990 = vshll.u32 %v973, 16
        %v993 = vshll.u32 %v974, 16
        %v996 = vshll.u32 %v975, 16
        %v999 = vshll.u32 %v976, 16
        %1001 = vrot.lane.b32.xlu0 %v978, 126
        %v1002 = vpop.permute.xlu0 %1001
        %1003 = vrot.lane.b32.xlu0 %v981, 126
        %v1004 = vpop.permute.xlu0 %1003
        %1005 = vrot.lane.b32.xlu0 %v984, 126
        %v1006 = vpop.permute.xlu0 %1005
        %1007 = vrot.lane.b32.xlu0 %v987, 126
        %v1008 = vpop.permute.xlu0 %1007
        %1009 = vrot.lane.b32.xlu0 %v990, 126
        %v1010 = vpop.permute.xlu0 %1009
        %1011 = vrot.lane.b32.xlu0 %v993, 126
        %v1012 = vpop.permute.xlu0 %1011
        %1013 = vrot.lane.b32.xlu0 %v996, 126
        %v1014 = vpop.permute.xlu0 %1013
        %1015 = vrot.lane.b32.xlu0 %v999, 126
        %v1016 = vpop.permute.xlu0 %1015
        %vm1017 = vcmask 1031168
        %v1018 = vsel %vm1017, %v1002, %v1004
        %v1019 = vsel %vm1017, %v1004, %v1006
        %v1020 = vsel %vm1017, %v1006, %v1008
        %v1021 = vsel %vm1017, %v1008, %v1010
        %v1022 = vsel %vm1017, %v1010, %v1012
        %v1023 = vsel %vm1017, %v1012, %v1014
        %v1024 = vsel %vm1017, %v1014, %v1016
        %vm1033 = vsmask.f32 7938
        %vm1034 = vmand %vm898, %vm1033
        %v1035 = vld [vmem:[#allocation14] sm:$0x1]
        %v1036 = vsel %vm1034, %v1018, %v1035
        %1037 = vst [vmem:[#allocation14] sm:$0x1] %v1036
        %v1038 = vld [vmem:[#allocation14 + $0x8] sm:$0x1]
        %v1039 = vsel %vm1034, %v1019, %v1038
        %1040 = vst [vmem:[#allocation14 + $0x8] sm:$0x1] %v1039
        %v1041 = vld [vmem:[#allocation14 + $0x10] sm:$0x1]
        %v1042 = vsel %vm1034, %v1020, %v1041
        %1043 = vst [vmem:[#allocation14 + $0x10] sm:$0x1] %v1042
        %v1044 = vld [vmem:[#allocation14 + $0x18] sm:$0x1]
        %v1045 = vsel %vm1034, %v1021, %v1044
        %1046 = vst [vmem:[#allocation14 + $0x18] sm:$0x1] %v1045
        %v1047 = vld [vmem:[#allocation14 + $0x20] sm:$0x1]
        %v1048 = vsel %vm1034, %v1022, %v1047
        %1049 = vst [vmem:[#allocation14 + $0x20] sm:$0x1] %v1048
        %v1050 = vld [vmem:[#allocation14 + $0x28] sm:$0x1]
        %v1051 = vsel %vm1034, %v1023, %v1050
        %1052 = vst [vmem:[#allocation14 + $0x28] sm:$0x1] %v1051
        %v1053 = vld [vmem:[#allocation14 + $0x30] sm:$0x1]
        %v1054 = vsel %vm1034, %v1024, %v1053
        %1055 = vst [vmem:[#allocation14 + $0x30] sm:$0x1] %v1054
        %vm1056 = vmand %vm922, %vm1033
        %v1057 = vld [vmem:[#allocation14 + $0x38] sm:$0x1]
        %v1058 = vsel %vm1056, %v1016, %v1057
        %1059 = vst [vmem:[#allocation14 + $0x38] sm:$0x1] %v1058
        %v1060 = vld [vmem:[%s760] sm:$0xff]
        %v1062 = vlaneseq
        %v1063 = vshrl.u32 %v1062, 7
        %v1064 = vsub.s32 0, %v1063
        %v1065 = vrot.slane %v1060, %v1064
        %v1066 = vlaneseq
        %v1067 = vshrl.u32 %v1066, 7
        %v1068 = vsub.s32 1, %v1067
        %v1069 = vrot.slane %v1060, %v1068
        %v1070 = vlaneseq
        %v1071 = vshrl.u32 %v1070, 7
        %v1072 = vsub.s32 2, %v1071
        %v1073 = vrot.slane %v1060, %v1072
        %v1074 = vlaneseq
        %v1075 = vshrl.u32 %v1074, 7
        %v1076 = vsub.s32 3, %v1075
        %v1077 = vrot.slane %v1060, %v1076
        %v1078 = vlaneseq
        %v1079 = vshrl.u32 %v1078, 7
        %v1080 = vsub.s32 4, %v1079
        %v1081 = vrot.slane %v1060, %v1080
        %v1082 = vlaneseq
        %v1083 = vshrl.u32 %v1082, 7
        %v1084 = vsub.s32 5, %v1083
        %v1085 = vrot.slane %v1060, %v1084
        %v1086 = vlaneseq
        %v1087 = vshrl.u32 %v1086, 7
        %v1088 = vsub.s32 6, %v1087
        %v1089 = vrot.slane %v1060, %v1088
        %v1090 = vlaneseq
        %v1091 = vshrl.u32 %v1090, 7
        %v1092 = vsub.s32 7, %v1091
        %v1093 = vrot.slane %v1060, %v1092
        %v1102 = vpack.c.bf16 %v1065, %v1065
        %v1103 = vpack.c.bf16 %v1069, %v1069
        %v1104 = vpack.c.bf16 %v1073, %v1073
        %v1105 = vpack.c.bf16 %v1077, %v1077
        %v1106 = vpack.c.bf16 %v1081, %v1081
        %v1107 = vpack.c.bf16 %v1085, %v1085
        %v1108 = vpack.c.bf16 %v1089, %v1089
        %v1109 = vpack.c.bf16 %v1093, %v1093
        %v1118 = vrot.slane %v1102, 7
        %v1119 = vrot.slane %v1103, 7
        %v1120 = vrot.slane %v1104, 7
        %v1121 = vrot.slane %v1105, 7
        %v1122 = vrot.slane %v1106, 7
        %v1123 = vrot.slane %v1107, 7
        %v1124 = vrot.slane %v1108, 7
        %v1125 = vrot.slane %v1109, 7
        %1126 = vrot.lane.b32.xlu0 %v1118, 125
        %v1127 = vpop.permute.xlu0 %1126
        %1128 = vrot.lane.b32.xlu0 %v1119, 125
        %v1129 = vpop.permute.xlu0 %1128
        %1130 = vrot.lane.b32.xlu0 %v1120, 125
        %v1131 = vpop.permute.xlu0 %1130
        %1132 = vrot.lane.b32.xlu0 %v1121, 125
        %v1133 = vpop.permute.xlu0 %1132
        %1134 = vrot.lane.b32.xlu0 %v1122, 125
        %v1135 = vpop.permute.xlu0 %1134
        %1136 = vrot.lane.b32.xlu0 %v1123, 125
        %v1137 = vpop.permute.xlu0 %1136
        %1138 = vrot.lane.b32.xlu0 %v1124, 125
        %v1139 = vpop.permute.xlu0 %1138
        %1140 = vrot.lane.b32.xlu0 %v1125, 125
        %v1141 = vpop.permute.xlu0 %1140
        %vm1142 = vcmask 1022976
        %v1143 = vsel %vm1142, %v1127, %v1129
        %v1144 = vsel %vm1142, %v1129, %v1131
        %v1145 = vsel %vm1142, %v1131, %v1133
        %v1146 = vsel %vm1142, %v1133, %v1135
        %v1147 = vsel %vm1142, %v1135, %v1137
        %v1148 = vsel %vm1142, %v1137, %v1139
        %v1149 = vsel %vm1142, %v1139, %v1141
        %vm1158 = vcmask 1041409
        %vm1159 = vsmask.f32 1280
        %vm1160 = vmand %vm1158, %vm1159
        %v1161 = vld [vmem:[#allocation14] sm:$0x2]
        %v1162 = vsel %vm1160, %v1143, %v1161
        %1163 = vst [vmem:[#allocation14] sm:$0x2] %v1162
        %v1164 = vld [vmem:[#allocation14 + $0x8] sm:$0x2]
        %v1165 = vsel %vm1160, %v1144, %v1164
        %1166 = vst [vmem:[#allocation14 + $0x8] sm:$0x2] %v1165
        %v1167 = vld [vmem:[#allocation14 + $0x10] sm:$0x2]
        %v1168 = vsel %vm1160, %v1145, %v1167
        %1169 = vst [vmem:[#allocation14 + $0x10] sm:$0x2] %v1168
        %v1170 = vld [vmem:[#allocation14 + $0x18] sm:$0x2]
        %v1171 = vsel %vm1160, %v1146, %v1170
        %1172 = vst [vmem:[#allocation14 + $0x18] sm:$0x2] %v1171
        %v1173 = vld [vmem:[#allocation14 + $0x20] sm:$0x2]
        %v1174 = vsel %vm1160, %v1147, %v1173
        %1175 = vst [vmem:[#allocation14 + $0x20] sm:$0x2] %v1174
        %v1176 = vld [vmem:[#allocation14 + $0x28] sm:$0x2]
        %v1177 = vsel %vm1160, %v1148, %v1176
        %1178 = vst [vmem:[#allocation14 + $0x28] sm:$0x2] %v1177
        %v1179 = vld [vmem:[#allocation14 + $0x30] sm:$0x2]
        %v1180 = vsel %vm1160, %v1149, %v1179
        %1181 = vst [vmem:[#allocation14 + $0x30] sm:$0x2] %v1180
        %vm1182 = vcmask 25601
        %vm1183 = vmand %vm1182, %vm1159
        %v1184 = vld [vmem:[#allocation14 + $0x38] sm:$0x2]
        %v1185 = vsel %vm1183, %v1141, %v1184
        %1186 = vst [vmem:[#allocation14 + $0x38] sm:$0x2] %v1185
        %v1187 = vld [vmem:[%s760] sm:$0xff]
        %v1189 = vlaneseq
        %v1190 = vshrl.u32 %v1189, 7
        %v1191 = vsub.s32 0, %v1190
        %v1192 = vrot.slane %v1187, %v1191
        %v1193 = vlaneseq
        %v1194 = vshrl.u32 %v1193, 7
        %v1195 = vsub.s32 1, %v1194
        %v1196 = vrot.slane %v1187, %v1195
        %v1197 = vlaneseq
        %v1198 = vshrl.u32 %v1197, 7
        %v1199 = vsub.s32 2, %v1198
        %v1200 = vrot.slane %v1187, %v1199
        %v1201 = vlaneseq
        %v1202 = vshrl.u32 %v1201, 7
        %v1203 = vsub.s32 3, %v1202
        %v1204 = vrot.slane %v1187, %v1203
        %v1205 = vlaneseq
        %v1206 = vshrl.u32 %v1205, 7
        %v1207 = vsub.s32 4, %v1206
        %v1208 = vrot.slane %v1187, %v1207
        %v1209 = vlaneseq
        %v1210 = vshrl.u32 %v1209, 7
        %v1211 = vsub.s32 5, %v1210
        %v1212 = vrot.slane %v1187, %v1211
        %v1213 = vlaneseq
        %v1214 = vshrl.u32 %v1213, 7
        %v1215 = vsub.s32 6, %v1214
        %v1216 = vrot.slane %v1187, %v1215
        %v1217 = vlaneseq
        %v1218 = vshrl.u32 %v1217, 7
        %v1219 = vsub.s32 7, %v1218
        %v1220 = vrot.slane %v1187, %v1219
        %v1229 = vpack.c.bf16 %v1192, %v1192
        %v1230 = vpack.c.bf16 %v1196, %v1196
        %v1231 = vpack.c.bf16 %v1200, %v1200
        %v1232 = vpack.c.bf16 %v1204, %v1204
        %v1233 = vpack.c.bf16 %v1208, %v1208
        %v1234 = vpack.c.bf16 %v1212, %v1212
        %v1235 = vpack.c.bf16 %v1216, %v1216
        %v1236 = vpack.c.bf16 %v1220, %v1220
        %v1238 = vshll.u32 %v1229, 16
        %v1240 = vrot.slane %v1238, 7
        %v1242 = vshll.u32 %v1230, 16
        %v1244 = vrot.slane %v1242, 7
        %v1246 = vshll.u32 %v1231, 16
        %v1248 = vrot.slane %v1246, 7
        %v1250 = vshll.u32 %v1232, 16
        %v1252 = vrot.slane %v1250, 7
        %v1254 = vshll.u32 %v1233, 16
        %v1256 = vrot.slane %v1254, 7
        %v1258 = vshll.u32 %v1234, 16
        %v1260 = vrot.slane %v1258, 7
        %v1262 = vshll.u32 %v1235, 16
        %v1264 = vrot.slane %v1262, 7
        %v1266 = vshll.u32 %v1236, 16
        %v1268 = vrot.slane %v1266, 7
        %1269 = vrot.lane.b32.xlu0 %v1240, 97
        %v1270 = vpop.permute.xlu0 %1269
        %1271 = vrot.lane.b32.xlu0 %v1244, 97
        %v1272 = vpop.permute.xlu0 %1271
        %1273 = vrot.lane.b32.xlu0 %v1248, 97
        %v1274 = vpop.permute.xlu0 %1273
        %1275 = vrot.lane.b32.xlu0 %v1252, 97
        %v1276 = vpop.permute.xlu0 %1275
        %1277 = vrot.lane.b32.xlu0 %v1256, 97
        %v1278 = vpop.permute.xlu0 %1277
        %1279 = vrot.lane.b32.xlu0 %v1260, 97
        %v1280 = vpop.permute.xlu0 %1279
        %1281 = vrot.lane.b32.xlu0 %v1264, 97
        %v1282 = vpop.permute.xlu0 %1281
        %1283 = vrot.lane.b32.xlu0 %v1268, 97
        %v1284 = vpop.permute.xlu0 %1283
        %vm1285 = vcmask 793600
        %v1286 = vsel %vm1285, %v1270, %v1272
        %v1287 = vsel %vm1285, %v1272, %v1274
        %v1288 = vsel %vm1285, %v1274, %v1276
        %v1289 = vsel %vm1285, %v1276, %v1278
        %v1290 = vsel %vm1285, %v1278, %v1280
        %v1291 = vsel %vm1285, %v1280, %v1282
        %v1292 = vsel %vm1285, %v1282, %v1284
        %vm1301 = vsmask.f32 7942
        %vm1302 = vmand %vm1158, %vm1301
        %v1303 = vld [vmem:[#allocation14] sm:$0x2]
        %v1304 = vsel %vm1302, %v1286, %v1303
        %1305 = vst [vmem:[#allocation14] sm:$0x2] %v1304
        %v1306 = vld [vmem:[#allocation14 + $0x8] sm:$0x2]
        %v1307 = vsel %vm1302, %v1287, %v1306
        %1308 = vst [vmem:[#allocation14 + $0x8] sm:$0x2] %v1307
        %v1309 = vld [vmem:[#allocation14 + $0x10] sm:$0x2]
        %v1310 = vsel %vm1302, %v1288, %v1309
        %1311 = vst [vmem:[#allocation14 + $0x10] sm:$0x2] %v1310
        %v1312 = vld [vmem:[#allocation14 + $0x18] sm:$0x2]
        %v1313 = vsel %vm1302, %v1289, %v1312
        %1314 = vst [vmem:[#allocation14 + $0x18] sm:$0x2] %v1313
        %v1315 = vld [vmem:[#allocation14 + $0x20] sm:$0x2]
        %v1316 = vsel %vm1302, %v1290, %v1315
        %1317 = vst [vmem:[#allocation14 + $0x20] sm:$0x2] %v1316
        %v1318 = vld [vmem:[#allocation14 + $0x28] sm:$0x2]
        %v1319 = vsel %vm1302, %v1291, %v1318
        %1320 = vst [vmem:[#allocation14 + $0x28] sm:$0x2] %v1319
        %v1321 = vld [vmem:[#allocation14 + $0x30] sm:$0x2]
        %v1322 = vsel %vm1302, %v1292, %v1321
        %1323 = vst [vmem:[#allocation14 + $0x30] sm:$0x2] %v1322
        %vm1324 = vmand %vm1182, %vm1301
        %v1325 = vld [vmem:[#allocation14 + $0x38] sm:$0x2]
        %v1326 = vsel %vm1324, %v1284, %v1325
        %1327 = vst [vmem:[#allocation14 + $0x38] sm:$0x2] %v1326
        %v1328 = vld [vmem:[%s760] sm:$0xff]
        %v1330 = vlaneseq
        %v1331 = vshrl.u32 %v1330, 7
        %v1332 = vsub.s32 0, %v1331
        %v1333 = vrot.slane %v1328, %v1332
        %v1334 = vlaneseq
        %v1335 = vshrl.u32 %v1334, 7
        %v1336 = vsub.s32 1, %v1335
        %v1337 = vrot.slane %v1328, %v1336
        %v1338 = vlaneseq
        %v1339 = vshrl.u32 %v1338, 7
        %v1340 = vsub.s32 2, %v1339
        %v1341 = vrot.slane %v1328, %v1340
        %v1342 = vlaneseq
        %v1343 = vshrl.u32 %v1342, 7
        %v1344 = vsub.s32 3, %v1343
        %v1345 = vrot.slane %v1328, %v1344
        %v1346 = vlaneseq
        %v1347 = vshrl.u32 %v1346, 7
        %v1348 = vsub.s32 4, %v1347
        %v1349 = vrot.slane %v1328, %v1348
        %v1350 = vlaneseq
        %v1351 = vshrl.u32 %v1350, 7
        %v1352 = vsub.s32 5, %v1351
        %v1353 = vrot.slane %v1328, %v1352
        %v1354 = vlaneseq
        %v1355 = vshrl.u32 %v1354, 7
        %v1356 = vsub.s32 6, %v1355
        %v1357 = vrot.slane %v1328, %v1356
        %v1358 = vlaneseq
        %v1359 = vshrl.u32 %v1358, 7
        %v1360 = vsub.s32 7, %v1359
        %v1361 = vrot.slane %v1328, %v1360
        %v1370 = vpack.c.bf16 %v1333, %v1333
        %v1371 = vpack.c.bf16 %v1337, %v1337
        %v1372 = vpack.c.bf16 %v1341, %v1341
        %v1373 = vpack.c.bf16 %v1345, %v1345
        %v1374 = vpack.c.bf16 %v1349, %v1349
        %v1375 = vpack.c.bf16 %v1353, %v1353
        %v1376 = vpack.c.bf16 %v1357, %v1357
        %v1377 = vpack.c.bf16 %v1361, %v1361
        %v1386 = vrot.slane %v1370, 6
        %v1387 = vrot.slane %v1371, 6
        %v1388 = vrot.slane %v1372, 6
        %v1389 = vrot.slane %v1373, 6
        %v1390 = vrot.slane %v1374, 6
        %v1391 = vrot.slane %v1375, 6
        %v1392 = vrot.slane %v1376, 6
        %v1393 = vrot.slane %v1377, 6
        %1394 = vrot.lane.b32.xlu0 %v1386, 96
        %v1395 = vpop.permute.xlu0 %1394
        %1396 = vrot.lane.b32.xlu0 %v1387, 96
        %v1397 = vpop.permute.xlu0 %1396
        %1398 = vrot.lane.b32.xlu0 %v1388, 96
        %v1399 = vpop.permute.xlu0 %1398
        %1400 = vrot.lane.b32.xlu0 %v1389, 96
        %v1401 = vpop.permute.xlu0 %1400
        %1402 = vrot.lane.b32.xlu0 %v1390, 96
        %v1403 = vpop.permute.xlu0 %1402
        %1404 = vrot.lane.b32.xlu0 %v1391, 96
        %v1405 = vpop.permute.xlu0 %1404
        %1406 = vrot.lane.b32.xlu0 %v1392, 96
        %v1407 = vpop.permute.xlu0 %1406
        %1408 = vrot.lane.b32.xlu0 %v1393, 96
        %v1409 = vpop.permute.xlu0 %1408
        %vm1410 = vcmask 785408
        %v1411 = vsel %vm1410, %v1395, %v1397
        %v1412 = vsel %vm1410, %v1397, %v1399
        %v1413 = vsel %vm1410, %v1399, %v1401
        %v1414 = vsel %vm1410, %v1401, %v1403
        %v1415 = vsel %vm1410, %v1403, %v1405
        %v1416 = vsel %vm1410, %v1405, %v1407
        %v1417 = vsel %vm1410, %v1407, %v1409
        %vm1426 = vcmask 1042434
        %vm1427 = vsmask.f32 2304
        %vm1428 = vmand %vm1426, %vm1427
        %v1429 = vld [vmem:[#allocation14] sm:$0x4]
        %v1430 = vsel %vm1428, %v1411, %v1429
        %1431 = vst [vmem:[#allocation14] sm:$0x4] %v1430
        %v1432 = vld [vmem:[#allocation14 + $0x8] sm:$0x4]
        %v1433 = vsel %vm1428, %v1412, %v1432
        %1434 = vst [vmem:[#allocation14 + $0x8] sm:$0x4] %v1433
        %v1435 = vld [vmem:[#allocation14 + $0x10] sm:$0x4]
        %v1436 = vsel %vm1428, %v1413, %v1435
        %1437 = vst [vmem:[#allocation14 + $0x10] sm:$0x4] %v1436
        %v1438 = vld [vmem:[#allocation14 + $0x18] sm:$0x4]
        %v1439 = vsel %vm1428, %v1414, %v1438
        %1440 = vst [vmem:[#allocation14 + $0x18] sm:$0x4] %v1439
        %v1441 = vld [vmem:[#allocation14 + $0x20] sm:$0x4]
        %v1442 = vsel %vm1428, %v1415, %v1441
        %1443 = vst [vmem:[#allocation14 + $0x20] sm:$0x4] %v1442
        %v1444 = vld [vmem:[#allocation14 + $0x28] sm:$0x4]
        %v1445 = vsel %vm1428, %v1416, %v1444
        %1446 = vst [vmem:[#allocation14 + $0x28] sm:$0x4] %v1445
        %v1447 = vld [vmem:[#allocation14 + $0x30] sm:$0x4]
        %v1448 = vsel %vm1428, %v1417, %v1447
        %1449 = vst [vmem:[#allocation14 + $0x30] sm:$0x4] %v1448
        %vm1450 = vcmask 26626
        %vm1451 = vmand %vm1450, %vm1427
        %v1452 = vld [vmem:[#allocation14 + $0x38] sm:$0x4]
        %v1453 = vsel %vm1451, %v1409, %v1452
        %1454 = vst [vmem:[#allocation14 + $0x38] sm:$0x4] %v1453
        %v1455 = vld [vmem:[%s760] sm:$0xff]
        %v1457 = vlaneseq
        %v1458 = vshrl.u32 %v1457, 7
        %v1459 = vsub.s32 0, %v1458
        %v1460 = vrot.slane %v1455, %v1459
        %v1461 = vlaneseq
        %v1462 = vshrl.u32 %v1461, 7
        %v1463 = vsub.s32 1, %v1462
        %v1464 = vrot.slane %v1455, %v1463
        %v1465 = vlaneseq
        %v1466 = vshrl.u32 %v1465, 7
        %v1467 = vsub.s32 2, %v1466
        %v1468 = vrot.slane %v1455, %v1467
        %v1469 = vlaneseq
        %v1470 = vshrl.u32 %v1469, 7
        %v1471 = vsub.s32 3, %v1470
        %v1472 = vrot.slane %v1455, %v1471
        %v1473 = vlaneseq
        %v1474 = vshrl.u32 %v1473, 7
        %v1475 = vsub.s32 4, %v1474
        %v1476 = vrot.slane %v1455, %v1475
        %v1477 = vlaneseq
        %v1478 = vshrl.u32 %v1477, 7
        %v1479 = vsub.s32 5, %v1478
        %v1480 = vrot.slane %v1455, %v1479
        %v1481 = vlaneseq
        %v1482 = vshrl.u32 %v1481, 7
        %v1483 = vsub.s32 6, %v1482
        %v1484 = vrot.slane %v1455, %v1483
        %v1485 = vlaneseq
        %v1486 = vshrl.u32 %v1485, 7
        %v1487 = vsub.s32 7, %v1486
        %v1488 = vrot.slane %v1455, %v1487
        %v1497 = vpack.c.bf16 %v1460, %v1460
        %v1498 = vpack.c.bf16 %v1464, %v1464
        %v1499 = vpack.c.bf16 %v1468, %v1468
        %v1500 = vpack.c.bf16 %v1472, %v1472
        %v1501 = vpack.c.bf16 %v1476, %v1476
        %v1502 = vpack.c.bf16 %v1480, %v1480
        %v1503 = vpack.c.bf16 %v1484, %v1484
        %v1504 = vpack.c.bf16 %v1488, %v1488
        %v1506 = vshll.u32 %v1497, 16
        %v1508 = vrot.slane %v1506, 6
        %v1510 = vshll.u32 %v1498, 16
        %v1512 = vrot.slane %v1510, 6
        %v1514 = vshll.u32 %v1499, 16
        %v1516 = vrot.slane %v1514, 6
        %v1518 = vshll.u32 %v1500, 16
        %v1520 = vrot.slane %v1518, 6
        %v1522 = vshll.u32 %v1501, 16
        %v1524 = vrot.slane %v1522, 6
        %v1526 = vshll.u32 %v1502, 16
        %v1528 = vrot.slane %v1526, 6
        %v1530 = vshll.u32 %v1503, 16
        %v1532 = vrot.slane %v1530, 6
        %v1534 = vshll.u32 %v1504, 16
        %v1536 = vrot.slane %v1534, 6
        %1537 = vrot.lane.b32.xlu0 %v1508, 95
        %v1538 = vpop.permute.xlu0 %1537
        %1539 = vrot.lane.b32.xlu0 %v1512, 95
        %v1540 = vpop.permute.xlu0 %1539
        %1541 = vrot.lane.b32.xlu0 %v1516, 95
        %v1542 = vpop.permute.xlu0 %1541
        %1543 = vrot.lane.b32.xlu0 %v1520, 95
        %v1544 = vpop.permute.xlu0 %1543
        %1545 = vrot.lane.b32.xlu0 %v1524, 95
        %v1546 = vpop.permute.xlu0 %1545
        %1547 = vrot.lane.b32.xlu0 %v1528, 95
        %v1548 = vpop.permute.xlu0 %1547
        %1549 = vrot.lane.b32.xlu0 %v1532, 95
        %v1550 = vpop.permute.xlu0 %1549
        %1551 = vrot.lane.b32.xlu0 %v1536, 95
        %v1552 = vpop.permute.xlu0 %1551
        %vm1553 = vcmask 777216
        %v1554 = vsel %vm1553, %v1538, %v1540
        %v1555 = vsel %vm1553, %v1540, %v1542
        %v1556 = vsel %vm1553, %v1542, %v1544
        %v1557 = vsel %vm1553, %v1544, %v1546
        %v1558 = vsel %vm1553, %v1546, %v1548
        %v1559 = vsel %vm1553, %v1548, %v1550
        %v1560 = vsel %vm1553, %v1550, %v1552
        %vm1569 = vsmask.f32 7946
        %vm1570 = vmand %vm1426, %vm1569
        %v1571 = vld [vmem:[#allocation14] sm:$0x4]
        %v1572 = vsel %vm1570, %v1554, %v1571
        %1573 = vst [vmem:[#allocation14] sm:$0x4] %v1572
        %v1574 = vld [vmem:[#allocation14 + $0x8] sm:$0x4]
        %v1575 = vsel %vm1570, %v1555, %v1574
        %1576 = vst [vmem:[#allocation14 + $0x8] sm:$0x4] %v1575
        %v1577 = vld [vmem:[#allocation14 + $0x10] sm:$0x4]
        %v1578 = vsel %vm1570, %v1556, %v1577
        %1579 = vst [vmem:[#allocation14 + $0x10] sm:$0x4] %v1578
        %v1580 = vld [vmem:[#allocation14 + $0x18] sm:$0x4]
        %v1581 = vsel %vm1570, %v1557, %v1580
        %1582 = vst [vmem:[#allocation14 + $0x18] sm:$0x4] %v1581
        %v1583 = vld [vmem:[#allocation14 + $0x20] sm:$0x4]
        %v1584 = vsel %vm1570, %v1558, %v1583
        %1585 = vst [vmem:[#allocation14 + $0x20] sm:$0x4] %v1584
        %v1586 = vld [vmem:[#allocation14 + $0x28] sm:$0x4]
        %v1587 = vsel %vm1570, %v1559, %v1586
        %1588 = vst [vmem:[#allocation14 + $0x28] sm:$0x4] %v1587
        %v1589 = vld [vmem:[#allocation14 + $0x30] sm:$0x4]
        %v1590 = vsel %vm1570, %v1560, %v1589
        %1591 = vst [vmem:[#allocation14 + $0x30] sm:$0x4] %v1590
        %vm1592 = vmand %vm1450, %vm1569
        %v1593 = vld [vmem:[#allocation14 + $0x38] sm:$0x4]
        %v1594 = vsel %vm1592, %v1552, %v1593
        %1595 = vst [vmem:[#allocation14 + $0x38] sm:$0x4] %v1594
        %v1596 = vld [vmem:[%s760] sm:$0xff]
        %v1598 = vlaneseq
        %v1599 = vshrl.u32 %v1598, 7
        %v1600 = vsub.s32 0, %v1599
        %v1601 = vrot.slane %v1596, %v1600
        %v1602 = vlaneseq
        %v1603 = vshrl.u32 %v1602, 7
        %v1604 = vsub.s32 1, %v1603
        %v1605 = vrot.slane %v1596, %v1604
        %v1606 = vlaneseq
        %v1607 = vshrl.u32 %v1606, 7
        %v1608 = vsub.s32 2, %v1607
        %v1609 = vrot.slane %v1596, %v1608
        %v1610 = vlaneseq
        %v1611 = vshrl.u32 %v1610, 7
        %v1612 = vsub.s32 3, %v1611
        %v1613 = vrot.slane %v1596, %v1612
        %v1614 = vlaneseq
        %v1615 = vshrl.u32 %v1614, 7
        %v1616 = vsub.s32 4, %v1615
        %v1617 = vrot.slane %v1596, %v1616
        %v1618 = vlaneseq
        %v1619 = vshrl.u32 %v1618, 7
        %v1620 = vsub.s32 5, %v1619
        %v1621 = vrot.slane %v1596, %v1620
        %v1622 = vlaneseq
        %v1623 = vshrl.u32 %v1622, 7
        %v1624 = vsub.s32 6, %v1623
        %v1625 = vrot.slane %v1596, %v1624
        %v1626 = vlaneseq
        %v1627 = vshrl.u32 %v1626, 7
        %v1628 = vsub.s32 7, %v1627
        %v1629 = vrot.slane %v1596, %v1628
        %v1638 = vpack.c.bf16 %v1601, %v1601
        %v1639 = vpack.c.bf16 %v1605, %v1605
        %v1640 = vpack.c.bf16 %v1609, %v1609
        %v1641 = vpack.c.bf16 %v1613, %v1613
        %v1642 = vpack.c.bf16 %v1617, %v1617
        %v1643 = vpack.c.bf16 %v1621, %v1621
        %v1644 = vpack.c.bf16 %v1625, %v1625
        %v1645 = vpack.c.bf16 %v1629, %v1629
        %v1654 = vrot.slane %v1638, 5
        %v1655 = vrot.slane %v1639, 5
        %v1656 = vrot.slane %v1640, 5
        %v1657 = vrot.slane %v1641, 5
        %v1658 = vrot.slane %v1642, 5
        %v1659 = vrot.slane %v1643, 5
        %v1660 = vrot.slane %v1644, 5
        %v1661 = vrot.slane %v1645, 5
        %1662 = vrot.lane.b32.xlu0 %v1654, 67
        %v1663 = vpop.permute.xlu0 %1662
        %1664 = vrot.lane.b32.xlu0 %v1655, 67
        %v1665 = vpop.permute.xlu0 %1664
        %1666 = vrot.lane.b32.xlu0 %v1656, 67
        %v1667 = vpop.permute.xlu0 %1666
        %1668 = vrot.lane.b32.xlu0 %v1657, 67
        %v1669 = vpop.permute.xlu0 %1668
        %1670 = vrot.lane.b32.xlu0 %v1658, 67
        %v1671 = vpop.permute.xlu0 %1670
        %1672 = vrot.lane.b32.xlu0 %v1659, 67
        %v1673 = vpop.permute.xlu0 %1672
        %1674 = vrot.lane.b32.xlu0 %v1660, 67
        %v1675 = vpop.permute.xlu0 %1674
        %1676 = vrot.lane.b32.xlu0 %v1661, 67
        %v1677 = vpop.permute.xlu0 %1676
        %vm1678 = vcmask 547840
        %v1679 = vsel %vm1678, %v1663, %v1665
        %v1680 = vsel %vm1678, %v1665, %v1667
        %v1681 = vsel %vm1678, %v1667, %v1669
        %v1682 = vsel %vm1678, %v1669, %v1671
        %v1683 = vsel %vm1678, %v1671, %v1673
        %v1684 = vsel %vm1678, %v1673, %v1675
        %v1685 = vsel %vm1678, %v1675, %v1677
        %vm1694 = vcmask 1043459
        %vm1695 = vsmask.f32 3328
        %vm1696 = vmand %vm1694, %vm1695
        %v1697 = vld [vmem:[#allocation14] sm:$0x8]
        %v1698 = vsel %vm1696, %v1679, %v1697
        %1699 = vst [vmem:[#allocation14] sm:$0x8] %v1698
        %v1700 = vld [vmem:[#allocation14 + $0x8] sm:$0x8]
        %v1701 = vsel %vm1696, %v1680, %v1700
        %1702 = vst [vmem:[#allocation14 + $0x8] sm:$0x8] %v1701
        %v1703 = vld [vmem:[#allocation14 + $0x10] sm:$0x8]
        %v1704 = vsel %vm1696, %v1681, %v1703
        %1705 = vst [vmem:[#allocation14 + $0x10] sm:$0x8] %v1704
        %v1706 = vld [vmem:[#allocation14 + $0x18] sm:$0x8]
        %v1707 = vsel %vm1696, %v1682, %v1706
        %1708 = vst [vmem:[#allocation14 + $0x18] sm:$0x8] %v1707
        %v1709 = vld [vmem:[#allocation14 + $0x20] sm:$0x8]
        %v1710 = vsel %vm1696, %v1683, %v1709
        %1711 = vst [vmem:[#allocation14 + $0x20] sm:$0x8] %v1710
        %v1712 = vld [vmem:[#allocation14 + $0x28] sm:$0x8]
        %v1713 = vsel %vm1696, %v1684, %v1712
        %1714 = vst [vmem:[#allocation14 + $0x28] sm:$0x8] %v1713
        %v1715 = vld [vmem:[#allocation14 + $0x30] sm:$0x8]
        %v1716 = vsel %vm1696, %v1685, %v1715
        %1717 = vst [vmem:[#allocation14 + $0x30] sm:$0x8] %v1716
        %vm1718 = vcmask 27651
        %vm1719 = vmand %vm1718, %vm1695
        %v1720 = vld [vmem:[#allocation14 + $0x38] sm:$0x8]
        %v1721 = vsel %vm1719, %v1677, %v1720
        %1722 = vst [vmem:[#allocation14 + $0x38] sm:$0x8] %v1721
        %v1723 = vld [vmem:[%s760] sm:$0xff]
        %v1725 = vlaneseq
        %v1726 = vshrl.u32 %v1725, 7
        %v1727 = vsub.s32 0, %v1726
        %v1728 = vrot.slane %v1723, %v1727
        %v1729 = vlaneseq
        %v1730 = vshrl.u32 %v1729, 7
        %v1731 = vsub.s32 1, %v1730
        %v1732 = vrot.slane %v1723, %v1731
        %v1733 = vlaneseq
        %v1734 = vshrl.u32 %v1733, 7
        %v1735 = vsub.s32 2, %v1734
        %v1736 = vrot.slane %v1723, %v1735
        %v1737 = vlaneseq
        %v1738 = vshrl.u32 %v1737, 7
        %v1739 = vsub.s32 3, %v1738
        %v1740 = vrot.slane %v1723, %v1739
        %v1741 = vlaneseq
        %v1742 = vshrl.u32 %v1741, 7
        %v1743 = vsub.s32 4, %v1742
        %v1744 = vrot.slane %v1723, %v1743
        %v1745 = vlaneseq
        %v1746 = vshrl.u32 %v1745, 7
        %v1747 = vsub.s32 5, %v1746
        %v1748 = vrot.slane %v1723, %v1747
        %v1749 = vlaneseq
        %v1750 = vshrl.u32 %v1749, 7
        %v1751 = vsub.s32 6, %v1750
        %v1752 = vrot.slane %v1723, %v1751
        %v1753 = vlaneseq
        %v1754 = vshrl.u32 %v1753, 7
        %v1755 = vsub.s32 7, %v1754
        %v1756 = vrot.slane %v1723, %v1755
        %v1765 = vpack.c.bf16 %v1728, %v1728
        %v1766 = vpack.c.bf16 %v1732, %v1732
        %v1767 = vpack.c.bf16 %v1736, %v1736
        %v1768 = vpack.c.bf16 %v1740, %v1740
        %v1769 = vpack.c.bf16 %v1744, %v1744
        %v1770 = vpack.c.bf16 %v1748, %v1748
        %v1771 = vpack.c.bf16 %v1752, %v1752
        %v1772 = vpack.c.bf16 %v1756, %v1756
        %v1774 = vshll.u32 %v1765, 16
        %v1776 = vrot.slane %v1774, 5
        %v1778 = vshll.u32 %v1766, 16
        %v1780 = vrot.slane %v1778, 5
        %v1782 = vshll.u32 %v1767, 16
        %v1784 = vrot.slane %v1782, 5
        %v1786 = vshll.u32 %v1768, 16
        %v1788 = vrot.slane %v1786, 5
        %v1790 = vshll.u32 %v1769, 16
        %v1792 = vrot.slane %v1790, 5
        %v1794 = vshll.u32 %v1770, 16
        %v1796 = vrot.slane %v1794, 5
        %v1798 = vshll.u32 %v1771, 16
        %v1800 = vrot.slane %v1798, 5
        %v1802 = vshll.u32 %v1772, 16
        %v1804 = vrot.slane %v1802, 5
        %1805 = vrot.lane.b32.xlu0 %v1776, 66
        %v1806 = vpop.permute.xlu0 %1805
        %1807 = vrot.lane.b32.xlu0 %v1780, 66
        %v1808 = vpop.permute.xlu0 %1807
        %1809 = vrot.lane.b32.xlu0 %v1784, 66
        %v1810 = vpop.permute.xlu0 %1809
        %1811 = vrot.lane.b32.xlu0 %v1788, 66
        %v1812 = vpop.permute.xlu0 %1811
        %1813 = vrot.lane.b32.xlu0 %v1792, 66
        %v1814 = vpop.permute.xlu0 %1813
        %1815 = vrot.lane.b32.xlu0 %v1796, 66
        %v1816 = vpop.permute.xlu0 %1815
        %1817 = vrot.lane.b32.xlu0 %v1800, 66
        %v1818 = vpop.permute.xlu0 %1817
        %1819 = vrot.lane.b32.xlu0 %v1804, 66
        %v1820 = vpop.permute.xlu0 %1819
        %vm1821 = vcmask 539648
        %v1822 = vsel %vm1821, %v1806, %v1808
        %v1823 = vsel %vm1821, %v1808, %v1810
        %v1824 = vsel %vm1821, %v1810, %v1812
        %v1825 = vsel %vm1821, %v1812, %v1814
        %v1826 = vsel %vm1821, %v1814, %v1816
        %v1827 = vsel %vm1821, %v1816, %v1818
        %v1828 = vsel %vm1821, %v1818, %v1820
        %vm1837 = vsmask.f32 7950
        %vm1838 = vmand %vm1694, %vm1837
        %v1839 = vld [vmem:[#allocation14] sm:$0x8]
        %v1840 = vsel %vm1838, %v1822, %v1839
        %1841 = vst [vmem:[#allocation14] sm:$0x8] %v1840
        %v1842 = vld [vmem:[#allocation14 + $0x8] sm:$0x8]
        %v1843 = vsel %vm1838, %v1823, %v1842
        %1844 = vst [vmem:[#allocation14 + $0x8] sm:$0x8] %v1843
        %v1845 = vld [vmem:[#allocation14 + $0x10] sm:$0x8]
        %v1846 = vsel %vm1838, %v1824, %v1845
        %1847 = vst [vmem:[#allocation14 + $0x10] sm:$0x8] %v1846
        %v1848 = vld [vmem:[#allocation14 + $0x18] sm:$0x8]
        %v1849 = vsel %vm1838, %v1825, %v1848
        %1850 = vst [vmem:[#allocation14 + $0x18] sm:$0x8] %v1849
        %v1851 = vld [vmem:[#allocation14 + $0x20] sm:$0x8]
        %v1852 = vsel %vm1838, %v1826, %v1851
        %1853 = vst [vmem:[#allocation14 + $0x20] sm:$0x8] %v1852
        %v1854 = vld [vmem:[#allocation14 + $0x28] sm:$0x8]
        %v1855 = vsel %vm1838, %v1827, %v1854
        %1856 = vst [vmem:[#allocation14 + $0x28] sm:$0x8] %v1855
        %v1857 = vld [vmem:[#allocation14 + $0x30] sm:$0x8]
        %v1858 = vsel %vm1838, %v1828, %v1857
        %1859 = vst [vmem:[#allocation14 + $0x30] sm:$0x8] %v1858
        %vm1860 = vmand %vm1718, %vm1837
        %v1861 = vld [vmem:[#allocation14 + $0x38] sm:$0x8]
        %v1862 = vsel %vm1860, %v1820, %v1861
        %1863 = vst [vmem:[#allocation14 + $0x38] sm:$0x8] %v1862
        %v1864 = vld [vmem:[%s760] sm:$0xff]
        %v1866 = vlaneseq
        %v1867 = vshrl.u32 %v1866, 7
        %v1868 = vsub.s32 0, %v1867
        %v1869 = vrot.slane %v1864, %v1868
        %v1870 = vlaneseq
        %v1871 = vshrl.u32 %v1870, 7
        %v1872 = vsub.s32 1, %v1871
        %v1873 = vrot.slane %v1864, %v1872
        %v1874 = vlaneseq
        %v1875 = vshrl.u32 %v1874, 7
        %v1876 = vsub.s32 2, %v1875
        %v1877 = vrot.slane %v1864, %v1876
        %v1878 = vlaneseq
        %v1879 = vshrl.u32 %v1878, 7
        %v1880 = vsub.s32 3, %v1879
        %v1881 = vrot.slane %v1864, %v1880
        %v1882 = vlaneseq
        %v1883 = vshrl.u32 %v1882, 7
        %v1884 = vsub.s32 4, %v1883
        %v1885 = vrot.slane %v1864, %v1884
        %v1886 = vlaneseq
        %v1887 = vshrl.u32 %v1886, 7
        %v1888 = vsub.s32 5, %v1887
        %v1889 = vrot.slane %v1864, %v1888
        %v1890 = vlaneseq
        %v1891 = vshrl.u32 %v1890, 7
        %v1892 = vsub.s32 6, %v1891
        %v1893 = vrot.slane %v1864, %v1892
        %v1894 = vlaneseq
        %v1895 = vshrl.u32 %v1894, 7
        %v1896 = vsub.s32 7, %v1895
        %v1897 = vrot.slane %v1864, %v1896
        %v1906 = vpack.c.bf16 %v1869, %v1869
        %v1907 = vpack.c.bf16 %v1873, %v1873
        %v1908 = vpack.c.bf16 %v1877, %v1877
        %v1909 = vpack.c.bf16 %v1881, %v1881
        %v1910 = vpack.c.bf16 %v1885, %v1885
        %v1911 = vpack.c.bf16 %v1889, %v1889
        %v1912 = vpack.c.bf16 %v1893, %v1893
        %v1913 = vpack.c.bf16 %v1897, %v1897
        %v1922 = vrot.slane %v1906, 4
        %v1923 = vrot.slane %v1907, 4
        %v1924 = vrot.slane %v1908, 4
        %v1925 = vrot.slane %v1909, 4
        %v1926 = vrot.slane %v1910, 4
        %v1927 = vrot.slane %v1911, 4
        %v1928 = vrot.slane %v1912, 4
        %v1929 = vrot.slane %v1913, 4
        %1930 = vrot.lane.b32.xlu0 %v1922, 65
        %v1931 = vpop.permute.xlu0 %1930
        %1932 = vrot.lane.b32.xlu0 %v1923, 65
        %v1933 = vpop.permute.xlu0 %1932
        %1934 = vrot.lane.b32.xlu0 %v1924, 65
        %v1935 = vpop.permute.xlu0 %1934
        %1936 = vrot.lane.b32.xlu0 %v1925, 65
        %v1937 = vpop.permute.xlu0 %1936
        %1938 = vrot.lane.b32.xlu0 %v1926, 65
        %v1939 = vpop.permute.xlu0 %1938
        %1940 = vrot.lane.b32.xlu0 %v1927, 65
        %v1941 = vpop.permute.xlu0 %1940
        %1942 = vrot.lane.b32.xlu0 %v1928, 65
        %v1943 = vpop.permute.xlu0 %1942
        %1944 = vrot.lane.b32.xlu0 %v1929, 65
        %v1945 = vpop.permute.xlu0 %1944
        %vm1946 = vcmask 531456
        %v1947 = vsel %vm1946, %v1931, %v1933
        %v1948 = vsel %vm1946, %v1933, %v1935
        %v1949 = vsel %vm1946, %v1935, %v1937
        %v1950 = vsel %vm1946, %v1937, %v1939
        %v1951 = vsel %vm1946, %v1939, %v1941
        %v1952 = vsel %vm1946, %v1941, %v1943
        %v1953 = vsel %vm1946, %v1943, %v1945
        %vm1962 = vcmask 1044484
        %vm1963 = vsmask.f32 4352
        %vm1964 = vmand %vm1962, %vm1963
        %v1965 = vld [vmem:[#allocation14] sm:$0x10]
        %v1966 = vsel %vm1964, %v1947, %v1965
        %1967 = vst [vmem:[#allocation14] sm:$0x10] %v1966
        %v1968 = vld [vmem:[#allocation14 + $0x8] sm:$0x10]
        %v1969 = vsel %vm1964, %v1948, %v1968
        %1970 = vst [vmem:[#allocation14 + $0x8] sm:$0x10] %v1969
        %v1971 = vld [vmem:[#allocation14 + $0x10] sm:$0x10]
        %v1972 = vsel %vm1964, %v1949, %v1971
        %1973 = vst [vmem:[#allocation14 + $0x10] sm:$0x10] %v1972
        %v1974 = vld [vmem:[#allocation14 + $0x18] sm:$0x10]
        %v1975 = vsel %vm1964, %v1950, %v1974
        %1976 = vst [vmem:[#allocation14 + $0x18] sm:$0x10] %v1975
        %v1977 = vld [vmem:[#allocation14 + $0x20] sm:$0x10]
        %v1978 = vsel %vm1964, %v1951, %v1977
        %1979 = vst [vmem:[#allocation14 + $0x20] sm:$0x10] %v1978
        %v1980 = vld [vmem:[#allocation14 + $0x28] sm:$0x10]
        %v1981 = vsel %vm1964, %v1952, %v1980
        %1982 = vst [vmem:[#allocation14 + $0x28] sm:$0x10] %v1981
        %v1983 = vld [vmem:[#allocation14 + $0x30] sm:$0x10]
        %v1984 = vsel %vm1964, %v1953, %v1983
        %1985 = vst [vmem:[#allocation14 + $0x30] sm:$0x10] %v1984
        %vm1986 = vcmask 28676
        %vm1987 = vmand %vm1986, %vm1963
        %v1988 = vld [vmem:[#allocation14 + $0x38] sm:$0x10]
        %v1989 = vsel %vm1987, %v1945, %v1988
        %1990 = vst [vmem:[#allocation14 + $0x38] sm:$0x10] %v1989
        %v1991 = vld [vmem:[%s1] sm:$0xf]
        %v1992 = vld [vmem:[%s1 + $0x4] sm:$0xf]
        %v1993 = vld [vmem:[#allocation14] sm:$0x1f]
        %v1994 = vld [vmem:[#allocation14 + $0x8] sm:$0x1f]
        %v1995 = vld [vmem:[#allocation14 + $0x10] sm:$0x1f]
        %v1996 = vld [vmem:[#allocation14 + $0x18] sm:$0x1f]
        %v1997 = vld [vmem:[#allocation14 + $0x20] sm:$0x1f]
        %v1998 = vld [vmem:[#allocation14 + $0x28] sm:$0x1f]
        %v1999 = vld [vmem:[#allocation14 + $0x30] sm:$0x1f]
        %v2000 = vld [vmem:[#allocation14 + $0x38] sm:$0x1f]
        %v2001 = vld [vmem:[%s8] sm:$0xff]
        %v2002 = vld [vmem:[%s8 + $0x8] sm:$0xff]
        %2004 = vset.pattern.permute.xlu0 0
        %2005 = vperm.xlu0 %2004, %v2001
        %v2006 = vpop.permute.xlu0 %2005
        %2009 = vset.pattern.permute.xlu0 0
        %2010 = vperm.xlu0 %2009, %v2002
        %v2011 = vpop.permute.xlu0 %2010
        %v2015 = vunpack.c.l.b16 %v1991
        %v2016 = vunpack.c.l.b16 %v1992
        %v2017 = vpack.c.b16 %v2016, %v2015
        %vm2018 = vcmask 72704
        %v2020 = vsel %vm2018, %v2017, 0
        %vm2022 = vcmask 1043456
        %vm2023 = vcmask 1044480
        %v2024 = vsel %vm2022, 4294967295, 65535
        %v2025 = vsel %vm2023, %v2024, 0
        %v2027 = vand.u32 %v1993, %v2025
        %v2030 = vand.u32 %v1994, %v2025
        %v2033 = vand.u32 %v1995, %v2025
        %v2036 = vand.u32 %v1996, %v2025
        %v2039 = vand.u32 %v1997, %v2025
        %v2042 = vand.u32 %v1998, %v2025
        %v2045 = vand.u32 %v1999, %v2025
        %v2048 = vand.u32 %v2000, %v2025
        %2050 = vmatprep.subr.bf16.mxu0 %v2030
        %2051 = vmatpush1.bf16.msra.mxu0 %v2027
        %2052 = vmatprep.subr.bf16.mxu0 0
        %2053 = vmatpush1.bf16.msra.mxu0 0
        %2054 = vmatprep.subr.bf16.mxu0 0
        %2055 = vmatpush1.bf16.msra.mxu0 0
        %2056 = vmatprep.subr.bf16.mxu0 0
        %2057 = vmatpush1.bf16.msra.mxu0 0
        %2058 = vmatprep.subr.bf16.mxu0 0
        %2059 = vmatpush1.bf16.msra.mxu0 0
        %2060 = vmatprep.subr.bf16.mxu0 0
        %2061 = vmatpush1.bf16.msra.mxu0 0
        %2062 = vmatprep.subr.bf16.mxu0 0
        %2063 = vmatpush1.bf16.msra.mxu0 0
        %2064 = vmatprep.subr.bf16.mxu0 0
        %2065 = vmatpush1.bf16.msra.mxu0 0
        %2066 = vmatprep.subr.bf16.mxu0 0
        %2067 = vmatpush1.bf16.msra.mxu0 0
        %2068 = vmatprep.subr.bf16.mxu0 0
        %2069 = vmatpush1.bf16.msra.mxu0 0
        %2070 = vmatprep.subr.bf16.mxu0 0
        %2071 = vmatpush1.bf16.msra.mxu0 0
        %2072 = vmatprep.subr.bf16.mxu0 0
        %2073 = vmatpush1.bf16.msra.mxu0 0
        %2074 = vmatprep.subr.bf16.mxu0 0
        %2075 = vmatpush1.bf16.msra.mxu0 0
        %2076 = vmatprep.subr.bf16.mxu0 0
        %2077 = vmatpush1.bf16.msra.mxu0 0
        %2078 = vmatprep.subr.bf16.mxu0 0
        %2079 = vmatpush1.bf16.msra.mxu0 0
        %2080 = vmatprep.subr.bf16.mxu0 0
        %2081 = vmatpush1.bf16.msra.mxu0 0
        %2082 = vmatprep.mubr.bf16.mxu0 0
        %2083 = vmatmul.mubr.bf16.gmra.mrb[0].mxu0 %v2020
        %v2084 = vpop.f32.mrb[0].mxu0
        %v2085 = vadd.f32 %v2006, %v2084
        %v2086 = vpop.f32.mrb[0].mxu0
        %v2087 = vadd.f32 %v2006, %v2086
        %v2088 = vpop.f32.mrb[0].mxu0
        %v2089 = vadd.f32 %v2011, %v2088
        %v2090 = vpop.f32.mrb[0].mxu0
        %v2091 = vadd.f32 %v2011, %v2090
        %2092 = vdwg.mxu0
        %2093 = vmatprep.subr.bf16.mxu0 %v2036
        %2094 = vmatpush1.bf16.msra.mxu0 %v2033
        %2095 = vmatprep.subr.bf16.mxu0 0
        %2096 = vmatpush1.bf16.msra.mxu0 0
        %2097 = vmatprep.subr.bf16.mxu0 0
        %2098 = vmatpush1.bf16.msra.mxu0 0
        %2099 = vmatprep.subr.bf16.mxu0 0
        %2100 = vmatpush1.bf16.msra.mxu0 0
        %2101 = vmatprep.subr.bf16.mxu0 0
        %2102 = vmatpush1.bf16.msra.mxu0 0
        %2103 = vmatprep.subr.bf16.mxu0 0
        %2104 = vmatpush1.bf16.msra.mxu0 0
        %2105 = vmatprep.subr.bf16.mxu0 0
        %2106 = vmatpush1.bf16.msra.mxu0 0
        %2107 = vmatprep.subr.bf16.mxu0 0
        %2108 = vmatpush1.bf16.msra.mxu0 0
        %2109 = vmatprep.subr.bf16.mxu0 0
        %2110 = vmatpush1.bf16.msra.mxu0 0
        %2111 = vmatprep.subr.bf16.mxu0 0
        %2112 = vmatpush1.bf16.msra.mxu0 0
        %2113 = vmatprep.subr.bf16.mxu0 0
        %2114 = vmatpush1.bf16.msra.mxu0 0
        %2115 = vmatprep.subr.bf16.mxu0 0
        %2116 = vmatpush1.bf16.msra.mxu0 0
        %2117 = vmatprep.subr.bf16.mxu0 0
        %2118 = vmatpush1.bf16.msra.mxu0 0
        %2119 = vmatprep.subr.bf16.mxu0 0
        %2120 = vmatpush1.bf16.msra.mxu0 0
        %2121 = vmatprep.subr.bf16.mxu0 0
        %2122 = vmatpush1.bf16.msra.mxu0 0
        %2123 = vmatprep.subr.bf16.mxu0 0
        %2124 = vmatpush1.bf16.msra.mxu0 0
        %2125 = vmatprep.mubr.bf16.mxu0 0
        %2126 = vmatmul.mubr.bf16.gmra.mrb[0].mxu0 %v2020
        %v2127 = vpop.f32.mrb[0].mxu0
        %v2128 = vadd.f32 %v2006, %v2127
        %v2129 = vpop.f32.mrb[0].mxu0
        %v2130 = vadd.f32 %v2006, %v2129
        %v2131 = vpop.f32.mrb[0].mxu0
        %v2132 = vadd.f32 %v2011, %v2131
        %v2133 = vpop.f32.mrb[0].mxu0
        %v2134 = vadd.f32 %v2011, %v2133
        %2135 = vdwg.mxu0
        %2136 = vmatprep.subr.bf16.mxu0 %v2042
        %2137 = vmatpush1.bf16.msra.mxu0 %v2039
        %2138 = vmatprep.subr.bf16.mxu0 0
        %2139 = vmatpush1.bf16.msra.mxu0 0
        %2140 = vmatprep.subr.bf16.mxu0 0
        %2141 = vmatpush1.bf16.msra.mxu0 0
        %2142 = vmatprep.subr.bf16.mxu0 0
        %2143 = vmatpush1.bf16.msra.mxu0 0
        %2144 = vmatprep.subr.bf16.mxu0 0
        %2145 = vmatpush1.bf16.msra.mxu0 0
        %2146 = vmatprep.subr.bf16.mxu0 0
        %2147 = vmatpush1.bf16.msra.mxu0 0
        %2148 = vmatprep.subr.bf16.mxu0 0
        %2149 = vmatpush1.bf16.msra.mxu0 0
        %2150 = vmatprep.subr.bf16.mxu0 0
        %2151 = vmatpush1.bf16.msra.mxu0 0
        %2152 = vmatprep.subr.bf16.mxu0 0
        %2153 = vmatpush1.bf16.msra.mxu0 0
        %2154 = vmatprep.subr.bf16.mxu0 0
        %2155 = vmatpush1.bf16.msra.mxu0 0
        %2156 = vmatprep.subr.bf16.mxu0 0
        %2157 = vmatpush1.bf16.msra.mxu0 0
        %2158 = vmatprep.subr.bf16.mxu0 0
        %2159 = vmatpush1.bf16.msra.mxu0 0
        %2160 = vmatprep.subr.bf16.mxu0 0
        %2161 = vmatpush1.bf16.msra.mxu0 0
        %2162 = vmatprep.subr.bf16.mxu0 0
        %2163 = vmatpush1.bf16.msra.mxu0 0
        %2164 = vmatprep.subr.bf16.mxu0 0
        %2165 = vmatpush1.bf16.msra.mxu0 0
        %2166 = vmatprep.subr.bf16.mxu0 0
        %2167 = vmatpush1.bf16.msra.mxu0 0
        %2168 = vmatprep.mubr.bf16.mxu0 0
        %2169 = vmatmul.mubr.bf16.gmra.mrb[0].mxu0 %v2020
        %v2170 = vpop.f32.mrb[0].mxu0
        %v2171 = vadd.f32 %v2006, %v2170
        %v2172 = vpop.f32.mrb[0].mxu0
        %v2173 = vadd.f32 %v2006, %v2172
        %v2174 = vpop.f32.mrb[0].mxu0
        %v2175 = vadd.f32 %v2011, %v2174
        %v2176 = vpop.f32.mrb[0].mxu0
        %v2177 = vadd.f32 %v2011, %v2176
        %2178 = vdwg.mxu0
        %2179 = vmatprep.subr.bf16.mxu0 %v2048
        %2180 = vmatpush1.bf16.msra.mxu0 %v2045
        %2181 = vmatprep.subr.bf16.mxu0 0
        %2182 = vmatpush1.bf16.msra.mxu0 0
        %2183 = vmatprep.subr.bf16.mxu0 0
        %2184 = vmatpush1.bf16.msra.mxu0 0
        %2185 = vmatprep.subr.bf16.mxu0 0
        %2186 = vmatpush1.bf16.msra.mxu0 0
        %2187 = vmatprep.subr.bf16.mxu0 0
        %2188 = vmatpush1.bf16.msra.mxu0 0
        %2189 = vmatprep.subr.bf16.mxu0 0
        %2190 = vmatpush1.bf16.msra.mxu0 0
        %2191 = vmatprep.subr.bf16.mxu0 0
        %2192 = vmatpush1.bf16.msra.mxu0 0
        %2193 = vmatprep.subr.bf16.mxu0 0
        %2194 = vmatpush1.bf16.msra.mxu0 0
        %2195 = vmatprep.subr.bf16.mxu0 0
        %2196 = vmatpush1.bf16.msra.mxu0 0
        %2197 = vmatprep.subr.bf16.mxu0 0
        %2198 = vmatpush1.bf16.msra.mxu0 0
        %2199 = vmatprep.subr.bf16.mxu0 0
        %2200 = vmatpush1.bf16.msra.mxu0 0
        %2201 = vmatprep.subr.bf16.mxu0 0
        %2202 = vmatpush1.bf16.msra.mxu0 0
        %2203 = vmatprep.subr.bf16.mxu0 0
        %2204 = vmatpush1.bf16.msra.mxu0 0
        %2205 = vmatprep.subr.bf16.mxu0 0
        %2206 = vmatpush1.bf16.msra.mxu0 0
        %2207 = vmatprep.subr.bf16.mxu0 0
        %2208 = vmatpush1.bf16.msra.mxu0 0
        %2209 = vmatprep.subr.bf16.mxu0 0
        %2210 = vmatpush1.bf16.msra.mxu0 0
        %2211 = vmatprep.mubr.bf16.mxu0 0
        %2212 = vmatmul.mubr.bf16.gmra.mrb[0].mxu0 %v2020
        %v2213 = vpop.f32.mrb[0].mxu0
        %v2214 = vadd.f32 %v2006, %v2213
        %v2215 = vpop.f32.mrb[0].mxu0
        %v2216 = vadd.f32 %v2006, %v2215
        %v2217 = vpop.f32.mrb[0].mxu0
        %v2218 = vadd.f32 %v2011, %v2217
        %v2219 = vpop.f32.mrb[0].mxu0
        %v2220 = vadd.f32 %v2011, %v2219
        %2221 = vdwg.mxu0
        %v2222 = vmax.f32 %v2085, 0.0
        %v2223 = vmax.f32 %v2087, 0.0
        %v2224 = vmax.f32 %v2128, 0.0
        %v2225 = vmax.f32 %v2130, 0.0
        %v2226 = vmax.f32 %v2171, 0.0
        %v2227 = vmax.f32 %v2173, 0.0
        %v2228 = vmax.f32 %v2214, 0.0
        %v2229 = vmax.f32 %v2216, 0.0
        %v2230 = vmax.f32 %v2089, 0.0
        %v2231 = vmax.f32 %v2091, 0.0
        %v2232 = vmax.f32 %v2132, 0.0
        %v2233 = vmax.f32 %v2134, 0.0
        %v2234 = vmax.f32 %v2175, 0.0
        %v2235 = vmax.f32 %v2177, 0.0
        %v2236 = vmax.f32 %v2218, 0.0
        %v2237 = vmax.f32 %v2220, 0.0
        %v2238 = vld [vmem:[%s15] sm:$0xff]
        %v2240 = vlaneseq
        %v2241 = vshrl.u32 %v2240, 7
        %v2242 = vsub.s32 0, %v2241
        %v2243 = vrot.slane %v2238, %v2242
        %v2244 = vlaneseq
        %v2245 = vshrl.u32 %v2244, 7
        %v2246 = vsub.s32 1, %v2245
        %v2247 = vrot.slane %v2238, %v2246
        %v2248 = vlaneseq
        %v2249 = vshrl.u32 %v2248, 7
        %v2250 = vsub.s32 2, %v2249
        %v2251 = vrot.slane %v2238, %v2250
        %v2252 = vlaneseq
        %v2253 = vshrl.u32 %v2252, 7
        %v2254 = vsub.s32 3, %v2253
        %v2255 = vrot.slane %v2238, %v2254
        %v2256 = vlaneseq
        %v2257 = vshrl.u32 %v2256, 7
        %v2258 = vsub.s32 4, %v2257
        %v2259 = vrot.slane %v2238, %v2258
        %v2260 = vlaneseq
        %v2261 = vshrl.u32 %v2260, 7
        %v2262 = vsub.s32 5, %v2261
        %v2263 = vrot.slane %v2238, %v2262
        %v2264 = vlaneseq
        %v2265 = vshrl.u32 %v2264, 7
        %v2266 = vsub.s32 6, %v2265
        %v2267 = vrot.slane %v2238, %v2266
        %v2268 = vlaneseq
        %v2269 = vshrl.u32 %v2268, 7
        %v2270 = vsub.s32 7, %v2269
        %v2271 = vrot.slane %v2238, %v2270
        %v2280 = vmul.f32 %v2222, %v2243
        %v2281 = vmul.f32 %v2223, %v2247
        %v2282 = vmul.f32 %v2224, %v2251
        %v2283 = vmul.f32 %v2225, %v2255
        %v2284 = vmul.f32 %v2226, %v2259
        %v2285 = vmul.f32 %v2227, %v2263
        %v2286 = vmul.f32 %v2228, %v2267
        %v2287 = vmul.f32 %v2229, %v2271
        %v2288 = vmul.f32 %v2230, %v2243
        %v2289 = vmul.f32 %v2231, %v2247
        %v2290 = vmul.f32 %v2232, %v2251
        %v2291 = vmul.f32 %v2233, %v2255
        %v2292 = vmul.f32 %v2234, %v2259
        %v2293 = vmul.f32 %v2235, %v2263
        %v2294 = vmul.f32 %v2236, %v2267
        %v2295 = vmul.f32 %v2237, %v2271
        %2312 = vrot.lane.b32.xlu0 %v2280, 32
        %v2313 = vpop.permute.xlu0 %2312
        %2314 = vrot.lane.b32.xlu0 %v2281, 32
        %v2315 = vpop.permute.xlu0 %2314
        %2316 = vrot.lane.b32.xlu0 %v2282, 32
        %v2317 = vpop.permute.xlu0 %2316
        %2318 = vrot.lane.b32.xlu0 %v2283, 32
        %v2319 = vpop.permute.xlu0 %2318
        %2320 = vrot.lane.b32.xlu0 %v2284, 32
        %v2321 = vpop.permute.xlu0 %2320
        %2322 = vrot.lane.b32.xlu0 %v2285, 32
        %v2323 = vpop.permute.xlu0 %2322
        %2324 = vrot.lane.b32.xlu0 %v2286, 32
        %v2325 = vpop.permute.xlu0 %2324
        %2326 = vrot.lane.b32.xlu0 %v2287, 32
        %v2327 = vpop.permute.xlu0 %2326
        %2328 = vrot.lane.b32.xlu0 %v2288, 32
        %v2329 = vpop.permute.xlu0 %2328
        %2330 = vrot.lane.b32.xlu0 %v2289, 32
        %v2331 = vpop.permute.xlu0 %2330
        %2332 = vrot.lane.b32.xlu0 %v2290, 32
        %v2333 = vpop.permute.xlu0 %2332
        %2334 = vrot.lane.b32.xlu0 %v2291, 32
        %v2335 = vpop.permute.xlu0 %2334
        %2336 = vrot.lane.b32.xlu0 %v2292, 32
        %v2337 = vpop.permute.xlu0 %2336
        %2338 = vrot.lane.b32.xlu0 %v2293, 32
        %v2339 = vpop.permute.xlu0 %2338
        %2340 = vrot.lane.b32.xlu0 %v2294, 32
        %v2341 = vpop.permute.xlu0 %2340
        %2342 = vrot.lane.b32.xlu0 %v2295, 32
        %v2343 = vpop.permute.xlu0 %2342
        %v2344 = vsel %vm766, %v2313, %v2315
        %v2345 = vsel %vm766, %v2315, %v2317
        %v2346 = vsel %vm766, %v2317, %v2319
        %v2347 = vsel %vm766, %v2319, %v2321
        %v2348 = vsel %vm766, %v2321, %v2323
        %v2349 = vsel %vm766, %v2323, %v2325
        %v2350 = vsel %vm766, %v2325, %v2327
        %v2351 = vsel %vm766, %v2329, %v2331
        %v2352 = vsel %vm766, %v2331, %v2333
        %v2353 = vsel %vm766, %v2333, %v2335
        %v2354 = vsel %vm766, %v2335, %v2337
        %v2355 = vsel %vm766, %v2337, %v2339
        %v2356 = vsel %vm766, %v2339, %v2341
        %v2357 = vsel %vm766, %v2341, %v2343
        %vm2374 = vcmask 1047808
        %2375 = vst.msk [vmem:[#allocation2] sm:$0xff] %vm2374, %v2313
        %2376 = vst [vmem:[#allocation2 + $0x8] sm:$0xff] %v2344
        %2377 = vst [vmem:[#allocation2 + $0x10] sm:$0xff] %v2345
        %2378 = vst [vmem:[#allocation2 + $0x18] sm:$0xff] %v2346
        %2379 = vst [vmem:[#allocation2 + $0x20] sm:$0xff] %v2347
        %2380 = vst [vmem:[#allocation2 + $0x28] sm:$0xff] %v2348
        %2381 = vst [vmem:[#allocation2 + $0x30] sm:$0xff] %v2349
        %vm2382 = vcmask 293888
        %2383 = vst.msk [vmem:[#allocation2 + $0x38] sm:$0xff] %vm2382, %v2350
        %2384 = vst.msk [vmem:[#allocation2 + $0x40] sm:$0xff] %vm2374, %v2329
        %2385 = vst [vmem:[#allocation2 + $0x48] sm:$0xff] %v2351
        %2386 = vst [vmem:[#allocation2 + $0x50] sm:$0xff] %v2352
        %2387 = vst [vmem:[#allocation2 + $0x58] sm:$0xff] %v2353
        %2388 = vst [vmem:[#allocation2 + $0x60] sm:$0xff] %v2354
        %2389 = vst [vmem:[#allocation2 + $0x68] sm:$0xff] %v2355
        %2390 = vst [vmem:[#allocation2 + $0x70] sm:$0xff] %v2356
        %2391 = vst.msk [vmem:[#allocation2 + $0x78] sm:$0xff] %vm2382, %v2357
        %v2392 = vld [vmem:[#allocation2] sm:$0xff]
        %v2393 = vld [vmem:[#allocation2 + $0x8] sm:$0xff]
        %v2394 = vld [vmem:[#allocation2 + $0x10] sm:$0xff]
        %v2395 = vld [vmem:[#allocation2 + $0x18] sm:$0xff]
        %v2396 = vld [vmem:[#allocation2 + $0x20] sm:$0xff]
        %v2397 = vld [vmem:[#allocation2 + $0x28] sm:$0xff]
        %v2398 = vld [vmem:[#allocation2 + $0x30] sm:$0xff]
        %v2399 = vld [vmem:[#allocation2 + $0x38] sm:$0xff]
        %v2400 = vld [vmem:[#allocation2 + $0x40] sm:$0xff]
        %v2401 = vld [vmem:[#allocation2 + $0x48] sm:$0xff]
        %v2402 = vld [vmem:[#allocation2 + $0x50] sm:$0xff]
        %v2403 = vld [vmem:[#allocation2 + $0x58] sm:$0xff]
        %v2404 = vld [vmem:[#allocation2 + $0x60] sm:$0xff]
        %v2405 = vld [vmem:[#allocation2 + $0x68] sm:$0xff]
        %v2406 = vld [vmem:[#allocation2 + $0x70] sm:$0xff]
        %v2407 = vld [vmem:[#allocation2 + $0x78] sm:$0xff]
        %2424 = vrot.lane.b32.xlu0 %v2392, 127
        %v2425 = vpop.permute.xlu0 %2424
        %2426 = vrot.lane.b32.xlu0 %v2393, 127
        %v2427 = vpop.permute.xlu0 %2426
        %2428 = vrot.lane.b32.xlu0 %v2394, 127
        %v2429 = vpop.permute.xlu0 %2428
        %2430 = vrot.lane.b32.xlu0 %v2395, 127
        %v2431 = vpop.permute.xlu0 %2430
        %2432 = vrot.lane.b32.xlu0 %v2396, 127
        %v2433 = vpop.permute.xlu0 %2432
        %2434 = vrot.lane.b32.xlu0 %v2397, 127
        %v2435 = vpop.permute.xlu0 %2434
        %2436 = vrot.lane.b32.xlu0 %v2398, 127
        %v2437 = vpop.permute.xlu0 %2436
        %2438 = vrot.lane.b32.xlu0 %v2399, 127
        %v2439 = vpop.permute.xlu0 %2438
        %2440 = vrot.lane.b32.xlu0 %v2400, 127
        %v2441 = vpop.permute.xlu0 %2440
        %2442 = vrot.lane.b32.xlu0 %v2401, 127
        %v2443 = vpop.permute.xlu0 %2442
        %2444 = vrot.lane.b32.xlu0 %v2402, 127
        %v2445 = vpop.permute.xlu0 %2444
        %2446 = vrot.lane.b32.xlu0 %v2403, 127
        %v2447 = vpop.permute.xlu0 %2446
        %2448 = vrot.lane.b32.xlu0 %v2404, 127
        %v2449 = vpop.permute.xlu0 %2448
        %2450 = vrot.lane.b32.xlu0 %v2405, 127
        %v2451 = vpop.permute.xlu0 %2450
        %2452 = vrot.lane.b32.xlu0 %v2406, 127
        %v2453 = vpop.permute.xlu0 %2452
        %2454 = vrot.lane.b32.xlu0 %v2407, 127
        %v2455 = vpop.permute.xlu0 %2454
        %vm2456 = vcmask 1039360
        %v2457 = vsel %vm2456, %v2425, %v2427
        %v2458 = vsel %vm2456, %v2427, %v2429
        %v2459 = vsel %vm2456, %v2429, %v2431
        %v2460 = vsel %vm2456, %v2431, %v2433
        %v2461 = vsel %vm2456, %v2433, %v2435
        %v2462 = vsel %vm2456, %v2435, %v2437
        %v2463 = vsel %vm2456, %v2437, %v2439
        %v2464 = vsel %vm2456, %v2441, %v2443
        %v2465 = vsel %vm2456, %v2443, %v2445
        %v2466 = vsel %vm2456, %v2445, %v2447
        %v2467 = vsel %vm2456, %v2447, %v2449
        %v2468 = vsel %vm2456, %v2449, %v2451
        %v2469 = vsel %vm2456, %v2451, %v2453
        %v2470 = vsel %vm2456, %v2453, %v2455
        %v2487 = vmax.f32 %v2392, %v2457
        %v2488 = vmax.f32 %v2393, %v2458
        %v2489 = vmax.f32 %v2394, %v2459
        %v2490 = vmax.f32 %v2395, %v2460
        %v2491 = vmax.f32 %v2396, %v2461
        %v2492 = vmax.f32 %v2397, %v2462
        %v2493 = vmax.f32 %v2398, %v2463
        %v2494 = vmax.f32 %v2399, %v2439
        %v2495 = vmax.f32 %v2400, %v2464
        %v2496 = vmax.f32 %v2401, %v2465
        %v2497 = vmax.f32 %v2402, %v2466
        %v2498 = vmax.f32 %v2403, %v2467
        %v2499 = vmax.f32 %v2404, %v2468
        %v2500 = vmax.f32 %v2405, %v2469
        %v2501 = vmax.f32 %v2406, %v2470
        %v2502 = vmax.f32 %v2407, %v2455
        %2519 = vrot.lane.b32.xlu0 %v2487, 98
        %v2520 = vpop.permute.xlu0 %2519
        %2521 = vrot.lane.b32.xlu0 %v2488, 98
        %v2522 = vpop.permute.xlu0 %2521
        %2523 = vrot.lane.b32.xlu0 %v2489, 98
        %v2524 = vpop.permute.xlu0 %2523
        %2525 = vrot.lane.b32.xlu0 %v2490, 98
        %v2526 = vpop.permute.xlu0 %2525
        %2527 = vrot.lane.b32.xlu0 %v2491, 98
        %v2528 = vpop.permute.xlu0 %2527
        %2529 = vrot.lane.b32.xlu0 %v2492, 98
        %v2530 = vpop.permute.xlu0 %2529
        %2531 = vrot.lane.b32.xlu0 %v2493, 98
        %v2532 = vpop.permute.xlu0 %2531
        %2533 = vrot.lane.b32.xlu0 %v2494, 98
        %v2534 = vpop.permute.xlu0 %2533
        %2535 = vrot.lane.b32.xlu0 %v2495, 98
        %v2536 = vpop.permute.xlu0 %2535
        %2537 = vrot.lane.b32.xlu0 %v2496, 98
        %v2538 = vpop.permute.xlu0 %2537
        %2539 = vrot.lane.b32.xlu0 %v2497, 98
        %v2540 = vpop.permute.xlu0 %2539
        %2541 = vrot.lane.b32.xlu0 %v2498, 98
        %v2542 = vpop.permute.xlu0 %2541
        %2543 = vrot.lane.b32.xlu0 %v2499, 98
        %v2544 = vpop.permute.xlu0 %2543
        %2545 = vrot.lane.b32.xlu0 %v2500, 98
        %v2546 = vpop.permute.xlu0 %2545
        %2547 = vrot.lane.b32.xlu0 %v2501, 98
        %v2548 = vpop.permute.xlu0 %2547
        %2549 = vrot.lane.b32.xlu0 %v2502, 98
        %v2550 = vpop.permute.xlu0 %2549
        %vm2551 = vcmask 801792
        %v2552 = vsel %vm2551, %v2520, %v2522
        %v2553 = vsel %vm2551, %v2522, %v2524
        %v2554 = vsel %vm2551, %v2524, %v2526
        %v2555 = vsel %vm2551, %v2526, %v2528
        %v2556 = vsel %vm2551, %v2528, %v2530
        %v2557 = vsel %vm2551, %v2530, %v2532
        %v2558 = vsel %vm2551, %v2532, %v2534
        %v2559 = vsel %vm2551, %v2536, %v2538
        %v2560 = vsel %vm2551, %v2538, %v2540
        %v2561 = vsel %vm2551, %v2540, %v2542
        %v2562 = vsel %vm2551, %v2542, %v2544
        %v2563 = vsel %vm2551, %v2544, %v2546
        %v2564 = vsel %vm2551, %v2546, %v2548
        %v2565 = vsel %vm2551, %v2548, %v2550
        %v2582 = vmax.f32 %v2487, %v2552
        %v2583 = vmax.f32 %v2488, %v2553
        %v2584 = vmax.f32 %v2489, %v2554
        %v2585 = vmax.f32 %v2490, %v2555
        %v2586 = vmax.f32 %v2491, %v2556
        %v2587 = vmax.f32 %v2492, %v2557
        %v2588 = vmax.f32 %v2493, %v2558
        %v2589 = vmax.f32 %v2494, %v2534
        %v2590 = vmax.f32 %v2495, %v2559
        %v2591 = vmax.f32 %v2496, %v2560
        %v2592 = vmax.f32 %v2497, %v2561
        %v2593 = vmax.f32 %v2498, %v2562
        %v2594 = vmax.f32 %v2499, %v2563
        %v2595 = vmax.f32 %v2500, %v2564
        %v2596 = vmax.f32 %v2501, %v2565
        %v2597 = vmax.f32 %v2502, %v2550
        %v2598 = vpack.c.bf16 %v2590, %v2582
        %v2599 = vpack.c.bf16 %v2591, %v2583
        %v2600 = vpack.c.bf16 %v2592, %v2584
        %v2601 = vpack.c.bf16 %v2593, %v2585
        %v2602 = vpack.c.bf16 %v2594, %v2586
        %v2603 = vpack.c.bf16 %v2595, %v2587
        %v2604 = vpack.c.bf16 %v2596, %v2588
        %v2605 = vpack.c.bf16 %v2597, %v2589
        %v2606 = vld [vmem:[#allocation16] sm:$0xff]
        %v2607 = vld [vmem:[#allocation16 + $0x8] sm:$0xf]
        %v2608 = vld [vmem:[#allocation16 + $0xc] sm:$0xff]
        %v2609 = vld [vmem:[#allocation16 + $0x14] sm:$0xf]
        %v2610 = vld [vmem:[#allocation16 + $0x18] sm:$0xff]
        %v2611 = vld [vmem:[#allocation16 + $0x20] sm:$0xf]
        %v2612 = vld [vmem:[#allocation16 + $0x24] sm:$0xff]
        %v2613 = vld [vmem:[#allocation16 + $0x2c] sm:$0xf]
        %v2614 = vld [vmem:[#allocation16 + $0x30] sm:$0xff]
        %v2615 = vld [vmem:[#allocation16 + $0x38] sm:$0xf]
        %v2616 = vld [vmem:[#allocation16 + $0x3c] sm:$0xff]
        %v2617 = vld [vmem:[#allocation16 + $0x44] sm:$0xf]
        %v2618 = vld [vmem:[#allocation16 + $0x48] sm:$0xff]
        %v2619 = vld [vmem:[#allocation16 + $0x50] sm:$0xf]
        %v2620 = vld [vmem:[#allocation16 + $0x54] sm:$0xff]
        %v2621 = vld [vmem:[#allocation16 + $0x5c] sm:$0xf]
        %v2622 = vld [vmem:[#allocation16 + $0x60] sm:$0xff]
        %v2623 = vld [vmem:[#allocation16 + $0x68] sm:$0xf]
        %v2624 = vld [vmem:[#allocation16 + $0x6c] sm:$0xff]
        %v2625 = vld [vmem:[#allocation16 + $0x74] sm:$0xf]
        %v2626 = vld [vmem:[#allocation16 + $0x78] sm:$0xff]
        %v2627 = vld [vmem:[#allocation16 + $0x80] sm:$0xf]
        %v2628 = vld [vmem:[#allocation16 + $0x84] sm:$0xff]
        %v2629 = vld [vmem:[#allocation16 + $0x8c] sm:$0xf]
        %v2630 = vld [vmem:[#allocation16 + $0x90] sm:$0xff]
        %v2631 = vld [vmem:[#allocation16 + $0x98] sm:$0xf]
        %v2632 = vld [vmem:[#allocation16 + $0x9c] sm:$0xff]
        %v2633 = vld [vmem:[#allocation16 + $0xa4] sm:$0xf]
        %v2634 = vld [vmem:[#allocation16 + $0xa8] sm:$0xff]
        %v2635 = vld [vmem:[#allocation16 + $0xb0] sm:$0xf]
        %v2636 = vld [vmem:[#allocation16 + $0xb4] sm:$0xff]
        %v2637 = vld [vmem:[#allocation16 + $0xbc] sm:$0xf]
        %v2638 = vld [vmem:[#allocation16 + $0xc0] sm:$0xff]
        %v2639 = vld [vmem:[#allocation16 + $0xc8] sm:$0xf]
        %v2640 = vld [vmem:[#allocation16 + $0xcc] sm:$0xff]
        %v2641 = vld [vmem:[#allocation16 + $0xd4] sm:$0xf]
        %v2642 = vld [vmem:[#allocation16 + $0xd8] sm:$0xff]
        %v2643 = vld [vmem:[#allocation16 + $0xe0] sm:$0xf]
        %v2644 = vld [vmem:[#allocation16 + $0xe4] sm:$0xff]
        %v2645 = vld [vmem:[#allocation16 + $0xec] sm:$0xf]
        %v2646 = vld [vmem:[#allocation16 + $0xf0] sm:$0xff]
        %v2647 = vld [vmem:[#allocation16 + $0xf8] sm:$0xf]
        %v2648 = vld [vmem:[#allocation16 + $0xfc] sm:$0xff]
        %v2649 = vld [vmem:[#allocation16 + $0x104] sm:$0xf]
        %v2650 = vld [vmem:[#allocation16 + $0x108] sm:$0xff]
        %v2651 = vld [vmem:[#allocation16 + $0x110] sm:$0xf]
        %v2652 = vld [vmem:[#allocation16 + $0x114] sm:$0xff]
        %v2653 = vld [vmem:[#allocation16 + $0x11c] sm:$0xf]
        %v2654 = vld [vmem:[#allocation16 + $0x120] sm:$0xff]
        %v2655 = vld [vmem:[#allocation16 + $0x128] sm:$0xf]
        %v2656 = vld [vmem:[#allocation16 + $0x12c] sm:$0xff]
        %v2657 = vld [vmem:[#allocation16 + $0x134] sm:$0xf]
        %v2658 = vld [vmem:[#allocation16 + $0x138] sm:$0xff]
        %v2659 = vld [vmem:[#allocation16 + $0x140] sm:$0xf]
        %v2660 = vld [vmem:[#allocation16 + $0x144] sm:$0xff]
        %v2661 = vld [vmem:[#allocation16 + $0x14c] sm:$0xf]
        %v2662 = vld [vmem:[#allocation16 + $0x150] sm:$0xff]
        %v2663 = vld [vmem:[#allocation16 + $0x158] sm:$0xf]
        %v2664 = vld [vmem:[#allocation16 + $0x15c] sm:$0xff]
        %v2665 = vld [vmem:[#allocation16 + $0x164] sm:$0xf]
        %v2666 = vld [vmem:[#allocation16 + $0x168] sm:$0xff]
        %v2667 = vld [vmem:[#allocation16 + $0x170] sm:$0xf]
        %v2668 = vld [vmem:[#allocation16 + $0x174] sm:$0xff]
        %v2669 = vld [vmem:[#allocation16 + $0x17c] sm:$0xf]
        %v2670 = vld [vmem:[#allocation16 + $0x180] sm:$0xff]
        %v2671 = vld [vmem:[#allocation16 + $0x188] sm:$0xf]
        %v2672 = vld [vmem:[#allocation16 + $0x18c] sm:$0xff]
        %v2673 = vld [vmem:[#allocation16 + $0x194] sm:$0xf]
        %v2674 = vld [vmem:[#allocation16 + $0x198] sm:$0xff]
        %v2675 = vld [vmem:[#allocation16 + $0x1a0] sm:$0xf]
        %v2676 = vld [vmem:[#allocation16 + $0x1a4] sm:$0xff]
        %v2677 = vld [vmem:[#allocation16 + $0x1ac] sm:$0xf]
        %v2678 = vld [vmem:[#allocation16 + $0x1b0] sm:$0xff]
        %v2679 = vld [vmem:[#allocation16 + $0x1b8] sm:$0xf]
        %v2680 = vld [vmem:[#allocation16 + $0x1bc] sm:$0xff]
        %v2681 = vld [vmem:[#allocation16 + $0x1c4] sm:$0xf]
        %v2682 = vld [vmem:[#allocation16 + $0x1c8] sm:$0xff]
        %v2683 = vld [vmem:[#allocation16 + $0x1d0] sm:$0xf]
        %v2684 = vld [vmem:[#allocation16 + $0x1d4] sm:$0xff]
        %v2685 = vld [vmem:[#allocation16 + $0x1dc] sm:$0xf]
        %v2686 = vld [vmem:[#allocation16 + $0x1e0] sm:$0xff]
        %v2687 = vld [vmem:[#allocation16 + $0x1e8] sm:$0xf]
        %v2688 = vld [vmem:[#allocation16 + $0x1ec] sm:$0xff]
        %v2689 = vld [vmem:[#allocation16 + $0x1f4] sm:$0xf]
        %v2690 = vld [vmem:[#allocation16 + $0x1f8] sm:$0xff]
        %v2691 = vld [vmem:[#allocation16 + $0x200] sm:$0xf]
        %v2692 = vld [vmem:[#allocation16 + $0x204] sm:$0xff]
        %v2693 = vld [vmem:[#allocation16 + $0x20c] sm:$0xf]
        %v2694 = vld [vmem:[#allocation16 + $0x210] sm:$0xff]
        %v2695 = vld [vmem:[#allocation16 + $0x218] sm:$0xf]
        %v2696 = vld [vmem:[#allocation16 + $0x21c] sm:$0xff]
        %v2697 = vld [vmem:[#allocation16 + $0x224] sm:$0xf]
        %v2698 = vld [vmem:[#allocation16 + $0x228] sm:$0xff]
        %v2699 = vld [vmem:[#allocation16 + $0x230] sm:$0xf]
        %v2700 = vld [vmem:[#allocation16 + $0x234] sm:$0xff]
        %v2701 = vld [vmem:[#allocation16 + $0x23c] sm:$0xf]
        %v2702 = vld [vmem:[#allocation16 + $0x240] sm:$0xff]
        %v2703 = vld [vmem:[#allocation16 + $0x248] sm:$0xf]
        %v2704 = vld [vmem:[#allocation16 + $0x24c] sm:$0xff]
        %v2705 = vld [vmem:[#allocation16 + $0x254] sm:$0xf]
        %v2706 = vld [vmem:[#allocation16 + $0x258] sm:$0xff]
        %v2707 = vld [vmem:[#allocation16 + $0x260] sm:$0xf]
        %v2708 = vld [vmem:[#allocation16 + $0x264] sm:$0xff]
        %v2709 = vld [vmem:[#allocation16 + $0x26c] sm:$0xf]
        %v2710 = vld [vmem:[#allocation16 + $0x270] sm:$0xff]
        %v2711 = vld [vmem:[#allocation16 + $0x278] sm:$0xf]
        %v2712 = vld [vmem:[#allocation16 + $0x27c] sm:$0xff]
        %v2713 = vld [vmem:[#allocation16 + $0x284] sm:$0xf]
        %v2714 = vld [vmem:[#allocation16 + $0x288] sm:$0xff]
        %v2715 = vld [vmem:[#allocation16 + $0x290] sm:$0xf]
        %v2716 = vld [vmem:[#allocation16 + $0x294] sm:$0xff]
        %v2717 = vld [vmem:[#allocation16 + $0x29c] sm:$0xf]
        %v2718 = vld [vmem:[#allocation16 + $0x2a0] sm:$0xff]
        %v2719 = vld [vmem:[#allocation16 + $0x2a8] sm:$0xf]
        %v2720 = vld [vmem:[#allocation16 + $0x2ac] sm:$0xff]
        %v2721 = vld [vmem:[#allocation16 + $0x2b4] sm:$0xf]
        %v2722 = vld [vmem:[#allocation16 + $0x2b8] sm:$0xff]
        %v2723 = vld [vmem:[#allocation16 + $0x2c0] sm:$0xf]
        %v2724 = vld [vmem:[#allocation16 + $0x2c4] sm:$0xff]
        %v2725 = vld [vmem:[#allocation16 + $0x2cc] sm:$0xf]
        %v2726 = vld [vmem:[#allocation16 + $0x2d0] sm:$0xff]
        %v2727 = vld [vmem:[#allocation16 + $0x2d8] sm:$0xf]
        %v2728 = vld [vmem:[#allocation16 + $0x2dc] sm:$0xff]
        %v2729 = vld [vmem:[#allocation16 + $0x2e4] sm:$0xf]
        %v2730 = vld [vmem:[#allocation16 + $0x2e8] sm:$0xff]
        %v2731 = vld [vmem:[#allocation16 + $0x2f0] sm:$0xf]
        %v2732 = vld [vmem:[#allocation16 + $0x2f4] sm:$0xff]
        %v2733 = vld [vmem:[#allocation16 + $0x2fc] sm:$0xf]
        %v2734 = vld [vmem:[#allocation16 + $0x300] sm:$0xff]
        %v2735 = vld [vmem:[#allocation16 + $0x308] sm:$0xf]
        %v2736 = vld [vmem:[#allocation16 + $0x30c] sm:$0xff]
        %v2737 = vld [vmem:[#allocation16 + $0x314] sm:$0xf]
        %v2738 = vld [vmem:[#allocation16 + $0x318] sm:$0xff]
        %v2739 = vld [vmem:[#allocation16 + $0x320] sm:$0xf]
        %v2740 = vld [vmem:[#allocation16 + $0x324] sm:$0xff]
        %v2741 = vld [vmem:[#allocation16 + $0x32c] sm:$0xf]
        %v2742 = vld [vmem:[#allocation16 + $0x330] sm:$0xff]
        %v2743 = vld [vmem:[#allocation16 + $0x338] sm:$0xf]
        %v2744 = vld [vmem:[#allocation16 + $0x33c] sm:$0xff]
        %v2745 = vld [vmem:[#allocation16 + $0x344] sm:$0xf]
        %v2746 = vld [vmem:[#allocation16 + $0x348] sm:$0xff]
        %v2747 = vld [vmem:[#allocation16 + $0x350] sm:$0xf]
        %v2748 = vld [vmem:[#allocation16 + $0x354] sm:$0xff]
        %v2749 = vld [vmem:[#allocation16 + $0x35c] sm:$0xf]
        %v2750 = vld [vmem:[#allocation16 + $0x360] sm:$0xff]
        %v2751 = vld [vmem:[#allocation16 + $0x368] sm:$0xf]
        %v2752 = vld [vmem:[#allocation16 + $0x36c] sm:$0xff]
        %v2753 = vld [vmem:[#allocation16 + $0x374] sm:$0xf]
        %v2754 = vld [vmem:[#allocation16 + $0x378] sm:$0xff]
        %v2755 = vld [vmem:[#allocation16 + $0x380] sm:$0xf]
        %v2756 = vld [vmem:[#allocation16 + $0x384] sm:$0xff]
        %v2757 = vld [vmem:[#allocation16 + $0x38c] sm:$0xf]
        %v2758 = vld [vmem:[#allocation16 + $0x390] sm:$0xff]
        %v2759 = vld [vmem:[#allocation16 + $0x398] sm:$0xf]
        %v2760 = vld [vmem:[#allocation16 + $0x39c] sm:$0xff]
        %v2761 = vld [vmem:[#allocation16 + $0x3a4] sm:$0xf]
        %v2762 = vld [vmem:[#allocation16 + $0x3a8] sm:$0xff]
        %v2763 = vld [vmem:[#allocation16 + $0x3b0] sm:$0xf]
        %v2764 = vld [vmem:[#allocation16 + $0x3b4] sm:$0xff]
        %v2765 = vld [vmem:[#allocation16 + $0x3bc] sm:$0xf]
        %v2766 = vld [vmem:[#allocation16 + $0x3c0] sm:$0xff]
        %v2767 = vld [vmem:[#allocation16 + $0x3c8] sm:$0xf]
        %v2768 = vld [vmem:[#allocation16 + $0x3cc] sm:$0xff]
        %v2769 = vld [vmem:[#allocation16 + $0x3d4] sm:$0xf]
        %v2770 = vld [vmem:[#allocation16 + $0x3d8] sm:$0xff]
        %v2771 = vld [vmem:[#allocation16 + $0x3e0] sm:$0xf]
        %v2772 = vld [vmem:[#allocation16 + $0x3e4] sm:$0xff]
        %v2773 = vld [vmem:[#allocation16 + $0x3ec] sm:$0xf]
        %v2774 = vld [vmem:[#allocation16 + $0x3f0] sm:$0xff]
        %v2775 = vld [vmem:[#allocation16 + $0x3f8] sm:$0xf]
        %v2776 = vld [vmem:[#allocation16 + $0x3fc] sm:$0xff]
        %v2777 = vld [vmem:[#allocation16 + $0x404] sm:$0xf]
        %v2778 = vld [vmem:[#allocation16 + $0x408] sm:$0xff]
        %v2779 = vld [vmem:[#allocation16 + $0x410] sm:$0xf]
        %v2780 = vld [vmem:[#allocation16 + $0x414] sm:$0xff]
        %v2781 = vld [vmem:[#allocation16 + $0x41c] sm:$0xf]
        %v2782 = vld [vmem:[#allocation16 + $0x420] sm:$0xff]
        %v2783 = vld [vmem:[#allocation16 + $0x428] sm:$0xf]
        %v2784 = vld [vmem:[#allocation16 + $0x42c] sm:$0xff]
        %v2785 = vld [vmem:[#allocation16 + $0x434] sm:$0xf]
        %v2786 = vld [vmem:[#allocation16 + $0x438] sm:$0xff]
        %v2787 = vld [vmem:[#allocation16 + $0x440] sm:$0xf]
        %v2788 = vld [vmem:[#allocation16 + $0x444] sm:$0xff]
        %v2789 = vld [vmem:[#allocation16 + $0x44c] sm:$0xf]
        %v2790 = vld [vmem:[#allocation16 + $0x450] sm:$0xff]
        %v2791 = vld [vmem:[#allocation16 + $0x458] sm:$0xf]
        %v2792 = vld [vmem:[#allocation16 + $0x45c] sm:$0xff]
        %v2793 = vld [vmem:[#allocation16 + $0x464] sm:$0xf]
        %v2794 = vld [vmem:[#allocation16 + $0x468] sm:$0xff]
        %v2795 = vld [vmem:[#allocation16 + $0x470] sm:$0xf]
        %v2796 = vld [vmem:[#allocation16 + $0x474] sm:$0xff]
        %v2797 = vld [vmem:[#allocation16 + $0x47c] sm:$0xf]
        %v2798 = vld [vmem:[#allocation16 + $0x480] sm:$0xff]
        %v2799 = vld [vmem:[#allocation16 + $0x488] sm:$0xf]
        %v2800 = vld [vmem:[#allocation16 + $0x48c] sm:$0xff]
        %v2801 = vld [vmem:[#allocation16 + $0x494] sm:$0xf]
        %v2802 = vld [vmem:[#allocation16 + $0x498] sm:$0xff]
        %v2803 = vld [vmem:[#allocation16 + $0x4a0] sm:$0xf]
        %v2804 = vld [vmem:[#allocation16 + $0x4a4] sm:$0xff]
        %v2805 = vld [vmem:[#allocation16 + $0x4ac] sm:$0xf]
        %v2806 = vld [vmem:[#allocation16 + $0x4b0] sm:$0xff]
        %v2807 = vld [vmem:[#allocation16 + $0x4b8] sm:$0xf]
        %v2808 = vld [vmem:[#allocation16 + $0x4bc] sm:$0xff]
        %v2809 = vld [vmem:[#allocation16 + $0x4c4] sm:$0xf]
        %v2810 = vld [vmem:[#allocation16 + $0x4c8] sm:$0xff]
        %v2811 = vld [vmem:[#allocation16 + $0x4d0] sm:$0xf]
        %v2812 = vld [vmem:[#allocation16 + $0x4d4] sm:$0xff]
        %v2813 = vld [vmem:[#allocation16 + $0x4dc] sm:$0xf]
        %v2814 = vld [vmem:[#allocation16 + $0x4e0] sm:$0xff]
        %v2815 = vld [vmem:[#allocation16 + $0x4e8] sm:$0xf]
        %v2816 = vld [vmem:[#allocation16 + $0x4ec] sm:$0xff]
        %v2817 = vld [vmem:[#allocation16 + $0x4f4] sm:$0xf]
        %v2818 = vld [vmem:[#allocation16 + $0x4f8] sm:$0xff]
        %v2819 = vld [vmem:[#allocation16 + $0x500] sm:$0xf]
        %v2820 = vld [vmem:[#allocation16 + $0x504] sm:$0xff]
        %v2821 = vld [vmem:[#allocation16 + $0x50c] sm:$0xf]
        %v2822 = vld [vmem:[#allocation16 + $0x510] sm:$0xff]
        %v2823 = vld [vmem:[#allocation16 + $0x518] sm:$0xf]
        %v2824 = vld [vmem:[#allocation16 + $0x51c] sm:$0xff]
        %v2825 = vld [vmem:[#allocation16 + $0x524] sm:$0xf]
        %v2826 = vld [vmem:[#allocation16 + $0x528] sm:$0xff]
        %v2827 = vld [vmem:[#allocation16 + $0x530] sm:$0xf]
        %v2828 = vld [vmem:[#allocation16 + $0x534] sm:$0xff]
        %v2829 = vld [vmem:[#allocation16 + $0x53c] sm:$0xf]
        %v2830 = vld [vmem:[#allocation16 + $0x540] sm:$0x33]
        %v2831 = vld [vmem:[#allocation16 + $0x548] sm:$0x3]
        %2840 = vrot.lane.b32.xlu0 %v2598, 96
        %v2841 = vpop.permute.xlu0 %2840
        %2842 = vrot.lane.b32.xlu0 %v2599, 96
        %v2843 = vpop.permute.xlu0 %2842
        %2844 = vrot.lane.b32.xlu0 %v2600, 96
        %v2845 = vpop.permute.xlu0 %2844
        %2846 = vrot.lane.b32.xlu0 %v2601, 96
        %v2847 = vpop.permute.xlu0 %2846
        %2848 = vrot.lane.b32.xlu0 %v2602, 96
        %v2849 = vpop.permute.xlu0 %2848
        %2850 = vrot.lane.b32.xlu0 %v2603, 96
        %v2851 = vpop.permute.xlu0 %2850
        %2852 = vrot.lane.b32.xlu0 %v2604, 96
        %v2853 = vpop.permute.xlu0 %2852
        %2854 = vrot.lane.b32.xlu0 %v2605, 96
        %v2855 = vpop.permute.xlu0 %2854
        %v2856 = vsel %vm1410, %v2841, %v2843
        %v2857 = vsel %vm1410, %v2843, %v2845
        %v2858 = vsel %vm1410, %v2845, %v2847
        %v2859 = vsel %vm1410, %v2847, %v2849
        %v2860 = vsel %vm1410, %v2849, %v2851
        %v2861 = vsel %vm1410, %v2851, %v2853
        %v2862 = vsel %vm1410, %v2853, %v2855
        %v3096 = vunpack.c.l.b16 %v2606
        %v3097 = vunpack.c.h.b16 %v2606
        %v3098 = vunpack.c.l.b16 %v2607
        %v3099 = vunpack.c.l.b16 %v2608
        %v3100 = vunpack.c.h.b16 %v2608
        %v3101 = vunpack.c.l.b16 %v2609
        %v3102 = vunpack.c.l.b16 %v2610
        %v3103 = vunpack.c.h.b16 %v2610
        %v3104 = vunpack.c.l.b16 %v2611
        %v3105 = vunpack.c.l.b16 %v2612
        %v3106 = vunpack.c.h.b16 %v2612
        %v3107 = vunpack.c.l.b16 %v2613
        %v3108 = vunpack.c.l.b16 %v2614
        %v3109 = vunpack.c.h.b16 %v2614
        %v3110 = vunpack.c.l.b16 %v2615
        %v3111 = vunpack.c.l.b16 %v2616
        %v3112 = vunpack.c.h.b16 %v2616
        %v3113 = vunpack.c.l.b16 %v2617
        %v3114 = vunpack.c.l.b16 %v2618
        %v3115 = vunpack.c.h.b16 %v2618
        %v3116 = vunpack.c.l.b16 %v2619
        %v3117 = vunpack.c.l.b16 %v2620
        %v3118 = vunpack.c.h.b16 %v2620
        %v3119 = vunpack.c.l.b16 %v2621
        %v3120 = vunpack.c.l.b16 %v2622
        %v3121 = vunpack.c.h.b16 %v2622
        %v3122 = vunpack.c.l.b16 %v2623
        %v3123 = vunpack.c.l.b16 %v2624
        %v3124 = vunpack.c.h.b16 %v2624
        %v3125 = vunpack.c.l.b16 %v2625
        %v3126 = vunpack.c.l.b16 %v2626
        %v3127 = vunpack.c.h.b16 %v2626
        %v3128 = vunpack.c.l.b16 %v2627
        %v3129 = vunpack.c.l.b16 %v2628
        %v3130 = vunpack.c.h.b16 %v2628
        %v3131 = vunpack.c.l.b16 %v2629
        %v3132 = vunpack.c.l.b16 %v2630
        %v3133 = vunpack.c.h.b16 %v2630
        %v3134 = vunpack.c.l.b16 %v2631
        %v3135 = vunpack.c.l.b16 %v2632
        %v3136 = vunpack.c.h.b16 %v2632
        %v3137 = vunpack.c.l.b16 %v2633
        %v3138 = vunpack.c.l.b16 %v2634
        %v3139 = vunpack.c.h.b16 %v2634
        %v3140 = vunpack.c.l.b16 %v2635
        %v3141 = vunpack.c.l.b16 %v2636
        %v3142 = vunpack.c.h.b16 %v2636
        %v3143 = vunpack.c.l.b16 %v2637
        %v3144 = vunpack.c.l.b16 %v2638
        %v3145 = vunpack.c.h.b16 %v2638
        %v3146 = vunpack.c.l.b16 %v2639
        %v3147 = vunpack.c.l.b16 %v2640
        %v3148 = vunpack.c.h.b16 %v2640
        %v3149 = vunpack.c.l.b16 %v2641
        %v3150 = vunpack.c.l.b16 %v2642
        %v3151 = vunpack.c.h.b16 %v2642
        %v3152 = vunpack.c.l.b16 %v2643
        %v3153 = vunpack.c.l.b16 %v2644
        %v3154 = vunpack.c.h.b16 %v2644
        %v3155 = vunpack.c.l.b16 %v2645
        %v3156 = vunpack.c.l.b16 %v2646
        %v3157 = vunpack.c.h.b16 %v2646
        %v3158 = vunpack.c.l.b16 %v2647
        %v3159 = vunpack.c.l.b16 %v2648
        %v3160 = vunpack.c.h.b16 %v2648
        %v3161 = vunpack.c.l.b16 %v2649
        %v3162 = vunpack.c.l.b16 %v2650
        %v3163 = vunpack.c.h.b16 %v2650
        %v3164 = vunpack.c.l.b16 %v2651
        %v3165 = vunpack.c.l.b16 %v2652
        %v3166 = vunpack.c.h.b16 %v2652
        %v3167 = vunpack.c.l.b16 %v2653
        %v3168 = vunpack.c.l.b16 %v2654
        %v3169 = vunpack.c.h.b16 %v2654
        %v3170 = vunpack.c.l.b16 %v2655
        %v3171 = vunpack.c.l.b16 %v2656
        %v3172 = vunpack.c.h.b16 %v2656
        %v3173 = vunpack.c.l.b16 %v2657
        %v3174 = vunpack.c.l.b16 %v2658
        %v3175 = vunpack.c.h.b16 %v2658
        %v3176 = vunpack.c.l.b16 %v2659
        %v3177 = vunpack.c.l.b16 %v2660
        %v3178 = vunpack.c.h.b16 %v2660
        %v3179 = vunpack.c.l.b16 %v2661
        %v3180 = vunpack.c.l.b16 %v2662
        %v3181 = vunpack.c.h.b16 %v2662
        %v3182 = vunpack.c.l.b16 %v2663
        %v3183 = vunpack.c.l.b16 %v2664
        %v3184 = vunpack.c.h.b16 %v2664
        %v3185 = vunpack.c.l.b16 %v2665
        %v3186 = vunpack.c.l.b16 %v2666
        %v3187 = vunpack.c.h.b16 %v2666
        %v3188 = vunpack.c.l.b16 %v2667
        %v3189 = vunpack.c.l.b16 %v2668
        %v3190 = vunpack.c.h.b16 %v2668
        %v3191 = vunpack.c.l.b16 %v2669
        %v3192 = vunpack.c.l.b16 %v2670
        %v3193 = vunpack.c.h.b16 %v2670
        %v3194 = vunpack.c.l.b16 %v2671
        %v3195 = vunpack.c.l.b16 %v2672
        %v3196 = vunpack.c.h.b16 %v2672
        %v3197 = vunpack.c.l.b16 %v2673
        %v3198 = vunpack.c.l.b16 %v2674
        %v3199 = vunpack.c.h.b16 %v2674
        %v3200 = vunpack.c.l.b16 %v2675
        %v3201 = vunpack.c.l.b16 %v2676
        %v3202 = vunpack.c.h.b16 %v2676
        %v3203 = vunpack.c.l.b16 %v2677
        %v3204 = vunpack.c.l.b16 %v2678
        %v3205 = vunpack.c.h.b16 %v2678
        %v3206 = vunpack.c.l.b16 %v2679
        %v3207 = vunpack.c.l.b16 %v2680
        %v3208 = vunpack.c.h.b16 %v2680
        %v3209 = vunpack.c.l.b16 %v2681
        %v3210 = vunpack.c.l.b16 %v2682
        %v3211 = vunpack.c.h.b16 %v2682
        %v3212 = vunpack.c.l.b16 %v2683
        %v3213 = vunpack.c.l.b16 %v2684
        %v3214 = vunpack.c.h.b16 %v2684
        %v3215 = vunpack.c.l.b16 %v2685
        %v3216 = vunpack.c.l.b16 %v2686
        %v3217 = vunpack.c.h.b16 %v2686
        %v3218 = vunpack.c.l.b16 %v2687
        %v3219 = vunpack.c.l.b16 %v2688
        %v3220 = vunpack.c.h.b16 %v2688
        %v3221 = vunpack.c.l.b16 %v2689
        %v3222 = vunpack.c.l.b16 %v2690
        %v3223 = vunpack.c.h.b16 %v2690
        %v3224 = vunpack.c.l.b16 %v2691
        %v3225 = vunpack.c.l.b16 %v2692
        %v3226 = vunpack.c.h.b16 %v2692
        %v3227 = vunpack.c.l.b16 %v2693
        %v3228 = vunpack.c.l.b16 %v2694
        %v3229 = vunpack.c.h.b16 %v2694
        %v3230 = vunpack.c.l.b16 %v2695
        %v3231 = vunpack.c.l.b16 %v2696
        %v3232 = vunpack.c.h.b16 %v2696
        %v3233 = vunpack.c.l.b16 %v2697
        %v3234 = vunpack.c.l.b16 %v2698
        %v3235 = vunpack.c.h.b16 %v2698
        %v3236 = vunpack.c.l.b16 %v2699
        %v3237 = vunpack.c.l.b16 %v2700
        %v3238 = vunpack.c.h.b16 %v2700
        %v3239 = vunpack.c.l.b16 %v2701
        %v3240 = vunpack.c.l.b16 %v2702
        %v3241 = vunpack.c.h.b16 %v2702
        %v3242 = vunpack.c.l.b16 %v2703
        %v3243 = vunpack.c.l.b16 %v2704
        %v3244 = vunpack.c.h.b16 %v2704
        %v3245 = vunpack.c.l.b16 %v2705
        %v3246 = vunpack.c.l.b16 %v2706
        %v3247 = vunpack.c.h.b16 %v2706
        %v3248 = vunpack.c.l.b16 %v2707
        %v3249 = vunpack.c.l.b16 %v2708
        %v3250 = vunpack.c.h.b16 %v2708
        %v3251 = vunpack.c.l.b16 %v2709
        %v3252 = vunpack.c.l.b16 %v2710
        %v3253 = vunpack.c.h.b16 %v2710
        %v3254 = vunpack.c.l.b16 %v2711
        %v3255 = vunpack.c.l.b16 %v2712
        %v3256 = vunpack.c.h.b16 %v2712
        %v3257 = vunpack.c.l.b16 %v2713
        %v3258 = vunpack.c.l.b16 %v2714
        %v3259 = vunpack.c.h.b16 %v2714
        %v3260 = vunpack.c.l.b16 %v2715
        %v3261 = vunpack.c.l.b16 %v2716
        %v3262 = vunpack.c.h.b16 %v2716
        %v3263 = vunpack.c.l.b16 %v2717
        %v3264 = vunpack.c.l.b16 %v2718
        %v3265 = vunpack.c.h.b16 %v2718
        %v3266 = vunpack.c.l.b16 %v2719
        %v3267 = vunpack.c.l.b16 %v2720
        %v3268 = vunpack.c.h.b16 %v2720
        %v3269 = vunpack.c.l.b16 %v2721
        %v3270 = vunpack.c.l.b16 %v2722
        %v3271 = vunpack.c.h.b16 %v2722
        %v3272 = vunpack.c.l.b16 %v2723
        %v3273 = vunpack.c.l.b16 %v2724
        %v3274 = vunpack.c.h.b16 %v2724
        %v3275 = vunpack.c.l.b16 %v2725
        %v3276 = vunpack.c.l.b16 %v2726
        %v3277 = vunpack.c.h.b16 %v2726
        %v3278 = vunpack.c.l.b16 %v2727
        %v3279 = vunpack.c.l.b16 %v2728
        %v3280 = vunpack.c.h.b16 %v2728
        %v3281 = vunpack.c.l.b16 %v2729
        %v3282 = vunpack.c.l.b16 %v2730
        %v3283 = vunpack.c.h.b16 %v2730
        %v3284 = vunpack.c.l.b16 %v2731
        %v3285 = vunpack.c.l.b16 %v2732
        %v3286 = vunpack.c.h.b16 %v2732
        %v3287 = vunpack.c.l.b16 %v2733
        %v3288 = vunpack.c.l.b16 %v2734
        %v3289 = vunpack.c.h.b16 %v2734
        %v3290 = vunpack.c.l.b16 %v2735
        %v3291 = vunpack.c.l.b16 %v2736
        %v3292 = vunpack.c.h.b16 %v2736
        %v3293 = vunpack.c.l.b16 %v2737
        %v3294 = vunpack.c.l.b16 %v2738
        %v3295 = vunpack.c.h.b16 %v2738
        %v3296 = vunpack.c.l.b16 %v2739
        %v3297 = vunpack.c.l.b16 %v2740
        %v3298 = vunpack.c.h.b16 %v2740
        %v3299 = vunpack.c.l.b16 %v2741
        %v3300 = vunpack.c.l.b16 %v2742
        %v3301 = vunpack.c.h.b16 %v2742
        %v3302 = vunpack.c.l.b16 %v2743
        %v3303 = vunpack.c.l.b16 %v2744
        %v3304 = vunpack.c.h.b16 %v2744
        %v3305 = vunpack.c.l.b16 %v2745
        %v3306 = vunpack.c.l.b16 %v2746
        %v3307 = vunpack.c.h.b16 %v2746
        %v3308 = vunpack.c.l.b16 %v2747
        %v3309 = vunpack.c.l.b16 %v2748
        %v3310 = vunpack.c.h.b16 %v2748
        %v3311 = vunpack.c.l.b16 %v2749
        %v3312 = vunpack.c.l.b16 %v2750
        %v3313 = vunpack.c.h.b16 %v2750
        %v3314 = vunpack.c.l.b16 %v2751
        %v3315 = vunpack.c.l.b16 %v2752
        %v3316 = vunpack.c.h.b16 %v2752
        %v3317 = vunpack.c.l.b16 %v2753
        %v3318 = vunpack.c.l.b16 %v2754
        %v3319 = vunpack.c.h.b16 %v2754
        %v3320 = vunpack.c.l.b16 %v2755
        %v3321 = vunpack.c.l.b16 %v2756
        %v3322 = vunpack.c.h.b16 %v2756
        %v3323 = vunpack.c.l.b16 %v2757
        %v3324 = vunpack.c.l.b16 %v2758
        %v3325 = vunpack.c.h.b16 %v2758
        %v3326 = vunpack.c.l.b16 %v2759
        %v3327 = vunpack.c.l.b16 %v2760
        %v3328 = vunpack.c.h.b16 %v2760
        %v3329 = vunpack.c.l.b16 %v2761
        %v3330 = vunpack.c.l.b16 %v2762
        %v3331 = vunpack.c.h.b16 %v2762
        %v3332 = vunpack.c.l.b16 %v2763
        %v3333 = vunpack.c.l.b16 %v2764
        %v3334 = vunpack.c.h.b16 %v2764
        %v3335 = vunpack.c.l.b16 %v2765
        %v3336 = vunpack.c.l.b16 %v2766
        %v3337 = vunpack.c.h.b16 %v2766
        %v3338 = vunpack.c.l.b16 %v2767
        %v3339 = vunpack.c.l.b16 %v2768
        %v3340 = vunpack.c.h.b16 %v2768
        %v3341 = vunpack.c.l.b16 %v2769
        %v3342 = vunpack.c.l.b16 %v2770
        %v3343 = vunpack.c.h.b16 %v2770
        %v3344 = vunpack.c.l.b16 %v2771
        %v3345 = vunpack.c.l.b16 %v2772
        %v3346 = vunpack.c.h.b16 %v2772
        %v3347 = vunpack.c.l.b16 %v2773
        %v3348 = vunpack.c.l.b16 %v2774
        %v3349 = vunpack.c.h.b16 %v2774
        %v3350 = vunpack.c.l.b16 %v2775
        %v3351 = vunpack.c.l.b16 %v2776
        %v3352 = vunpack.c.h.b16 %v2776
        %v3353 = vunpack.c.l.b16 %v2777
        %v3354 = vunpack.c.l.b16 %v2778
        %v3355 = vunpack.c.h.b16 %v2778
        %v3356 = vunpack.c.l.b16 %v2779
        %v3357 = vunpack.c.l.b16 %v2780
        %v3358 = vunpack.c.h.b16 %v2780
        %v3359 = vunpack.c.l.b16 %v2781
        %v3360 = vunpack.c.l.b16 %v2782
        %v3361 = vunpack.c.h.b16 %v2782
        %v3362 = vunpack.c.l.b16 %v2783
        %v3363 = vunpack.c.l.b16 %v2784
        %v3364 = vunpack.c.h.b16 %v2784
        %v3365 = vunpack.c.l.b16 %v2785
        %v3366 = vunpack.c.l.b16 %v2786
        %v3367 = vunpack.c.h.b16 %v2786
        %v3368 = vunpack.c.l.b16 %v2787
        %v3369 = vunpack.c.l.b16 %v2788
        %v3370 = vunpack.c.h.b16 %v2788
        %v3371 = vunpack.c.l.b16 %v2789
        %v3372 = vunpack.c.l.b16 %v2790
        %v3373 = vunpack.c.h.b16 %v2790
        %v3374 = vunpack.c.l.b16 %v2791
        %v3375 = vunpack.c.l.b16 %v2792
        %v3376 = vunpack.c.h.b16 %v2792
        %v3377 = vunpack.c.l.b16 %v2793
        %v3378 = vunpack.c.l.b16 %v2794
        %v3379 = vunpack.c.h.b16 %v2794
        %v3380 = vunpack.c.l.b16 %v2795
        %v3381 = vunpack.c.l.b16 %v2796
        %v3382 = vunpack.c.h.b16 %v2796
        %v3383 = vunpack.c.l.b16 %v2797
        %v3384 = vunpack.c.l.b16 %v2798
        %v3385 = vunpack.c.h.b16 %v2798
        %v3386 = vunpack.c.l.b16 %v2799
        %v3387 = vunpack.c.l.b16 %v2800
        %v3388 = vunpack.c.h.b16 %v2800
        %v3389 = vunpack.c.l.b16 %v2801
        %v3390 = vunpack.c.l.b16 %v2802
        %v3391 = vunpack.c.h.b16 %v2802
        %v3392 = vunpack.c.l.b16 %v2803
        %v3393 = vunpack.c.l.b16 %v2804
        %v3394 = vunpack.c.h.b16 %v2804
        %v3395 = vunpack.c.l.b16 %v2805
        %v3396 = vunpack.c.l.b16 %v2806
        %v3397 = vunpack.c.h.b16 %v2806
        %v3398 = vunpack.c.l.b16 %v2807
        %v3399 = vunpack.c.l.b16 %v2808
        %v3400 = vunpack.c.h.b16 %v2808
        %v3401 = vunpack.c.l.b16 %v2809
        %v3402 = vunpack.c.l.b16 %v2810
        %v3403 = vunpack.c.h.b16 %v2810
        %v3404 = vunpack.c.l.b16 %v2811
        %v3405 = vunpack.c.l.b16 %v2812
        %v3406 = vunpack.c.h.b16 %v2812
        %v3407 = vunpack.c.l.b16 %v2813
        %v3408 = vunpack.c.l.b16 %v2814
        %v3409 = vunpack.c.h.b16 %v2814
        %v3410 = vunpack.c.l.b16 %v2815
        %v3411 = vunpack.c.l.b16 %v2816
        %v3412 = vunpack.c.h.b16 %v2816
        %v3413 = vunpack.c.l.b16 %v2817
        %v3414 = vunpack.c.l.b16 %v2818
        %v3415 = vunpack.c.h.b16 %v2818
        %v3416 = vunpack.c.l.b16 %v2819
        %v3417 = vunpack.c.l.b16 %v2820
        %v3418 = vunpack.c.h.b16 %v2820
        %v3419 = vunpack.c.l.b16 %v2821
        %v3420 = vunpack.c.l.b16 %v2822
        %v3421 = vunpack.c.h.b16 %v2822
        %v3422 = vunpack.c.l.b16 %v2823
        %v3423 = vunpack.c.l.b16 %v2824
        %v3424 = vunpack.c.h.b16 %v2824
        %v3425 = vunpack.c.l.b16 %v2825
        %v3426 = vunpack.c.l.b16 %v2826
        %v3427 = vunpack.c.h.b16 %v2826
        %v3428 = vunpack.c.l.b16 %v2827
        %v3429 = vunpack.c.l.b16 %v2828
        %v3430 = vunpack.c.h.b16 %v2828
        %v3431 = vunpack.c.l.b16 %v2829
        %v3432 = vunpack.c.l.b16 %v2830
        %v3433 = vunpack.c.h.b16 %v2830
        %v3434 = vunpack.c.l.b16 %v2831
        %v3435 = vpack.c.b16 %v3099, %v3096
        %v3436 = vpack.c.b16 %v3100, %v3097
        %v3437 = vpack.c.b16 %v3101, %v3098
        %v3438 = vpack.c.b16 %v3105, %v3102
        %v3439 = vpack.c.b16 %v3106, %v3103
        %v3440 = vpack.c.b16 %v3107, %v3104
        %v3441 = vpack.c.b16 %v3111, %v3108
        %v3442 = vpack.c.b16 %v3112, %v3109
        %v3443 = vpack.c.b16 %v3113, %v3110
        %v3444 = vpack.c.b16 %v3117, %v3114
        %v3445 = vpack.c.b16 %v3118, %v3115
        %v3446 = vpack.c.b16 %v3119, %v3116
        %v3447 = vpack.c.b16 %v3123, %v3120
        %v3448 = vpack.c.b16 %v3124, %v3121
        %v3449 = vpack.c.b16 %v3125, %v3122
        %v3450 = vpack.c.b16 %v3129, %v3126
        %v3451 = vpack.c.b16 %v3130, %v3127
        %v3452 = vpack.c.b16 %v3131, %v3128
        %v3453 = vpack.c.b16 %v3135, %v3132
        %v3454 = vpack.c.b16 %v3136, %v3133
        %v3455 = vpack.c.b16 %v3137, %v3134
        %v3456 = vpack.c.b16 %v3141, %v3138
        %v3457 = vpack.c.b16 %v3142, %v3139
        %v3458 = vpack.c.b16 %v3143, %v3140
        %v3459 = vpack.c.b16 %v3147, %v3144
        %v3460 = vpack.c.b16 %v3148, %v3145
        %v3461 = vpack.c.b16 %v3149, %v3146
        %v3462 = vpack.c.b16 %v3153, %v3150
        %v3463 = vpack.c.b16 %v3154, %v3151
        %v3464 = vpack.c.b16 %v3155, %v3152
        %v3465 = vpack.c.b16 %v3159, %v3156
        %v3466 = vpack.c.b16 %v3160, %v3157
        %v3467 = vpack.c.b16 %v3161, %v3158
        %v3468 = vpack.c.b16 %v3165, %v3162
        %v3469 = vpack.c.b16 %v3166, %v3163
        %v3470 = vpack.c.b16 %v3167, %v3164
        %v3471 = vpack.c.b16 %v3171, %v3168
        %v3472 = vpack.c.b16 %v3172, %v3169
        %v3473 = vpack.c.b16 %v3173, %v3170
        %v3474 = vpack.c.b16 %v3177, %v3174
        %v3475 = vpack.c.b16 %v3178, %v3175
        %v3476 = vpack.c.b16 %v3179, %v3176
        %v3477 = vpack.c.b16 %v3183, %v3180
        %v3478 = vpack.c.b16 %v3184, %v3181
        %v3479 = vpack.c.b16 %v3185, %v3182
        %v3480 = vpack.c.b16 %v3189, %v3186
        %v3481 = vpack.c.b16 %v3190, %v3187
        %v3482 = vpack.c.b16 %v3191, %v3188
        %v3483 = vpack.c.b16 %v3195, %v3192
        %v3484 = vpack.c.b16 %v3196, %v3193
        %v3485 = vpack.c.b16 %v3197, %v3194
        %v3486 = vpack.c.b16 %v3201, %v3198
        %v3487 = vpack.c.b16 %v3202, %v3199
        %v3488 = vpack.c.b16 %v3203, %v3200
        %v3489 = vpack.c.b16 %v3207, %v3204
        %v3490 = vpack.c.b16 %v3208, %v3205
        %v3491 = vpack.c.b16 %v3209, %v3206
        %v3492 = vpack.c.b16 %v3213, %v3210
        %v3493 = vpack.c.b16 %v3214, %v3211
        %v3494 = vpack.c.b16 %v3215, %v3212
        %v3495 = vpack.c.b16 %v3219, %v3216
        %v3496 = vpack.c.b16 %v3220, %v3217
        %v3497 = vpack.c.b16 %v3221, %v3218
        %v3498 = vpack.c.b16 %v3225, %v3222
        %v3499 = vpack.c.b16 %v3226, %v3223
        %v3500 = vpack.c.b16 %v3227, %v3224
        %v3501 = vpack.c.b16 %v3231, %v3228
        %v3502 = vpack.c.b16 %v3232, %v3229
        %v3503 = vpack.c.b16 %v3233, %v3230
        %v3504 = vpack.c.b16 %v3237, %v3234
        %v3505 = vpack.c.b16 %v3238, %v3235
        %v3506 = vpack.c.b16 %v3239, %v3236
        %v3507 = vpack.c.b16 %v3243, %v3240
        %v3508 = vpack.c.b16 %v3244, %v3241
        %v3509 = vpack.c.b16 %v3245, %v3242
        %v3510 = vpack.c.b16 %v3249, %v3246
        %v3511 = vpack.c.b16 %v3250, %v3247
        %v3512 = vpack.c.b16 %v3251, %v3248
        %v3513 = vpack.c.b16 %v3255, %v3252
        %v3514 = vpack.c.b16 %v3256, %v3253
        %v3515 = vpack.c.b16 %v3257, %v3254
        %v3516 = vpack.c.b16 %v3261, %v3258
        %v3517 = vpack.c.b16 %v3262, %v3259
        %v3518 = vpack.c.b16 %v3263, %v3260
        %v3519 = vpack.c.b16 %v3267, %v3264
        %v3520 = vpack.c.b16 %v3268, %v3265
        %v3521 = vpack.c.b16 %v3269, %v3266
        %v3522 = vpack.c.b16 %v3273, %v3270
        %v3523 = vpack.c.b16 %v3274, %v3271
        %v3524 = vpack.c.b16 %v3275, %v3272
        %v3525 = vpack.c.b16 %v3279, %v3276
        %v3526 = vpack.c.b16 %v3280, %v3277
        %v3527 = vpack.c.b16 %v3281, %v3278
        %v3528 = vpack.c.b16 %v3285, %v3282
        %v3529 = vpack.c.b16 %v3286, %v3283
        %v3530 = vpack.c.b16 %v3287, %v3284
        %v3531 = vpack.c.b16 %v3291, %v3288
        %v3532 = vpack.c.b16 %v3292, %v3289
        %v3533 = vpack.c.b16 %v3293, %v3290
        %v3534 = vpack.c.b16 %v3297, %v3294
        %v3535 = vpack.c.b16 %v3298, %v3295
        %v3536 = vpack.c.b16 %v3299, %v3296
        %v3537 = vpack.c.b16 %v3303, %v3300
        %v3538 = vpack.c.b16 %v3304, %v3301
        %v3539 = vpack.c.b16 %v3305, %v3302
        %v3540 = vpack.c.b16 %v3309, %v3306
        %v3541 = vpack.c.b16 %v3310, %v3307
        %v3542 = vpack.c.b16 %v3311, %v3308
        %v3543 = vpack.c.b16 %v3315, %v3312
        %v3544 = vpack.c.b16 %v3316, %v3313
        %v3545 = vpack.c.b16 %v3317, %v3314
        %v3546 = vpack.c.b16 %v3321, %v3318
        %v3547 = vpack.c.b16 %v3322, %v3319
        %v3548 = vpack.c.b16 %v3323, %v3320
        %v3549 = vpack.c.b16 %v3327, %v3324
        %v3550 = vpack.c.b16 %v3328, %v3325
        %v3551 = vpack.c.b16 %v3329, %v3326
        %v3552 = vpack.c.b16 %v3333, %v3330
        %v3553 = vpack.c.b16 %v3334, %v3331
        %v3554 = vpack.c.b16 %v3335, %v3332
        %v3555 = vpack.c.b16 %v3339, %v3336
        %v3556 = vpack.c.b16 %v3340, %v3337
        %v3557 = vpack.c.b16 %v3341, %v3338
        %v3558 = vpack.c.b16 %v3345, %v3342
        %v3559 = vpack.c.b16 %v3346, %v3343
        %v3560 = vpack.c.b16 %v3347, %v3344
        %v3561 = vpack.c.b16 %v3351, %v3348
        %v3562 = vpack.c.b16 %v3352, %v3349
        %v3563 = vpack.c.b16 %v3353, %v3350
        %v3564 = vpack.c.b16 %v3357, %v3354
        %v3565 = vpack.c.b16 %v3358, %v3355
        %v3566 = vpack.c.b16 %v3359, %v3356
        %v3567 = vpack.c.b16 %v3363, %v3360
        %v3568 = vpack.c.b16 %v3364, %v3361
        %v3569 = vpack.c.b16 %v3365, %v3362
        %v3570 = vpack.c.b16 %v3369, %v3366
        %v3571 = vpack.c.b16 %v3370, %v3367
        %v3572 = vpack.c.b16 %v3371, %v3368
        %v3573 = vpack.c.b16 %v3375, %v3372
        %v3574 = vpack.c.b16 %v3376, %v3373
        %v3575 = vpack.c.b16 %v3377, %v3374
        %v3576 = vpack.c.b16 %v3381, %v3378
        %v3577 = vpack.c.b16 %v3382, %v3379
        %v3578 = vpack.c.b16 %v3383, %v3380
        %v3579 = vpack.c.b16 %v3387, %v3384
        %v3580 = vpack.c.b16 %v3388, %v3385
        %v3581 = vpack.c.b16 %v3389, %v3386
        %v3582 = vpack.c.b16 %v3393, %v3390
        %v3583 = vpack.c.b16 %v3394, %v3391
        %v3584 = vpack.c.b16 %v3395, %v3392
        %v3585 = vpack.c.b16 %v3399, %v3396
        %v3586 = vpack.c.b16 %v3400, %v3397
        %v3587 = vpack.c.b16 %v3401, %v3398
        %v3588 = vpack.c.b16 %v3405, %v3402
        %v3589 = vpack.c.b16 %v3406, %v3403
        %v3590 = vpack.c.b16 %v3407, %v3404
        %v3591 = vpack.c.b16 %v3411, %v3408
        %v3592 = vpack.c.b16 %v3412, %v3409
        %v3593 = vpack.c.b16 %v3413, %v3410
        %v3594 = vpack.c.b16 %v3417, %v3414
        %v3595 = vpack.c.b16 %v3418, %v3415
        %v3596 = vpack.c.b16 %v3419, %v3416
        %v3597 = vpack.c.b16 %v3423, %v3420
        %v3598 = vpack.c.b16 %v3424, %v3421
        %v3599 = vpack.c.b16 %v3425, %v3422
        %v3600 = vpack.c.b16 %v3429, %v3426
        %v3601 = vpack.c.b16 %v3430, %v3427
        %v3602 = vpack.c.b16 %v3431, %v3428
        %v3603 = vpack.c.b16 %v3432, %v3432
        %v3604 = vpack.c.b16 %v3433, %v3433
        %v3605 = vpack.c.b16 %v3434, %v3434
        %v3775 = vsel %vm796, %v2855, 0
        %vm3777 = vcmask 1041408
        %v3779 = vsel %vm3777, %v3603, 0
        %v3782 = vsel %vm3777, %v3604, 0
        %v3785 = vsel %vm3777, %v3605, 0
        %3787 = vmatprep.subr.bf16.mxu0 %v3436
        %3788 = vmatpush1.bf16.msra.mxu0 %v3435
        %3789 = vmatprep.subr.bf16.mxu0 %v3439
        %3790 = vmatpush1.bf16.msra.mxu0 %v3438
        %3791 = vmatprep.subr.bf16.mxu0 %v3442
        %3792 = vmatpush1.bf16.msra.mxu0 %v3441
        %3793 = vmatprep.subr.bf16.mxu0 %v3445
        %3794 = vmatpush1.bf16.msra.mxu0 %v3444
        %3795 = vmatprep.subr.bf16.mxu0 %v3448
        %3796 = vmatpush1.bf16.msra.mxu0 %v3447
        %3797 = vmatprep.subr.bf16.mxu0 %v3451
        %3798 = vmatpush1.bf16.msra.mxu0 %v3450
        %3799 = vmatprep.subr.bf16.mxu0 %v3454
        %3800 = vmatpush1.bf16.msra.mxu0 %v3453
        %3801 = vmatprep.subr.bf16.mxu0 %v3457
        %3802 = vmatpush1.bf16.msra.mxu0 %v3456
        %3803 = vmatprep.subr.bf16.mxu0 %v3460
        %3804 = vmatpush1.bf16.msra.mxu0 %v3459
        %3805 = vmatprep.subr.bf16.mxu0 %v3463
        %3806 = vmatpush1.bf16.msra.mxu0 %v3462
        %3807 = vmatprep.subr.bf16.mxu0 %v3466
        %3808 = vmatpush1.bf16.msra.mxu0 %v3465
        %3809 = vmatprep.subr.bf16.mxu0 %v3469
        %3810 = vmatpush1.bf16.msra.mxu0 %v3468
        %3811 = vmatprep.subr.bf16.mxu0 %v3472
        %3812 = vmatpush1.bf16.msra.mxu0 %v3471
        %3813 = vmatprep.subr.bf16.mxu0 %v3475
        %3814 = vmatpush1.bf16.msra.mxu0 %v3474
        %3815 = vmatprep.subr.bf16.mxu0 %v3478
        %3816 = vmatpush1.bf16.msra.mxu0 %v3477
        %3817 = vmatprep.subr.bf16.mxu0 %v3481
        %3818 = vmatpush1.bf16.msra.mxu0 %v3480
        %3819 = vmatprep.mubr.bf16.mxu0 %v2857
        %3820 = vmatmul.mubr.bf16.gmra.mrb[0].mxu0 %v2856
        %v3821 = vpop.f32.mrb[0].mxu0
        %v3822 = vadd.f32 0.0, %v3821
        %v3823 = vpop.f32.mrb[0].mxu0
        %v3824 = vadd.f32 0.0, %v3823
        %v3825 = vpop.f32.mrb[0].mxu0
        %v3826 = vadd.f32 0.0, %v3825
        %v3827 = vpop.f32.mrb[0].mxu0
        %v3828 = vadd.f32 0.0, %v3827
        %3829 = vdwg.mxu0
        %3830 = vmatprep.subr.bf16.mxu0 %v3484
        %3831 = vmatpush1.bf16.msra.mxu0 %v3483
        %3832 = vmatprep.subr.bf16.mxu0 %v3487
        %3833 = vmatpush1.bf16.msra.mxu0 %v3486
        %3834 = vmatprep.subr.bf16.mxu0 %v3490
        %3835 = vmatpush1.bf16.msra.mxu0 %v3489
        %3836 = vmatprep.subr.bf16.mxu0 %v3493
        %3837 = vmatpush1.bf16.msra.mxu0 %v3492
        %3838 = vmatprep.subr.bf16.mxu0 %v3496
        %3839 = vmatpush1.bf16.msra.mxu0 %v3495
        %3840 = vmatprep.subr.bf16.mxu0 %v3499
        %3841 = vmatpush1.bf16.msra.mxu0 %v3498
        %3842 = vmatprep.subr.bf16.mxu0 %v3502
        %3843 = vmatpush1.bf16.msra.mxu0 %v3501
        %3844 = vmatprep.subr.bf16.mxu0 %v3505
        %3845 = vmatpush1.bf16.msra.mxu0 %v3504
        %3846 = vmatprep.subr.bf16.mxu0 %v3508
        %3847 = vmatpush1.bf16.msra.mxu0 %v3507
        %3848 = vmatprep.subr.bf16.mxu0 %v3511
        %3849 = vmatpush1.bf16.msra.mxu0 %v3510
        %3850 = vmatprep.subr.bf16.mxu0 %v3514
        %3851 = vmatpush1.bf16.msra.mxu0 %v3513
        %3852 = vmatprep.subr.bf16.mxu0 %v3517
        %3853 = vmatpush1.bf16.msra.mxu0 %v3516
        %3854 = vmatprep.subr.bf16.mxu0 %v3520
        %3855 = vmatpush1.bf16.msra.mxu0 %v3519
        %3856 = vmatprep.subr.bf16.mxu0 %v3523
        %3857 = vmatpush1.bf16.msra.mxu0 %v3522
        %3858 = vmatprep.subr.bf16.mxu0 %v3526
        %3859 = vmatpush1.bf16.msra.mxu0 %v3525
        %3860 = vmatprep.subr.bf16.mxu0 %v3529
        %3861 = vmatpush1.bf16.msra.mxu0 %v3528
        %3862 = vmatprep.mubr.bf16.mxu0 %v2859
        %3863 = vmatmul.mubr.bf16.gmra.mrb[0].mxu0 %v2858
        %v3864 = vpop.f32.mrb[0].mxu0
        %v3865 = vadd.f32 %v3822, %v3864
        %v3866 = vpop.f32.mrb[0].mxu0
        %v3867 = vadd.f32 %v3824, %v3866
        %v3868 = vpop.f32.mrb[0].mxu0
        %v3869 = vadd.f32 %v3826, %v3868
        %v3870 = vpop.f32.mrb[0].mxu0
        %v3871 = vadd.f32 %v3828, %v3870
        %3872 = vdwg.mxu0
        %3873 = vmatprep.subr.bf16.mxu0 %v3532
        %3874 = vmatpush1.bf16.msra.mxu0 %v3531
        %3875 = vmatprep.subr.bf16.mxu0 %v3535
        %3876 = vmatpush1.bf16.msra.mxu0 %v3534
        %3877 = vmatprep.subr.bf16.mxu0 %v3538
        %3878 = vmatpush1.bf16.msra.mxu0 %v3537
        %3879 = vmatprep.subr.bf16.mxu0 %v3541
        %3880 = vmatpush1.bf16.msra.mxu0 %v3540
        %3881 = vmatprep.subr.bf16.mxu0 %v3544
        %3882 = vmatpush1.bf16.msra.mxu0 %v3543
        %3883 = vmatprep.subr.bf16.mxu0 %v3547
        %3884 = vmatpush1.bf16.msra.mxu0 %v3546
        %3885 = vmatprep.subr.bf16.mxu0 %v3550
        %3886 = vmatpush1.bf16.msra.mxu0 %v3549
        %3887 = vmatprep.subr.bf16.mxu0 %v3553
        %3888 = vmatpush1.bf16.msra.mxu0 %v3552
        %3889 = vmatprep.subr.bf16.mxu0 %v3556
        %3890 = vmatpush1.bf16.msra.mxu0 %v3555
        %3891 = vmatprep.subr.bf16.mxu0 %v3559
        %3892 = vmatpush1.bf16.msra.mxu0 %v3558
        %3893 = vmatprep.subr.bf16.mxu0 %v3562
        %3894 = vmatpush1.bf16.msra.mxu0 %v3561
        %3895 = vmatprep.subr.bf16.mxu0 %v3565
        %3896 = vmatpush1.bf16.msra.mxu0 %v3564
        %3897 = vmatprep.subr.bf16.mxu0 %v3568
        %3898 = vmatpush1.bf16.msra.mxu0 %v3567
        %3899 = vmatprep.subr.bf16.mxu0 %v3571
        %3900 = vmatpush1.bf16.msra.mxu0 %v3570
        %3901 = vmatprep.subr.bf16.mxu0 %v3574
        %3902 = vmatpush1.bf16.msra.mxu0 %v3573
        %3903 = vmatprep.subr.bf16.mxu0 %v3577
        %3904 = vmatpush1.bf16.msra.mxu0 %v3576
        %3905 = vmatprep.mubr.bf16.mxu0 %v2861
        %3906 = vmatmul.mubr.bf16.gmra.mrb[0].mxu0 %v2860
        %v3907 = vpop.f32.mrb[0].mxu0
        %v3908 = vadd.f32 %v3865, %v3907
        %v3909 = vpop.f32.mrb[0].mxu0
        %v3910 = vadd.f32 %v3867, %v3909
        %v3911 = vpop.f32.mrb[0].mxu0
        %v3912 = vadd.f32 %v3869, %v3911
        %v3913 = vpop.f32.mrb[0].mxu0
        %v3914 = vadd.f32 %v3871, %v3913
        %3915 = vdwg.mxu0
        %3916 = vmatprep.subr.bf16.mxu0 %v3580
        %3917 = vmatpush1.bf16.msra.mxu0 %v3579
        %3918 = vmatprep.subr.bf16.mxu0 %v3583
        %3919 = vmatpush1.bf16.msra.mxu0 %v3582
        %3920 = vmatprep.subr.bf16.mxu0 %v3586
        %3921 = vmatpush1.bf16.msra.mxu0 %v3585
        %3922 = vmatprep.subr.bf16.mxu0 %v3589
        %3923 = vmatpush1.bf16.msra.mxu0 %v3588
        %3924 = vmatprep.subr.bf16.mxu0 %v3592
        %3925 = vmatpush1.bf16.msra.mxu0 %v3591
        %3926 = vmatprep.subr.bf16.mxu0 %v3595
        %3927 = vmatpush1.bf16.msra.mxu0 %v3594
        %3928 = vmatprep.subr.bf16.mxu0 %v3598
        %3929 = vmatpush1.bf16.msra.mxu0 %v3597
        %3930 = vmatprep.subr.bf16.mxu0 %v3601
        %3931 = vmatpush1.bf16.msra.mxu0 %v3600
        %3932 = vmatprep.subr.bf16.mxu0 %v3782
        %3933 = vmatpush1.bf16.msra.mxu0 %v3779
        %3934 = vmatprep.subr.bf16.mxu0 0
        %3935 = vmatpush1.bf16.msra.mxu0 0
        %3936 = vmatprep.subr.bf16.mxu0 0
        %3937 = vmatpush1.bf16.msra.mxu0 0
        %3938 = vmatprep.subr.bf16.mxu0 0
        %3939 = vmatpush1.bf16.msra.mxu0 0
        %3940 = vmatprep.subr.bf16.mxu0 0
        %3941 = vmatpush1.bf16.msra.mxu0 0
        %3942 = vmatprep.subr.bf16.mxu0 0
        %3943 = vmatpush1.bf16.msra.mxu0 0
        %3944 = vmatprep.subr.bf16.mxu0 0
        %3945 = vmatpush1.bf16.msra.mxu0 0
        %3946 = vmatprep.subr.bf16.mxu0 0
        %3947 = vmatpush1.bf16.msra.mxu0 0
        %3948 = vmatprep.mubr.bf16.mxu0 %v3775
        %3949 = vmatmul.mubr.bf16.gmra.mrb[0].mxu0 %v2862
        %v3950 = vpop.f32.mrb[0].mxu0
        %v3951 = vadd.f32 %v3908, %v3950
        %v3952 = vpop.f32.mrb[0].mxu0
        %v3953 = vadd.f32 %v3910, %v3952
        %v3954 = vpop.f32.mrb[0].mxu0
        %v3955 = vadd.f32 %v3912, %v3954
        %v3956 = vpop.f32.mrb[0].mxu0
        %v3957 = vadd.f32 %v3914, %v3956
        %3958 = vdwg.mxu0
        %3959 = vmatprep.subr.bf16.mxu0 0
        %3960 = vmatpush1.bf16.msra.mxu0 %v3437
        %3961 = vmatprep.subr.bf16.mxu0 0
        %3962 = vmatpush1.bf16.msra.mxu0 %v3440
        %3963 = vmatprep.subr.bf16.mxu0 0
        %3964 = vmatpush1.bf16.msra.mxu0 %v3443
        %3965 = vmatprep.subr.bf16.mxu0 0
        %3966 = vmatpush1.bf16.msra.mxu0 %v3446
        %3967 = vmatprep.subr.bf16.mxu0 0
        %3968 = vmatpush1.bf16.msra.mxu0 %v3449
        %3969 = vmatprep.subr.bf16.mxu0 0
        %3970 = vmatpush1.bf16.msra.mxu0 %v3452
        %3971 = vmatprep.subr.bf16.mxu0 0
        %3972 = vmatpush1.bf16.msra.mxu0 %v3455
        %3973 = vmatprep.subr.bf16.mxu0 0
        %3974 = vmatpush1.bf16.msra.mxu0 %v3458
        %3975 = vmatprep.subr.bf16.mxu0 0
        %3976 = vmatpush1.bf16.msra.mxu0 %v3461
        %3977 = vmatprep.subr.bf16.mxu0 0
        %3978 = vmatpush1.bf16.msra.mxu0 %v3464
        %3979 = vmatprep.subr.bf16.mxu0 0
        %3980 = vmatpush1.bf16.msra.mxu0 %v3467
        %3981 = vmatprep.subr.bf16.mxu0 0
        %3982 = vmatpush1.bf16.msra.mxu0 %v3470
        %3983 = vmatprep.subr.bf16.mxu0 0
        %3984 = vmatpush1.bf16.msra.mxu0 %v3473
        %3985 = vmatprep.subr.bf16.mxu0 0
        %3986 = vmatpush1.bf16.msra.mxu0 %v3476
        %3987 = vmatprep.subr.bf16.mxu0 0
        %3988 = vmatpush1.bf16.msra.mxu0 %v3479
        %3989 = vmatprep.subr.bf16.mxu0 0
        %3990 = vmatpush1.bf16.msra.mxu0 %v3482
        %3991 = vmatprep.mubr.bf16.mxu0 %v2857
        %3992 = vmatmul.mubr.bf16.gmra.mrb[0].mxu0 %v2856
        %v3993 = vpop.f32.mrb[0].mxu0
        %v3994 = vadd.f32 0.0, %v3993
        %v3995 = vpop.f32.mrb[0].mxu0
        %v3996 = vpop.f32.mrb[0].mxu0
        %v3997 = vadd.f32 0.0, %v3996
        %v3998 = vpop.f32.mrb[0].mxu0
        %3999 = vdwg.mxu0
        %4000 = vmatprep.subr.bf16.mxu0 0
        %4001 = vmatpush1.bf16.msra.mxu0 %v3485
        %4002 = vmatprep.subr.bf16.mxu0 0
        %4003 = vmatpush1.bf16.msra.mxu0 %v3488
        %4004 = vmatprep.subr.bf16.mxu0 0
        %4005 = vmatpush1.bf16.msra.mxu0 %v3491
        %4006 = vmatprep.subr.bf16.mxu0 0
        %4007 = vmatpush1.bf16.msra.mxu0 %v3494
        %4008 = vmatprep.subr.bf16.mxu0 0
        %4009 = vmatpush1.bf16.msra.mxu0 %v3497
        %4010 = vmatprep.subr.bf16.mxu0 0
        %4011 = vmatpush1.bf16.msra.mxu0 %v3500
        %4012 = vmatprep.subr.bf16.mxu0 0
        %4013 = vmatpush1.bf16.msra.mxu0 %v3503
        %4014 = vmatprep.subr.bf16.mxu0 0
        %4015 = vmatpush1.bf16.msra.mxu0 %v3506
        %4016 = vmatprep.subr.bf16.mxu0 0
        %4017 = vmatpush1.bf16.msra.mxu0 %v3509
        %4018 = vmatprep.subr.bf16.mxu0 0
        %4019 = vmatpush1.bf16.msra.mxu0 %v3512
        %4020 = vmatprep.subr.bf16.mxu0 0
        %4021 = vmatpush1.bf16.msra.mxu0 %v3515
        %4022 = vmatprep.subr.bf16.mxu0 0
        %4023 = vmatpush1.bf16.msra.mxu0 %v3518
        %4024 = vmatprep.subr.bf16.mxu0 0
        %4025 = vmatpush1.bf16.msra.mxu0 %v3521
        %4026 = vmatprep.subr.bf16.mxu0 0
        %4027 = vmatpush1.bf16.msra.mxu0 %v3524
        %4028 = vmatprep.subr.bf16.mxu0 0
        %4029 = vmatpush1.bf16.msra.mxu0 %v3527
        %4030 = vmatprep.subr.bf16.mxu0 0
        %4031 = vmatpush1.bf16.msra.mxu0 %v3530
        %4032 = vmatprep.mubr.bf16.mxu0 %v2859
        %4033 = vmatmul.mubr.bf16.gmra.mrb[0].mxu0 %v2858
        %v4034 = vpop.f32.mrb[0].mxu0
        %v4035 = vadd.f32 %v3994, %v4034
        %v4036 = vpop.f32.mrb[0].mxu0
        %v4037 = vpop.f32.mrb[0].mxu0
        %v4038 = vadd.f32 %v3997, %v4037
        %v4039 = vpop.f32.mrb[0].mxu0
        %4040 = vdwg.mxu0
        %4041 = vmatprep.subr.bf16.mxu0 0
        %4042 = vmatpush1.bf16.msra.mxu0 %v3533
        %4043 = vmatprep.subr.bf16.mxu0 0
        %4044 = vmatpush1.bf16.msra.mxu0 %v3536
        %4045 = vmatprep.subr.bf16.mxu0 0
        %4046 = vmatpush1.bf16.msra.mxu0 %v3539
        %4047 = vmatprep.subr.bf16.mxu0 0
        %4048 = vmatpush1.bf16.msra.mxu0 %v3542
        %4049 = vmatprep.subr.bf16.mxu0 0
        %4050 = vmatpush1.bf16.msra.mxu0 %v3545
        %4051 = vmatprep.subr.bf16.mxu0 0
        %4052 = vmatpush1.bf16.msra.mxu0 %v3548
        %4053 = vmatprep.subr.bf16.mxu0 0
        %4054 = vmatpush1.bf16.msra.mxu0 %v3551
        %4055 = vmatprep.subr.bf16.mxu0 0
        %4056 = vmatpush1.bf16.msra.mxu0 %v3554
        %4057 = vmatprep.subr.bf16.mxu0 0
        %4058 = vmatpush1.bf16.msra.mxu0 %v3557
        %4059 = vmatprep.subr.bf16.mxu0 0
        %4060 = vmatpush1.bf16.msra.mxu0 %v3560
        %4061 = vmatprep.subr.bf16.mxu0 0
        %4062 = vmatpush1.bf16.msra.mxu0 %v3563
        %4063 = vmatprep.subr.bf16.mxu0 0
        %4064 = vmatpush1.bf16.msra.mxu0 %v3566
        %4065 = vmatprep.subr.bf16.mxu0 0
        %4066 = vmatpush1.bf16.msra.mxu0 %v3569
        %4067 = vmatprep.subr.bf16.mxu0 0
        %4068 = vmatpush1.bf16.msra.mxu0 %v3572
        %4069 = vmatprep.subr.bf16.mxu0 0
        %4070 = vmatpush1.bf16.msra.mxu0 %v3575
        %4071 = vmatprep.subr.bf16.mxu0 0
        %4072 = vmatpush1.bf16.msra.mxu0 %v3578
        %4073 = vmatprep.mubr.bf16.mxu0 %v2861
        %4074 = vmatmul.mubr.bf16.gmra.mrb[0].mxu0 %v2860
        %v4075 = vpop.f32.mrb[0].mxu0
        %v4076 = vadd.f32 %v4035, %v4075
        %v4077 = vpop.f32.mrb[0].mxu0
        %v4078 = vpop.f32.mrb[0].mxu0
        %v4079 = vadd.f32 %v4038, %v4078
        %v4080 = vpop.f32.mrb[0].mxu0
        %4081 = vdwg.mxu0
        %4082 = vmatprep.subr.bf16.mxu0 0
        %4083 = vmatpush1.bf16.msra.mxu0 %v3581
        %4084 = vmatprep.subr.bf16.mxu0 0
        %4085 = vmatpush1.bf16.msra.mxu0 %v3584
        %4086 = vmatprep.subr.bf16.mxu0 0
        %4087 = vmatpush1.bf16.msra.mxu0 %v3587
        %4088 = vmatprep.subr.bf16.mxu0 0
        %4089 = vmatpush1.bf16.msra.mxu0 %v3590
        %4090 = vmatprep.subr.bf16.mxu0 0
        %4091 = vmatpush1.bf16.msra.mxu0 %v3593
        %4092 = vmatprep.subr.bf16.mxu0 0
        %4093 = vmatpush1.bf16.msra.mxu0 %v3596
        %4094 = vmatprep.subr.bf16.mxu0 0
        %4095 = vmatpush1.bf16.msra.mxu0 %v3599
        %4096 = vmatprep.subr.bf16.mxu0 0
        %4097 = vmatpush1.bf16.msra.mxu0 %v3602
        %4098 = vmatprep.subr.bf16.mxu0 0
        %4099 = vmatpush1.bf16.msra.mxu0 %v3785
        %4100 = vmatprep.subr.bf16.mxu0 0
        %4101 = vmatpush1.bf16.msra.mxu0 0
        %4102 = vmatprep.subr.bf16.mxu0 0
        %4103 = vmatpush1.bf16.msra.mxu0 0
        %4104 = vmatprep.subr.bf16.mxu0 0
        %4105 = vmatpush1.bf16.msra.mxu0 0
        %4106 = vmatprep.subr.bf16.mxu0 0
        %4107 = vmatpush1.bf16.msra.mxu0 0
        %4108 = vmatprep.subr.bf16.mxu0 0
        %4109 = vmatpush1.bf16.msra.mxu0 0
        %4110 = vmatprep.subr.bf16.mxu0 0
        %4111 = vmatpush1.bf16.msra.mxu0 0
        %4112 = vmatprep.subr.bf16.mxu0 0
        %4113 = vmatpush1.bf16.msra.mxu0 0
        %4114 = vmatprep.mubr.bf16.mxu0 %v3775
        %4115 = vmatmul.mubr.bf16.gmra.mrb[0].mxu0 %v2862
        %v4116 = vpop.f32.mrb[0].mxu0
        %v4117 = vadd.f32 %v4076, %v4116
        %v4118 = vpop.f32.mrb[0].mxu0
        %v4119 = vpop.f32.mrb[0].mxu0
        %v4120 = vadd.f32 %v4079, %v4119
        %v4121 = vpop.f32.mrb[0].mxu0
        %4122 = vdwg.mxu0
        %4129 = vrot.lane.b32.xlu0 %v3951, 32
        %v4130 = vpop.permute.xlu0 %4129
        %4131 = vrot.lane.b32.xlu0 %v3953, 32
        %v4132 = vpop.permute.xlu0 %4131
        %4133 = vrot.lane.b32.xlu0 %v4117, 32
        %v4134 = vpop.permute.xlu0 %4133
        %4135 = vrot.lane.b32.xlu0 %v3955, 32
        %v4136 = vpop.permute.xlu0 %4135
        %4137 = vrot.lane.b32.xlu0 %v3957, 32
        %v4138 = vpop.permute.xlu0 %4137
        %4139 = vrot.lane.b32.xlu0 %v4120, 32
        %v4140 = vpop.permute.xlu0 %4139
        %v4141 = vsel %vm766, %v4130, %v4132
        %v4142 = vsel %vm766, %v4132, %v4134
        %v4143 = vsel %vm766, %v4136, %v4138
        %v4144 = vsel %vm766, %v4138, %v4140
        %4151 = vst.msk [vmem:[#allocation3] sm:$0xff] %vm2374, %v4130
        %4152 = vst [vmem:[#allocation3 + $0x8] sm:$0xff] %v4141
        %vm4153 = vcmask 531456
        %4154 = vst.msk [vmem:[#allocation3 + $0x10] sm:$0xff] %vm4153, %v4142
        %4155 = vst.msk [vmem:[#allocation3 + $0x18] sm:$0xff] %vm2374, %v4136
        %4156 = vst [vmem:[#allocation3 + $0x20] sm:$0xff] %v4143
        %4157 = vst.msk [vmem:[#allocation3 + $0x28] sm:$0xff] %vm4153, %v4144
        %v4158 = vld [vmem:[#allocation3] sm:$0xff]
        %v4159 = vld [vmem:[#allocation3 + $0x8] sm:$0xff]
        %v4160 = vld [vmem:[#allocation3 + $0x10] sm:$0xff]
        %v4161 = vld [vmem:[#allocation3 + $0x18] sm:$0xff]
        %v4162 = vld [vmem:[#allocation3 + $0x20] sm:$0xff]
        %v4163 = vld [vmem:[#allocation3 + $0x28] sm:$0xff]
        %v4164 = vpack.c.bf16 %v4161, %v4158
        %v4165 = vpack.c.bf16 %v4162, %v4159
        %v4166 = vpack.c.bf16 %v4163, %v4160
        %4170 = vrot.lane.b32.xlu0 %v4164, 114
        %v4171 = vpop.permute.xlu0 %4170
        %4172 = vrot.lane.b32.xlu0 %v4165, 114
        %v4173 = vpop.permute.xlu0 %4172
        %4174 = vrot.lane.b32.xlu0 %v4166, 114
        %v4175 = vpop.permute.xlu0 %4174
        %vm4176 = vcmask 932864
        %v4177 = vsel %vm4176, %v4171, %v4173
        %v4178 = vsel %vm4176, %v4173, %v4175
        %4182 = vst [vmem:[#allocation14] sm:$0xff] %v4177
        %4183 = vst [vmem:[#allocation14 + $0x8] sm:$0xff] %v4178
        %vm4184 = vcmask 269312
        %4185 = vst.msk [vmem:[#allocation14 + $0x10] sm:$0xff] %vm4184, %v4175
        %v4186 = vld [vmem:[#allocation3] sm:$0xff]
        %v4187 = vld [vmem:[#allocation3 + $0x8] sm:$0xff]
        %v4188 = vld [vmem:[#allocation3 + $0x10] sm:$0xff]
        %v4189 = vld [vmem:[#allocation3 + $0x18] sm:$0xff]
        %v4190 = vld [vmem:[#allocation3 + $0x20] sm:$0xff]
        %v4191 = vld [vmem:[#allocation3 + $0x28] sm:$0xff]
        %v4192 = vpack.c.bf16 %v4189, %v4186
        %v4193 = vpack.c.bf16 %v4190, %v4187
        %v4194 = vpack.c.bf16 %v4191, %v4188
        %4198 = vrot.lane.b32.xlu0 %v4192, 113
        %v4199 = vpop.permute.xlu0 %4198
        %4200 = vrot.lane.b32.xlu0 %v4193, 113
        %v4201 = vpop.permute.xlu0 %4200
        %4202 = vrot.lane.b32.xlu0 %v4194, 113
        %v4203 = vpop.permute.xlu0 %4202
        %vm4204 = vcmask 924672
        %v4205 = vsel %vm4204, %v4199, %v4201
        %v4206 = vsel %vm4204, %v4201, %v4203
        %4210 = vst [vmem:[#allocation14 + $0x40] sm:$0xff] %v4205
        %4211 = vst [vmem:[#allocation14 + $0x48] sm:$0xff] %v4206
        %4212 = vst.msk [vmem:[#allocation14 + $0x50] sm:$0xff] %vm4184, %v4203
        %v4213 = vld [vmem:[#allocation3] sm:$0xff]
        %v4214 = vld [vmem:[#allocation3 + $0x8] sm:$0xff]
        %v4215 = vld [vmem:[#allocation3 + $0x10] sm:$0xff]
        %v4216 = vld [vmem:[#allocation3 + $0x18] sm:$0xff]
        %v4217 = vld [vmem:[#allocation3 + $0x20] sm:$0xff]
        %v4218 = vld [vmem:[#allocation3 + $0x28] sm:$0xff]
        %v4219 = vpack.c.bf16 %v4216, %v4213
        %v4220 = vpack.c.bf16 %v4217, %v4214
        %v4221 = vpack.c.bf16 %v4218, %v4215
        %4225 = vrot.lane.b32.xlu0 %v4219, 112
        %v4226 = vpop.permute.xlu0 %4225
        %4227 = vrot.lane.b32.xlu0 %v4220, 112
        %v4228 = vpop.permute.xlu0 %4227
        %4229 = vrot.lane.b32.xlu0 %v4221, 112
        %v4230 = vpop.permute.xlu0 %4229
        %vm4231 = vcmask 916480
        %v4232 = vsel %vm4231, %v4226, %v4228
        %v4233 = vsel %vm4231, %v4228, %v4230
        %4237 = vst [vmem:[#allocation14 + $0x80] sm:$0xff] %v4232
        %4238 = vst [vmem:[#allocation14 + $0x88] sm:$0xff] %v4233
        %4239 = vst.msk [vmem:[#allocation14 + $0x90] sm:$0xff] %vm4184, %v4230
        %v4240 = vld [vmem:[#allocation3] sm:$0xff]
        %v4241 = vld [vmem:[#allocation3 + $0x8] sm:$0xff]
        %v4242 = vld [vmem:[#allocation3 + $0x10] sm:$0xff]
        %v4243 = vld [vmem:[#allocation3 + $0x18] sm:$0xff]
        %v4244 = vld [vmem:[#allocation3 + $0x20] sm:$0xff]
        %v4245 = vld [vmem:[#allocation3 + $0x28] sm:$0xff]
        %v4246 = vpack.c.bf16 %v4243, %v4240
        %v4247 = vpack.c.bf16 %v4244, %v4241
        %v4248 = vpack.c.bf16 %v4245, %v4242
        %4252 = vrot.lane.b32.xlu0 %v4246, 97
        %v4253 = vpop.permute.xlu0 %4252
        %4254 = vrot.lane.b32.xlu0 %v4247, 97
        %v4255 = vpop.permute.xlu0 %4254
        %4256 = vrot.lane.b32.xlu0 %v4248, 97
        %v4257 = vpop.permute.xlu0 %4256
        %v4258 = vsel %vm1285, %v4253, %v4255
        %v4259 = vsel %vm1285, %v4255, %v4257
        %4263 = vst [vmem:[#allocation14 + $0xc0] sm:$0xff] %v4258
        %4264 = vst [vmem:[#allocation14 + $0xc8] sm:$0xff] %v4259
        %4265 = vst.msk [vmem:[#allocation14 + $0xd0] sm:$0xff] %vm4184, %v4257
        %v4266 = vld [vmem:[#allocation3] sm:$0xff]
        %v4267 = vld [vmem:[#allocation3 + $0x8] sm:$0xff]
        %v4268 = vld [vmem:[#allocation3 + $0x10] sm:$0xff]
        %v4269 = vld [vmem:[#allocation3 + $0x18] sm:$0xff]
        %v4270 = vld [vmem:[#allocation3 + $0x20] sm:$0xff]
        %v4271 = vld [vmem:[#allocation3 + $0x28] sm:$0xff]
        %v4272 = vpack.c.bf16 %v4269, %v4266
        %v4273 = vpack.c.bf16 %v4270, %v4267
        %v4274 = vpack.c.bf16 %v4271, %v4268
        %4278 = vrot.lane.b32.xlu0 %v4272, 96
        %v4279 = vpop.permute.xlu0 %4278
        %4280 = vrot.lane.b32.xlu0 %v4273, 96
        %v4281 = vpop.permute.xlu0 %4280
        %4282 = vrot.lane.b32.xlu0 %v4274, 96
        %v4283 = vpop.permute.xlu0 %4282
        %v4284 = vsel %vm1410, %v4279, %v4281
        %v4285 = vsel %vm1410, %v4281, %v4283
        %4289 = vst [vmem:[#allocation14 + $0x100] sm:$0xff] %v4284
        %4290 = vst [vmem:[#allocation14 + $0x108] sm:$0xff] %v4285
        %4291 = vst.msk [vmem:[#allocation14 + $0x110] sm:$0xff] %vm4184, %v4283
        %v4292 = vld [vmem:[#allocation3] sm:$0xff]
        %v4293 = vld [vmem:[#allocation3 + $0x8] sm:$0xff]
        %v4294 = vld [vmem:[#allocation3 + $0x10] sm:$0xff]
        %v4295 = vld [vmem:[#allocation3 + $0x18] sm:$0xff]
        %v4296 = vld [vmem:[#allocation3 + $0x20] sm:$0xff]
        %v4297 = vld [vmem:[#allocation3 + $0x28] sm:$0xff]
        %v4298 = vpack.c.bf16 %v4295, %v4292
        %v4299 = vpack.c.bf16 %v4296, %v4293
        %v4300 = vpack.c.bf16 %v4297, %v4294
        %4304 = vrot.lane.b32.xlu0 %v4298, 95
        %v4305 = vpop.permute.xlu0 %4304
        %4306 = vrot.lane.b32.xlu0 %v4299, 95
        %v4307 = vpop.permute.xlu0 %4306
        %4308 = vrot.lane.b32.xlu0 %v4300, 95
        %v4309 = vpop.permute.xlu0 %4308
        %v4310 = vsel %vm1553, %v4305, %v4307
        %v4311 = vsel %vm1553, %v4307, %v4309
        %4315 = vst [vmem:[#allocation14 + $0x140] sm:$0xff] %v4310
        %4316 = vst [vmem:[#allocation14 + $0x148] sm:$0xff] %v4311
        %4317 = vst.msk [vmem:[#allocation14 + $0x150] sm:$0xff] %vm4184, %v4309
        %v4318 = vld [vmem:[#allocation3] sm:$0xff]
        %v4319 = vld [vmem:[#allocation3 + $0x8] sm:$0xff]
        %v4320 = vld [vmem:[#allocation3 + $0x10] sm:$0xff]
        %v4321 = vld [vmem:[#allocation3 + $0x18] sm:$0xff]
        %v4322 = vld [vmem:[#allocation3 + $0x20] sm:$0xff]
        %v4323 = vld [vmem:[#allocation3 + $0x28] sm:$0xff]
        %v4324 = vpack.c.bf16 %v4321, %v4318
        %v4325 = vpack.c.bf16 %v4322, %v4319
        %v4326 = vpack.c.bf16 %v4323, %v4320
        %4330 = vrot.lane.b32.xlu0 %v4324, 80
        %v4331 = vpop.permute.xlu0 %4330
        %4332 = vrot.lane.b32.xlu0 %v4325, 80
        %v4333 = vpop.permute.xlu0 %4332
        %4334 = vrot.lane.b32.xlu0 %v4326, 80
        %v4335 = vpop.permute.xlu0 %4334
        %vm4336 = vcmask 654336
        %v4337 = vsel %vm4336, %v4331, %v4333
        %v4338 = vsel %vm4336, %v4333, %v4335
        %4342 = vst [vmem:[#allocation14 + $0x180] sm:$0xff] %v4337
        %4343 = vst [vmem:[#allocation14 + $0x188] sm:$0xff] %v4338
        %4344 = vst.msk [vmem:[#allocation14 + $0x190] sm:$0xff] %vm4184, %v4335
        %v4345 = vld [vmem:[#allocation3] sm:$0xff]
        %v4346 = vld [vmem:[#allocation3 + $0x8] sm:$0xff]
        %v4347 = vld [vmem:[#allocation3 + $0x10] sm:$0xff]
        %v4348 = vld [vmem:[#allocation3 + $0x18] sm:$0xff]
        %v4349 = vld [vmem:[#allocation3 + $0x20] sm:$0xff]
        %v4350 = vld [vmem:[#allocation3 + $0x28] sm:$0xff]
        %v4351 = vpack.c.bf16 %v4348, %v4345
        %v4352 = vpack.c.bf16 %v4349, %v4346
        %v4353 = vpack.c.bf16 %v4350, %v4347
        %4357 = vrot.lane.b32.xlu0 %v4351, 79
        %v4358 = vpop.permute.xlu0 %4357
        %4359 = vrot.lane.b32.xlu0 %v4352, 79
        %v4360 = vpop.permute.xlu0 %4359
        %4361 = vrot.lane.b32.xlu0 %v4353, 79
        %v4362 = vpop.permute.xlu0 %4361
        %vm4363 = vcmask 646144
        %v4364 = vsel %vm4363, %v4358, %v4360
        %v4365 = vsel %vm4363, %v4360, %v4362
        %4369 = vst [vmem:[#allocation14 + $0x1c0] sm:$0xff] %v4364
        %4370 = vst [vmem:[#allocation14 + $0x1c8] sm:$0xff] %v4365
        %4371 = vst.msk [vmem:[#allocation14 + $0x1d0] sm:$0xff] %vm4184, %v4362
        %v4372 = vld [vmem:[#allocation3] sm:$0xff]
        %v4373 = vld [vmem:[#allocation3 + $0x8] sm:$0xff]
        %v4374 = vld [vmem:[#allocation3 + $0x10] sm:$0xff]
        %v4375 = vld [vmem:[#allocation3 + $0x18] sm:$0xff]
        %v4376 = vld [vmem:[#allocation3 + $0x20] sm:$0xff]
        %v4377 = vld [vmem:[#allocation3 + $0x28] sm:$0xff]
        %v4378 = vpack.c.bf16 %v4375, %v4372
        %v4379 = vpack.c.bf16 %v4376, %v4373
        %v4380 = vpack.c.bf16 %v4377, %v4374
        %4384 = vrot.lane.b32.xlu0 %v4378, 78
        %v4385 = vpop.permute.xlu0 %4384
        %4386 = vrot.lane.b32.xlu0 %v4379, 78
        %v4387 = vpop.permute.xlu0 %4386
        %4388 = vrot.lane.b32.xlu0 %v4380, 78
        %v4389 = vpop.permute.xlu0 %4388
        %vm4390 = vcmask 637952
        %v4391 = vsel %vm4390, %v4385, %v4387
        %v4392 = vsel %vm4390, %v4387, %v4389
        %4396 = vst [vmem:[#allocation14 + $0x200] sm:$0xff] %v4391
        %4397 = vst [vmem:[#allocation14 + $0x208] sm:$0xff] %v4392
        %4398 = vst.msk [vmem:[#allocation14 + $0x210] sm:$0xff] %vm4184, %v4389
        %v4399 = vld [vmem:[%s2] sm:$0xff]
        %v4400 = vld [vmem:[#allocation14] sm:$0xff]
        %v4401 = vld [vmem:[#allocation14 + $0x8] sm:$0xff]
        %v4402 = vld [vmem:[#allocation14 + $0x10] sm:$0xff]
        %v4403 = vld [vmem:[#allocation14 + $0x40] sm:$0xff]
        %v4404 = vld [vmem:[#allocation14 + $0x48] sm:$0xff]
        %v4405 = vld [vmem:[#allocation14 + $0x50] sm:$0xff]
        %v4406 = vld [vmem:[#allocation14 + $0x80] sm:$0xff]
        %v4407 = vld [vmem:[#allocation14 + $0x88] sm:$0xff]
        %v4408 = vld [vmem:[#allocation14 + $0x90] sm:$0xff]
        %v4409 = vld [vmem:[#allocation14 + $0xc0] sm:$0xff]
        %v4410 = vld [vmem:[#allocation14 + $0xc8] sm:$0xff]
        %v4411 = vld [vmem:[#allocation14 + $0xd0] sm:$0xff]
        %v4412 = vld [vmem:[#allocation14 + $0x100] sm:$0xff]
        %v4413 = vld [vmem:[#allocation14 + $0x108] sm:$0xff]
        %v4414 = vld [vmem:[#allocation14 + $0x110] sm:$0xff]
        %v4415 = vld [vmem:[#allocation14 + $0x140] sm:$0xff]
        %v4416 = vld [vmem:[#allocation14 + $0x148] sm:$0xff]
        %v4417 = vld [vmem:[#allocation14 + $0x150] sm:$0xff]
        %v4418 = vld [vmem:[#allocation14 + $0x180] sm:$0xff]
        %v4419 = vld [vmem:[#allocation14 + $0x188] sm:$0xff]
        %v4420 = vld [vmem:[#allocation14 + $0x190] sm:$0xff]
        %v4421 = vld [vmem:[#allocation14 + $0x1c0] sm:$0xff]
        %v4422 = vld [vmem:[#allocation14 + $0x1c8] sm:$0xff]
        %v4423 = vld [vmem:[#allocation14 + $0x1d0] sm:$0xff]
        %v4424 = vld [vmem:[#allocation14 + $0x200] sm:$0xff]
        %v4425 = vld [vmem:[#allocation14 + $0x208] sm:$0xff]
        %v4426 = vld [vmem:[#allocation14 + $0x210] sm:$0xff]
        %v4427 = vld [vmem:[%s9] sm:$0xff]
        %4429 = vset.pattern.permute.xlu0 0
        %4430 = vperm.xlu0 %4429, %v4427
        %v4431 = vpop.permute.xlu0 %4430
        %v4434 = vunpack.c.l.b16 %v4399
        %v4435 = vunpack.c.h.b16 %v4399
        %v4436 = vpack.c.b16 %v4434, %v4434
        %v4437 = vpack.c.b16 %v4435, %v4435
        %vm4439 = vcmask 130048
        %v4441 = vsel %vm4439, %v4437, 0
        %4443 = vmatprep.subr.bf16.mxu0 %v4401
        %4444 = vmatpush1.bf16.msra.mxu0 %v4400
        %4445 = vmatprep.subr.bf16.mxu0 %v4404
        %4446 = vmatpush1.bf16.msra.mxu0 %v4403
        %4447 = vmatprep.subr.bf16.mxu0 %v4407
        %4448 = vmatpush1.bf16.msra.mxu0 %v4406
        %4449 = vmatprep.subr.bf16.mxu0 %v4410
        %4450 = vmatpush1.bf16.msra.mxu0 %v4409
        %4451 = vmatprep.subr.bf16.mxu0 %v4413
        %4452 = vmatpush1.bf16.msra.mxu0 %v4412
        %4453 = vmatprep.subr.bf16.mxu0 %v4416
        %4454 = vmatpush1.bf16.msra.mxu0 %v4415
        %4455 = vmatprep.subr.bf16.mxu0 %v4419
        %4456 = vmatpush1.bf16.msra.mxu0 %v4418
        %4457 = vmatprep.subr.bf16.mxu0 %v4422
        %4458 = vmatpush1.bf16.msra.mxu0 %v4421
        %4459 = vmatprep.subr.bf16.mxu0 %v4425
        %4460 = vmatpush1.bf16.msra.mxu0 %v4424
        %4461 = vmatprep.subr.bf16.mxu0 0
        %4462 = vmatpush1.bf16.msra.mxu0 0
        %4463 = vmatprep.subr.bf16.mxu0 0
        %4464 = vmatpush1.bf16.msra.mxu0 0
        %4465 = vmatprep.subr.bf16.mxu0 0
        %4466 = vmatpush1.bf16.msra.mxu0 0
        %4467 = vmatprep.subr.bf16.mxu0 0
        %4468 = vmatpush1.bf16.msra.mxu0 0
        %4469 = vmatprep.subr.bf16.mxu0 0
        %4470 = vmatpush1.bf16.msra.mxu0 0
        %4471 = vmatprep.subr.bf16.mxu0 0
        %4472 = vmatpush1.bf16.msra.mxu0 0
        %4473 = vmatprep.subr.bf16.mxu0 0
        %4474 = vmatpush1.bf16.msra.mxu0 0
        %4475 = vmatprep.mubr.bf16.mxu0 %v4441
        %4476 = vmatmul.mubr.bf16.gmra.mrb[0].mxu0 %v4436
        %v4477 = vpop.f32.mrb[0].mxu0
        %v4478 = vadd.f32 %v4431, %v4477
        %v4479 = vpop.f32.mrb[0].mxu0
        %v4480 = vadd.f32 %v4431, %v4479
        %v4481 = vpop.f32.mrb[0].mxu0
        %v4482 = vpop.f32.mrb[0].mxu0
        %4483 = vdwg.mxu0
        %4484 = vmatprep.subr.bf16.mxu0 0
        %4485 = vmatpush1.bf16.msra.mxu0 %v4402
        %4486 = vmatprep.subr.bf16.mxu0 0
        %4487 = vmatpush1.bf16.msra.mxu0 %v4405
        %4488 = vmatprep.subr.bf16.mxu0 0
        %4489 = vmatpush1.bf16.msra.mxu0 %v4408
        %4490 = vmatprep.subr.bf16.mxu0 0
        %4491 = vmatpush1.bf16.msra.mxu0 %v4411
        %4492 = vmatprep.subr.bf16.mxu0 0
        %4493 = vmatpush1.bf16.msra.mxu0 %v4414
        %4494 = vmatprep.subr.bf16.mxu0 0
        %4495 = vmatpush1.bf16.msra.mxu0 %v4417
        %4496 = vmatprep.subr.bf16.mxu0 0
        %4497 = vmatpush1.bf16.msra.mxu0 %v4420
        %4498 = vmatprep.subr.bf16.mxu0 0
        %4499 = vmatpush1.bf16.msra.mxu0 %v4423
        %4500 = vmatprep.subr.bf16.mxu0 0
        %4501 = vmatpush1.bf16.msra.mxu0 %v4426
        %4502 = vmatprep.subr.bf16.mxu0 0
        %4503 = vmatpush1.bf16.msra.mxu0 0
        %4504 = vmatprep.subr.bf16.mxu0 0
        %4505 = vmatpush1.bf16.msra.mxu0 0
        %4506 = vmatprep.subr.bf16.mxu0 0
        %4507 = vmatpush1.bf16.msra.mxu0 0
        %4508 = vmatprep.subr.bf16.mxu0 0
        %4509 = vmatpush1.bf16.msra.mxu0 0
        %4510 = vmatprep.subr.bf16.mxu0 0
        %4511 = vmatpush1.bf16.msra.mxu0 0
        %4512 = vmatprep.subr.bf16.mxu0 0
        %4513 = vmatpush1.bf16.msra.mxu0 0
        %4514 = vmatprep.subr.bf16.mxu0 0
        %4515 = vmatpush1.bf16.msra.mxu0 0
        %4516 = vmatprep.mubr.bf16.mxu0 %v4441
        %4517 = vmatmul.mubr.bf16.gmra.mrb[0].mxu0 %v4436
        %v4518 = vpop.f32.mrb[0].mxu0
        %v4519 = vadd.f32 %v4431, %v4518
        %v4520 = vpop.f32.mrb[0].mxu0
        %v4521 = vpop.f32.mrb[0].mxu0
        %v4522 = vpop.f32.mrb[0].mxu0
        %4523 = vdwg.mxu0
        %v4524 = vmax.f32 %v4478, 0.0
        %v4525 = vmax.f32 %v4480, 0.0
        %v4526 = vmax.f32 %v4519, 0.0
        %v4527 = vld [vmem:[%s16] sm:$0x7]
        %v4529 = vlaneseq
        %v4530 = vshrl.u32 %v4529, 7
        %v4531 = vsub.s32 0, %v4530
        %v4532 = vrot.slane %v4527, %v4531
        %v4533 = vlaneseq
        %v4534 = vshrl.u32 %v4533, 7
        %v4535 = vsub.s32 1, %v4534
        %v4536 = vrot.slane %v4527, %v4535
        %v4537 = vlaneseq
        %v4538 = vshrl.u32 %v4537, 7
        %v4539 = vsub.s32 2, %v4538
        %v4540 = vrot.slane %v4527, %v4539
        %v4544 = vmul.f32 %v4524, %v4532
        %v4545 = vmul.f32 %v4525, %v4536
        %v4546 = vmul.f32 %v4526, %v4540
        %4550 = vrot.lane.b32.xlu0 %v4544, 32
        %v4551 = vpop.permute.xlu0 %4550
        %4552 = vrot.lane.b32.xlu0 %v4545, 32
        %v4553 = vpop.permute.xlu0 %4552
        %4554 = vrot.lane.b32.xlu0 %v4546, 32
        %v4555 = vpop.permute.xlu0 %4554
        %v4556 = vsel %vm766, %v4551, %v4553
        %v4557 = vsel %vm766, %v4553, %v4555
        %4561 = vst.msk [vmem:[#allocation4] sm:$0xff] %vm2374, %v4551
        %4562 = vst [vmem:[#allocation4 + $0x8] sm:$0xff] %v4556
        %4563 = vst.msk [vmem:[#allocation4 + $0x10] sm:$0xff] %vm4153, %v4557
        %v4564 = vld [vmem:[#allocation4] sm:$0xff]
        %v4565 = vld [vmem:[#allocation4 + $0x8] sm:$0xff]
        %v4566 = vld [vmem:[#allocation4 + $0x10] sm:$0xff]
        %4570 = vrot.lane.b32.xlu0 %v4564, 127
        %v4571 = vpop.permute.xlu0 %4570
        %4572 = vrot.lane.b32.xlu0 %v4565, 127
        %v4573 = vpop.permute.xlu0 %4572
        %4574 = vrot.lane.b32.xlu0 %v4566, 127
        %v4575 = vpop.permute.xlu0 %4574
        %v4576 = vsel %vm2456, %v4571, %v4573
        %v4577 = vsel %vm2456, %v4573, %v4575
        %v4581 = vmax.f32 %v4564, %v4576
        %v4582 = vmax.f32 %v4565, %v4577
        %v4583 = vmax.f32 %v4566, %v4575
        %4587 = vrot.lane.b32.xlu0 %v4581, 111
        %v4588 = vpop.permute.xlu0 %4587
        %4589 = vrot.lane.b32.xlu0 %v4582, 111
        %v4590 = vpop.permute.xlu0 %4589
        %4591 = vrot.lane.b32.xlu0 %v4583, 111
        %v4592 = vpop.permute.xlu0 %4591
        %vm4593 = vcmask 908288
        %v4594 = vsel %vm4593, %v4588, %v4590
        %v4595 = vsel %vm4593, %v4590, %v4592
        %v4599 = vmax.f32 %v4581, %v4594
        %v4600 = vmax.f32 %v4582, %v4595
        %v4601 = vmax.f32 %v4583, %v4592
        %v4602 = vpack.c.bf16 %v4599, %v4599
        %v4603 = vpack.c.bf16 %v4600, %v4600
        %v4604 = vpack.c.bf16 %v4601, %v4601
        %v4605 = vld [vmem:[%s19] sm:$0xf]
        %v4606 = vld [vmem:[%s19 + $0x4] sm:$0xf]
        %v4607 = vld [vmem:[%s19 + $0x8] sm:$0xf]
        %v4608 = vld [vmem:[%s19 + $0xc] sm:$0xf]
        %v4609 = vld [vmem:[%s19 + $0x10] sm:$0xf]
        %v4610 = vld [vmem:[%s19 + $0x14] sm:$0xf]
        %v4611 = vld [vmem:[%s19 + $0x18] sm:$0xf]
        %v4612 = vld [vmem:[%s19 + $0x1c] sm:$0xf]
        %v4613 = vld [vmem:[%s19 + $0x20] sm:$0xf]
        %v4614 = vld [vmem:[%s19 + $0x24] sm:$0xf]
        %v4615 = vld [vmem:[%s19 + $0x28] sm:$0xf]
        %v4616 = vld [vmem:[%s19 + $0x2c] sm:$0xf]
        %v4617 = vld [vmem:[%s19 + $0x30] sm:$0xf]
        %v4618 = vld [vmem:[%s19 + $0x34] sm:$0xf]
        %v4619 = vld [vmem:[%s19 + $0x38] sm:$0xf]
        %v4620 = vld [vmem:[%s19 + $0x3c] sm:$0xf]
        %v4621 = vld [vmem:[%s19 + $0x40] sm:$0xf]
        %v4622 = vld [vmem:[%s19 + $0x44] sm:$0xf]
        %v4623 = vld [vmem:[%s19 + $0x48] sm:$0xf]
        %v4624 = vld [vmem:[%s19 + $0x4c] sm:$0xf]
        %v4625 = vld [vmem:[%s19 + $0x50] sm:$0xf]
        %v4626 = vld [vmem:[%s19 + $0x54] sm:$0xf]
        %v4627 = vld [vmem:[%s19 + $0x58] sm:$0xf]
        %v4628 = vld [vmem:[%s19 + $0x5c] sm:$0xf]
        %v4629 = vld [vmem:[%s19 + $0x60] sm:$0xf]
        %v4630 = vld [vmem:[%s19 + $0x64] sm:$0xf]
        %v4631 = vld [vmem:[%s19 + $0x68] sm:$0xf]
        %v4632 = vld [vmem:[%s19 + $0x6c] sm:$0xf]
        %v4633 = vld [vmem:[%s19 + $0x70] sm:$0xf]
        %v4634 = vld [vmem:[%s19 + $0x74] sm:$0xf]
        %v4635 = vld [vmem:[%s19 + $0x78] sm:$0xf]
        %v4636 = vld [vmem:[%s19 + $0x7c] sm:$0xf]
        %v4637 = vld [vmem:[%s19 + $0x80] sm:$0xf]
        %v4638 = vld [vmem:[%s19 + $0x84] sm:$0xf]
        %v4639 = vld [vmem:[%s19 + $0x88] sm:$0xf]
        %v4640 = vld [vmem:[%s19 + $0x8c] sm:$0xf]
        %v4641 = vld [vmem:[%s19 + $0x90] sm:$0x1]
        %4645 = vrot.lane.b32.xlu0 %v4602, 96
        %v4646 = vpop.permute.xlu0 %4645
        %4647 = vrot.lane.b32.xlu0 %v4603, 96
        %v4648 = vpop.permute.xlu0 %4647
        %4649 = vrot.lane.b32.xlu0 %v4604, 96
        %v4650 = vpop.permute.xlu0 %4649
        %v4651 = vsel %vm1410, %v4646, %v4648
        %v4652 = vsel %vm1410, %v4648, %v4650
        %v4692 = vunpack.c.l.b16 %v4605
        %v4693 = vunpack.c.l.b16 %v4606
        %v4694 = vunpack.c.l.b16 %v4607
        %v4695 = vunpack.c.l.b16 %v4608
        %v4696 = vunpack.c.l.b16 %v4609
        %v4697 = vunpack.c.l.b16 %v4610
        %v4698 = vunpack.c.l.b16 %v4611
        %v4699 = vunpack.c.l.b16 %v4612
        %v4700 = vunpack.c.l.b16 %v4613
        %v4701 = vunpack.c.l.b16 %v4614
        %v4702 = vunpack.c.l.b16 %v4615
        %v4703 = vunpack.c.l.b16 %v4616
        %v4704 = vunpack.c.l.b16 %v4617
        %v4705 = vunpack.c.l.b16 %v4618
        %v4706 = vunpack.c.l.b16 %v4619
        %v4707 = vunpack.c.l.b16 %v4620
        %v4708 = vunpack.c.l.b16 %v4621
        %v4709 = vunpack.c.l.b16 %v4622
        %v4710 = vunpack.c.l.b16 %v4623
        %v4711 = vunpack.c.l.b16 %v4624
        %v4712 = vunpack.c.l.b16 %v4625
        %v4713 = vunpack.c.l.b16 %v4626
        %v4714 = vunpack.c.l.b16 %v4627
        %v4715 = vunpack.c.l.b16 %v4628
        %v4716 = vunpack.c.l.b16 %v4629
        %v4717 = vunpack.c.l.b16 %v4630
        %v4718 = vunpack.c.l.b16 %v4631
        %v4719 = vunpack.c.l.b16 %v4632
        %v4720 = vunpack.c.l.b16 %v4633
        %v4721 = vunpack.c.l.b16 %v4634
        %v4722 = vunpack.c.l.b16 %v4635
        %v4723 = vunpack.c.l.b16 %v4636
        %v4724 = vunpack.c.l.b16 %v4637
        %v4725 = vunpack.c.l.b16 %v4638
        %v4726 = vunpack.c.l.b16 %v4639
        %v4727 = vunpack.c.l.b16 %v4640
        %v4728 = vunpack.c.l.b16 %v4641
        %v4729 = vpack.c.b16 %v4693, %v4692
        %v4730 = vpack.c.b16 %v4695, %v4694
        %v4731 = vpack.c.b16 %v4697, %v4696
        %v4732 = vpack.c.b16 %v4699, %v4698
        %v4733 = vpack.c.b16 %v4701, %v4700
        %v4734 = vpack.c.b16 %v4703, %v4702
        %v4735 = vpack.c.b16 %v4705, %v4704
        %v4736 = vpack.c.b16 %v4707, %v4706
        %v4737 = vpack.c.b16 %v4709, %v4708
        %v4738 = vpack.c.b16 %v4711, %v4710
        %v4739 = vpack.c.b16 %v4713, %v4712
        %v4740 = vpack.c.b16 %v4715, %v4714
        %v4741 = vpack.c.b16 %v4717, %v4716
        %v4742 = vpack.c.b16 %v4719, %v4718
        %v4743 = vpack.c.b16 %v4721, %v4720
        %v4744 = vpack.c.b16 %v4723, %v4722
        %v4745 = vpack.c.b16 %v4725, %v4724
        %v4746 = vpack.c.b16 %v4727, %v4726
        %v4747 = vpack.c.b16 %v4728, %v4728
        %v4767 = vsel %vm4184, %v4650, 0
        %vm4769 = vcmask 1040384
        %v4770 = vsel 0, 4294967295, 65535
        %v4771 = vsel %vm4769, %v4770, 0
        %v4773 = vand.u32 %v4747, %v4771
        %4775 = vmatprep.subr.bf16.mxu0 0
        %4776 = vmatpush1.bf16.msra.mxu0 %v4729
        %4777 = vmatprep.subr.bf16.mxu0 0
        %4778 = vmatpush1.bf16.msra.mxu0 %v4730
        %4779 = vmatprep.subr.bf16.mxu0 0
        %4780 = vmatpush1.bf16.msra.mxu0 %v4731
        %4781 = vmatprep.subr.bf16.mxu0 0
        %4782 = vmatpush1.bf16.msra.mxu0 %v4732
        %4783 = vmatprep.subr.bf16.mxu0 0
        %4784 = vmatpush1.bf16.msra.mxu0 %v4733
        %4785 = vmatprep.subr.bf16.mxu0 0
        %4786 = vmatpush1.bf16.msra.mxu0 %v4734
        %4787 = vmatprep.subr.bf16.mxu0 0
        %4788 = vmatpush1.bf16.msra.mxu0 %v4735
        %4789 = vmatprep.subr.bf16.mxu0 0
        %4790 = vmatpush1.bf16.msra.mxu0 %v4736
        %4791 = vmatprep.subr.bf16.mxu0 0
        %4792 = vmatpush1.bf16.msra.mxu0 %v4737
        %4793 = vmatprep.subr.bf16.mxu0 0
        %4794 = vmatpush1.bf16.msra.mxu0 %v4738
        %4795 = vmatprep.subr.bf16.mxu0 0
        %4796 = vmatpush1.bf16.msra.mxu0 %v4739
        %4797 = vmatprep.subr.bf16.mxu0 0
        %4798 = vmatpush1.bf16.msra.mxu0 %v4740
        %4799 = vmatprep.subr.bf16.mxu0 0
        %4800 = vmatpush1.bf16.msra.mxu0 %v4741
        %4801 = vmatprep.subr.bf16.mxu0 0
        %4802 = vmatpush1.bf16.msra.mxu0 %v4742
        %4803 = vmatprep.subr.bf16.mxu0 0
        %4804 = vmatpush1.bf16.msra.mxu0 %v4743
        %4805 = vmatprep.subr.bf16.mxu0 0
        %4806 = vmatpush1.bf16.msra.mxu0 %v4744
        %4807 = vmatprep.mubr.bf16.mxu0 %v4652
        %4808 = vmatmul.mubr.bf16.gmra.mrb[0].mxu0 %v4651
        %v4809 = vpop.f32.mrb[0].mxu0
        %v4810 = vadd.f32 0.0, %v4809
        %v4811 = vpop.f32.mrb[0].mxu0
        %v4812 = vpop.f32.mrb[0].mxu0
        %v4813 = vpop.f32.mrb[0].mxu0
        %4814 = vdwg.mxu0
        %4815 = vmatprep.subr.bf16.mxu0 0
        %4816 = vmatpush1.bf16.msra.mxu0 %v4745
        %4817 = vmatprep.subr.bf16.mxu0 0
        %4818 = vmatpush1.bf16.msra.mxu0 %v4746
        %4819 = vmatprep.subr.bf16.mxu0 0
        %4820 = vmatpush1.bf16.msra.mxu0 %v4773
        %4821 = vmatprep.subr.bf16.mxu0 0
        %4822 = vmatpush1.bf16.msra.mxu0 0
        %4823 = vmatprep.subr.bf16.mxu0 0
        %4824 = vmatpush1.bf16.msra.mxu0 0
        %4825 = vmatprep.subr.bf16.mxu0 0
        %4826 = vmatpush1.bf16.msra.mxu0 0
        %4827 = vmatprep.subr.bf16.mxu0 0
        %4828 = vmatpush1.bf16.msra.mxu0 0
        %4829 = vmatprep.subr.bf16.mxu0 0
        %4830 = vmatpush1.bf16.msra.mxu0 0
        %4831 = vmatprep.subr.bf16.mxu0 0
        %4832 = vmatpush1.bf16.msra.mxu0 0
        %4833 = vmatprep.subr.bf16.mxu0 0
        %4834 = vmatpush1.bf16.msra.mxu0 0
        %4835 = vmatprep.subr.bf16.mxu0 0
        %4836 = vmatpush1.bf16.msra.mxu0 0
        %4837 = vmatprep.subr.bf16.mxu0 0
        %4838 = vmatpush1.bf16.msra.mxu0 0
        %4839 = vmatprep.subr.bf16.mxu0 0
        %4840 = vmatpush1.bf16.msra.mxu0 0
        %4841 = vmatprep.subr.bf16.mxu0 0
        %4842 = vmatpush1.bf16.msra.mxu0 0
        %4843 = vmatprep.subr.bf16.mxu0 0
        %4844 = vmatpush1.bf16.msra.mxu0 0
        %4845 = vmatprep.subr.bf16.mxu0 0
        %4846 = vmatpush1.bf16.msra.mxu0 0
        %4847 = vmatprep.mubr.bf16.mxu0 0
        %4848 = vmatmul.mubr.bf16.gmra.mrb[0].mxu0 %v4767
        %v4849 = vpop.f32.mrb[0].mxu0
        %v4850 = vadd.f32 %v4810, %v4849
        %v4851 = vpop.f32.mrb[0].mxu0
        %v4852 = vpop.f32.mrb[0].mxu0
        %v4853 = vpop.f32.mrb[0].mxu0
        %4854 = vdwg.mxu0
        %4856 = vrot.lane.b32.xlu0 %v4850, 32
        %v4857 = vpop.permute.xlu0 %4856
        %4859 = vst.msk [vmem:[#allocation5] sm:$0xff] %vm2374, %v4857
        %4860 = vst.msk [vmem:[#allocation5 + $0x8] sm:$0xff] %vm796, %v4857
        %v4861 = vld [vmem:[#allocation5] sm:$0xff]
        %v4862 = vpack.c.bf16 %v4861, %v4861
        %4864 = vrot.lane.b32.xlu0 %v4862, 107
        %v4865 = vpop.permute.xlu0 %4864
        %vm4867 = vcmask 814080
        %4868 = vst.msk [vmem:[#allocation14] sm:$0xf] %vm4867, %v4865
        %v4869 = vld [vmem:[#allocation5] sm:$0xff]
        %v4870 = vpack.c.bf16 %v4869, %v4869
        %v4872 = vrot.slane %v4870, 4
        %4873 = vrot.lane.b32.xlu0 %v4872, 106
        %v4874 = vpop.permute.xlu0 %4873
        %vm4876 = vcmask 818180
        %4877 = vst.msk [vmem:[#allocation14] sm:$0xf0] %vm4876, %v4874
        %v4878 = vld [vmem:[#allocation5] sm:$0xff]
        %v4879 = vpack.c.bf16 %v4878, %v4878
        %4881 = vrot.lane.b32.xlu0 %v4879, 105
        %v4882 = vpop.permute.xlu0 %4881
        %4884 = vst.msk [vmem:[#allocation14 + $0x40] sm:$0xf] %vm4867, %v4882
        %v4885 = vld [vmem:[#allocation5] sm:$0xff]
        %v4886 = vld [vmem:[#allocation5 + $0x8] sm:$0xff]
        %v4887 = vpack.c.bf16 %v4885, %v4885
        %v4888 = vpack.c.bf16 %v4886, %v4886
        %v4891 = vrot.slane %v4887, 4
        %v4892 = vrot.slane %v4888, 4
        %4893 = vrot.lane.b32.xlu0 %v4891, 97
        %v4894 = vpop.permute.xlu0 %4893
        %4895 = vrot.lane.b32.xlu0 %v4892, 97
        %v4896 = vpop.permute.xlu0 %4895
        %v4897 = vsel %vm1285, %v4894, %v4896
        %4899 = vst.msk [vmem:[#allocation14 + $0x40] sm:$0xf0] %vm4876, %v4897
        %v4900 = vld [vmem:[#allocation5] sm:$0xff]
        %v4901 = vld [vmem:[#allocation5 + $0x8] sm:$0xff]
        %v4902 = vpack.c.bf16 %v4900, %v4900
        %v4903 = vpack.c.bf16 %v4901, %v4901
        %4906 = vrot.lane.b32.xlu0 %v4902, 96
        %v4907 = vpop.permute.xlu0 %4906
        %4908 = vrot.lane.b32.xlu0 %v4903, 96
        %v4909 = vpop.permute.xlu0 %4908
        %v4910 = vsel %vm1410, %v4907, %v4909
        %4912 = vst.msk [vmem:[#allocation14 + $0x80] sm:$0xf] %vm4867, %v4910
        %v4913 = vld [vmem:[#allocation5] sm:$0xff]
        %v4914 = vld [vmem:[#allocation5 + $0x8] sm:$0xff]
        %v4915 = vpack.c.bf16 %v4913, %v4913
        %v4916 = vpack.c.bf16 %v4914, %v4914
        %v4919 = vrot.slane %v4915, 4
        %v4920 = vrot.slane %v4916, 4
        %4921 = vrot.lane.b32.xlu0 %v4919, 95
        %v4922 = vpop.permute.xlu0 %4921
        %4923 = vrot.lane.b32.xlu0 %v4920, 95
        %v4924 = vpop.permute.xlu0 %4923
        %v4925 = vsel %vm1553, %v4922, %v4924
        %4927 = vst.msk [vmem:[#allocation14 + $0x80] sm:$0xf0] %vm4876, %v4925
        %v4928 = vld [vmem:[#allocation5] sm:$0xff]
        %v4929 = vld [vmem:[#allocation5 + $0x8] sm:$0xff]
        %v4930 = vpack.c.bf16 %v4928, %v4928
        %v4931 = vpack.c.bf16 %v4929, %v4929
        %4934 = vrot.lane.b32.xlu0 %v4930, 87
        %v4935 = vpop.permute.xlu0 %4934
        %4936 = vrot.lane.b32.xlu0 %v4931, 87
        %v4937 = vpop.permute.xlu0 %4936
        %vm4938 = vcmask 711680
        %v4939 = vsel %vm4938, %v4935, %v4937
        %4941 = vst.msk [vmem:[#allocation14 + $0xc0] sm:$0xf] %vm4867, %v4939
        %v4942 = vld [vmem:[#allocation5] sm:$0xff]
        %v4943 = vld [vmem:[#allocation5 + $0x8] sm:$0xff]
        %v4944 = vpack.c.bf16 %v4942, %v4942
        %v4945 = vpack.c.bf16 %v4943, %v4943
        %v4948 = vrot.slane %v4944, 4
        %v4949 = vrot.slane %v4945, 4
        %4950 = vrot.lane.b32.xlu0 %v4948, 86
        %v4951 = vpop.permute.xlu0 %4950
        %4952 = vrot.lane.b32.xlu0 %v4949, 86
        %v4953 = vpop.permute.xlu0 %4952
        %vm4954 = vcmask 703488
        %v4955 = vsel %vm4954, %v4951, %v4953
        %4957 = vst.msk [vmem:[#allocation14 + $0xc0] sm:$0xf0] %vm4876, %v4955
        %v4958 = vld [vmem:[#allocation5] sm:$0xff]
        %v4959 = vld [vmem:[#allocation5 + $0x8] sm:$0xff]
        %v4960 = vpack.c.bf16 %v4958, %v4958
        %v4961 = vpack.c.bf16 %v4959, %v4959
        %4964 = vrot.lane.b32.xlu0 %v4960, 85
        %v4965 = vpop.permute.xlu0 %4964
        %4966 = vrot.lane.b32.xlu0 %v4961, 85
        %v4967 = vpop.permute.xlu0 %4966
        %vm4968 = vcmask 695296
        %v4969 = vsel %vm4968, %v4965, %v4967
        %4971 = vst.msk [vmem:[#allocation14 + $0x100] sm:$0xf] %vm4867, %v4969
        %v4972 = vld [vmem:[%s3] sm:$0xf]
        %v4973 = vld [vmem:[#allocation14] sm:$0xff]
        %v4974 = vld [vmem:[#allocation14 + $0x40] sm:$0xff]
        %v4975 = vld [vmem:[#allocation14 + $0x80] sm:$0xff]
        %v4976 = vld [vmem:[#allocation14 + $0xc0] sm:$0xff]
        %v4977 = vld [vmem:[#allocation14 + $0x100] sm:$0xf]
        %v4978 = vld [vmem:[%s10] sm:$0xff]
        %4980 = vset.pattern.permute.xlu0 0
        %4981 = vperm.xlu0 %4980, %v4978
        %v4982 = vpop.permute.xlu0 %4981
        %vm4984 = vcmask 588800
        %v4986 = vsel %vm4984, %v4972, 0
        %v4989 = vsel %vm2022, %v4977, 0
        %4991 = vmatprep.subr.bf16.mxu0 0
        %4992 = vmatpush1.bf16.msra.mxu0 %v4973
        %4993 = vmatprep.subr.bf16.mxu0 0
        %4994 = vmatpush1.bf16.msra.mxu0 %v4974
        %4995 = vmatprep.subr.bf16.mxu0 0
        %4996 = vmatpush1.bf16.msra.mxu0 %v4975
        %4997 = vmatprep.subr.bf16.mxu0 0
        %4998 = vmatpush1.bf16.msra.mxu0 %v4976
        %4999 = vmatprep.subr.bf16.mxu0 0
        %5000 = vmatpush1.bf16.msra.mxu0 %v4989
        %5001 = vmatprep.subr.bf16.mxu0 0
        %5002 = vmatpush1.bf16.msra.mxu0 0
        %5003 = vmatprep.subr.bf16.mxu0 0
        %5004 = vmatpush1.bf16.msra.mxu0 0
        %5005 = vmatprep.subr.bf16.mxu0 0
        %5006 = vmatpush1.bf16.msra.mxu0 0
        %5007 = vmatprep.subr.bf16.mxu0 0
        %5008 = vmatpush1.bf16.msra.mxu0 0
        %5009 = vmatprep.subr.bf16.mxu0 0
        %5010 = vmatpush1.bf16.msra.mxu0 0
        %5011 = vmatprep.subr.bf16.mxu0 0
        %5012 = vmatpush1.bf16.msra.mxu0 0
        %5013 = vmatprep.subr.bf16.mxu0 0
        %5014 = vmatpush1.bf16.msra.mxu0 0
        %5015 = vmatprep.subr.bf16.mxu0 0
        %5016 = vmatpush1.bf16.msra.mxu0 0
        %5017 = vmatprep.subr.bf16.mxu0 0
        %5018 = vmatpush1.bf16.msra.mxu0 0
        %5019 = vmatprep.subr.bf16.mxu0 0
        %5020 = vmatpush1.bf16.msra.mxu0 0
        %5021 = vmatprep.subr.bf16.mxu0 0
        %5022 = vmatpush1.bf16.msra.mxu0 0
        %5023 = vmatprep.mubr.bf16.mxu0 0
        %5024 = vmatmul.mubr.bf16.gmra.mrb[0].mxu0 %v4986
        %v5025 = vpop.f32.mrb[0].mxu0
        %v5026 = vadd.f32 %v4982, %v5025
        %v5027 = vpop.f32.mrb[0].mxu0
        %v5028 = vpop.f32.mrb[0].mxu0
        %v5029 = vpop.f32.mrb[0].mxu0
        %5030 = vdwg.mxu0
        %v5031 = vmax.f32 %v5026, 0.0
        %v5032 = vld [vmem:[%s17] sm:$0x1]
        %v5034 = vlaneseq
        %v5035 = vshrl.u32 %v5034, 7
        %v5036 = vsub.s32 0, %v5035
        %v5037 = vrot.slane %v5032, %v5036
        %v5039 = vmul.f32 %v5031, %v5037
        %5041 = vrot.lane.b32.xlu0 %v5039, 32
        %v5042 = vpop.permute.xlu0 %5041
        %5044 = vst.msk [vmem:[#allocation6] sm:$0xff] %vm2374, %v5042
        %5045 = vst.msk [vmem:[#allocation6 + $0x8] sm:$0xff] %vm796, %v5042
        %v5046 = vld [vmem:[#allocation6] sm:$0xff]
        %v5047 = vld [vmem:[#allocation6 + $0x8] sm:$0xff]
        %5050 = vrot.lane.b32.xlu0 %v5046, 127
        %v5051 = vpop.permute.xlu0 %5050
        %5052 = vrot.lane.b32.xlu0 %v5047, 127
        %v5053 = vpop.permute.xlu0 %5052
        %v5054 = vsel %vm2456, %v5051, %v5053
        %v5057 = vmax.f32 %v5046, %v5054
        %v5058 = vmax.f32 %v5047, %v5053
        %5061 = vrot.lane.b32.xlu0 %v5057, 118
        %v5062 = vpop.permute.xlu0 %5061
        %5063 = vrot.lane.b32.xlu0 %v5058, 118
        %v5064 = vpop.permute.xlu0 %5063
        %vm5065 = vcmask 965632
        %v5066 = vsel %vm5065, %v5062, %v5064
        %v5069 = vmax.f32 %v5057, %v5066
        %v5070 = vmax.f32 %v5058, %v5064
        %v5071 = vpack.c.bf16 %v5069, %v5069
        %v5072 = vpack.c.bf16 %v5070, %v5070
        %v5073 = vld [vmem:[%s20] sm:$0xf]
        %v5074 = vld [vmem:[%s20 + $0x4] sm:$0xf]
        %v5075 = vld [vmem:[%s20 + $0x8] sm:$0xf]
        %v5076 = vld [vmem:[%s20 + $0xc] sm:$0xf]
        %v5077 = vld [vmem:[%s20 + $0x10] sm:$0xf]
        %v5078 = vld [vmem:[%s20 + $0x14] sm:$0xf]
        %v5079 = vld [vmem:[%s20 + $0x18] sm:$0xf]
        %v5080 = vld [vmem:[%s20 + $0x1c] sm:$0xf]
        %v5081 = vld [vmem:[%s20 + $0x20] sm:$0xf]
        %v5082 = vld [vmem:[%s20 + $0x24] sm:$0xf]
        %v5083 = vld [vmem:[%s20 + $0x28] sm:$0xf]
        %v5084 = vld [vmem:[%s20 + $0x2c] sm:$0xf]
        %v5085 = vld [vmem:[%s20 + $0x30] sm:$0x3]
        %5088 = vrot.lane.b32.xlu0 %v5071, 96
        %v5089 = vpop.permute.xlu0 %5088
        %5090 = vrot.lane.b32.xlu0 %v5072, 96
        %v5091 = vpop.permute.xlu0 %5090
        %v5092 = vsel %vm1410, %v5089, %v5091
        %v5106 = vunpack.c.l.b16 %v5073
        %v5107 = vunpack.c.l.b16 %v5074
        %v5108 = vunpack.c.l.b16 %v5075
        %v5109 = vunpack.c.l.b16 %v5076
        %v5110 = vunpack.c.l.b16 %v5077
        %v5111 = vunpack.c.l.b16 %v5078
        %v5112 = vunpack.c.l.b16 %v5079
        %v5113 = vunpack.c.l.b16 %v5080
        %v5114 = vunpack.c.l.b16 %v5081
        %v5115 = vunpack.c.l.b16 %v5082
        %v5116 = vunpack.c.l.b16 %v5083
        %v5117 = vunpack.c.l.b16 %v5084
        %v5118 = vunpack.c.l.b16 %v5085
        %v5119 = vpack.c.b16 %v5107, %v5106
        %v5120 = vpack.c.b16 %v5109, %v5108
        %v5121 = vpack.c.b16 %v5111, %v5110
        %v5122 = vpack.c.b16 %v5113, %v5112
        %v5123 = vpack.c.b16 %v5115, %v5114
        %v5124 = vpack.c.b16 %v5117, %v5116
        %v5125 = vpack.c.b16 %v5118, %v5118
        %vm5132 = vcmask 818176
        %v5134 = vsel %vm5132, %v5092, 0
        %v5137 = vsel %vm3777, %v5125, 0
        %5139 = vmatprep.subr.bf16.mxu0 0
        %5140 = vmatpush1.bf16.msra.mxu0 %v5119
        %5141 = vmatprep.subr.bf16.mxu0 0
        %5142 = vmatpush1.bf16.msra.mxu0 %v5120
        %5143 = vmatprep.subr.bf16.mxu0 0
        %5144 = vmatpush1.bf16.msra.mxu0 %v5121
        %5145 = vmatprep.subr.bf16.mxu0 0
        %5146 = vmatpush1.bf16.msra.mxu0 %v5122
        %5147 = vmatprep.subr.bf16.mxu0 0
        %5148 = vmatpush1.bf16.msra.mxu0 %v5123
        %5149 = vmatprep.subr.bf16.mxu0 0
        %5150 = vmatpush1.bf16.msra.mxu0 %v5124
        %5151 = vmatprep.subr.bf16.mxu0 0
        %5152 = vmatpush1.bf16.msra.mxu0 %v5137
        %5153 = vmatprep.subr.bf16.mxu0 0
        %5154 = vmatpush1.bf16.msra.mxu0 0
        %5155 = vmatprep.subr.bf16.mxu0 0
        %5156 = vmatpush1.bf16.msra.mxu0 0
        %5157 = vmatprep.subr.bf16.mxu0 0
        %5158 = vmatpush1.bf16.msra.mxu0 0
        %5159 = vmatprep.subr.bf16.mxu0 0
        %5160 = vmatpush1.bf16.msra.mxu0 0
        %5161 = vmatprep.subr.bf16.mxu0 0
        %5162 = vmatpush1.bf16.msra.mxu0 0
        %5163 = vmatprep.subr.bf16.mxu0 0
        %5164 = vmatpush1.bf16.msra.mxu0 0
        %5165 = vmatprep.subr.bf16.mxu0 0
        %5166 = vmatpush1.bf16.msra.mxu0 0
        %5167 = vmatprep.subr.bf16.mxu0 0
        %5168 = vmatpush1.bf16.msra.mxu0 0
        %5169 = vmatprep.subr.bf16.mxu0 0
        %5170 = vmatpush1.bf16.msra.mxu0 0
        %5171 = vmatprep.mubr.bf16.mxu0 0
        %5172 = vmatmul.mubr.bf16.gmra.mrb[0].mxu0 %v5134
        %v5173 = vpop.f32.mrb[0].mxu0
        %v5174 = vadd.f32 0.0, %v5173
        %v5175 = vpop.f32.mrb[0].mxu0
        %v5176 = vpop.f32.mrb[0].mxu0
        %v5177 = vpop.f32.mrb[0].mxu0
        %5178 = vdwg.mxu0
        %5180 = vrot.lane.b32.xlu0 %v5174, 32
        %v5181 = vpop.permute.xlu0 %5180
        %vm5183 = vcmask 662784
        %5184 = vst.msk [vmem:[#allocation7] sm:$0xff] %vm5183, %v5181
        %v5185 = vld [vmem:[#allocation7] sm:$0xff]
        %v5186 = vpack.c.bf16 %v5185, %v5185
        %5188 = vrot.lane.b32.xlu0 %v5186, 104
        %v5189 = vpop.permute.xlu0 %5188
        %vm5191 = vcmask 396288
        %5192 = vst.msk [vmem:[#allocation14] sm:$0xf] %vm5191, %v5189
        %v5193 = vld [vmem:[#allocation7] sm:$0xff]
        %v5194 = vpack.c.bf16 %v5193, %v5193
        %v5196 = vrot.slane %v5194, 4
        %5197 = vrot.lane.b32.xlu0 %v5196, 103
        %v5198 = vpop.permute.xlu0 %5197
        %vm5200 = vcmask 400388
        %5201 = vst.msk [vmem:[#allocation14] sm:$0xf0] %vm5200, %v5198
        %v5202 = vld [vmem:[#allocation7] sm:$0xff]
        %v5203 = vpack.c.bf16 %v5202, %v5202
        %5205 = vrot.lane.b32.xlu0 %v5203, 102
        %v5206 = vpop.permute.xlu0 %5205
        %5208 = vst.msk [vmem:[#allocation14 + $0x40] sm:$0xf] %vm5191, %v5206
        %v5209 = vld [vmem:[#allocation7] sm:$0xff]
        %v5210 = vpack.c.bf16 %v5209, %v5209
        %v5212 = vrot.slane %v5210, 4
        %5213 = vrot.lane.b32.xlu0 %v5212, 97
        %v5214 = vpop.permute.xlu0 %5213
        %5216 = vst.msk [vmem:[#allocation14 + $0x40] sm:$0xf0] %vm5200, %v5214
        %v5217 = vld [vmem:[#allocation7] sm:$0xff]
        %v5218 = vpack.c.bf16 %v5217, %v5217
        %5220 = vrot.lane.b32.xlu0 %v5218, 96
        %v5221 = vpop.permute.xlu0 %5220
        %5223 = vst.msk [vmem:[#allocation14 + $0x80] sm:$0xf] %vm5191, %v5221
        %v5224 = vld [vmem:[#allocation7] sm:$0xff]
        %v5225 = vpack.c.bf16 %v5224, %v5224
        %v5227 = vrot.slane %v5225, 4
        %5228 = vrot.lane.b32.xlu0 %v5227, 95
        %v5229 = vpop.permute.xlu0 %5228
        %5231 = vst.msk [vmem:[#allocation14 + $0x80] sm:$0xf0] %vm5200, %v5229
        %v5232 = vld [vmem:[#allocation7] sm:$0xff]
        %v5233 = vpack.c.bf16 %v5232, %v5232
        %5235 = vrot.lane.b32.xlu0 %v5233, 90
        %v5236 = vpop.permute.xlu0 %5235
        %5238 = vst.msk [vmem:[#allocation14 + $0xc0] sm:$0xf] %vm5191, %v5236
        %v5239 = vld [vmem:[#allocation7] sm:$0xff]
        %v5240 = vpack.c.bf16 %v5239, %v5239
        %v5242 = vrot.slane %v5240, 4
        %5243 = vrot.lane.b32.xlu0 %v5242, 89
        %v5244 = vpop.permute.xlu0 %5243
        %5246 = vst.msk [vmem:[#allocation14 + $0xc0] sm:$0xf0] %vm5200, %v5244
        %v5247 = vld [vmem:[#allocation7] sm:$0xff]
        %v5248 = vpack.c.bf16 %v5247, %v5247
        %5250 = vrot.lane.b32.xlu0 %v5248, 88
        %v5251 = vpop.permute.xlu0 %5250
        %5253 = vst.msk [vmem:[#allocation14 + $0x100] sm:$0xf] %vm5191, %v5251
        %v5254 = vld [vmem:[%s4] sm:$0xf]
        %v5255 = vld [vmem:[#allocation14] sm:$0xff]
        %v5256 = vld [vmem:[#allocation14 + $0x40] sm:$0xff]
        %v5257 = vld [vmem:[#allocation14 + $0x80] sm:$0xff]
        %v5258 = vld [vmem:[#allocation14 + $0xc0] sm:$0xff]
        %v5259 = vld [vmem:[#allocation14 + $0x100] sm:$0xf]
        %v5260 = vld [vmem:[%s11] sm:$0xff]
        %5262 = vset.pattern.permute.xlu0 0
        %5263 = vperm.xlu0 %5262, %v5260
        %v5264 = vpop.permute.xlu0 %5263
        %v5267 = vsel %vm4984, %v5254, 0
        %v5270 = vsel %vm2022, %v5259, 0
        %5272 = vmatprep.subr.bf16.mxu0 0
        %5273 = vmatpush1.bf16.msra.mxu0 %v5255
        %5274 = vmatprep.subr.bf16.mxu0 0
        %5275 = vmatpush1.bf16.msra.mxu0 %v5256
        %5276 = vmatprep.subr.bf16.mxu0 0
        %5277 = vmatpush1.bf16.msra.mxu0 %v5257
        %5278 = vmatprep.subr.bf16.mxu0 0
        %5279 = vmatpush1.bf16.msra.mxu0 %v5258
        %5280 = vmatprep.subr.bf16.mxu0 0
        %5281 = vmatpush1.bf16.msra.mxu0 %v5270
        %5282 = vmatprep.subr.bf16.mxu0 0
        %5283 = vmatpush1.bf16.msra.mxu0 0
        %5284 = vmatprep.subr.bf16.mxu0 0
        %5285 = vmatpush1.bf16.msra.mxu0 0
        %5286 = vmatprep.subr.bf16.mxu0 0
        %5287 = vmatpush1.bf16.msra.mxu0 0
        %5288 = vmatprep.subr.bf16.mxu0 0
        %5289 = vmatpush1.bf16.msra.mxu0 0
        %5290 = vmatprep.subr.bf16.mxu0 0
        %5291 = vmatpush1.bf16.msra.mxu0 0
        %5292 = vmatprep.subr.bf16.mxu0 0
        %5293 = vmatpush1.bf16.msra.mxu0 0
        %5294 = vmatprep.subr.bf16.mxu0 0
        %5295 = vmatpush1.bf16.msra.mxu0 0
        %5296 = vmatprep.subr.bf16.mxu0 0
        %5297 = vmatpush1.bf16.msra.mxu0 0
        %5298 = vmatprep.subr.bf16.mxu0 0
        %5299 = vmatpush1.bf16.msra.mxu0 0
        %5300 = vmatprep.subr.bf16.mxu0 0
        %5301 = vmatpush1.bf16.msra.mxu0 0
        %5302 = vmatprep.subr.bf16.mxu0 0
        %5303 = vmatpush1.bf16.msra.mxu0 0
        %5304 = vmatprep.mubr.bf16.mxu0 0
        %5305 = vmatmul.mubr.bf16.gmra.mrb[0].mxu0 %v5267
        %v5306 = vpop.f32.mrb[0].mxu0
        %v5307 = vadd.f32 %v5264, %v5306
        %v5308 = vpop.f32.mrb[0].mxu0
        %v5309 = vpop.f32.mrb[0].mxu0
        %v5310 = vpop.f32.mrb[0].mxu0
        %5311 = vdwg.mxu0
        %v5312 = vmax.f32 %v5307, 0.0
        %5314 = vrot.lane.b32.xlu0 %v5312, 32
        %v5315 = vpop.permute.xlu0 %5314
        %5317 = vst.msk [vmem:[#allocation8] sm:$0xff] %vm5183, %v5315
        %v5318 = vld [vmem:[#allocation8] sm:$0xff]
        %v5319 = vpack.c.bf16 %v5318, %v5318
        %v5320 = vld [vmem:[%s21] sm:$0xf]
        %v5321 = vld [vmem:[%s21 + $0x4] sm:$0xf]
        %v5322 = vld [vmem:[%s21 + $0x8] sm:$0xf]
        %v5323 = vld [vmem:[%s21 + $0xc] sm:$0xf]
        %v5324 = vld [vmem:[%s21 + $0x10] sm:$0xf]
        %v5325 = vld [vmem:[%s21 + $0x14] sm:$0xf]
        %v5326 = vld [vmem:[%s21 + $0x18] sm:$0x1]
        %5328 = vrot.lane.b32.xlu0 %v5319, 96
        %v5329 = vpop.permute.xlu0 %5328
        %v5337 = vunpack.c.l.b16 %v5320
        %v5338 = vunpack.c.l.b16 %v5321
        %v5339 = vunpack.c.l.b16 %v5322
        %v5340 = vunpack.c.l.b16 %v5323
        %v5341 = vunpack.c.l.b16 %v5324
        %v5342 = vunpack.c.l.b16 %v5325
        %v5343 = vunpack.c.l.b16 %v5326
        %v5344 = vpack.c.b16 %v5338, %v5337
        %v5345 = vpack.c.b16 %v5340, %v5339
        %v5346 = vpack.c.b16 %v5342, %v5341
        %v5347 = vpack.c.b16 %v5343, %v5343
        %vm5351 = vcmask 400384
        %v5353 = vsel %vm5351, %v5329, 0
        %v5356 = vand.u32 %v5347, %v4771
        %5358 = vmatprep.subr.bf16.mxu0 0
        %5359 = vmatpush1.bf16.msra.mxu0 %v5344
        %5360 = vmatprep.subr.bf16.mxu0 0
        %5361 = vmatpush1.bf16.msra.mxu0 %v5345
        %5362 = vmatprep.subr.bf16.mxu0 0
        %5363 = vmatpush1.bf16.msra.mxu0 %v5346
        %5364 = vmatprep.subr.bf16.mxu0 0
        %5365 = vmatpush1.bf16.msra.mxu0 %v5356
        %5366 = vmatprep.subr.bf16.mxu0 0
        %5367 = vmatpush1.bf16.msra.mxu0 0
        %5368 = vmatprep.subr.bf16.mxu0 0
        %5369 = vmatpush1.bf16.msra.mxu0 0
        %5370 = vmatprep.subr.bf16.mxu0 0
        %5371 = vmatpush1.bf16.msra.mxu0 0
        %5372 = vmatprep.subr.bf16.mxu0 0
        %5373 = vmatpush1.bf16.msra.mxu0 0
        %5374 = vmatprep.subr.bf16.mxu0 0
        %5375 = vmatpush1.bf16.msra.mxu0 0
        %5376 = vmatprep.subr.bf16.mxu0 0
        %5377 = vmatpush1.bf16.msra.mxu0 0
        %5378 = vmatprep.subr.bf16.mxu0 0
        %5379 = vmatpush1.bf16.msra.mxu0 0
        %5380 = vmatprep.subr.bf16.mxu0 0
        %5381 = vmatpush1.bf16.msra.mxu0 0
        %5382 = vmatprep.subr.bf16.mxu0 0
        %5383 = vmatpush1.bf16.msra.mxu0 0
        %5384 = vmatprep.subr.bf16.mxu0 0
        %5385 = vmatpush1.bf16.msra.mxu0 0
        %5386 = vmatprep.subr.bf16.mxu0 0
        %5387 = vmatpush1.bf16.msra.mxu0 0
        %5388 = vmatprep.subr.bf16.mxu0 0
        %5389 = vmatpush1.bf16.msra.mxu0 0
        %5390 = vmatprep.mubr.bf16.mxu0 0
        %5391 = vmatmul.mubr.bf16.gmra.mrb[0].mxu0 %v5353
        %v5392 = vpop.f32.mrb[0].mxu0
        %v5393 = vadd.f32 0.0, %v5392
        %v5394 = vpop.f32.mrb[0].mxu0
        %v5395 = vpop.f32.mrb[0].mxu0
        %v5396 = vpop.f32.mrb[0].mxu0
        %5397 = vdwg.mxu0
        %5399 = vrot.lane.b32.xlu0 %v5393, 32
        %v5400 = vpop.permute.xlu0 %5399
        %5402 = vst.msk [vmem:[#allocation9] sm:$0xff] %vm2374, %v5400
        %5403 = vst.msk [vmem:[#allocation9 + $0x8] sm:$0xff] %vm796, %v5400
        %v5404 = vld [vmem:[#allocation9] sm:$0xff]
        %v5405 = vpack.c.bf16 %v5404, %v5404
        %5407 = vrot.lane.b32.xlu0 %v5405, 107
        %v5408 = vpop.permute.xlu0 %5407
        %5410 = vst.msk [vmem:[#allocation14] sm:$0xf] %vm4867, %v5408
        %v5411 = vld [vmem:[#allocation9] sm:$0xff]
        %v5412 = vpack.c.bf16 %v5411, %v5411
        %v5414 = vrot.slane %v5412, 4
        %5415 = vrot.lane.b32.xlu0 %v5414, 106
        %v5416 = vpop.permute.xlu0 %5415
        %5418 = vst.msk [vmem:[#allocation14] sm:$0xf0] %vm4876, %v5416
        %v5419 = vld [vmem:[#allocation9] sm:$0xff]
        %v5420 = vpack.c.bf16 %v5419, %v5419
        %5422 = vrot.lane.b32.xlu0 %v5420, 105
        %v5423 = vpop.permute.xlu0 %5422
        %5425 = vst.msk [vmem:[#allocation14 + $0x40] sm:$0xf] %vm4867, %v5423
        %v5426 = vld [vmem:[#allocation9] sm:$0xff]
        %v5427 = vld [vmem:[#allocation9 + $0x8] sm:$0xff]
        %v5428 = vpack.c.bf16 %v5426, %v5426
        %v5429 = vpack.c.bf16 %v5427, %v5427
        %v5432 = vrot.slane %v5428, 4
        %v5433 = vrot.slane %v5429, 4
        %5434 = vrot.lane.b32.xlu0 %v5432, 97
        %v5435 = vpop.permute.xlu0 %5434
        %5436 = vrot.lane.b32.xlu0 %v5433, 97
        %v5437 = vpop.permute.xlu0 %5436
        %v5438 = vsel %vm1285, %v5435, %v5437
        %5440 = vst.msk [vmem:[#allocation14 + $0x40] sm:$0xf0] %vm4876, %v5438
        %v5441 = vld [vmem:[#allocation9] sm:$0xff]
        %v5442 = vld [vmem:[#allocation9 + $0x8] sm:$0xff]
        %v5443 = vpack.c.bf16 %v5441, %v5441
        %v5444 = vpack.c.bf16 %v5442, %v5442
        %5447 = vrot.lane.b32.xlu0 %v5443, 96
        %v5448 = vpop.permute.xlu0 %5447
        %5449 = vrot.lane.b32.xlu0 %v5444, 96
        %v5450 = vpop.permute.xlu0 %5449
        %v5451 = vsel %vm1410, %v5448, %v5450
        %5453 = vst.msk [vmem:[#allocation14 + $0x80] sm:$0xf] %vm4867, %v5451
        %v5454 = vld [vmem:[#allocation9] sm:$0xff]
        %v5455 = vld [vmem:[#allocation9 + $0x8] sm:$0xff]
        %v5456 = vpack.c.bf16 %v5454, %v5454
        %v5457 = vpack.c.bf16 %v5455, %v5455
        %v5460 = vrot.slane %v5456, 4
        %v5461 = vrot.slane %v5457, 4
        %5462 = vrot.lane.b32.xlu0 %v5460, 95
        %v5463 = vpop.permute.xlu0 %5462
        %5464 = vrot.lane.b32.xlu0 %v5461, 95
        %v5465 = vpop.permute.xlu0 %5464
        %v5466 = vsel %vm1553, %v5463, %v5465
        %5468 = vst.msk [vmem:[#allocation14 + $0x80] sm:$0xf0] %vm4876, %v5466
        %v5469 = vld [vmem:[#allocation9] sm:$0xff]
        %v5470 = vld [vmem:[#allocation9 + $0x8] sm:$0xff]
        %v5471 = vpack.c.bf16 %v5469, %v5469
        %v5472 = vpack.c.bf16 %v5470, %v5470
        %5475 = vrot.lane.b32.xlu0 %v5471, 87
        %v5476 = vpop.permute.xlu0 %5475
        %5477 = vrot.lane.b32.xlu0 %v5472, 87
        %v5478 = vpop.permute.xlu0 %5477
        %v5479 = vsel %vm4938, %v5476, %v5478
        %5481 = vst.msk [vmem:[#allocation14 + $0xc0] sm:$0xf] %vm4867, %v5479
        %v5482 = vld [vmem:[#allocation9] sm:$0xff]
        %v5483 = vld [vmem:[#allocation9 + $0x8] sm:$0xff]
        %v5484 = vpack.c.bf16 %v5482, %v5482
        %v5485 = vpack.c.bf16 %v5483, %v5483
        %v5488 = vrot.slane %v5484, 4
        %v5489 = vrot.slane %v5485, 4
        %5490 = vrot.lane.b32.xlu0 %v5488, 86
        %v5491 = vpop.permute.xlu0 %5490
        %5492 = vrot.lane.b32.xlu0 %v5489, 86
        %v5493 = vpop.permute.xlu0 %5492
        %v5494 = vsel %vm4954, %v5491, %v5493
        %5496 = vst.msk [vmem:[#allocation14 + $0xc0] sm:$0xf0] %vm4876, %v5494
        %v5497 = vld [vmem:[#allocation9] sm:$0xff]
        %v5498 = vld [vmem:[#allocation9 + $0x8] sm:$0xff]
        %v5499 = vpack.c.bf16 %v5497, %v5497
        %v5500 = vpack.c.bf16 %v5498, %v5498
        %5503 = vrot.lane.b32.xlu0 %v5499, 85
        %v5504 = vpop.permute.xlu0 %5503
        %5505 = vrot.lane.b32.xlu0 %v5500, 85
        %v5506 = vpop.permute.xlu0 %5505
        %v5507 = vsel %vm4968, %v5504, %v5506
        %5509 = vst.msk [vmem:[#allocation14 + $0x100] sm:$0xf] %vm4867, %v5507
        %v5510 = vld [vmem:[%s5] sm:$0xf]
        %v5511 = vld [vmem:[#allocation14] sm:$0xff]
        %v5512 = vld [vmem:[#allocation14 + $0x40] sm:$0xff]
        %v5513 = vld [vmem:[#allocation14 + $0x80] sm:$0xff]
        %v5514 = vld [vmem:[#allocation14 + $0xc0] sm:$0xff]
        %v5515 = vld [vmem:[#allocation14 + $0x100] sm:$0xf]
        %v5516 = vld [vmem:[%s12] sm:$0xff]
        %5518 = vset.pattern.permute.xlu0 0
        %5519 = vperm.xlu0 %5518, %v5516
        %v5520 = vpop.permute.xlu0 %5519
        %v5523 = vsel %vm4984, %v5510, 0
        %v5526 = vsel %vm2022, %v5515, 0
        %5528 = vmatprep.subr.bf16.mxu0 0
        %5529 = vmatpush1.bf16.msra.mxu0 %v5511
        %5530 = vmatprep.subr.bf16.mxu0 0
        %5531 = vmatpush1.bf16.msra.mxu0 %v5512
        %5532 = vmatprep.subr.bf16.mxu0 0
        %5533 = vmatpush1.bf16.msra.mxu0 %v5513
        %5534 = vmatprep.subr.bf16.mxu0 0
        %5535 = vmatpush1.bf16.msra.mxu0 %v5514
        %5536 = vmatprep.subr.bf16.mxu0 0
        %5537 = vmatpush1.bf16.msra.mxu0 %v5526
        %5538 = vmatprep.subr.bf16.mxu0 0
        %5539 = vmatpush1.bf16.msra.mxu0 0
        %5540 = vmatprep.subr.bf16.mxu0 0
        %5541 = vmatpush1.bf16.msra.mxu0 0
        %5542 = vmatprep.subr.bf16.mxu0 0
        %5543 = vmatpush1.bf16.msra.mxu0 0
        %5544 = vmatprep.subr.bf16.mxu0 0
        %5545 = vmatpush1.bf16.msra.mxu0 0
        %5546 = vmatprep.subr.bf16.mxu0 0
        %5547 = vmatpush1.bf16.msra.mxu0 0
        %5548 = vmatprep.subr.bf16.mxu0 0
        %5549 = vmatpush1.bf16.msra.mxu0 0
        %5550 = vmatprep.subr.bf16.mxu0 0
        %5551 = vmatpush1.bf16.msra.mxu0 0
        %5552 = vmatprep.subr.bf16.mxu0 0
        %5553 = vmatpush1.bf16.msra.mxu0 0
        %5554 = vmatprep.subr.bf16.mxu0 0
        %5555 = vmatpush1.bf16.msra.mxu0 0
        %5556 = vmatprep.subr.bf16.mxu0 0
        %5557 = vmatpush1.bf16.msra.mxu0 0
        %5558 = vmatprep.subr.bf16.mxu0 0
        %5559 = vmatpush1.bf16.msra.mxu0 0
        %5560 = vmatprep.mubr.bf16.mxu0 0
        %5561 = vmatmul.mubr.bf16.gmra.mrb[0].mxu0 %v5523
        %v5562 = vpop.f32.mrb[0].mxu0
        %v5563 = vadd.f32 %v5520, %v5562
        %v5564 = vpop.f32.mrb[0].mxu0
        %v5565 = vpop.f32.mrb[0].mxu0
        %v5566 = vpop.f32.mrb[0].mxu0
        %5567 = vdwg.mxu0
        %v5568 = vmax.f32 %v5563, 0.0
        %5570 = vrot.lane.b32.xlu0 %v5568, 32
        %v5571 = vpop.permute.xlu0 %5570
        %5573 = vst.msk [vmem:[#allocation10] sm:$0xff] %vm2374, %v5571
        %5574 = vst.msk [vmem:[#allocation10 + $0x8] sm:$0xff] %vm796, %v5571
        %v5575 = vld [vmem:[#allocation10] sm:$0xff]
        %v5576 = vld [vmem:[#allocation10 + $0x8] sm:$0xff]
        %v5577 = vpack.c.bf16 %v5575, %v5575
        %v5578 = vpack.c.bf16 %v5576, %v5576
        %v5579 = vld [vmem:[%s22] sm:$0xff]
        %v5580 = vld [vmem:[%s22 + $0x8] sm:$0xf]
        %v5581 = vld [vmem:[%s22 + $0xc] sm:$0xff]
        %v5582 = vld [vmem:[%s22 + $0x14] sm:$0xf]
        %v5583 = vld [vmem:[%s22 + $0x18] sm:$0xff]
        %v5584 = vld [vmem:[%s22 + $0x20] sm:$0xf]
        %v5585 = vld [vmem:[%s22 + $0x24] sm:$0xff]
        %v5586 = vld [vmem:[%s22 + $0x2c] sm:$0xf]
        %v5587 = vld [vmem:[%s22 + $0x30] sm:$0xff]
        %v5588 = vld [vmem:[%s22 + $0x38] sm:$0xf]
        %v5589 = vld [vmem:[%s22 + $0x3c] sm:$0xff]
        %v5590 = vld [vmem:[%s22 + $0x44] sm:$0xf]
        %v5591 = vld [vmem:[%s22 + $0x48] sm:$0xff]
        %v5592 = vld [vmem:[%s22 + $0x50] sm:$0xf]
        %v5593 = vld [vmem:[%s22 + $0x54] sm:$0xff]
        %v5594 = vld [vmem:[%s22 + $0x5c] sm:$0xf]
        %v5595 = vld [vmem:[%s22 + $0x60] sm:$0xff]
        %v5596 = vld [vmem:[%s22 + $0x68] sm:$0xf]
        %v5597 = vld [vmem:[%s22 + $0x6c] sm:$0xff]
        %v5598 = vld [vmem:[%s22 + $0x74] sm:$0xf]
        %v5599 = vld [vmem:[%s22 + $0x78] sm:$0xff]
        %v5600 = vld [vmem:[%s22 + $0x80] sm:$0xf]
        %v5601 = vld [vmem:[%s22 + $0x84] sm:$0xff]
        %v5602 = vld [vmem:[%s22 + $0x8c] sm:$0xf]
        %v5603 = vld [vmem:[%s22 + $0x90] sm:$0x33]
        %v5604 = vld [vmem:[%s22 + $0x98] sm:$0x3]
        %5607 = vrot.lane.b32.xlu0 %v5577, 96
        %v5608 = vpop.permute.xlu0 %5607
        %5609 = vrot.lane.b32.xlu0 %v5578, 96
        %v5610 = vpop.permute.xlu0 %5609
        %v5611 = vsel %vm1410, %v5608, %v5610
        %v5638 = vunpack.c.l.b16 %v5579
        %v5639 = vunpack.c.h.b16 %v5579
        %v5640 = vunpack.c.l.b16 %v5580
        %v5641 = vunpack.c.l.b16 %v5581
        %v5642 = vunpack.c.h.b16 %v5581
        %v5643 = vunpack.c.l.b16 %v5582
        %v5644 = vunpack.c.l.b16 %v5583
        %v5645 = vunpack.c.h.b16 %v5583
        %v5646 = vunpack.c.l.b16 %v5584
        %v5647 = vunpack.c.l.b16 %v5585
        %v5648 = vunpack.c.h.b16 %v5585
        %v5649 = vunpack.c.l.b16 %v5586
        %v5650 = vunpack.c.l.b16 %v5587
        %v5651 = vunpack.c.h.b16 %v5587
        %v5652 = vunpack.c.l.b16 %v5588
        %v5653 = vunpack.c.l.b16 %v5589
        %v5654 = vunpack.c.h.b16 %v5589
        %v5655 = vunpack.c.l.b16 %v5590
        %v5656 = vunpack.c.l.b16 %v5591
        %v5657 = vunpack.c.h.b16 %v5591
        %v5658 = vunpack.c.l.b16 %v5592
        %v5659 = vunpack.c.l.b16 %v5593
        %v5660 = vunpack.c.h.b16 %v5593
        %v5661 = vunpack.c.l.b16 %v5594
        %v5662 = vunpack.c.l.b16 %v5595
        %v5663 = vunpack.c.h.b16 %v5595
        %v5664 = vunpack.c.l.b16 %v5596
        %v5665 = vunpack.c.l.b16 %v5597
        %v5666 = vunpack.c.h.b16 %v5597
        %v5667 = vunpack.c.l.b16 %v5598
        %v5668 = vunpack.c.l.b16 %v5599
        %v5669 = vunpack.c.h.b16 %v5599
        %v5670 = vunpack.c.l.b16 %v5600
        %v5671 = vunpack.c.l.b16 %v5601
        %v5672 = vunpack.c.h.b16 %v5601
        %v5673 = vunpack.c.l.b16 %v5602
        %v5674 = vunpack.c.l.b16 %v5603
        %v5675 = vunpack.c.h.b16 %v5603
        %v5676 = vunpack.c.l.b16 %v5604
        %v5677 = vpack.c.b16 %v5641, %v5638
        %v5678 = vpack.c.b16 %v5642, %v5639
        %v5679 = vpack.c.b16 %v5643, %v5640
        %v5680 = vpack.c.b16 %v5647, %v5644
        %v5681 = vpack.c.b16 %v5648, %v5645
        %v5682 = vpack.c.b16 %v5649, %v5646
        %v5683 = vpack.c.b16 %v5653, %v5650
        %v5684 = vpack.c.b16 %v5654, %v5651
        %v5685 = vpack.c.b16 %v5655, %v5652
        %v5686 = vpack.c.b16 %v5659, %v5656
        %v5687 = vpack.c.b16 %v5660, %v5657
        %v5688 = vpack.c.b16 %v5661, %v5658
        %v5689 = vpack.c.b16 %v5665, %v5662
        %v5690 = vpack.c.b16 %v5666, %v5663
        %v5691 = vpack.c.b16 %v5667, %v5664
        %v5692 = vpack.c.b16 %v5671, %v5668
        %v5693 = vpack.c.b16 %v5672, %v5669
        %v5694 = vpack.c.b16 %v5673, %v5670
        %v5695 = vpack.c.b16 %v5674, %v5674
        %v5696 = vpack.c.b16 %v5675, %v5675
        %v5697 = vpack.c.b16 %v5676, %v5676
        %v5717 = vsel %vm5132, %v5611, 0
        %v5720 = vsel %vm3777, %v5695, 0
        %v5723 = vsel %vm3777, %v5696, 0
        %v5726 = vsel %vm3777, %v5697, 0
        %5728 = vmatprep.subr.bf16.mxu0 %v5678
        %5729 = vmatpush1.bf16.msra.mxu0 %v5677
        %5730 = vmatprep.subr.bf16.mxu0 %v5681
        %5731 = vmatpush1.bf16.msra.mxu0 %v5680
        %5732 = vmatprep.subr.bf16.mxu0 %v5684
        %5733 = vmatpush1.bf16.msra.mxu0 %v5683
        %5734 = vmatprep.subr.bf16.mxu0 %v5687
        %5735 = vmatpush1.bf16.msra.mxu0 %v5686
        %5736 = vmatprep.subr.bf16.mxu0 %v5690
        %5737 = vmatpush1.bf16.msra.mxu0 %v5689
        %5738 = vmatprep.subr.bf16.mxu0 %v5693
        %5739 = vmatpush1.bf16.msra.mxu0 %v5692
        %5740 = vmatprep.subr.bf16.mxu0 %v5723
        %5741 = vmatpush1.bf16.msra.mxu0 %v5720
        %5742 = vmatprep.subr.bf16.mxu0 0
        %5743 = vmatpush1.bf16.msra.mxu0 0
        %5744 = vmatprep.subr.bf16.mxu0 0
        %5745 = vmatpush1.bf16.msra.mxu0 0
        %5746 = vmatprep.subr.bf16.mxu0 0
        %5747 = vmatpush1.bf16.msra.mxu0 0
        %5748 = vmatprep.subr.bf16.mxu0 0
        %5749 = vmatpush1.bf16.msra.mxu0 0
        %5750 = vmatprep.subr.bf16.mxu0 0
        %5751 = vmatpush1.bf16.msra.mxu0 0
        %5752 = vmatprep.subr.bf16.mxu0 0
        %5753 = vmatpush1.bf16.msra.mxu0 0
        %5754 = vmatprep.subr.bf16.mxu0 0
        %5755 = vmatpush1.bf16.msra.mxu0 0
        %5756 = vmatprep.subr.bf16.mxu0 0
        %5757 = vmatpush1.bf16.msra.mxu0 0
        %5758 = vmatprep.subr.bf16.mxu0 0
        %5759 = vmatpush1.bf16.msra.mxu0 0
        %5760 = vmatprep.mubr.bf16.mxu0 0
        %5761 = vmatmul.mubr.bf16.gmra.mrb[0].mxu0 %v5717
        %v5762 = vpop.f32.mrb[0].mxu0
        %v5763 = vadd.f32 0.0, %v5762
        %v5764 = vpop.f32.mrb[0].mxu0
        %v5765 = vadd.f32 0.0, %v5764
        %v5766 = vpop.f32.mrb[0].mxu0
        %v5767 = vpop.f32.mrb[0].mxu0
        %5768 = vdwg.mxu0
        %5769 = vmatprep.subr.bf16.mxu0 0
        %5770 = vmatpush1.bf16.msra.mxu0 %v5679
        %5771 = vmatprep.subr.bf16.mxu0 0
        %5772 = vmatpush1.bf16.msra.mxu0 %v5682
        %5773 = vmatprep.subr.bf16.mxu0 0
        %5774 = vmatpush1.bf16.msra.mxu0 %v5685
        %5775 = vmatprep.subr.bf16.mxu0 0
        %5776 = vmatpush1.bf16.msra.mxu0 %v5688
        %5777 = vmatprep.subr.bf16.mxu0 0
        %5778 = vmatpush1.bf16.msra.mxu0 %v5691
        %5779 = vmatprep.subr.bf16.mxu0 0
        %5780 = vmatpush1.bf16.msra.mxu0 %v5694
        %5781 = vmatprep.subr.bf16.mxu0 0
        %5782 = vmatpush1.bf16.msra.mxu0 %v5726
        %5783 = vmatprep.subr.bf16.mxu0 0
        %5784 = vmatpush1.bf16.msra.mxu0 0
        %5785 = vmatprep.subr.bf16.mxu0 0
        %5786 = vmatpush1.bf16.msra.mxu0 0
        %5787 = vmatprep.subr.bf16.mxu0 0
        %5788 = vmatpush1.bf16.msra.mxu0 0
        %5789 = vmatprep.subr.bf16.mxu0 0
        %5790 = vmatpush1.bf16.msra.mxu0 0
        %5791 = vmatprep.subr.bf16.mxu0 0
        %5792 = vmatpush1.bf16.msra.mxu0 0
        %5793 = vmatprep.subr.bf16.mxu0 0
        %5794 = vmatpush1.bf16.msra.mxu0 0
        %5795 = vmatprep.subr.bf16.mxu0 0
        %5796 = vmatpush1.bf16.msra.mxu0 0
        %5797 = vmatprep.subr.bf16.mxu0 0
        %5798 = vmatpush1.bf16.msra.mxu0 0
        %5799 = vmatprep.subr.bf16.mxu0 0
        %5800 = vmatpush1.bf16.msra.mxu0 0
        %5801 = vmatprep.mubr.bf16.mxu0 0
        %5802 = vmatmul.mubr.bf16.gmra.mrb[0].mxu0 %v5717
        %v5803 = vpop.f32.mrb[0].mxu0
        %v5804 = vadd.f32 0.0, %v5803
        %v5805 = vpop.f32.mrb[0].mxu0
        %v5806 = vpop.f32.mrb[0].mxu0
        %v5807 = vpop.f32.mrb[0].mxu0
        %5808 = vdwg.mxu0
        %5812 = vrot.lane.b32.xlu0 %v5763, 32
        %v5813 = vpop.permute.xlu0 %5812
        %5814 = vrot.lane.b32.xlu0 %v5765, 32
        %v5815 = vpop.permute.xlu0 %5814
        %5816 = vrot.lane.b32.xlu0 %v5804, 32
        %v5817 = vpop.permute.xlu0 %5816
        %v5818 = vsel %vm766, %v5813, %v5815
        %v5819 = vsel %vm766, %v5815, %v5817
        %5823 = vst.msk [vmem:[#allocation11] sm:$0xff] %vm2374, %v5813
        %5824 = vst [vmem:[#allocation11 + $0x8] sm:$0xff] %v5818
        %5825 = vst.msk [vmem:[#allocation11 + $0x10] sm:$0xff] %vm5132, %v5819
        %v5826 = vld [vmem:[#allocation11] sm:$0xff]
        %v5827 = vld [vmem:[#allocation11 + $0x8] sm:$0xff]
        %v5828 = vld [vmem:[#allocation11 + $0x10] sm:$0xff]
        %v5829 = vpack.c.bf16 %v5826, %v5826
        %v5830 = vpack.c.bf16 %v5827, %v5827
        %v5831 = vpack.c.bf16 %v5828, %v5828
        %5835 = vrot.lane.b32.xlu0 %v5829, 115
        %v5836 = vpop.permute.xlu0 %5835
        %5837 = vrot.lane.b32.xlu0 %v5830, 115
        %v5838 = vpop.permute.xlu0 %5837
        %5839 = vrot.lane.b32.xlu0 %v5831, 115
        %v5840 = vpop.permute.xlu0 %5839
        %vm5841 = vcmask 941056
        %v5842 = vsel %vm5841, %v5836, %v5838
        %v5843 = vsel %vm5841, %v5838, %v5840
        %5847 = vst [vmem:[#allocation14] sm:$0xf] %v5842
        %5848 = vst [vmem:[#allocation14 + $0x8] sm:$0xf] %v5843
        %vm5849 = vcmask 551936
        %5850 = vst.msk [vmem:[#allocation14 + $0x10] sm:$0xf] %vm5849, %v5840
        %v5851 = vld [vmem:[#allocation11] sm:$0xff]
        %v5852 = vld [vmem:[#allocation11 + $0x8] sm:$0xff]
        %v5853 = vld [vmem:[#allocation11 + $0x10] sm:$0xff]
        %v5854 = vpack.c.bf16 %v5851, %v5851
        %v5855 = vpack.c.bf16 %v5852, %v5852
        %v5856 = vpack.c.bf16 %v5853, %v5853
        %v5860 = vrot.slane %v5854, 4
        %v5861 = vrot.slane %v5855, 4
        %v5862 = vrot.slane %v5856, 4
        %5863 = vrot.lane.b32.xlu0 %v5860, 114
        %v5864 = vpop.permute.xlu0 %5863
        %5865 = vrot.lane.b32.xlu0 %v5861, 114
        %v5866 = vpop.permute.xlu0 %5865
        %5867 = vrot.lane.b32.xlu0 %v5862, 114
        %v5868 = vpop.permute.xlu0 %5867
        %v5869 = vsel %vm4176, %v5864, %v5866
        %v5870 = vsel %vm4176, %v5866, %v5868
        %5874 = vst [vmem:[#allocation14] sm:$0xf0] %v5869
        %5875 = vst [vmem:[#allocation14 + $0x8] sm:$0xf0] %v5870
        %vm5876 = vcmask 556036
        %5877 = vst.msk [vmem:[#allocation14 + $0x10] sm:$0xf0] %vm5876, %v5868
        %v5878 = vld [vmem:[#allocation11] sm:$0xff]
        %v5879 = vld [vmem:[#allocation11 + $0x8] sm:$0xff]
        %v5880 = vld [vmem:[#allocation11 + $0x10] sm:$0xff]
        %v5881 = vpack.c.bf16 %v5878, %v5878
        %v5882 = vpack.c.bf16 %v5879, %v5879
        %v5883 = vpack.c.bf16 %v5880, %v5880
        %5887 = vrot.lane.b32.xlu0 %v5881, 113
        %v5888 = vpop.permute.xlu0 %5887
        %5889 = vrot.lane.b32.xlu0 %v5882, 113
        %v5890 = vpop.permute.xlu0 %5889
        %5891 = vrot.lane.b32.xlu0 %v5883, 113
        %v5892 = vpop.permute.xlu0 %5891
        %v5893 = vsel %vm4204, %v5888, %v5890
        %v5894 = vsel %vm4204, %v5890, %v5892
        %5898 = vst [vmem:[#allocation14 + $0x40] sm:$0xf] %v5893
        %5899 = vst [vmem:[#allocation14 + $0x48] sm:$0xf] %v5894
        %5900 = vst.msk [vmem:[#allocation14 + $0x50] sm:$0xf] %vm5849, %v5892
        %v5901 = vld [vmem:[#allocation11] sm:$0xff]
        %v5902 = vld [vmem:[#allocation11 + $0x8] sm:$0xff]
        %v5903 = vld [vmem:[#allocation11 + $0x10] sm:$0xff]
        %v5904 = vpack.c.bf16 %v5901, %v5901
        %v5905 = vpack.c.bf16 %v5902, %v5902
        %v5906 = vpack.c.bf16 %v5903, %v5903
        %v5910 = vrot.slane %v5904, 4
        %v5911 = vrot.slane %v5905, 4
        %v5912 = vrot.slane %v5906, 4
        %5913 = vrot.lane.b32.xlu0 %v5910, 97
        %v5914 = vpop.permute.xlu0 %5913
        %5915 = vrot.lane.b32.xlu0 %v5911, 97
        %v5916 = vpop.permute.xlu0 %5915
        %5917 = vrot.lane.b32.xlu0 %v5912, 97
        %v5918 = vpop.permute.xlu0 %5917
        %v5919 = vsel %vm1285, %v5914, %v5916
        %v5920 = vsel %vm1285, %v5916, %v5918
        %5924 = vst [vmem:[#allocation14 + $0x40] sm:$0xf0] %v5919
        %5925 = vst [vmem:[#allocation14 + $0x48] sm:$0xf0] %v5920
        %5926 = vst.msk [vmem:[#allocation14 + $0x50] sm:$0xf0] %vm5876, %v5918
        %v5927 = vld [vmem:[#allocation11] sm:$0xff]
        %v5928 = vld [vmem:[#allocation11 + $0x8] sm:$0xff]
        %v5929 = vld [vmem:[#allocation11 + $0x10] sm:$0xff]
        %v5930 = vpack.c.bf16 %v5927, %v5927
        %v5931 = vpack.c.bf16 %v5928, %v5928
        %v5932 = vpack.c.bf16 %v5929, %v5929
        %5936 = vrot.lane.b32.xlu0 %v5930, 96
        %v5937 = vpop.permute.xlu0 %5936
        %5938 = vrot.lane.b32.xlu0 %v5931, 96
        %v5939 = vpop.permute.xlu0 %5938
        %5940 = vrot.lane.b32.xlu0 %v5932, 96
        %v5941 = vpop.permute.xlu0 %5940
        %v5942 = vsel %vm1410, %v5937, %v5939
        %v5943 = vsel %vm1410, %v5939, %v5941
        %5947 = vst [vmem:[#allocation14 + $0x80] sm:$0xf] %v5942
        %5948 = vst [vmem:[#allocation14 + $0x88] sm:$0xf] %v5943
        %5949 = vst.msk [vmem:[#allocation14 + $0x90] sm:$0xf] %vm5849, %v5941
        %v5950 = vld [vmem:[#allocation11] sm:$0xff]
        %v5951 = vld [vmem:[#allocation11 + $0x8] sm:$0xff]
        %v5952 = vld [vmem:[#allocation11 + $0x10] sm:$0xff]
        %v5953 = vpack.c.bf16 %v5950, %v5950
        %v5954 = vpack.c.bf16 %v5951, %v5951
        %v5955 = vpack.c.bf16 %v5952, %v5952
        %v5959 = vrot.slane %v5953, 4
        %v5960 = vrot.slane %v5954, 4
        %v5961 = vrot.slane %v5955, 4
        %5962 = vrot.lane.b32.xlu0 %v5959, 95
        %v5963 = vpop.permute.xlu0 %5962
        %5964 = vrot.lane.b32.xlu0 %v5960, 95
        %v5965 = vpop.permute.xlu0 %5964
        %5966 = vrot.lane.b32.xlu0 %v5961, 95
        %v5967 = vpop.permute.xlu0 %5966
        %v5968 = vsel %vm1553, %v5963, %v5965
        %v5969 = vsel %vm1553, %v5965, %v5967
        %5973 = vst [vmem:[#allocation14 + $0x80] sm:$0xf0] %v5968
        %5974 = vst [vmem:[#allocation14 + $0x88] sm:$0xf0] %v5969
        %5975 = vst.msk [vmem:[#allocation14 + $0x90] sm:$0xf0] %vm5876, %v5967
        %v5976 = vld [vmem:[#allocation11] sm:$0xff]
        %v5977 = vld [vmem:[#allocation11 + $0x8] sm:$0xff]
        %v5978 = vld [vmem:[#allocation11 + $0x10] sm:$0xff]
        %v5979 = vpack.c.bf16 %v5976, %v5976
        %v5980 = vpack.c.bf16 %v5977, %v5977
        %v5981 = vpack.c.bf16 %v5978, %v5978
        %5985 = vrot.lane.b32.xlu0 %v5979, 79
        %v5986 = vpop.permute.xlu0 %5985
        %5987 = vrot.lane.b32.xlu0 %v5980, 79
        %v5988 = vpop.permute.xlu0 %5987
        %5989 = vrot.lane.b32.xlu0 %v5981, 79
        %v5990 = vpop.permute.xlu0 %5989
        %v5991 = vsel %vm4363, %v5986, %v5988
        %v5992 = vsel %vm4363, %v5988, %v5990
        %5996 = vst [vmem:[#allocation14 + $0xc0] sm:$0xf] %v5991
        %5997 = vst [vmem:[#allocation14 + $0xc8] sm:$0xf] %v5992
        %5998 = vst.msk [vmem:[#allocation14 + $0xd0] sm:$0xf] %vm5849, %v5990
        %v5999 = vld [vmem:[#allocation11] sm:$0xff]
        %v6000 = vld [vmem:[#allocation11 + $0x8] sm:$0xff]
        %v6001 = vld [vmem:[#allocation11 + $0x10] sm:$0xff]
        %v6002 = vpack.c.bf16 %v5999, %v5999
        %v6003 = vpack.c.bf16 %v6000, %v6000
        %v6004 = vpack.c.bf16 %v6001, %v6001
        %v6008 = vrot.slane %v6002, 4
        %v6009 = vrot.slane %v6003, 4
        %v6010 = vrot.slane %v6004, 4
        %6011 = vrot.lane.b32.xlu0 %v6008, 78
        %v6012 = vpop.permute.xlu0 %6011
        %6013 = vrot.lane.b32.xlu0 %v6009, 78
        %v6014 = vpop.permute.xlu0 %6013
        %6015 = vrot.lane.b32.xlu0 %v6010, 78
        %v6016 = vpop.permute.xlu0 %6015
        %v6017 = vsel %vm4390, %v6012, %v6014
        %v6018 = vsel %vm4390, %v6014, %v6016
        %6022 = vst [vmem:[#allocation14 + $0xc0] sm:$0xf0] %v6017
        %6023 = vst [vmem:[#allocation14 + $0xc8] sm:$0xf0] %v6018
        %6024 = vst.msk [vmem:[#allocation14 + $0xd0] sm:$0xf0] %vm5876, %v6016
        %v6025 = vld [vmem:[#allocation11] sm:$0xff]
        %v6026 = vld [vmem:[#allocation11 + $0x8] sm:$0xff]
        %v6027 = vld [vmem:[#allocation11 + $0x10] sm:$0xff]
        %v6028 = vpack.c.bf16 %v6025, %v6025
        %v6029 = vpack.c.bf16 %v6026, %v6026
        %v6030 = vpack.c.bf16 %v6027, %v6027
        %6034 = vrot.lane.b32.xlu0 %v6028, 77
        %v6035 = vpop.permute.xlu0 %6034
        %6036 = vrot.lane.b32.xlu0 %v6029, 77
        %v6037 = vpop.permute.xlu0 %6036
        %6038 = vrot.lane.b32.xlu0 %v6030, 77
        %v6039 = vpop.permute.xlu0 %6038
        %vm6040 = vcmask 629760
        %v6041 = vsel %vm6040, %v6035, %v6037
        %v6042 = vsel %vm6040, %v6037, %v6039
        %6046 = vst [vmem:[#allocation14 + $0x100] sm:$0xf] %v6041
        %6047 = vst [vmem:[#allocation14 + $0x108] sm:$0xf] %v6042
        %6048 = vst.msk [vmem:[#allocation14 + $0x110] sm:$0xf] %vm5849, %v6039
        %v6049 = vld [vmem:[%s6] sm:$0xf]
        %v6050 = vld [vmem:[%s6 + $0x4] sm:$0xf]
        %v6051 = vld [vmem:[#allocation14] sm:$0xff]
        %v6052 = vld [vmem:[#allocation14 + $0x8] sm:$0xff]
        %v6053 = vld [vmem:[#allocation14 + $0x10] sm:$0xff]
        %v6054 = vld [vmem:[#allocation14 + $0x40] sm:$0xff]
        %v6055 = vld [vmem:[#allocation14 + $0x48] sm:$0xff]
        %v6056 = vld [vmem:[#allocation14 + $0x50] sm:$0xff]
        %v6057 = vld [vmem:[#allocation14 + $0x80] sm:$0xff]
        %v6058 = vld [vmem:[#allocation14 + $0x88] sm:$0xff]
        %v6059 = vld [vmem:[#allocation14 + $0x90] sm:$0xff]
        %v6060 = vld [vmem:[#allocation14 + $0xc0] sm:$0xff]
        %v6061 = vld [vmem:[#allocation14 + $0xc8] sm:$0xff]
        %v6062 = vld [vmem:[#allocation14 + $0xd0] sm:$0xff]
        %v6063 = vld [vmem:[#allocation14 + $0x100] sm:$0xf]
        %v6064 = vld [vmem:[#allocation14 + $0x108] sm:$0xf]
        %v6065 = vld [vmem:[#allocation14 + $0x110] sm:$0xf]
        %v6066 = vld [vmem:[%s13] sm:$0xff]
        %v6067 = vld [vmem:[%s13 + $0x8] sm:$0xff]
        %6069 = vset.pattern.permute.xlu0 0
        %6070 = vperm.xlu0 %6069, %v6066
        %v6071 = vpop.permute.xlu0 %6070
        %6074 = vset.pattern.permute.xlu0 0
        %6075 = vperm.xlu0 %6074, %v6067
        %v6076 = vpop.permute.xlu0 %6075
        %v6080 = vunpack.c.l.b16 %v6049
        %v6081 = vunpack.c.l.b16 %v6050
        %v6082 = vpack.c.b16 %v6081, %v6080
        %v6084 = vsel %vm4984, %v6082, 0
        %v6087 = vsel %vm2022, %v6063, 0
        %v6090 = vsel %vm2022, %v6064, 0
        %v6093 = vsel %vm2022, %v6065, 0
        %6095 = vmatprep.subr.bf16.mxu0 %v6052
        %6096 = vmatpush1.bf16.msra.mxu0 %v6051
        %6097 = vmatprep.subr.bf16.mxu0 %v6055
        %6098 = vmatpush1.bf16.msra.mxu0 %v6054
        %6099 = vmatprep.subr.bf16.mxu0 %v6058
        %6100 = vmatpush1.bf16.msra.mxu0 %v6057
        %6101 = vmatprep.subr.bf16.mxu0 %v6061
        %6102 = vmatpush1.bf16.msra.mxu0 %v6060
        %6103 = vmatprep.subr.bf16.mxu0 %v6090
        %6104 = vmatpush1.bf16.msra.mxu0 %v6087
        %6105 = vmatprep.subr.bf16.mxu0 0
        %6106 = vmatpush1.bf16.msra.mxu0 0
        %6107 = vmatprep.subr.bf16.mxu0 0
        %6108 = vmatpush1.bf16.msra.mxu0 0
        %6109 = vmatprep.subr.bf16.mxu0 0
        %6110 = vmatpush1.bf16.msra.mxu0 0
        %6111 = vmatprep.subr.bf16.mxu0 0
        %6112 = vmatpush1.bf16.msra.mxu0 0
        %6113 = vmatprep.subr.bf16.mxu0 0
        %6114 = vmatpush1.bf16.msra.mxu0 0
        %6115 = vmatprep.subr.bf16.mxu0 0
        %6116 = vmatpush1.bf16.msra.mxu0 0
        %6117 = vmatprep.subr.bf16.mxu0 0
        %6118 = vmatpush1.bf16.msra.mxu0 0
        %6119 = vmatprep.subr.bf16.mxu0 0
        %6120 = vmatpush1.bf16.msra.mxu0 0
        %6121 = vmatprep.subr.bf16.mxu0 0
        %6122 = vmatpush1.bf16.msra.mxu0 0
        %6123 = vmatprep.subr.bf16.mxu0 0
        %6124 = vmatpush1.bf16.msra.mxu0 0
        %6125 = vmatprep.subr.bf16.mxu0 0
        %6126 = vmatpush1.bf16.msra.mxu0 0
        %6127 = vmatprep.mubr.bf16.mxu0 0
        %6128 = vmatmul.mubr.bf16.gmra.mrb[0].mxu0 %v6084
        %v6129 = vpop.f32.mrb[0].mxu0
        %v6130 = vadd.f32 %v6071, %v6129
        %v6131 = vpop.f32.mrb[0].mxu0
        %v6132 = vadd.f32 %v6071, %v6131
        %v6133 = vpop.f32.mrb[0].mxu0
        %v6134 = vadd.f32 %v6076, %v6133
        %v6135 = vpop.f32.mrb[0].mxu0
        %v6136 = vadd.f32 %v6076, %v6135
        %6137 = vdwg.mxu0
        %6138 = vmatprep.subr.bf16.mxu0 0
        %6139 = vmatpush1.bf16.msra.mxu0 %v6053
        %6140 = vmatprep.subr.bf16.mxu0 0
        %6141 = vmatpush1.bf16.msra.mxu0 %v6056
        %6142 = vmatprep.subr.bf16.mxu0 0
        %6143 = vmatpush1.bf16.msra.mxu0 %v6059
        %6144 = vmatprep.subr.bf16.mxu0 0
        %6145 = vmatpush1.bf16.msra.mxu0 %v6062
        %6146 = vmatprep.subr.bf16.mxu0 0
        %6147 = vmatpush1.bf16.msra.mxu0 %v6093
        %6148 = vmatprep.subr.bf16.mxu0 0
        %6149 = vmatpush1.bf16.msra.mxu0 0
        %6150 = vmatprep.subr.bf16.mxu0 0
        %6151 = vmatpush1.bf16.msra.mxu0 0
        %6152 = vmatprep.subr.bf16.mxu0 0
        %6153 = vmatpush1.bf16.msra.mxu0 0
        %6154 = vmatprep.subr.bf16.mxu0 0
        %6155 = vmatpush1.bf16.msra.mxu0 0
        %6156 = vmatprep.subr.bf16.mxu0 0
        %6157 = vmatpush1.bf16.msra.mxu0 0
        %6158 = vmatprep.subr.bf16.mxu0 0
        %6159 = vmatpush1.bf16.msra.mxu0 0
        %6160 = vmatprep.subr.bf16.mxu0 0
        %6161 = vmatpush1.bf16.msra.mxu0 0
        %6162 = vmatprep.subr.bf16.mxu0 0
        %6163 = vmatpush1.bf16.msra.mxu0 0
        %6164 = vmatprep.subr.bf16.mxu0 0
        %6165 = vmatpush1.bf16.msra.mxu0 0
        %6166 = vmatprep.subr.bf16.mxu0 0
        %6167 = vmatpush1.bf16.msra.mxu0 0
        %6168 = vmatprep.subr.bf16.mxu0 0
        %6169 = vmatpush1.bf16.msra.mxu0 0
        %6170 = vmatprep.mubr.bf16.mxu0 0
        %6171 = vmatmul.mubr.bf16.gmra.mrb[0].mxu0 %v6084
        %v6172 = vpop.f32.mrb[0].mxu0
        %v6173 = vadd.f32 %v6071, %v6172
        %v6174 = vpop.f32.mrb[0].mxu0
        %v6175 = vpop.f32.mrb[0].mxu0
        %v6176 = vadd.f32 %v6076, %v6175
        %v6177 = vpop.f32.mrb[0].mxu0
        %6178 = vdwg.mxu0
        %v6179 = vmax.f32 %v6130, 0.0
        %v6180 = vmax.f32 %v6132, 0.0
        %v6181 = vmax.f32 %v6173, 0.0
        %v6182 = vmax.f32 %v6134, 0.0
        %v6183 = vmax.f32 %v6136, 0.0
        %v6184 = vmax.f32 %v6176, 0.0
        %6191 = vrot.lane.b32.xlu0 %v6179, 32
        %v6192 = vpop.permute.xlu0 %6191
        %6193 = vrot.lane.b32.xlu0 %v6180, 32
        %v6194 = vpop.permute.xlu0 %6193
        %6195 = vrot.lane.b32.xlu0 %v6181, 32
        %v6196 = vpop.permute.xlu0 %6195
        %6197 = vrot.lane.b32.xlu0 %v6182, 32
        %v6198 = vpop.permute.xlu0 %6197
        %6199 = vrot.lane.b32.xlu0 %v6183, 32
        %v6200 = vpop.permute.xlu0 %6199
        %6201 = vrot.lane.b32.xlu0 %v6184, 32
        %v6202 = vpop.permute.xlu0 %6201
        %v6203 = vsel %vm766, %v6192, %v6194
        %v6204 = vsel %vm766, %v6194, %v6196
        %v6205 = vsel %vm766, %v6198, %v6200
        %v6206 = vsel %vm766, %v6200, %v6202
        %6213 = vst.msk [vmem:[#allocation12] sm:$0xff] %vm2374, %v6192
        %6214 = vst [vmem:[#allocation12 + $0x8] sm:$0xff] %v6203
        %6215 = vst.msk [vmem:[#allocation12 + $0x10] sm:$0xff] %vm5132, %v6204
        %6216 = vst.msk [vmem:[#allocation12 + $0x20] sm:$0xff] %vm2374, %v6198
        %6217 = vst [vmem:[#allocation12 + $0x28] sm:$0xff] %v6205
        %6218 = vst.msk [vmem:[#allocation12 + $0x30] sm:$0xff] %vm5132, %v6206
        %v6219 = vld [vmem:[#allocation12] sm:$0xff]
        %v6220 = vld [vmem:[#allocation12 + $0x8] sm:$0xff]
        %v6221 = vld [vmem:[#allocation12 + $0x10] sm:$0xff]
        %v6222 = vld [vmem:[#allocation12 + $0x20] sm:$0xff]
        %v6223 = vld [vmem:[#allocation12 + $0x28] sm:$0xff]
        %v6224 = vld [vmem:[#allocation12 + $0x30] sm:$0xff]
        %v6225 = vpack.c.bf16 %v6222, %v6219
        %v6226 = vpack.c.bf16 %v6223, %v6220
        %v6227 = vpack.c.bf16 %v6224, %v6221
        %v6228 = vld [vmem:[#allocation18] sm:$0xff]
        %v6229 = vld [vmem:[#allocation18 + $0x8] sm:$0xff]
        %v6230 = vld [vmem:[#allocation18 + $0x10] sm:$0xff]
        %v6231 = vld [vmem:[#allocation18 + $0x18] sm:$0xff]
        %v6232 = vld [vmem:[#allocation18 + $0x20] sm:$0xff]
        %v6233 = vld [vmem:[#allocation18 + $0x28] sm:$0xff]
        %v6234 = vld [vmem:[#allocation18 + $0x30] sm:$0xff]
        %v6235 = vld [vmem:[#allocation18 + $0x38] sm:$0xff]
        %v6236 = vld [vmem:[#allocation18 + $0x40] sm:$0xff]
        %v6237 = vld [vmem:[#allocation18 + $0x48] sm:$0xff]
        %v6238 = vld [vmem:[#allocation18 + $0x50] sm:$0xff]
        %v6239 = vld [vmem:[#allocation18 + $0x58] sm:$0xff]
        %v6240 = vld [vmem:[#allocation18 + $0x60] sm:$0xff]
        %v6241 = vld [vmem:[#allocation18 + $0x68] sm:$0xff]
        %v6242 = vld [vmem:[#allocation18 + $0x70] sm:$0xff]
        %v6243 = vld [vmem:[#allocation18 + $0x78] sm:$0xff]
        %v6244 = vld [vmem:[#allocation18 + $0x80] sm:$0xff]
        %v6245 = vld [vmem:[#allocation18 + $0x88] sm:$0xff]
        %v6246 = vld [vmem:[#allocation18 + $0x90] sm:$0xff]
        %v6247 = vld [vmem:[#allocation18 + $0x98] sm:$0xff]
        %v6248 = vld [vmem:[#allocation18 + $0xa0] sm:$0xff]
        %v6249 = vld [vmem:[#allocation18 + $0xa8] sm:$0xff]
        %v6250 = vld [vmem:[#allocation18 + $0xb0] sm:$0xff]
        %v6251 = vld [vmem:[#allocation18 + $0xb8] sm:$0xff]
        %v6252 = vld [vmem:[#allocation18 + $0xc0] sm:$0xff]
        %v6253 = vld [vmem:[#allocation18 + $0xc8] sm:$0xff]
        %v6254 = vld [vmem:[#allocation18 + $0xd0] sm:$0xff]
        %v6255 = vld [vmem:[#allocation18 + $0xd8] sm:$0xff]
        %v6256 = vld [vmem:[#allocation18 + $0xe0] sm:$0xff]
        %v6257 = vld [vmem:[#allocation18 + $0xe8] sm:$0xff]
        %v6258 = vld [vmem:[#allocation18 + $0xf0] sm:$0xff]
        %v6259 = vld [vmem:[#allocation18 + $0xf8] sm:$0xff]
        %v6260 = vld [vmem:[#allocation18 + $0x100] sm:$0xff]
        %v6261 = vld [vmem:[#allocation18 + $0x108] sm:$0xff]
        %v6262 = vld [vmem:[#allocation18 + $0x110] sm:$0xff]
        %v6263 = vld [vmem:[#allocation18 + $0x118] sm:$0xff]
        %v6264 = vld [vmem:[#allocation18 + $0x120] sm:$0xff]
        %v6265 = vld [vmem:[#allocation18 + $0x128] sm:$0xff]
        %v6266 = vld [vmem:[#allocation18 + $0x130] sm:$0xff]
        %v6267 = vld [vmem:[#allocation18 + $0x138] sm:$0xff]
        %v6268 = vld [vmem:[#allocation18 + $0x140] sm:$0xff]
        %v6269 = vld [vmem:[#allocation18 + $0x148] sm:$0xff]
        %v6270 = vld [vmem:[#allocation18 + $0x150] sm:$0xff]
        %v6271 = vld [vmem:[#allocation18 + $0x158] sm:$0xff]
        %v6272 = vld [vmem:[#allocation18 + $0x160] sm:$0xff]
        %v6273 = vld [vmem:[#allocation18 + $0x168] sm:$0xff]
        %v6274 = vld [vmem:[#allocation18 + $0x170] sm:$0xff]
        %v6275 = vld [vmem:[#allocation18 + $0x178] sm:$0xff]
        %v6276 = vld [vmem:[#allocation18 + $0x180] sm:$0xff]
        %v6277 = vld [vmem:[#allocation18 + $0x188] sm:$0xff]
        %v6278 = vld [vmem:[#allocation18 + $0x190] sm:$0xff]
        %v6279 = vld [vmem:[#allocation18 + $0x198] sm:$0xff]
        %v6280 = vld [vmem:[#allocation18 + $0x1a0] sm:$0xff]
        %v6281 = vld [vmem:[#allocation18 + $0x1a8] sm:$0xff]
        %v6282 = vld [vmem:[#allocation18 + $0x1b0] sm:$0xff]
        %v6283 = vld [vmem:[#allocation18 + $0x1b8] sm:$0xff]
        %v6284 = vld [vmem:[#allocation18 + $0x1c0] sm:$0xff]
        %v6285 = vld [vmem:[#allocation18 + $0x1c8] sm:$0xff]
        %v6286 = vld [vmem:[#allocation18 + $0x1d0] sm:$0xff]
        %v6287 = vld [vmem:[#allocation18 + $0x1d8] sm:$0xff]
        %v6288 = vld [vmem:[#allocation18 + $0x1e0] sm:$0xff]
        %v6289 = vld [vmem:[#allocation18 + $0x1e8] sm:$0xff]
        %v6290 = vld [vmem:[#allocation18 + $0x1f0] sm:$0xff]
        %v6291 = vld [vmem:[#allocation18 + $0x1f8] sm:$0xff]
        %v6292 = vld [vmem:[#allocation18 + $0x200] sm:$0xff]
        %v6293 = vld [vmem:[#allocation18 + $0x208] sm:$0xff]
        %v6294 = vld [vmem:[#allocation18 + $0x210] sm:$0xff]
        %v6295 = vld [vmem:[#allocation18 + $0x218] sm:$0xff]
        %v6296 = vld [vmem:[#allocation18 + $0x220] sm:$0xff]
        %v6297 = vld [vmem:[#allocation18 + $0x228] sm:$0xff]
        %v6298 = vld [vmem:[#allocation18 + $0x230] sm:$0xff]
        %v6299 = vld [vmem:[#allocation18 + $0x238] sm:$0xff]
        %v6300 = vld [vmem:[#allocation18 + $0x240] sm:$0xff]
        %v6301 = vld [vmem:[#allocation18 + $0x248] sm:$0xff]
        %v6302 = vld [vmem:[#allocation18 + $0x250] sm:$0xff]
        %v6303 = vld [vmem:[#allocation18 + $0x258] sm:$0xff]
        %v6304 = vld [vmem:[#allocation18 + $0x260] sm:$0xff]
        %v6305 = vld [vmem:[#allocation18 + $0x268] sm:$0xff]
        %v6306 = vld [vmem:[#allocation18 + $0x270] sm:$0xff]
        %v6307 = vld [vmem:[#allocation18 + $0x278] sm:$0xff]
        %v6308 = vld [vmem:[#allocation18 + $0x280] sm:$0xff]
        %v6309 = vld [vmem:[#allocation18 + $0x288] sm:$0xff]
        %v6310 = vld [vmem:[#allocation18 + $0x290] sm:$0xff]
        %v6311 = vld [vmem:[#allocation18 + $0x298] sm:$0xff]
        %v6312 = vld [vmem:[#allocation18 + $0x2a0] sm:$0xff]
        %v6313 = vld [vmem:[#allocation18 + $0x2a8] sm:$0xff]
        %v6314 = vld [vmem:[#allocation18 + $0x2b0] sm:$0xff]
        %v6315 = vld [vmem:[#allocation18 + $0x2b8] sm:$0xff]
        %v6316 = vld [vmem:[#allocation18 + $0x2c0] sm:$0xff]
        %v6317 = vld [vmem:[#allocation18 + $0x2c8] sm:$0xff]
        %v6318 = vld [vmem:[#allocation18 + $0x2d0] sm:$0xff]
        %v6319 = vld [vmem:[#allocation18 + $0x2d8] sm:$0xff]
        %v6320 = vld [vmem:[#allocation18 + $0x2e0] sm:$0xff]
        %v6321 = vld [vmem:[#allocation18 + $0x2e8] sm:$0xff]
        %v6322 = vld [vmem:[#allocation18 + $0x2f0] sm:$0xff]
        %v6323 = vld [vmem:[#allocation18 + $0x2f8] sm:$0xff]
        %v6324 = vld [vmem:[#allocation18 + $0x300] sm:$0xff]
        %v6325 = vld [vmem:[#allocation18 + $0x308] sm:$0xff]
        %v6326 = vld [vmem:[#allocation18 + $0x310] sm:$0xff]
        %v6327 = vld [vmem:[#allocation18 + $0x318] sm:$0xff]
        %v6328 = vld [vmem:[#allocation18 + $0x320] sm:$0xff]
        %v6329 = vld [vmem:[#allocation18 + $0x328] sm:$0xff]
        %v6330 = vld [vmem:[#allocation18 + $0x330] sm:$0xff]
        %v6331 = vld [vmem:[#allocation18 + $0x338] sm:$0xff]
        %v6332 = vld [vmem:[#allocation18 + $0x340] sm:$0xff]
        %v6333 = vld [vmem:[#allocation18 + $0x348] sm:$0xff]
        %v6334 = vld [vmem:[#allocation18 + $0x350] sm:$0xff]
        %v6335 = vld [vmem:[#allocation18 + $0x358] sm:$0xff]
        %v6336 = vld [vmem:[#allocation18 + $0x360] sm:$0xff]
        %v6337 = vld [vmem:[#allocation18 + $0x368] sm:$0xff]
        %v6338 = vld [vmem:[#allocation18 + $0x370] sm:$0xff]
        %v6339 = vld [vmem:[#allocation18 + $0x378] sm:$0xff]
        %v6340 = vld [vmem:[#allocation18 + $0x380] sm:$0xff]
        %v6341 = vld [vmem:[#allocation18 + $0x388] sm:$0xff]
        %v6342 = vld [vmem:[#allocation18 + $0x390] sm:$0xff]
        %v6343 = vld [vmem:[#allocation18 + $0x398] sm:$0xff]
        %v6344 = vld [vmem:[#allocation18 + $0x3a0] sm:$0xff]
        %v6345 = vld [vmem:[#allocation18 + $0x3a8] sm:$0xff]
        %v6346 = vld [vmem:[#allocation18 + $0x3b0] sm:$0xff]
        %v6347 = vld [vmem:[#allocation18 + $0x3b8] sm:$0xff]
        %v6348 = vld [vmem:[#allocation18 + $0x3c0] sm:$0xff]
        %v6349 = vld [vmem:[#allocation18 + $0x3c8] sm:$0xff]
        %v6350 = vld [vmem:[#allocation18 + $0x3d0] sm:$0xff]
        %v6351 = vld [vmem:[#allocation18 + $0x3d8] sm:$0xff]
        %v6352 = vld [vmem:[#allocation18 + $0x3e0] sm:$0xff]
        %v6353 = vld [vmem:[#allocation18 + $0x3e8] sm:$0xff]
        %v6354 = vld [vmem:[#allocation18 + $0x3f0] sm:$0xff]
        %v6355 = vld [vmem:[#allocation18 + $0x3f8] sm:$0xff]
        %v6356 = vld [vmem:[#allocation18 + $0x400] sm:$0xff]
        %v6357 = vld [vmem:[#allocation18 + $0x408] sm:$0xff]
        %v6358 = vld [vmem:[#allocation18 + $0x410] sm:$0xff]
        %v6359 = vld [vmem:[#allocation18 + $0x418] sm:$0xff]
        %v6360 = vld [vmem:[#allocation18 + $0x420] sm:$0xff]
        %v6361 = vld [vmem:[#allocation18 + $0x428] sm:$0xff]
        %v6362 = vld [vmem:[#allocation18 + $0x430] sm:$0xff]
        %v6363 = vld [vmem:[#allocation18 + $0x438] sm:$0xff]
        %v6364 = vld [vmem:[#allocation18 + $0x440] sm:$0xff]
        %v6365 = vld [vmem:[#allocation18 + $0x448] sm:$0xff]
        %v6366 = vld [vmem:[#allocation18 + $0x450] sm:$0xff]
        %v6367 = vld [vmem:[#allocation18 + $0x458] sm:$0xff]
        %v6368 = vld [vmem:[#allocation18 + $0x460] sm:$0xff]
        %v6369 = vld [vmem:[#allocation18 + $0x468] sm:$0xff]
        %v6370 = vld [vmem:[#allocation18 + $0x470] sm:$0xff]
        %v6371 = vld [vmem:[#allocation18 + $0x478] sm:$0xff]
        %v6372 = vld [vmem:[#allocation18 + $0x480] sm:$0xff]
        %v6373 = vld [vmem:[#allocation18 + $0x488] sm:$0xff]
        %v6374 = vld [vmem:[#allocation18 + $0x490] sm:$0xff]
        %v6375 = vld [vmem:[#allocation18 + $0x498] sm:$0xff]
        %v6376 = vld [vmem:[#allocation18 + $0x4a0] sm:$0xff]
        %v6377 = vld [vmem:[#allocation18 + $0x4a8] sm:$0xff]
        %v6378 = vld [vmem:[#allocation18 + $0x4b0] sm:$0xff]
        %v6379 = vld [vmem:[#allocation18 + $0x4b8] sm:$0xff]
        %v6380 = vld [vmem:[#allocation18 + $0x4c0] sm:$0xff]
        %v6381 = vld [vmem:[#allocation18 + $0x4c8] sm:$0xff]
        %v6382 = vld [vmem:[#allocation18 + $0x4d0] sm:$0xff]
        %v6383 = vld [vmem:[#allocation18 + $0x4d8] sm:$0xff]
        %v6384 = vld [vmem:[#allocation18 + $0x4e0] sm:$0xff]
        %v6385 = vld [vmem:[#allocation18 + $0x4e8] sm:$0xff]
        %v6386 = vld [vmem:[#allocation18 + $0x4f0] sm:$0xff]
        %v6387 = vld [vmem:[#allocation18 + $0x4f8] sm:$0xff]
        %v6388 = vld [vmem:[#allocation18 + $0x500] sm:$0x33]
        %v6389 = vld [vmem:[#allocation18 + $0x508] sm:$0x33]
        %v6390 = vld [vmem:[#allocation18 + $0x510] sm:$0x33]
        %v6391 = vld [vmem:[#allocation18 + $0x518] sm:$0x33]
        %6395 = vrot.lane.b32.xlu0 %v6225, 96
        %v6396 = vpop.permute.xlu0 %6395
        %6397 = vrot.lane.b32.xlu0 %v6226, 96
        %v6398 = vpop.permute.xlu0 %6397
        %6399 = vrot.lane.b32.xlu0 %v6227, 96
        %v6400 = vpop.permute.xlu0 %6399
        %v6401 = vsel %vm1410, %v6396, %v6398
        %v6402 = vsel %vm1410, %v6398, %v6400
        %v6569 = vunpack.c.l.b16 %v6228
        %v6570 = vunpack.c.h.b16 %v6228
        %v6571 = vunpack.c.l.b16 %v6229
        %v6572 = vunpack.c.h.b16 %v6229
        %v6573 = vunpack.c.l.b16 %v6230
        %v6574 = vunpack.c.h.b16 %v6230
        %v6575 = vunpack.c.l.b16 %v6231
        %v6576 = vunpack.c.h.b16 %v6231
        %v6577 = vunpack.c.l.b16 %v6232
        %v6578 = vunpack.c.h.b16 %v6232
        %v6579 = vunpack.c.l.b16 %v6233
        %v6580 = vunpack.c.h.b16 %v6233
        %v6581 = vunpack.c.l.b16 %v6234
        %v6582 = vunpack.c.h.b16 %v6234
        %v6583 = vunpack.c.l.b16 %v6235
        %v6584 = vunpack.c.h.b16 %v6235
        %v6585 = vunpack.c.l.b16 %v6236
        %v6586 = vunpack.c.h.b16 %v6236
        %v6587 = vunpack.c.l.b16 %v6237
        %v6588 = vunpack.c.h.b16 %v6237
        %v6589 = vunpack.c.l.b16 %v6238
        %v6590 = vunpack.c.h.b16 %v6238
        %v6591 = vunpack.c.l.b16 %v6239
        %v6592 = vunpack.c.h.b16 %v6239
        %v6593 = vunpack.c.l.b16 %v6240
        %v6594 = vunpack.c.h.b16 %v6240
        %v6595 = vunpack.c.l.b16 %v6241
        %v6596 = vunpack.c.h.b16 %v6241
        %v6597 = vunpack.c.l.b16 %v6242
        %v6598 = vunpack.c.h.b16 %v6242
        %v6599 = vunpack.c.l.b16 %v6243
        %v6600 = vunpack.c.h.b16 %v6243
        %v6601 = vunpack.c.l.b16 %v6244
        %v6602 = vunpack.c.h.b16 %v6244
        %v6603 = vunpack.c.l.b16 %v6245
        %v6604 = vunpack.c.h.b16 %v6245
        %v6605 = vunpack.c.l.b16 %v6246
        %v6606 = vunpack.c.h.b16 %v6246
        %v6607 = vunpack.c.l.b16 %v6247
        %v6608 = vunpack.c.h.b16 %v6247
        %v6609 = vunpack.c.l.b16 %v6248
        %v6610 = vunpack.c.h.b16 %v6248
        %v6611 = vunpack.c.l.b16 %v6249
        %v6612 = vunpack.c.h.b16 %v6249
        %v6613 = vunpack.c.l.b16 %v6250
        %v6614 = vunpack.c.h.b16 %v6250
        %v6615 = vunpack.c.l.b16 %v6251
        %v6616 = vunpack.c.h.b16 %v6251
        %v6617 = vunpack.c.l.b16 %v6252
        %v6618 = vunpack.c.h.b16 %v6252
        %v6619 = vunpack.c.l.b16 %v6253
        %v6620 = vunpack.c.h.b16 %v6253
        %v6621 = vunpack.c.l.b16 %v6254
        %v6622 = vunpack.c.h.b16 %v6254
        %v6623 = vunpack.c.l.b16 %v6255
        %v6624 = vunpack.c.h.b16 %v6255
        %v6625 = vunpack.c.l.b16 %v6256
        %v6626 = vunpack.c.h.b16 %v6256
        %v6627 = vunpack.c.l.b16 %v6257
        %v6628 = vunpack.c.h.b16 %v6257
        %v6629 = vunpack.c.l.b16 %v6258
        %v6630 = vunpack.c.h.b16 %v6258
        %v6631 = vunpack.c.l.b16 %v6259
        %v6632 = vunpack.c.h.b16 %v6259
        %v6633 = vunpack.c.l.b16 %v6260
        %v6634 = vunpack.c.h.b16 %v6260
        %v6635 = vunpack.c.l.b16 %v6261
        %v6636 = vunpack.c.h.b16 %v6261
        %v6637 = vunpack.c.l.b16 %v6262
        %v6638 = vunpack.c.h.b16 %v6262
        %v6639 = vunpack.c.l.b16 %v6263
        %v6640 = vunpack.c.h.b16 %v6263
        %v6641 = vunpack.c.l.b16 %v6264
        %v6642 = vunpack.c.h.b16 %v6264
        %v6643 = vunpack.c.l.b16 %v6265
        %v6644 = vunpack.c.h.b16 %v6265
        %v6645 = vunpack.c.l.b16 %v6266
        %v6646 = vunpack.c.h.b16 %v6266
        %v6647 = vunpack.c.l.b16 %v6267
        %v6648 = vunpack.c.h.b16 %v6267
        %v6649 = vunpack.c.l.b16 %v6268
        %v6650 = vunpack.c.h.b16 %v6268
        %v6651 = vunpack.c.l.b16 %v6269
        %v6652 = vunpack.c.h.b16 %v6269
        %v6653 = vunpack.c.l.b16 %v6270
        %v6654 = vunpack.c.h.b16 %v6270
        %v6655 = vunpack.c.l.b16 %v6271
        %v6656 = vunpack.c.h.b16 %v6271
        %v6657 = vunpack.c.l.b16 %v6272
        %v6658 = vunpack.c.h.b16 %v6272
        %v6659 = vunpack.c.l.b16 %v6273
        %v6660 = vunpack.c.h.b16 %v6273
        %v6661 = vunpack.c.l.b16 %v6274
        %v6662 = vunpack.c.h.b16 %v6274
        %v6663 = vunpack.c.l.b16 %v6275
        %v6664 = vunpack.c.h.b16 %v6275
        %v6665 = vunpack.c.l.b16 %v6276
        %v6666 = vunpack.c.h.b16 %v6276
        %v6667 = vunpack.c.l.b16 %v6277
        %v6668 = vunpack.c.h.b16 %v6277
        %v6669 = vunpack.c.l.b16 %v6278
        %v6670 = vunpack.c.h.b16 %v6278
        %v6671 = vunpack.c.l.b16 %v6279
        %v6672 = vunpack.c.h.b16 %v6279
        %v6673 = vunpack.c.l.b16 %v6280
        %v6674 = vunpack.c.h.b16 %v6280
        %v6675 = vunpack.c.l.b16 %v6281
        %v6676 = vunpack.c.h.b16 %v6281
        %v6677 = vunpack.c.l.b16 %v6282
        %v6678 = vunpack.c.h.b16 %v6282
        %v6679 = vunpack.c.l.b16 %v6283
        %v6680 = vunpack.c.h.b16 %v6283
        %v6681 = vunpack.c.l.b16 %v6284
        %v6682 = vunpack.c.h.b16 %v6284
        %v6683 = vunpack.c.l.b16 %v6285
        %v6684 = vunpack.c.h.b16 %v6285
        %v6685 = vunpack.c.l.b16 %v6286
        %v6686 = vunpack.c.h.b16 %v6286
        %v6687 = vunpack.c.l.b16 %v6287
        %v6688 = vunpack.c.h.b16 %v6287
        %v6689 = vunpack.c.l.b16 %v6288
        %v6690 = vunpack.c.h.b16 %v6288
        %v6691 = vunpack.c.l.b16 %v6289
        %v6692 = vunpack.c.h.b16 %v6289
        %v6693 = vunpack.c.l.b16 %v6290
        %v6694 = vunpack.c.h.b16 %v6290
        %v6695 = vunpack.c.l.b16 %v6291
        %v6696 = vunpack.c.h.b16 %v6291
        %v6697 = vunpack.c.l.b16 %v6292
        %v6698 = vunpack.c.h.b16 %v6292
        %v6699 = vunpack.c.l.b16 %v6293
        %v6700 = vunpack.c.h.b16 %v6293
        %v6701 = vunpack.c.l.b16 %v6294
        %v6702 = vunpack.c.h.b16 %v6294
        %v6703 = vunpack.c.l.b16 %v6295
        %v6704 = vunpack.c.h.b16 %v6295
        %v6705 = vunpack.c.l.b16 %v6296
        %v6706 = vunpack.c.h.b16 %v6296
        %v6707 = vunpack.c.l.b16 %v6297
        %v6708 = vunpack.c.h.b16 %v6297
        %v6709 = vunpack.c.l.b16 %v6298
        %v6710 = vunpack.c.h.b16 %v6298
        %v6711 = vunpack.c.l.b16 %v6299
        %v6712 = vunpack.c.h.b16 %v6299
        %v6713 = vunpack.c.l.b16 %v6300
        %v6714 = vunpack.c.h.b16 %v6300
        %v6715 = vunpack.c.l.b16 %v6301
        %v6716 = vunpack.c.h.b16 %v6301
        %v6717 = vunpack.c.l.b16 %v6302
        %v6718 = vunpack.c.h.b16 %v6302
        %v6719 = vunpack.c.l.b16 %v6303
        %v6720 = vunpack.c.h.b16 %v6303
        %v6721 = vunpack.c.l.b16 %v6304
        %v6722 = vunpack.c.h.b16 %v6304
        %v6723 = vunpack.c.l.b16 %v6305
        %v6724 = vunpack.c.h.b16 %v6305
        %v6725 = vunpack.c.l.b16 %v6306
        %v6726 = vunpack.c.h.b16 %v6306
        %v6727 = vunpack.c.l.b16 %v6307
        %v6728 = vunpack.c.h.b16 %v6307
        %v6729 = vunpack.c.l.b16 %v6308
        %v6730 = vunpack.c.h.b16 %v6308
        %v6731 = vunpack.c.l.b16 %v6309
        %v6732 = vunpack.c.h.b16 %v6309
        %v6733 = vunpack.c.l.b16 %v6310
        %v6734 = vunpack.c.h.b16 %v6310
        %v6735 = vunpack.c.l.b16 %v6311
        %v6736 = vunpack.c.h.b16 %v6311
        %v6737 = vunpack.c.l.b16 %v6312
        %v6738 = vunpack.c.h.b16 %v6312
        %v6739 = vunpack.c.l.b16 %v6313
        %v6740 = vunpack.c.h.b16 %v6313
        %v6741 = vunpack.c.l.b16 %v6314
        %v6742 = vunpack.c.h.b16 %v6314
        %v6743 = vunpack.c.l.b16 %v6315
        %v6744 = vunpack.c.h.b16 %v6315
        %v6745 = vunpack.c.l.b16 %v6316
        %v6746 = vunpack.c.h.b16 %v6316
        %v6747 = vunpack.c.l.b16 %v6317
        %v6748 = vunpack.c.h.b16 %v6317
        %v6749 = vunpack.c.l.b16 %v6318
        %v6750 = vunpack.c.h.b16 %v6318
        %v6751 = vunpack.c.l.b16 %v6319
        %v6752 = vunpack.c.h.b16 %v6319
        %v6753 = vunpack.c.l.b16 %v6320
        %v6754 = vunpack.c.h.b16 %v6320
        %v6755 = vunpack.c.l.b16 %v6321
        %v6756 = vunpack.c.h.b16 %v6321
        %v6757 = vunpack.c.l.b16 %v6322
        %v6758 = vunpack.c.h.b16 %v6322
        %v6759 = vunpack.c.l.b16 %v6323
        %v6760 = vunpack.c.h.b16 %v6323
        %v6761 = vunpack.c.l.b16 %v6324
        %v6762 = vunpack.c.h.b16 %v6324
        %v6763 = vunpack.c.l.b16 %v6325
        %v6764 = vunpack.c.h.b16 %v6325
        %v6765 = vunpack.c.l.b16 %v6326
        %v6766 = vunpack.c.h.b16 %v6326
        %v6767 = vunpack.c.l.b16 %v6327
        %v6768 = vunpack.c.h.b16 %v6327
        %v6769 = vunpack.c.l.b16 %v6328
        %v6770 = vunpack.c.h.b16 %v6328
        %v6771 = vunpack.c.l.b16 %v6329
        %v6772 = vunpack.c.h.b16 %v6329
        %v6773 = vunpack.c.l.b16 %v6330
        %v6774 = vunpack.c.h.b16 %v6330
        %v6775 = vunpack.c.l.b16 %v6331
        %v6776 = vunpack.c.h.b16 %v6331
        %v6777 = vunpack.c.l.b16 %v6332
        %v6778 = vunpack.c.h.b16 %v6332
        %v6779 = vunpack.c.l.b16 %v6333
        %v6780 = vunpack.c.h.b16 %v6333
        %v6781 = vunpack.c.l.b16 %v6334
        %v6782 = vunpack.c.h.b16 %v6334
        %v6783 = vunpack.c.l.b16 %v6335
        %v6784 = vunpack.c.h.b16 %v6335
        %v6785 = vunpack.c.l.b16 %v6336
        %v6786 = vunpack.c.h.b16 %v6336
        %v6787 = vunpack.c.l.b16 %v6337
        %v6788 = vunpack.c.h.b16 %v6337
        %v6789 = vunpack.c.l.b16 %v6338
        %v6790 = vunpack.c.h.b16 %v6338
        %v6791 = vunpack.c.l.b16 %v6339
        %v6792 = vunpack.c.h.b16 %v6339
        %v6793 = vunpack.c.l.b16 %v6340
        %v6794 = vunpack.c.h.b16 %v6340
        %v6795 = vunpack.c.l.b16 %v6341
        %v6796 = vunpack.c.h.b16 %v6341
        %v6797 = vunpack.c.l.b16 %v6342
        %v6798 = vunpack.c.h.b16 %v6342
        %v6799 = vunpack.c.l.b16 %v6343
        %v6800 = vunpack.c.h.b16 %v6343
        %v6801 = vunpack.c.l.b16 %v6344
        %v6802 = vunpack.c.h.b16 %v6344
        %v6803 = vunpack.c.l.b16 %v6345
        %v6804 = vunpack.c.h.b16 %v6345
        %v6805 = vunpack.c.l.b16 %v6346
        %v6806 = vunpack.c.h.b16 %v6346
        %v6807 = vunpack.c.l.b16 %v6347
        %v6808 = vunpack.c.h.b16 %v6347
        %v6809 = vunpack.c.l.b16 %v6348
        %v6810 = vunpack.c.h.b16 %v6348
        %v6811 = vunpack.c.l.b16 %v6349
        %v6812 = vunpack.c.h.b16 %v6349
        %v6813 = vunpack.c.l.b16 %v6350
        %v6814 = vunpack.c.h.b16 %v6350
        %v6815 = vunpack.c.l.b16 %v6351
        %v6816 = vunpack.c.h.b16 %v6351
        %v6817 = vunpack.c.l.b16 %v6352
        %v6818 = vunpack.c.h.b16 %v6352
        %v6819 = vunpack.c.l.b16 %v6353
        %v6820 = vunpack.c.h.b16 %v6353
        %v6821 = vunpack.c.l.b16 %v6354
        %v6822 = vunpack.c.h.b16 %v6354
        %v6823 = vunpack.c.l.b16 %v6355
        %v6824 = vunpack.c.h.b16 %v6355
        %v6825 = vunpack.c.l.b16 %v6356
        %v6826 = vunpack.c.h.b16 %v6356
        %v6827 = vunpack.c.l.b16 %v6357
        %v6828 = vunpack.c.h.b16 %v6357
        %v6829 = vunpack.c.l.b16 %v6358
        %v6830 = vunpack.c.h.b16 %v6358
        %v6831 = vunpack.c.l.b16 %v6359
        %v6832 = vunpack.c.h.b16 %v6359
        %v6833 = vunpack.c.l.b16 %v6360
        %v6834 = vunpack.c.h.b16 %v6360
        %v6835 = vunpack.c.l.b16 %v6361
        %v6836 = vunpack.c.h.b16 %v6361
        %v6837 = vunpack.c.l.b16 %v6362
        %v6838 = vunpack.c.h.b16 %v6362
        %v6839 = vunpack.c.l.b16 %v6363
        %v6840 = vunpack.c.h.b16 %v6363
        %v6841 = vunpack.c.l.b16 %v6364
        %v6842 = vunpack.c.h.b16 %v6364
        %v6843 = vunpack.c.l.b16 %v6365
        %v6844 = vunpack.c.h.b16 %v6365
        %v6845 = vunpack.c.l.b16 %v6366
        %v6846 = vunpack.c.h.b16 %v6366
        %v6847 = vunpack.c.l.b16 %v6367
        %v6848 = vunpack.c.h.b16 %v6367
        %v6849 = vunpack.c.l.b16 %v6368
        %v6850 = vunpack.c.h.b16 %v6368
        %v6851 = vunpack.c.l.b16 %v6369
        %v6852 = vunpack.c.h.b16 %v6369
        %v6853 = vunpack.c.l.b16 %v6370
        %v6854 = vunpack.c.h.b16 %v6370
        %v6855 = vunpack.c.l.b16 %v6371
        %v6856 = vunpack.c.h.b16 %v6371
        %v6857 = vunpack.c.l.b16 %v6372
        %v6858 = vunpack.c.h.b16 %v6372
        %v6859 = vunpack.c.l.b16 %v6373
        %v6860 = vunpack.c.h.b16 %v6373
        %v6861 = vunpack.c.l.b16 %v6374
        %v6862 = vunpack.c.h.b16 %v6374
        %v6863 = vunpack.c.l.b16 %v6375
        %v6864 = vunpack.c.h.b16 %v6375
        %v6865 = vunpack.c.l.b16 %v6376
        %v6866 = vunpack.c.h.b16 %v6376
        %v6867 = vunpack.c.l.b16 %v6377
        %v6868 = vunpack.c.h.b16 %v6377
        %v6869 = vunpack.c.l.b16 %v6378
        %v6870 = vunpack.c.h.b16 %v6378
        %v6871 = vunpack.c.l.b16 %v6379
        %v6872 = vunpack.c.h.b16 %v6379
        %v6873 = vunpack.c.l.b16 %v6380
        %v6874 = vunpack.c.h.b16 %v6380
        %v6875 = vunpack.c.l.b16 %v6381
        %v6876 = vunpack.c.h.b16 %v6381
        %v6877 = vunpack.c.l.b16 %v6382
        %v6878 = vunpack.c.h.b16 %v6382
        %v6879 = vunpack.c.l.b16 %v6383
        %v6880 = vunpack.c.h.b16 %v6383
        %v6881 = vunpack.c.l.b16 %v6384
        %v6882 = vunpack.c.h.b16 %v6384
        %v6883 = vunpack.c.l.b16 %v6385
        %v6884 = vunpack.c.h.b16 %v6385
        %v6885 = vunpack.c.l.b16 %v6386
        %v6886 = vunpack.c.h.b16 %v6386
        %v6887 = vunpack.c.l.b16 %v6387
        %v6888 = vunpack.c.h.b16 %v6387
        %v6889 = vunpack.c.l.b16 %v6388
        %v6890 = vunpack.c.h.b16 %v6388
        %v6891 = vunpack.c.l.b16 %v6389
        %v6892 = vunpack.c.h.b16 %v6389
        %v6893 = vunpack.c.l.b16 %v6390
        %v6894 = vunpack.c.h.b16 %v6390
        %v6895 = vunpack.c.l.b16 %v6391
        %v6896 = vunpack.c.h.b16 %v6391
        %v6897 = vpack.c.b16 %v6577, %v6569
        %v6898 = vpack.c.b16 %v6578, %v6570
        %v6899 = vpack.c.b16 %v6579, %v6571
        %v6900 = vpack.c.b16 %v6580, %v6572
        %v6901 = vpack.c.b16 %v6581, %v6573
        %v6902 = vpack.c.b16 %v6582, %v6574
        %v6903 = vpack.c.b16 %v6583, %v6575
        %v6904 = vpack.c.b16 %v6584, %v6576
        %v6905 = vpack.c.b16 %v6593, %v6585
        %v6906 = vpack.c.b16 %v6594, %v6586
        %v6907 = vpack.c.b16 %v6595, %v6587
        %v6908 = vpack.c.b16 %v6596, %v6588
        %v6909 = vpack.c.b16 %v6597, %v6589
        %v6910 = vpack.c.b16 %v6598, %v6590
        %v6911 = vpack.c.b16 %v6599, %v6591
        %v6912 = vpack.c.b16 %v6600, %v6592
        %v6913 = vpack.c.b16 %v6609, %v6601
        %v6914 = vpack.c.b16 %v6610, %v6602
        %v6915 = vpack.c.b16 %v6611, %v6603
        %v6916 = vpack.c.b16 %v6612, %v6604
        %v6917 = vpack.c.b16 %v6613, %v6605
        %v6918 = vpack.c.b16 %v6614, %v6606
        %v6919 = vpack.c.b16 %v6615, %v6607
        %v6920 = vpack.c.b16 %v6616, %v6608
        %v6921 = vpack.c.b16 %v6625, %v6617
        %v6922 = vpack.c.b16 %v6626, %v6618
        %v6923 = vpack.c.b16 %v6627, %v6619
        %v6924 = vpack.c.b16 %v6628, %v6620
        %v6925 = vpack.c.b16 %v6629, %v6621
        %v6926 = vpack.c.b16 %v6630, %v6622
        %v6927 = vpack.c.b16 %v6631, %v6623
        %v6928 = vpack.c.b16 %v6632, %v6624
        %v6929 = vpack.c.b16 %v6641, %v6633
        %v6930 = vpack.c.b16 %v6642, %v6634
        %v6931 = vpack.c.b16 %v6643, %v6635
        %v6932 = vpack.c.b16 %v6644, %v6636
        %v6933 = vpack.c.b16 %v6645, %v6637
        %v6934 = vpack.c.b16 %v6646, %v6638
        %v6935 = vpack.c.b16 %v6647, %v6639
        %v6936 = vpack.c.b16 %v6648, %v6640
        %v6937 = vpack.c.b16 %v6657, %v6649
        %v6938 = vpack.c.b16 %v6658, %v6650
        %v6939 = vpack.c.b16 %v6659, %v6651
        %v6940 = vpack.c.b16 %v6660, %v6652
        %v6941 = vpack.c.b16 %v6661, %v6653
        %v6942 = vpack.c.b16 %v6662, %v6654
        %v6943 = vpack.c.b16 %v6663, %v6655
        %v6944 = vpack.c.b16 %v6664, %v6656
        %v6945 = vpack.c.b16 %v6673, %v6665
        %v6946 = vpack.c.b16 %v6674, %v6666
        %v6947 = vpack.c.b16 %v6675, %v6667
        %v6948 = vpack.c.b16 %v6676, %v6668
        %v6949 = vpack.c.b16 %v6677, %v6669
        %v6950 = vpack.c.b16 %v6678, %v6670
        %v6951 = vpack.c.b16 %v6679, %v6671
        %v6952 = vpack.c.b16 %v6680, %v6672
        %v6953 = vpack.c.b16 %v6689, %v6681
        %v6954 = vpack.c.b16 %v6690, %v6682
        %v6955 = vpack.c.b16 %v6691, %v6683
        %v6956 = vpack.c.b16 %v6692, %v6684
        %v6957 = vpack.c.b16 %v6693, %v6685
        %v6958 = vpack.c.b16 %v6694, %v6686
        %v6959 = vpack.c.b16 %v6695, %v6687
        %v6960 = vpack.c.b16 %v6696, %v6688
        %v6961 = vpack.c.b16 %v6705, %v6697
        %v6962 = vpack.c.b16 %v6706, %v6698
        %v6963 = vpack.c.b16 %v6707, %v6699
        %v6964 = vpack.c.b16 %v6708, %v6700
        %v6965 = vpack.c.b16 %v6709, %v6701
        %v6966 = vpack.c.b16 %v6710, %v6702
        %v6967 = vpack.c.b16 %v6711, %v6703
        %v6968 = vpack.c.b16 %v6712, %v6704
        %v6969 = vpack.c.b16 %v6721, %v6713
        %v6970 = vpack.c.b16 %v6722, %v6714
        %v6971 = vpack.c.b16 %v6723, %v6715
        %v6972 = vpack.c.b16 %v6724, %v6716
        %v6973 = vpack.c.b16 %v6725, %v6717
        %v6974 = vpack.c.b16 %v6726, %v6718
        %v6975 = vpack.c.b16 %v6727, %v6719
        %v6976 = vpack.c.b16 %v6728, %v6720
        %v6977 = vpack.c.b16 %v6737, %v6729
        %v6978 = vpack.c.b16 %v6738, %v6730
        %v6979 = vpack.c.b16 %v6739, %v6731
        %v6980 = vpack.c.b16 %v6740, %v6732
        %v6981 = vpack.c.b16 %v6741, %v6733
        %v6982 = vpack.c.b16 %v6742, %v6734
        %v6983 = vpack.c.b16 %v6743, %v6735
        %v6984 = vpack.c.b16 %v6744, %v6736
        %v6985 = vpack.c.b16 %v6753, %v6745
        %v6986 = vpack.c.b16 %v6754, %v6746
        %v6987 = vpack.c.b16 %v6755, %v6747
        %v6988 = vpack.c.b16 %v6756, %v6748
        %v6989 = vpack.c.b16 %v6757, %v6749
        %v6990 = vpack.c.b16 %v6758, %v6750
        %v6991 = vpack.c.b16 %v6759, %v6751
        %v6992 = vpack.c.b16 %v6760, %v6752
        %v6993 = vpack.c.b16 %v6769, %v6761
        %v6994 = vpack.c.b16 %v6770, %v6762
        %v6995 = vpack.c.b16 %v6771, %v6763
        %v6996 = vpack.c.b16 %v6772, %v6764
        %v6997 = vpack.c.b16 %v6773, %v6765
        %v6998 = vpack.c.b16 %v6774, %v6766
        %v6999 = vpack.c.b16 %v6775, %v6767
        %v7000 = vpack.c.b16 %v6776, %v6768
        %v7001 = vpack.c.b16 %v6785, %v6777
        %v7002 = vpack.c.b16 %v6786, %v6778
        %v7003 = vpack.c.b16 %v6787, %v6779
        %v7004 = vpack.c.b16 %v6788, %v6780
        %v7005 = vpack.c.b16 %v6789, %v6781
        %v7006 = vpack.c.b16 %v6790, %v6782
        %v7007 = vpack.c.b16 %v6791, %v6783
        %v7008 = vpack.c.b16 %v6792, %v6784
        %v7009 = vpack.c.b16 %v6801, %v6793
        %v7010 = vpack.c.b16 %v6802, %v6794
        %v7011 = vpack.c.b16 %v6803, %v6795
        %v7012 = vpack.c.b16 %v6804, %v6796
        %v7013 = vpack.c.b16 %v6805, %v6797
        %v7014 = vpack.c.b16 %v6806, %v6798
        %v7015 = vpack.c.b16 %v6807, %v6799
        %v7016 = vpack.c.b16 %v6808, %v6800
        %v7017 = vpack.c.b16 %v6817, %v6809
        %v7018 = vpack.c.b16 %v6818, %v6810
        %v7019 = vpack.c.b16 %v6819, %v6811
        %v7020 = vpack.c.b16 %v6820, %v6812
        %v7021 = vpack.c.b16 %v6821, %v6813
        %v7022 = vpack.c.b16 %v6822, %v6814
        %v7023 = vpack.c.b16 %v6823, %v6815
        %v7024 = vpack.c.b16 %v6824, %v6816
        %v7025 = vpack.c.b16 %v6833, %v6825
        %v7026 = vpack.c.b16 %v6834, %v6826
        %v7027 = vpack.c.b16 %v6835, %v6827
        %v7028 = vpack.c.b16 %v6836, %v6828
        %v7029 = vpack.c.b16 %v6837, %v6829
        %v7030 = vpack.c.b16 %v6838, %v6830
        %v7031 = vpack.c.b16 %v6839, %v6831
        %v7032 = vpack.c.b16 %v6840, %v6832
        %v7033 = vpack.c.b16 %v6849, %v6841
        %v7034 = vpack.c.b16 %v6850, %v6842
        %v7035 = vpack.c.b16 %v6851, %v6843
        %v7036 = vpack.c.b16 %v6852, %v6844
        %v7037 = vpack.c.b16 %v6853, %v6845
        %v7038 = vpack.c.b16 %v6854, %v6846
        %v7039 = vpack.c.b16 %v6855, %v6847
        %v7040 = vpack.c.b16 %v6856, %v6848
        %v7041 = vpack.c.b16 %v6865, %v6857
        %v7042 = vpack.c.b16 %v6866, %v6858
        %v7043 = vpack.c.b16 %v6867, %v6859
        %v7044 = vpack.c.b16 %v6868, %v6860
        %v7045 = vpack.c.b16 %v6869, %v6861
        %v7046 = vpack.c.b16 %v6870, %v6862
        %v7047 = vpack.c.b16 %v6871, %v6863
        %v7048 = vpack.c.b16 %v6872, %v6864
        %v7049 = vpack.c.b16 %v6881, %v6873
        %v7050 = vpack.c.b16 %v6882, %v6874
        %v7051 = vpack.c.b16 %v6883, %v6875
        %v7052 = vpack.c.b16 %v6884, %v6876
        %v7053 = vpack.c.b16 %v6885, %v6877
        %v7054 = vpack.c.b16 %v6886, %v6878
        %v7055 = vpack.c.b16 %v6887, %v6879
        %v7056 = vpack.c.b16 %v6888, %v6880
        %v7057 = vpack.c.b16 %v6889, %v6889
        %v7058 = vpack.c.b16 %v6890, %v6890
        %v7059 = vpack.c.b16 %v6891, %v6891
        %v7060 = vpack.c.b16 %v6892, %v6892
        %v7061 = vpack.c.b16 %v6893, %v6893
        %v7062 = vpack.c.b16 %v6894, %v6894
        %v7063 = vpack.c.b16 %v6895, %v6895
        %v7064 = vpack.c.b16 %v6896, %v6896
        %vm7225 = vcmask 556032
        %v7227 = vsel %vm7225, %v6400, 0
        %v7230 = vsel %vm3777, %v7057, 0
        %v7233 = vsel %vm3777, %v7058, 0
        %v7236 = vsel %vm3777, %v7059, 0
        %v7239 = vsel %vm3777, %v7060, 0
        %v7242 = vsel %vm3777, %v7061, 0
        %v7245 = vsel %vm3777, %v7062, 0
        %v7248 = vsel %vm3777, %v7063, 0
        %v7251 = vsel %vm3777, %v7064, 0
        %7253 = vmatprep.subr.bf16.mxu0 %v6898
        %7254 = vmatpush1.bf16.msra.mxu0 %v6897
        %7255 = vmatprep.subr.bf16.mxu0 %v6906
        %7256 = vmatpush1.bf16.msra.mxu0 %v6905
        %7257 = vmatprep.subr.bf16.mxu0 %v6914
        %7258 = vmatpush1.bf16.msra.mxu0 %v6913
        %7259 = vmatprep.subr.bf16.mxu0 %v6922
        %7260 = vmatpush1.bf16.msra.mxu0 %v6921
        %7261 = vmatprep.subr.bf16.mxu0 %v6930
        %7262 = vmatpush1.bf16.msra.mxu0 %v6929
        %7263 = vmatprep.subr.bf16.mxu0 %v6938
        %7264 = vmatpush1.bf16.msra.mxu0 %v6937
        %7265 = vmatprep.subr.bf16.mxu0 %v6946
        %7266 = vmatpush1.bf16.msra.mxu0 %v6945
        %7267 = vmatprep.subr.bf16.mxu0 %v6954
        %7268 = vmatpush1.bf16.msra.mxu0 %v6953
        %7269 = vmatprep.subr.bf16.mxu0 %v6962
        %7270 = vmatpush1.bf16.msra.mxu0 %v6961
        %7271 = vmatprep.subr.bf16.mxu0 %v6970
        %7272 = vmatpush1.bf16.msra.mxu0 %v6969
        %7273 = vmatprep.subr.bf16.mxu0 %v6978
        %7274 = vmatpush1.bf16.msra.mxu0 %v6977
        %7275 = vmatprep.subr.bf16.mxu0 %v6986
        %7276 = vmatpush1.bf16.msra.mxu0 %v6985
        %7277 = vmatprep.subr.bf16.mxu0 %v6994
        %7278 = vmatpush1.bf16.msra.mxu0 %v6993
        %7279 = vmatprep.subr.bf16.mxu0 %v7002
        %7280 = vmatpush1.bf16.msra.mxu0 %v7001
        %7281 = vmatprep.subr.bf16.mxu0 %v7010
        %7282 = vmatpush1.bf16.msra.mxu0 %v7009
        %7283 = vmatprep.subr.bf16.mxu0 %v7018
        %7284 = vmatpush1.bf16.msra.mxu0 %v7017
        %7285 = vmatprep.mubr.bf16.mxu0 %v6402
        %7286 = vmatmul.mubr.bf16.gmra.mrb[0].mxu0 %v6401
        %v7287 = vpop.f32.mrb[0].mxu0
        %v7288 = vadd.f32 0.0, %v7287
        %v7289 = vpop.f32.mrb[0].mxu0
        %v7290 = vadd.f32 0.0, %v7289
        %v7291 = vpop.f32.mrb[0].mxu0
        %v7292 = vadd.f32 0.0, %v7291
        %v7293 = vpop.f32.mrb[0].mxu0
        %v7294 = vadd.f32 0.0, %v7293
        %7295 = vdwg.mxu0
        %7296 = vmatprep.subr.bf16.mxu0 %v7026
        %7297 = vmatpush1.bf16.msra.mxu0 %v7025
        %7298 = vmatprep.subr.bf16.mxu0 %v7034
        %7299 = vmatpush1.bf16.msra.mxu0 %v7033
        %7300 = vmatprep.subr.bf16.mxu0 %v7042
        %7301 = vmatpush1.bf16.msra.mxu0 %v7041
        %7302 = vmatprep.subr.bf16.mxu0 %v7050
        %7303 = vmatpush1.bf16.msra.mxu0 %v7049
        %7304 = vmatprep.subr.bf16.mxu0 %v7233
        %7305 = vmatpush1.bf16.msra.mxu0 %v7230
        %7306 = vmatprep.subr.bf16.mxu0 0
        %7307 = vmatpush1.bf16.msra.mxu0 0
        %7308 = vmatprep.subr.bf16.mxu0 0
        %7309 = vmatpush1.bf16.msra.mxu0 0
        %7310 = vmatprep.subr.bf16.mxu0 0
        %7311 = vmatpush1.bf16.msra.mxu0 0
        %7312 = vmatprep.subr.bf16.mxu0 0
        %7313 = vmatpush1.bf16.msra.mxu0 0
        %7314 = vmatprep.subr.bf16.mxu0 0
        %7315 = vmatpush1.bf16.msra.mxu0 0
        %7316 = vmatprep.subr.bf16.mxu0 0
        %7317 = vmatpush1.bf16.msra.mxu0 0
        %7318 = vmatprep.subr.bf16.mxu0 0
        %7319 = vmatpush1.bf16.msra.mxu0 0
        %7320 = vmatprep.subr.bf16.mxu0 0
        %7321 = vmatpush1.bf16.msra.mxu0 0
        %7322 = vmatprep.subr.bf16.mxu0 0
        %7323 = vmatpush1.bf16.msra.mxu0 0
        %7324 = vmatprep.subr.bf16.mxu0 0
        %7325 = vmatpush1.bf16.msra.mxu0 0
        %7326 = vmatprep.subr.bf16.mxu0 0
        %7327 = vmatpush1.bf16.msra.mxu0 0
        %7328 = vmatprep.mubr.bf16.mxu0 0
        %7329 = vmatmul.mubr.bf16.gmra.mrb[0].mxu0 %v7227
        %v7330 = vpop.f32.mrb[0].mxu0
        %v7331 = vadd.f32 %v7288, %v7330
        %v7332 = vpop.f32.mrb[0].mxu0
        %v7333 = vadd.f32 %v7290, %v7332
        %v7334 = vpop.f32.mrb[0].mxu0
        %v7335 = vadd.f32 %v7292, %v7334
        %v7336 = vpop.f32.mrb[0].mxu0
        %v7337 = vadd.f32 %v7294, %v7336
        %7338 = vdwg.mxu0
        %7339 = vmatprep.subr.bf16.mxu0 %v6900
        %7340 = vmatpush1.bf16.msra.mxu0 %v6899
        %7341 = vmatprep.subr.bf16.mxu0 %v6908
        %7342 = vmatpush1.bf16.msra.mxu0 %v6907
        %7343 = vmatprep.subr.bf16.mxu0 %v6916
        %7344 = vmatpush1.bf16.msra.mxu0 %v6915
        %7345 = vmatprep.subr.bf16.mxu0 %v6924
        %7346 = vmatpush1.bf16.msra.mxu0 %v6923
        %7347 = vmatprep.subr.bf16.mxu0 %v6932
        %7348 = vmatpush1.bf16.msra.mxu0 %v6931
        %7349 = vmatprep.subr.bf16.mxu0 %v6940
        %7350 = vmatpush1.bf16.msra.mxu0 %v6939
        %7351 = vmatprep.subr.bf16.mxu0 %v6948
        %7352 = vmatpush1.bf16.msra.mxu0 %v6947
        %7353 = vmatprep.subr.bf16.mxu0 %v6956
        %7354 = vmatpush1.bf16.msra.mxu0 %v6955
        %7355 = vmatprep.subr.bf16.mxu0 %v6964
        %7356 = vmatpush1.bf16.msra.mxu0 %v6963
        %7357 = vmatprep.subr.bf16.mxu0 %v6972
        %7358 = vmatpush1.bf16.msra.mxu0 %v6971
        %7359 = vmatprep.subr.bf16.mxu0 %v6980
        %7360 = vmatpush1.bf16.msra.mxu0 %v6979
        %7361 = vmatprep.subr.bf16.mxu0 %v6988
        %7362 = vmatpush1.bf16.msra.mxu0 %v6987
        %7363 = vmatprep.subr.bf16.mxu0 %v6996
        %7364 = vmatpush1.bf16.msra.mxu0 %v6995
        %7365 = vmatprep.subr.bf16.mxu0 %v7004
        %7366 = vmatpush1.bf16.msra.mxu0 %v7003
        %7367 = vmatprep.subr.bf16.mxu0 %v7012
        %7368 = vmatpush1.bf16.msra.mxu0 %v7011
        %7369 = vmatprep.subr.bf16.mxu0 %v7020
        %7370 = vmatpush1.bf16.msra.mxu0 %v7019
        %7371 = vmatprep.mubr.bf16.mxu0 %v6402
        %7372 = vmatmul.mubr.bf16.gmra.mrb[0].mxu0 %v6401
        %v7373 = vpop.f32.mrb[0].mxu0
        %v7374 = vadd.f32 0.0, %v7373
        %v7375 = vpop.f32.mrb[0].mxu0
        %v7376 = vadd.f32 0.0, %v7375
        %v7377 = vpop.f32.mrb[0].mxu0
        %v7378 = vadd.f32 0.0, %v7377
        %v7379 = vpop.f32.mrb[0].mxu0
        %v7380 = vadd.f32 0.0, %v7379
        %7381 = vdwg.mxu0
        %7382 = vmatprep.subr.bf16.mxu0 %v7028
        %7383 = vmatpush1.bf16.msra.mxu0 %v7027
        %7384 = vmatprep.subr.bf16.mxu0 %v7036
        %7385 = vmatpush1.bf16.msra.mxu0 %v7035
        %7386 = vmatprep.subr.bf16.mxu0 %v7044
        %7387 = vmatpush1.bf16.msra.mxu0 %v7043
        %7388 = vmatprep.subr.bf16.mxu0 %v7052
        %7389 = vmatpush1.bf16.msra.mxu0 %v7051
        %7390 = vmatprep.subr.bf16.mxu0 %v7239
        %7391 = vmatpush1.bf16.msra.mxu0 %v7236
        %7392 = vmatprep.subr.bf16.mxu0 0
        %7393 = vmatpush1.bf16.msra.mxu0 0
        %7394 = vmatprep.subr.bf16.mxu0 0
        %7395 = vmatpush1.bf16.msra.mxu0 0
        %7396 = vmatprep.subr.bf16.mxu0 0
        %7397 = vmatpush1.bf16.msra.mxu0 0
        %7398 = vmatprep.subr.bf16.mxu0 0
        %7399 = vmatpush1.bf16.msra.mxu0 0
        %7400 = vmatprep.subr.bf16.mxu0 0
        %7401 = vmatpush1.bf16.msra.mxu0 0
        %7402 = vmatprep.subr.bf16.mxu0 0
        %7403 = vmatpush1.bf16.msra.mxu0 0
        %7404 = vmatprep.subr.bf16.mxu0 0
        %7405 = vmatpush1.bf16.msra.mxu0 0
        %7406 = vmatprep.subr.bf16.mxu0 0
        %7407 = vmatpush1.bf16.msra.mxu0 0
        %7408 = vmatprep.subr.bf16.mxu0 0
        %7409 = vmatpush1.bf16.msra.mxu0 0
        %7410 = vmatprep.subr.bf16.mxu0 0
        %7411 = vmatpush1.bf16.msra.mxu0 0
        %7412 = vmatprep.subr.bf16.mxu0 0
        %7413 = vmatpush1.bf16.msra.mxu0 0
        %7414 = vmatprep.mubr.bf16.mxu0 0
        %7415 = vmatmul.mubr.bf16.gmra.mrb[0].mxu0 %v7227
        %v7416 = vpop.f32.mrb[0].mxu0
        %v7417 = vadd.f32 %v7374, %v7416
        %v7418 = vpop.f32.mrb[0].mxu0
        %v7419 = vadd.f32 %v7376, %v7418
        %v7420 = vpop.f32.mrb[0].mxu0
        %v7421 = vadd.f32 %v7378, %v7420
        %v7422 = vpop.f32.mrb[0].mxu0
        %v7423 = vadd.f32 %v7380, %v7422
        %7424 = vdwg.mxu0
        %7425 = vmatprep.subr.bf16.mxu0 %v6902
        %7426 = vmatpush1.bf16.msra.mxu0 %v6901
        %7427 = vmatprep.subr.bf16.mxu0 %v6910
        %7428 = vmatpush1.bf16.msra.mxu0 %v6909
        %7429 = vmatprep.subr.bf16.mxu0 %v6918
        %7430 = vmatpush1.bf16.msra.mxu0 %v6917
        %7431 = vmatprep.subr.bf16.mxu0 %v6926
        %7432 = vmatpush1.bf16.msra.mxu0 %v6925
        %7433 = vmatprep.subr.bf16.mxu0 %v6934
        %7434 = vmatpush1.bf16.msra.mxu0 %v6933
        %7435 = vmatprep.subr.bf16.mxu0 %v6942
        %7436 = vmatpush1.bf16.msra.mxu0 %v6941
        %7437 = vmatprep.subr.bf16.mxu0 %v6950
        %7438 = vmatpush1.bf16.msra.mxu0 %v6949
        %7439 = vmatprep.subr.bf16.mxu0 %v6958
        %7440 = vmatpush1.bf16.msra.mxu0 %v6957
        %7441 = vmatprep.subr.bf16.mxu0 %v6966
        %7442 = vmatpush1.bf16.msra.mxu0 %v6965
        %7443 = vmatprep.subr.bf16.mxu0 %v6974
        %7444 = vmatpush1.bf16.msra.mxu0 %v6973
        %7445 = vmatprep.subr.bf16.mxu0 %v6982
        %7446 = vmatpush1.bf16.msra.mxu0 %v6981
        %7447 = vmatprep.subr.bf16.mxu0 %v6990
        %7448 = vmatpush1.bf16.msra.mxu0 %v6989
        %7449 = vmatprep.subr.bf16.mxu0 %v6998
        %7450 = vmatpush1.bf16.msra.mxu0 %v6997
        %7451 = vmatprep.subr.bf16.mxu0 %v7006
        %7452 = vmatpush1.bf16.msra.mxu0 %v7005
        %7453 = vmatprep.subr.bf16.mxu0 %v7014
        %7454 = vmatpush1.bf16.msra.mxu0 %v7013
        %7455 = vmatprep.subr.bf16.mxu0 %v7022
        %7456 = vmatpush1.bf16.msra.mxu0 %v7021
        %7457 = vmatprep.mubr.bf16.mxu0 %v6402
        %7458 = vmatmul.mubr.bf16.gmra.mrb[0].mxu0 %v6401
        %v7459 = vpop.f32.mrb[0].mxu0
        %v7460 = vadd.f32 0.0, %v7459
        %v7461 = vpop.f32.mrb[0].mxu0
        %v7462 = vadd.f32 0.0, %v7461
        %v7463 = vpop.f32.mrb[0].mxu0
        %v7464 = vadd.f32 0.0, %v7463
        %v7465 = vpop.f32.mrb[0].mxu0
        %v7466 = vadd.f32 0.0, %v7465
        %7467 = vdwg.mxu0
        %7468 = vmatprep.subr.bf16.mxu0 %v7030
        %7469 = vmatpush1.bf16.msra.mxu0 %v7029
        %7470 = vmatprep.subr.bf16.mxu0 %v7038
        %7471 = vmatpush1.bf16.msra.mxu0 %v7037
        %7472 = vmatprep.subr.bf16.mxu0 %v7046
        %7473 = vmatpush1.bf16.msra.mxu0 %v7045
        %7474 = vmatprep.subr.bf16.mxu0 %v7054
        %7475 = vmatpush1.bf16.msra.mxu0 %v7053
        %7476 = vmatprep.subr.bf16.mxu0 %v7245
        %7477 = vmatpush1.bf16.msra.mxu0 %v7242
        %7478 = vmatprep.subr.bf16.mxu0 0
        %7479 = vmatpush1.bf16.msra.mxu0 0
        %7480 = vmatprep.subr.bf16.mxu0 0
        %7481 = vmatpush1.bf16.msra.mxu0 0
        %7482 = vmatprep.subr.bf16.mxu0 0
        %7483 = vmatpush1.bf16.msra.mxu0 0
        %7484 = vmatprep.subr.bf16.mxu0 0
        %7485 = vmatpush1.bf16.msra.mxu0 0
        %7486 = vmatprep.subr.bf16.mxu0 0
        %7487 = vmatpush1.bf16.msra.mxu0 0
        %7488 = vmatprep.subr.bf16.mxu0 0
        %7489 = vmatpush1.bf16.msra.mxu0 0
        %7490 = vmatprep.subr.bf16.mxu0 0
        %7491 = vmatpush1.bf16.msra.mxu0 0
        %7492 = vmatprep.subr.bf16.mxu0 0
        %7493 = vmatpush1.bf16.msra.mxu0 0
        %7494 = vmatprep.subr.bf16.mxu0 0
        %7495 = vmatpush1.bf16.msra.mxu0 0
        %7496 = vmatprep.subr.bf16.mxu0 0
        %7497 = vmatpush1.bf16.msra.mxu0 0
        %7498 = vmatprep.subr.bf16.mxu0 0
        %7499 = vmatpush1.bf16.msra.mxu0 0
        %7500 = vmatprep.mubr.bf16.mxu0 0
        %7501 = vmatmul.mubr.bf16.gmra.mrb[0].mxu0 %v7227
        %v7502 = vpop.f32.mrb[0].mxu0
        %v7503 = vadd.f32 %v7460, %v7502
        %v7504 = vpop.f32.mrb[0].mxu0
        %v7505 = vadd.f32 %v7462, %v7504
        %v7506 = vpop.f32.mrb[0].mxu0
        %v7507 = vadd.f32 %v7464, %v7506
        %v7508 = vpop.f32.mrb[0].mxu0
        %v7509 = vadd.f32 %v7466, %v7508
        %7510 = vdwg.mxu0
        %7511 = vmatprep.subr.bf16.mxu0 %v6904
        %7512 = vmatpush1.bf16.msra.mxu0 %v6903
        %7513 = vmatprep.subr.bf16.mxu0 %v6912
        %7514 = vmatpush1.bf16.msra.mxu0 %v6911
        %7515 = vmatprep.subr.bf16.mxu0 %v6920
        %7516 = vmatpush1.bf16.msra.mxu0 %v6919
        %7517 = vmatprep.subr.bf16.mxu0 %v6928
        %7518 = vmatpush1.bf16.msra.mxu0 %v6927
        %7519 = vmatprep.subr.bf16.mxu0 %v6936
        %7520 = vmatpush1.bf16.msra.mxu0 %v6935
        %7521 = vmatprep.subr.bf16.mxu0 %v6944
        %7522 = vmatpush1.bf16.msra.mxu0 %v6943
        %7523 = vmatprep.subr.bf16.mxu0 %v6952
        %7524 = vmatpush1.bf16.msra.mxu0 %v6951
        %7525 = vmatprep.subr.bf16.mxu0 %v6960
        %7526 = vmatpush1.bf16.msra.mxu0 %v6959
        %7527 = vmatprep.subr.bf16.mxu0 %v6968
        %7528 = vmatpush1.bf16.msra.mxu0 %v6967
        %7529 = vmatprep.subr.bf16.mxu0 %v6976
        %7530 = vmatpush1.bf16.msra.mxu0 %v6975
        %7531 = vmatprep.subr.bf16.mxu0 %v6984
        %7532 = vmatpush1.bf16.msra.mxu0 %v6983
        %7533 = vmatprep.subr.bf16.mxu0 %v6992
        %7534 = vmatpush1.bf16.msra.mxu0 %v6991
        %7535 = vmatprep.subr.bf16.mxu0 %v7000
        %7536 = vmatpush1.bf16.msra.mxu0 %v6999
        %7537 = vmatprep.subr.bf16.mxu0 %v7008
        %7538 = vmatpush1.bf16.msra.mxu0 %v7007
        %7539 = vmatprep.subr.bf16.mxu0 %v7016
        %7540 = vmatpush1.bf16.msra.mxu0 %v7015
        %7541 = vmatprep.subr.bf16.mxu0 %v7024
        %7542 = vmatpush1.bf16.msra.mxu0 %v7023
        %7543 = vmatprep.mubr.bf16.mxu0 %v6402
        %7544 = vmatmul.mubr.bf16.gmra.mrb[0].mxu0 %v6401
        %v7545 = vpop.f32.mrb[0].mxu0
        %v7546 = vadd.f32 0.0, %v7545
        %v7547 = vpop.f32.mrb[0].mxu0
        %v7548 = vadd.f32 0.0, %v7547
        %v7549 = vpop.f32.mrb[0].mxu0
        %v7550 = vadd.f32 0.0, %v7549
        %v7551 = vpop.f32.mrb[0].mxu0
        %v7552 = vadd.f32 0.0, %v7551
        %7553 = vdwg.mxu0
        %7554 = vmatprep.subr.bf16.mxu0 %v7032
        %7555 = vmatpush1.bf16.msra.mxu0 %v7031
        %7556 = vmatprep.subr.bf16.mxu0 %v7040
        %7557 = vmatpush1.bf16.msra.mxu0 %v7039
        %7558 = vmatprep.subr.bf16.mxu0 %v7048
        %7559 = vmatpush1.bf16.msra.mxu0 %v7047
        %7560 = vmatprep.subr.bf16.mxu0 %v7056
        %7561 = vmatpush1.bf16.msra.mxu0 %v7055
        %7562 = vmatprep.subr.bf16.mxu0 %v7251
        %7563 = vmatpush1.bf16.msra.mxu0 %v7248
        %7564 = vmatprep.subr.bf16.mxu0 0
        %7565 = vmatpush1.bf16.msra.mxu0 0
        %7566 = vmatprep.subr.bf16.mxu0 0
        %7567 = vmatpush1.bf16.msra.mxu0 0
        %7568 = vmatprep.subr.bf16.mxu0 0
        %7569 = vmatpush1.bf16.msra.mxu0 0
        %7570 = vmatprep.subr.bf16.mxu0 0
        %7571 = vmatpush1.bf16.msra.mxu0 0
        %7572 = vmatprep.subr.bf16.mxu0 0
        %7573 = vmatpush1.bf16.msra.mxu0 0
        %7574 = vmatprep.subr.bf16.mxu0 0
        %7575 = vmatpush1.bf16.msra.mxu0 0
        %7576 = vmatprep.subr.bf16.mxu0 0
        %7577 = vmatpush1.bf16.msra.mxu0 0
        %7578 = vmatprep.subr.bf16.mxu0 0
        %7579 = vmatpush1.bf16.msra.mxu0 0
        %7580 = vmatprep.subr.bf16.mxu0 0
        %7581 = vmatpush1.bf16.msra.mxu0 0
        %7582 = vmatprep.subr.bf16.mxu0 0
        %7583 = vmatpush1.bf16.msra.mxu0 0
        %7584 = vmatprep.subr.bf16.mxu0 0
        %7585 = vmatpush1.bf16.msra.mxu0 0
        %7586 = vmatprep.mubr.bf16.mxu0 0
        %7587 = vmatmul.mubr.bf16.gmra.mrb[0].mxu0 %v7227
        %v7588 = vpop.f32.mrb[0].mxu0
        %v7589 = vadd.f32 %v7546, %v7588
        %v7590 = vpop.f32.mrb[0].mxu0
        %v7591 = vadd.f32 %v7548, %v7590
        %v7592 = vpop.f32.mrb[0].mxu0
        %v7593 = vadd.f32 %v7550, %v7592
        %v7594 = vpop.f32.mrb[0].mxu0
        %v7595 = vadd.f32 %v7552, %v7594
        %7596 = vdwg.mxu0
        %7613 = vrot.lane.b32.xlu0 %v7331, 32
        %v7614 = vpop.permute.xlu0 %7613
        %7615 = vrot.lane.b32.xlu0 %v7333, 32
        %v7616 = vpop.permute.xlu0 %7615
        %7617 = vrot.lane.b32.xlu0 %v7417, 32
        %v7618 = vpop.permute.xlu0 %7617
        %7619 = vrot.lane.b32.xlu0 %v7419, 32
        %v7620 = vpop.permute.xlu0 %7619
        %7621 = vrot.lane.b32.xlu0 %v7503, 32
        %v7622 = vpop.permute.xlu0 %7621
        %7623 = vrot.lane.b32.xlu0 %v7505, 32
        %v7624 = vpop.permute.xlu0 %7623
        %7625 = vrot.lane.b32.xlu0 %v7589, 32
        %v7626 = vpop.permute.xlu0 %7625
        %7627 = vrot.lane.b32.xlu0 %v7591, 32
        %v7628 = vpop.permute.xlu0 %7627
        %7629 = vrot.lane.b32.xlu0 %v7335, 32
        %v7630 = vpop.permute.xlu0 %7629
        %7631 = vrot.lane.b32.xlu0 %v7337, 32
        %v7632 = vpop.permute.xlu0 %7631
        %7633 = vrot.lane.b32.xlu0 %v7421, 32
        %v7634 = vpop.permute.xlu0 %7633
        %7635 = vrot.lane.b32.xlu0 %v7423, 32
        %v7636 = vpop.permute.xlu0 %7635
        %7637 = vrot.lane.b32.xlu0 %v7507, 32
        %v7638 = vpop.permute.xlu0 %7637
        %7639 = vrot.lane.b32.xlu0 %v7509, 32
        %v7640 = vpop.permute.xlu0 %7639
        %7641 = vrot.lane.b32.xlu0 %v7593, 32
        %v7642 = vpop.permute.xlu0 %7641
        %7643 = vrot.lane.b32.xlu0 %v7595, 32
        %v7644 = vpop.permute.xlu0 %7643
        %v7645 = vsel %vm766, %v7614, %v7616
        %v7646 = vsel %vm766, %v7616, %v7618
        %v7647 = vsel %vm766, %v7618, %v7620
        %v7648 = vsel %vm766, %v7620, %v7622
        %v7649 = vsel %vm766, %v7622, %v7624
        %v7650 = vsel %vm766, %v7624, %v7626
        %v7651 = vsel %vm766, %v7626, %v7628
        %v7652 = vsel %vm766, %v7630, %v7632
        %v7653 = vsel %vm766, %v7632, %v7634
        %v7654 = vsel %vm766, %v7634, %v7636
        %v7655 = vsel %vm766, %v7636, %v7638
        %v7656 = vsel %vm766, %v7638, %v7640
        %v7657 = vsel %vm766, %v7640, %v7642
        %v7658 = vsel %vm766, %v7642, %v7644
        %7675 = vst.msk [vmem:[#allocation13] sm:$0xff] %vm2374, %v7614
        %7676 = vst [vmem:[#allocation13 + $0x8] sm:$0xff] %v7645
        %7677 = vst [vmem:[#allocation13 + $0x10] sm:$0xff] %v7646
        %7678 = vst [vmem:[#allocation13 + $0x18] sm:$0xff] %v7647
        %7679 = vst [vmem:[#allocation13 + $0x20] sm:$0xff] %v7648
        %7680 = vst [vmem:[#allocation13 + $0x28] sm:$0xff] %v7649
        %7681 = vst [vmem:[#allocation13 + $0x30] sm:$0xff] %v7650
        %7682 = vst.msk [vmem:[#allocation13 + $0x38] sm:$0xff] %vm2382, %v7651
        %7683 = vst.msk [vmem:[#allocation13 + $0x40] sm:$0xff] %vm2374, %v7630
        %7684 = vst [vmem:[#allocation13 + $0x48] sm:$0xff] %v7652
        %7685 = vst [vmem:[#allocation13 + $0x50] sm:$0xff] %v7653
        %7686 = vst [vmem:[#allocation13 + $0x58] sm:$0xff] %v7654
        %7687 = vst [vmem:[#allocation13 + $0x60] sm:$0xff] %v7655
        %7688 = vst [vmem:[#allocation13 + $0x68] sm:$0xff] %v7656
        %7689 = vst [vmem:[#allocation13 + $0x70] sm:$0xff] %v7657
        %7690 = vst.msk [vmem:[#allocation13 + $0x78] sm:$0xff] %vm2382, %v7658
        %v7691 = vld [vmem:[#allocation13] sm:$0xff]
        %v7692 = vld [vmem:[#allocation13 + $0x8] sm:$0xff]
        %v7693 = vld [vmem:[#allocation13 + $0x10] sm:$0xff]
        %v7694 = vld [vmem:[#allocation13 + $0x18] sm:$0xff]
        %v7695 = vld [vmem:[#allocation13 + $0x20] sm:$0xff]
        %v7696 = vld [vmem:[#allocation13 + $0x28] sm:$0xff]
        %v7697 = vld [vmem:[#allocation13 + $0x30] sm:$0xff]
        %v7698 = vld [vmem:[#allocation13 + $0x38] sm:$0xff]
        %v7699 = vld [vmem:[#allocation13 + $0x40] sm:$0xff]
        %v7700 = vld [vmem:[#allocation13 + $0x48] sm:$0xff]
        %v7701 = vld [vmem:[#allocation13 + $0x50] sm:$0xff]
        %v7702 = vld [vmem:[#allocation13 + $0x58] sm:$0xff]
        %v7703 = vld [vmem:[#allocation13 + $0x60] sm:$0xff]
        %v7704 = vld [vmem:[#allocation13 + $0x68] sm:$0xff]
        %v7705 = vld [vmem:[#allocation13 + $0x70] sm:$0xff]
        %v7706 = vld [vmem:[#allocation13 + $0x78] sm:$0xff]
        %v7707 = vpack.c.bf16 %v7699, %v7691
        %v7708 = vpack.c.bf16 %v7700, %v7692
        %v7709 = vpack.c.bf16 %v7701, %v7693
        %v7710 = vpack.c.bf16 %v7702, %v7694
        %v7711 = vpack.c.bf16 %v7703, %v7695
        %v7712 = vpack.c.bf16 %v7704, %v7696
        %v7713 = vpack.c.bf16 %v7705, %v7697
        %v7714 = vpack.c.bf16 %v7706, %v7698
        %7723 = vrot.lane.b32.xlu0 %v7707, 127
        %v7724 = vpop.permute.xlu0 %7723
        %7725 = vrot.lane.b32.xlu0 %v7708, 127
        %v7726 = vpop.permute.xlu0 %7725
        %7727 = vrot.lane.b32.xlu0 %v7709, 127
        %v7728 = vpop.permute.xlu0 %7727
        %7729 = vrot.lane.b32.xlu0 %v7710, 127
        %v7730 = vpop.permute.xlu0 %7729
        %7731 = vrot.lane.b32.xlu0 %v7711, 127
        %v7732 = vpop.permute.xlu0 %7731
        %7733 = vrot.lane.b32.xlu0 %v7712, 127
        %v7734 = vpop.permute.xlu0 %7733
        %7735 = vrot.lane.b32.xlu0 %v7713, 127
        %v7736 = vpop.permute.xlu0 %7735
        %7737 = vrot.lane.b32.xlu0 %v7714, 127
        %v7738 = vpop.permute.xlu0 %7737
        %v7739 = vsel %vm882, %v7724, %v7726
        %v7740 = vsel %vm882, %v7726, %v7728
        %v7741 = vsel %vm882, %v7728, %v7730
        %v7742 = vsel %vm882, %v7730, %v7732
        %v7743 = vsel %vm882, %v7732, %v7734
        %v7744 = vsel %vm882, %v7734, %v7736
        %v7745 = vsel %vm882, %v7736, %v7738
        %7754 = vst [vmem:[#allocation14] sm:$0xff] %v7739
        %7755 = vst [vmem:[#allocation14 + $0x8] sm:$0xff] %v7740
        %7756 = vst [vmem:[#allocation14 + $0x10] sm:$0xff] %v7741
        %7757 = vst [vmem:[#allocation14 + $0x18] sm:$0xff] %v7742
        %7758 = vst [vmem:[#allocation14 + $0x20] sm:$0xff] %v7743
        %7759 = vst [vmem:[#allocation14 + $0x28] sm:$0xff] %v7744
        %7760 = vst [vmem:[#allocation14 + $0x30] sm:$0xff] %v7745
        %7761 = vst.msk [vmem:[#allocation14 + $0x38] sm:$0xff] %vm796, %v7738
        %v7762 = vld [vmem:[#allocation13] sm:$0xff]
        %v7763 = vld [vmem:[#allocation13 + $0x8] sm:$0xff]
        %v7764 = vld [vmem:[#allocation13 + $0x10] sm:$0xff]
        %v7765 = vld [vmem:[#allocation13 + $0x18] sm:$0xff]
        %v7766 = vld [vmem:[#allocation13 + $0x20] sm:$0xff]
        %v7767 = vld [vmem:[#allocation13 + $0x28] sm:$0xff]
        %v7768 = vld [vmem:[#allocation13 + $0x30] sm:$0xff]
        %v7769 = vld [vmem:[#allocation13 + $0x38] sm:$0xff]
        %v7770 = vld [vmem:[#allocation13 + $0x40] sm:$0xff]
        %v7771 = vld [vmem:[#allocation13 + $0x48] sm:$0xff]
        %v7772 = vld [vmem:[#allocation13 + $0x50] sm:$0xff]
        %v7773 = vld [vmem:[#allocation13 + $0x58] sm:$0xff]
        %v7774 = vld [vmem:[#allocation13 + $0x60] sm:$0xff]
        %v7775 = vld [vmem:[#allocation13 + $0x68] sm:$0xff]
        %v7776 = vld [vmem:[#allocation13 + $0x70] sm:$0xff]
        %v7777 = vld [vmem:[#allocation13 + $0x78] sm:$0xff]
        %v7778 = vpack.c.bf16 %v7770, %v7762
        %v7779 = vpack.c.bf16 %v7771, %v7763
        %v7780 = vpack.c.bf16 %v7772, %v7764
        %v7781 = vpack.c.bf16 %v7773, %v7765
        %v7782 = vpack.c.bf16 %v7774, %v7766
        %v7783 = vpack.c.bf16 %v7775, %v7767
        %v7784 = vpack.c.bf16 %v7776, %v7768
        %v7785 = vpack.c.bf16 %v7777, %v7769
        %7794 = vrot.lane.b32.xlu0 %v7778, 126
        %v7795 = vpop.permute.xlu0 %7794
        %7796 = vrot.lane.b32.xlu0 %v7779, 126
        %v7797 = vpop.permute.xlu0 %7796
        %7798 = vrot.lane.b32.xlu0 %v7780, 126
        %v7799 = vpop.permute.xlu0 %7798
        %7800 = vrot.lane.b32.xlu0 %v7781, 126
        %v7801 = vpop.permute.xlu0 %7800
        %7802 = vrot.lane.b32.xlu0 %v7782, 126
        %v7803 = vpop.permute.xlu0 %7802
        %7804 = vrot.lane.b32.xlu0 %v7783, 126
        %v7805 = vpop.permute.xlu0 %7804
        %7806 = vrot.lane.b32.xlu0 %v7784, 126
        %v7807 = vpop.permute.xlu0 %7806
        %7808 = vrot.lane.b32.xlu0 %v7785, 126
        %v7809 = vpop.permute.xlu0 %7808
        %v7810 = vsel %vm1017, %v7795, %v7797
        %v7811 = vsel %vm1017, %v7797, %v7799
        %v7812 = vsel %vm1017, %v7799, %v7801
        %v7813 = vsel %vm1017, %v7801, %v7803
        %v7814 = vsel %vm1017, %v7803, %v7805
        %v7815 = vsel %vm1017, %v7805, %v7807
        %v7816 = vsel %vm1017, %v7807, %v7809
        %7825 = vst [vmem:[#allocation14 + $0x40] sm:$0xff] %v7810
        %7826 = vst [vmem:[#allocation14 + $0x48] sm:$0xff] %v7811
        %7827 = vst [vmem:[#allocation14 + $0x50] sm:$0xff] %v7812
        %7828 = vst [vmem:[#allocation14 + $0x58] sm:$0xff] %v7813
        %7829 = vst [vmem:[#allocation14 + $0x60] sm:$0xff] %v7814
        %7830 = vst [vmem:[#allocation14 + $0x68] sm:$0xff] %v7815
        %7831 = vst [vmem:[#allocation14 + $0x70] sm:$0xff] %v7816
        %7832 = vst.msk [vmem:[#allocation14 + $0x78] sm:$0xff] %vm796, %v7809
        %v7833 = vld [vmem:[#allocation13] sm:$0xff]
        %v7834 = vld [vmem:[#allocation13 + $0x8] sm:$0xff]
        %v7835 = vld [vmem:[#allocation13 + $0x10] sm:$0xff]
        %v7836 = vld [vmem:[#allocation13 + $0x18] sm:$0xff]
        %v7837 = vld [vmem:[#allocation13 + $0x20] sm:$0xff]
        %v7838 = vld [vmem:[#allocation13 + $0x28] sm:$0xff]
        %v7839 = vld [vmem:[#allocation13 + $0x30] sm:$0xff]
        %v7840 = vld [vmem:[#allocation13 + $0x38] sm:$0xff]
        %v7841 = vld [vmem:[#allocation13 + $0x40] sm:$0xff]
        %v7842 = vld [vmem:[#allocation13 + $0x48] sm:$0xff]
        %v7843 = vld [vmem:[#allocation13 + $0x50] sm:$0xff]
        %v7844 = vld [vmem:[#allocation13 + $0x58] sm:$0xff]
        %v7845 = vld [vmem:[#allocation13 + $0x60] sm:$0xff]
        %v7846 = vld [vmem:[#allocation13 + $0x68] sm:$0xff]
        %v7847 = vld [vmem:[#allocation13 + $0x70] sm:$0xff]
        %v7848 = vld [vmem:[#allocation13 + $0x78] sm:$0xff]
        %v7849 = vpack.c.bf16 %v7841, %v7833
        %v7850 = vpack.c.bf16 %v7842, %v7834
        %v7851 = vpack.c.bf16 %v7843, %v7835
        %v7852 = vpack.c.bf16 %v7844, %v7836
        %v7853 = vpack.c.bf16 %v7845, %v7837
        %v7854 = vpack.c.bf16 %v7846, %v7838
        %v7855 = vpack.c.bf16 %v7847, %v7839
        %v7856 = vpack.c.bf16 %v7848, %v7840
        %7865 = vrot.lane.b32.xlu0 %v7849, 125
        %v7866 = vpop.permute.xlu0 %7865
        %7867 = vrot.lane.b32.xlu0 %v7850, 125
        %v7868 = vpop.permute.xlu0 %7867
        %7869 = vrot.lane.b32.xlu0 %v7851, 125
        %v7870 = vpop.permute.xlu0 %7869
        %7871 = vrot.lane.b32.xlu0 %v7852, 125
        %v7872 = vpop.permute.xlu0 %7871
        %7873 = vrot.lane.b32.xlu0 %v7853, 125
        %v7874 = vpop.permute.xlu0 %7873
        %7875 = vrot.lane.b32.xlu0 %v7854, 125
        %v7876 = vpop.permute.xlu0 %7875
        %7877 = vrot.lane.b32.xlu0 %v7855, 125
        %v7878 = vpop.permute.xlu0 %7877
        %7879 = vrot.lane.b32.xlu0 %v7856, 125
        %v7880 = vpop.permute.xlu0 %7879
        %v7881 = vsel %vm1142, %v7866, %v7868
        %v7882 = vsel %vm1142, %v7868, %v7870
        %v7883 = vsel %vm1142, %v7870, %v7872
        %v7884 = vsel %vm1142, %v7872, %v7874
        %v7885 = vsel %vm1142, %v7874, %v7876
        %v7886 = vsel %vm1142, %v7876, %v7878
        %v7887 = vsel %vm1142, %v7878, %v7880
        %7896 = vst [vmem:[#allocation14 + $0x80] sm:$0xff] %v7881
        %7897 = vst [vmem:[#allocation14 + $0x88] sm:$0xff] %v7882
        %7898 = vst [vmem:[#allocation14 + $0x90] sm:$0xff] %v7883
        %7899 = vst [vmem:[#allocation14 + $0x98] sm:$0xff] %v7884
        %7900 = vst [vmem:[#allocation14 + $0xa0] sm:$0xff] %v7885
        %7901 = vst [vmem:[#allocation14 + $0xa8] sm:$0xff] %v7886
        %7902 = vst [vmem:[#allocation14 + $0xb0] sm:$0xff] %v7887
        %7903 = vst.msk [vmem:[#allocation14 + $0xb8] sm:$0xff] %vm796, %v7880
        %v7904 = vld [vmem:[#allocation13] sm:$0xff]
        %v7905 = vld [vmem:[#allocation13 + $0x8] sm:$0xff]
        %v7906 = vld [vmem:[#allocation13 + $0x10] sm:$0xff]
        %v7907 = vld [vmem:[#allocation13 + $0x18] sm:$0xff]
        %v7908 = vld [vmem:[#allocation13 + $0x20] sm:$0xff]
        %v7909 = vld [vmem:[#allocation13 + $0x28] sm:$0xff]
        %v7910 = vld [vmem:[#allocation13 + $0x30] sm:$0xff]
        %v7911 = vld [vmem:[#allocation13 + $0x38] sm:$0xff]
        %v7912 = vld [vmem:[#allocation13 + $0x40] sm:$0xff]
        %v7913 = vld [vmem:[#allocation13 + $0x48] sm:$0xff]
        %v7914 = vld [vmem:[#allocation13 + $0x50] sm:$0xff]
        %v7915 = vld [vmem:[#allocation13 + $0x58] sm:$0xff]
        %v7916 = vld [vmem:[#allocation13 + $0x60] sm:$0xff]
        %v7917 = vld [vmem:[#allocation13 + $0x68] sm:$0xff]
        %v7918 = vld [vmem:[#allocation13 + $0x70] sm:$0xff]
        %v7919 = vld [vmem:[#allocation13 + $0x78] sm:$0xff]
        %v7920 = vpack.c.bf16 %v7912, %v7904
        %v7921 = vpack.c.bf16 %v7913, %v7905
        %v7922 = vpack.c.bf16 %v7914, %v7906
        %v7923 = vpack.c.bf16 %v7915, %v7907
        %v7924 = vpack.c.bf16 %v7916, %v7908
        %v7925 = vpack.c.bf16 %v7917, %v7909
        %v7926 = vpack.c.bf16 %v7918, %v7910
        %v7927 = vpack.c.bf16 %v7919, %v7911
        %7936 = vrot.lane.b32.xlu0 %v7920, 97
        %v7937 = vpop.permute.xlu0 %7936
        %7938 = vrot.lane.b32.xlu0 %v7921, 97
        %v7939 = vpop.permute.xlu0 %7938
        %7940 = vrot.lane.b32.xlu0 %v7922, 97
        %v7941 = vpop.permute.xlu0 %7940
        %7942 = vrot.lane.b32.xlu0 %v7923, 97
        %v7943 = vpop.permute.xlu0 %7942
        %7944 = vrot.lane.b32.xlu0 %v7924, 97
        %v7945 = vpop.permute.xlu0 %7944
        %7946 = vrot.lane.b32.xlu0 %v7925, 97
        %v7947 = vpop.permute.xlu0 %7946
        %7948 = vrot.lane.b32.xlu0 %v7926, 97
        %v7949 = vpop.permute.xlu0 %7948
        %7950 = vrot.lane.b32.xlu0 %v7927, 97
        %v7951 = vpop.permute.xlu0 %7950
        %v7952 = vsel %vm1285, %v7937, %v7939
        %v7953 = vsel %vm1285, %v7939, %v7941
        %v7954 = vsel %vm1285, %v7941, %v7943
        %v7955 = vsel %vm1285, %v7943, %v7945
        %v7956 = vsel %vm1285, %v7945, %v7947
        %v7957 = vsel %vm1285, %v7947, %v7949
        %v7958 = vsel %vm1285, %v7949, %v7951
        %7967 = vst [vmem:[#allocation14 + $0xc0] sm:$0xff] %v7952
        %7968 = vst [vmem:[#allocation14 + $0xc8] sm:$0xff] %v7953
        %7969 = vst [vmem:[#allocation14 + $0xd0] sm:$0xff] %v7954
        %7970 = vst [vmem:[#allocation14 + $0xd8] sm:$0xff] %v7955
        %7971 = vst [vmem:[#allocation14 + $0xe0] sm:$0xff] %v7956
        %7972 = vst [vmem:[#allocation14 + $0xe8] sm:$0xff] %v7957
        %7973 = vst [vmem:[#allocation14 + $0xf0] sm:$0xff] %v7958
        %7974 = vst.msk [vmem:[#allocation14 + $0xf8] sm:$0xff] %vm796, %v7951
        %v7975 = vld [vmem:[#allocation13] sm:$0xff]
        %v7976 = vld [vmem:[#allocation13 + $0x8] sm:$0xff]
        %v7977 = vld [vmem:[#allocation13 + $0x10] sm:$0xff]
        %v7978 = vld [vmem:[#allocation13 + $0x18] sm:$0xff]
        %v7979 = vld [vmem:[#allocation13 + $0x20] sm:$0xff]
        %v7980 = vld [vmem:[#allocation13 + $0x28] sm:$0xff]
        %v7981 = vld [vmem:[#allocation13 + $0x30] sm:$0xff]
        %v7982 = vld [vmem:[#allocation13 + $0x38] sm:$0xff]
        %v7983 = vld [vmem:[#allocation13 + $0x40] sm:$0xff]
        %v7984 = vld [vmem:[#allocation13 + $0x48] sm:$0xff]
        %v7985 = vld [vmem:[#allocation13 + $0x50] sm:$0xff]
        %v7986 = vld [vmem:[#allocation13 + $0x58] sm:$0xff]
        %v7987 = vld [vmem:[#allocation13 + $0x60] sm:$0xff]
        %v7988 = vld [vmem:[#allocation13 + $0x68] sm:$0xff]
        %v7989 = vld [vmem:[#allocation13 + $0x70] sm:$0xff]
        %v7990 = vld [vmem:[#allocation13 + $0x78] sm:$0xff]
        %v7991 = vpack.c.bf16 %v7983, %v7975
        %v7992 = vpack.c.bf16 %v7984, %v7976
        %v7993 = vpack.c.bf16 %v7985, %v7977
        %v7994 = vpack.c.bf16 %v7986, %v7978
        %v7995 = vpack.c.bf16 %v7987, %v7979
        %v7996 = vpack.c.bf16 %v7988, %v7980
        %v7997 = vpack.c.bf16 %v7989, %v7981
        %v7998 = vpack.c.bf16 %v7990, %v7982
        %8007 = vrot.lane.b32.xlu0 %v7991, 96
        %v8008 = vpop.permute.xlu0 %8007
        %8009 = vrot.lane.b32.xlu0 %v7992, 96
        %v8010 = vpop.permute.xlu0 %8009
        %8011 = vrot.lane.b32.xlu0 %v7993, 96
        %v8012 = vpop.permute.xlu0 %8011
        %8013 = vrot.lane.b32.xlu0 %v7994, 96
        %v8014 = vpop.permute.xlu0 %8013
        %8015 = vrot.lane.b32.xlu0 %v7995, 96
        %v8016 = vpop.permute.xlu0 %8015
        %8017 = vrot.lane.b32.xlu0 %v7996, 96
        %v8018 = vpop.permute.xlu0 %8017
        %8019 = vrot.lane.b32.xlu0 %v7997, 96
        %v8020 = vpop.permute.xlu0 %8019
        %8021 = vrot.lane.b32.xlu0 %v7998, 96
        %v8022 = vpop.permute.xlu0 %8021
        %v8023 = vsel %vm1410, %v8008, %v8010
        %v8024 = vsel %vm1410, %v8010, %v8012
        %v8025 = vsel %vm1410, %v8012, %v8014
        %v8026 = vsel %vm1410, %v8014, %v8016
        %v8027 = vsel %vm1410, %v8016, %v8018
        %v8028 = vsel %vm1410, %v8018, %v8020
        %v8029 = vsel %vm1410, %v8020, %v8022
        %8038 = vst [vmem:[#allocation14 + $0x100] sm:$0xff] %v8023
        %8039 = vst [vmem:[#allocation14 + $0x108] sm:$0xff] %v8024
        %8040 = vst [vmem:[#allocation14 + $0x110] sm:$0xff] %v8025
        %8041 = vst [vmem:[#allocation14 + $0x118] sm:$0xff] %v8026
        %8042 = vst [vmem:[#allocation14 + $0x120] sm:$0xff] %v8027
        %8043 = vst [vmem:[#allocation14 + $0x128] sm:$0xff] %v8028
        %8044 = vst [vmem:[#allocation14 + $0x130] sm:$0xff] %v8029
        %8045 = vst.msk [vmem:[#allocation14 + $0x138] sm:$0xff] %vm796, %v8022
        %v8046 = vld [vmem:[#allocation13] sm:$0xff]
        %v8047 = vld [vmem:[#allocation13 + $0x8] sm:$0xff]
        %v8048 = vld [vmem:[#allocation13 + $0x10] sm:$0xff]
        %v8049 = vld [vmem:[#allocation13 + $0x18] sm:$0xff]
        %v8050 = vld [vmem:[#allocation13 + $0x20] sm:$0xff]
        %v8051 = vld [vmem:[#allocation13 + $0x28] sm:$0xff]
        %v8052 = vld [vmem:[#allocation13 + $0x30] sm:$0xff]
        %v8053 = vld [vmem:[#allocation13 + $0x38] sm:$0xff]
        %v8054 = vld [vmem:[#allocation13 + $0x40] sm:$0xff]
        %v8055 = vld [vmem:[#allocation13 + $0x48] sm:$0xff]
        %v8056 = vld [vmem:[#allocation13 + $0x50] sm:$0xff]
        %v8057 = vld [vmem:[#allocation13 + $0x58] sm:$0xff]
        %v8058 = vld [vmem:[#allocation13 + $0x60] sm:$0xff]
        %v8059 = vld [vmem:[#allocation13 + $0x68] sm:$0xff]
        %v8060 = vld [vmem:[#allocation13 + $0x70] sm:$0xff]
        %v8061 = vld [vmem:[#allocation13 + $0x78] sm:$0xff]
        %v8062 = vpack.c.bf16 %v8054, %v8046
        %v8063 = vpack.c.bf16 %v8055, %v8047
        %v8064 = vpack.c.bf16 %v8056, %v8048
        %v8065 = vpack.c.bf16 %v8057, %v8049
        %v8066 = vpack.c.bf16 %v8058, %v8050
        %v8067 = vpack.c.bf16 %v8059, %v8051
        %v8068 = vpack.c.bf16 %v8060, %v8052
        %v8069 = vpack.c.bf16 %v8061, %v8053
        %8078 = vrot.lane.b32.xlu0 %v8062, 95
        %v8079 = vpop.permute.xlu0 %8078
        %8080 = vrot.lane.b32.xlu0 %v8063, 95
        %v8081 = vpop.permute.xlu0 %8080
        %8082 = vrot.lane.b32.xlu0 %v8064, 95
        %v8083 = vpop.permute.xlu0 %8082
        %8084 = vrot.lane.b32.xlu0 %v8065, 95
        %v8085 = vpop.permute.xlu0 %8084
        %8086 = vrot.lane.b32.xlu0 %v8066, 95
        %v8087 = vpop.permute.xlu0 %8086
        %8088 = vrot.lane.b32.xlu0 %v8067, 95
        %v8089 = vpop.permute.xlu0 %8088
        %8090 = vrot.lane.b32.xlu0 %v8068, 95
        %v8091 = vpop.permute.xlu0 %8090
        %8092 = vrot.lane.b32.xlu0 %v8069, 95
        %v8093 = vpop.permute.xlu0 %8092
        %v8094 = vsel %vm1553, %v8079, %v8081
        %v8095 = vsel %vm1553, %v8081, %v8083
        %v8096 = vsel %vm1553, %v8083, %v8085
        %v8097 = vsel %vm1553, %v8085, %v8087
        %v8098 = vsel %vm1553, %v8087, %v8089
        %v8099 = vsel %vm1553, %v8089, %v8091
        %v8100 = vsel %vm1553, %v8091, %v8093
        %8109 = vst [vmem:[#allocation14 + $0x140] sm:$0xff] %v8094
        %8110 = vst [vmem:[#allocation14 + $0x148] sm:$0xff] %v8095
        %8111 = vst [vmem:[#allocation14 + $0x150] sm:$0xff] %v8096
        %8112 = vst [vmem:[#allocation14 + $0x158] sm:$0xff] %v8097
        %8113 = vst [vmem:[#allocation14 + $0x160] sm:$0xff] %v8098
        %8114 = vst [vmem:[#allocation14 + $0x168] sm:$0xff] %v8099
        %8115 = vst [vmem:[#allocation14 + $0x170] sm:$0xff] %v8100
        %8116 = vst.msk [vmem:[#allocation14 + $0x178] sm:$0xff] %vm796, %v8093
        %v8117 = vld [vmem:[#allocation13] sm:$0xff]
        %v8118 = vld [vmem:[#allocation13 + $0x8] sm:$0xff]
        %v8119 = vld [vmem:[#allocation13 + $0x10] sm:$0xff]
        %v8120 = vld [vmem:[#allocation13 + $0x18] sm:$0xff]
        %v8121 = vld [vmem:[#allocation13 + $0x20] sm:$0xff]
        %v8122 = vld [vmem:[#allocation13 + $0x28] sm:$0xff]
        %v8123 = vld [vmem:[#allocation13 + $0x30] sm:$0xff]
        %v8124 = vld [vmem:[#allocation13 + $0x38] sm:$0xff]
        %v8125 = vld [vmem:[#allocation13 + $0x40] sm:$0xff]
        %v8126 = vld [vmem:[#allocation13 + $0x48] sm:$0xff]
        %v8127 = vld [vmem:[#allocation13 + $0x50] sm:$0xff]
        %v8128 = vld [vmem:[#allocation13 + $0x58] sm:$0xff]
        %v8129 = vld [vmem:[#allocation13 + $0x60] sm:$0xff]
        %v8130 = vld [vmem:[#allocation13 + $0x68] sm:$0xff]
        %v8131 = vld [vmem:[#allocation13 + $0x70] sm:$0xff]
        %v8132 = vld [vmem:[#allocation13 + $0x78] sm:$0xff]
        %v8133 = vpack.c.bf16 %v8125, %v8117
        %v8134 = vpack.c.bf16 %v8126, %v8118
        %v8135 = vpack.c.bf16 %v8127, %v8119
        %v8136 = vpack.c.bf16 %v8128, %v8120
        %v8137 = vpack.c.bf16 %v8129, %v8121
        %v8138 = vpack.c.bf16 %v8130, %v8122
        %v8139 = vpack.c.bf16 %v8131, %v8123
        %v8140 = vpack.c.bf16 %v8132, %v8124
        %8149 = vrot.lane.b32.xlu0 %v8133, 67
        %v8150 = vpop.permute.xlu0 %8149
        %8151 = vrot.lane.b32.xlu0 %v8134, 67
        %v8152 = vpop.permute.xlu0 %8151
        %8153 = vrot.lane.b32.xlu0 %v8135, 67
        %v8154 = vpop.permute.xlu0 %8153
        %8155 = vrot.lane.b32.xlu0 %v8136, 67
        %v8156 = vpop.permute.xlu0 %8155
        %8157 = vrot.lane.b32.xlu0 %v8137, 67
        %v8158 = vpop.permute.xlu0 %8157
        %8159 = vrot.lane.b32.xlu0 %v8138, 67
        %v8160 = vpop.permute.xlu0 %8159
        %8161 = vrot.lane.b32.xlu0 %v8139, 67
        %v8162 = vpop.permute.xlu0 %8161
        %8163 = vrot.lane.b32.xlu0 %v8140, 67
        %v8164 = vpop.permute.xlu0 %8163
        %v8165 = vsel %vm1678, %v8150, %v8152
        %v8166 = vsel %vm1678, %v8152, %v8154
        %v8167 = vsel %vm1678, %v8154, %v8156
        %v8168 = vsel %vm1678, %v8156, %v8158
        %v8169 = vsel %vm1678, %v8158, %v8160
        %v8170 = vsel %vm1678, %v8160, %v8162
        %v8171 = vsel %vm1678, %v8162, %v8164
        %8180 = vst [vmem:[#allocation14 + $0x180] sm:$0xff] %v8165
        %8181 = vst [vmem:[#allocation14 + $0x188] sm:$0xff] %v8166
        %8182 = vst [vmem:[#allocation14 + $0x190] sm:$0xff] %v8167
        %8183 = vst [vmem:[#allocation14 + $0x198] sm:$0xff] %v8168
        %8184 = vst [vmem:[#allocation14 + $0x1a0] sm:$0xff] %v8169
        %8185 = vst [vmem:[#allocation14 + $0x1a8] sm:$0xff] %v8170
        %8186 = vst [vmem:[#allocation14 + $0x1b0] sm:$0xff] %v8171
        %8187 = vst.msk [vmem:[#allocation14 + $0x1b8] sm:$0xff] %vm796, %v8164
        %v8188 = vld [vmem:[#allocation13] sm:$0xff]
        %v8189 = vld [vmem:[#allocation13 + $0x8] sm:$0xff]
        %v8190 = vld [vmem:[#allocation13 + $0x10] sm:$0xff]
        %v8191 = vld [vmem:[#allocation13 + $0x18] sm:$0xff]
        %v8192 = vld [vmem:[#allocation13 + $0x20] sm:$0xff]
        %v8193 = vld [vmem:[#allocation13 + $0x28] sm:$0xff]
        %v8194 = vld [vmem:[#allocation13 + $0x30] sm:$0xff]
        %v8195 = vld [vmem:[#allocation13 + $0x38] sm:$0xff]
        %v8196 = vld [vmem:[#allocation13 + $0x40] sm:$0xff]
        %v8197 = vld [vmem:[#allocation13 + $0x48] sm:$0xff]
        %v8198 = vld [vmem:[#allocation13 + $0x50] sm:$0xff]
        %v8199 = vld [vmem:[#allocation13 + $0x58] sm:$0xff]
        %v8200 = vld [vmem:[#allocation13 + $0x60] sm:$0xff]
        %v8201 = vld [vmem:[#allocation13 + $0x68] sm:$0xff]
        %v8202 = vld [vmem:[#allocation13 + $0x70] sm:$0xff]
        %v8203 = vld [vmem:[#allocation13 + $0x78] sm:$0xff]
        %v8204 = vpack.c.bf16 %v8196, %v8188
        %v8205 = vpack.c.bf16 %v8197, %v8189
        %v8206 = vpack.c.bf16 %v8198, %v8190
        %v8207 = vpack.c.bf16 %v8199, %v8191
        %v8208 = vpack.c.bf16 %v8200, %v8192
        %v8209 = vpack.c.bf16 %v8201, %v8193
        %v8210 = vpack.c.bf16 %v8202, %v8194
        %v8211 = vpack.c.bf16 %v8203, %v8195
        %8220 = vrot.lane.b32.xlu0 %v8204, 66
        %v8221 = vpop.permute.xlu0 %8220
        %8222 = vrot.lane.b32.xlu0 %v8205, 66
        %v8223 = vpop.permute.xlu0 %8222
        %8224 = vrot.lane.b32.xlu0 %v8206, 66
        %v8225 = vpop.permute.xlu0 %8224
        %8226 = vrot.lane.b32.xlu0 %v8207, 66
        %v8227 = vpop.permute.xlu0 %8226
        %8228 = vrot.lane.b32.xlu0 %v8208, 66
        %v8229 = vpop.permute.xlu0 %8228
        %8230 = vrot.lane.b32.xlu0 %v8209, 66
        %v8231 = vpop.permute.xlu0 %8230
        %8232 = vrot.lane.b32.xlu0 %v8210, 66
        %v8233 = vpop.permute.xlu0 %8232
        %8234 = vrot.lane.b32.xlu0 %v8211, 66
        %v8235 = vpop.permute.xlu0 %8234
        %v8236 = vsel %vm1821, %v8221, %v8223
        %v8237 = vsel %vm1821, %v8223, %v8225
        %v8238 = vsel %vm1821, %v8225, %v8227
        %v8239 = vsel %vm1821, %v8227, %v8229
        %v8240 = vsel %vm1821, %v8229, %v8231
        %v8241 = vsel %vm1821, %v8231, %v8233
        %v8242 = vsel %vm1821, %v8233, %v8235
        %8251 = vst [vmem:[#allocation14 + $0x1c0] sm:$0xff] %v8236
        %8252 = vst [vmem:[#allocation14 + $0x1c8] sm:$0xff] %v8237
        %8253 = vst [vmem:[#allocation14 + $0x1d0] sm:$0xff] %v8238
        %8254 = vst [vmem:[#allocation14 + $0x1d8] sm:$0xff] %v8239
        %8255 = vst [vmem:[#allocation14 + $0x1e0] sm:$0xff] %v8240
        %8256 = vst [vmem:[#allocation14 + $0x1e8] sm:$0xff] %v8241
        %8257 = vst [vmem:[#allocation14 + $0x1f0] sm:$0xff] %v8242
        %8258 = vst.msk [vmem:[#allocation14 + $0x1f8] sm:$0xff] %vm796, %v8235
        %v8259 = vld [vmem:[#allocation13] sm:$0xff]
        %v8260 = vld [vmem:[#allocation13 + $0x8] sm:$0xff]
        %v8261 = vld [vmem:[#allocation13 + $0x10] sm:$0xff]
        %v8262 = vld [vmem:[#allocation13 + $0x18] sm:$0xff]
        %v8263 = vld [vmem:[#allocation13 + $0x20] sm:$0xff]
        %v8264 = vld [vmem:[#allocation13 + $0x28] sm:$0xff]
        %v8265 = vld [vmem:[#allocation13 + $0x30] sm:$0xff]
        %v8266 = vld [vmem:[#allocation13 + $0x38] sm:$0xff]
        %v8267 = vld [vmem:[#allocation13 + $0x40] sm:$0xff]
        %v8268 = vld [vmem:[#allocation13 + $0x48] sm:$0xff]
        %v8269 = vld [vmem:[#allocation13 + $0x50] sm:$0xff]
        %v8270 = vld [vmem:[#allocation13 + $0x58] sm:$0xff]
        %v8271 = vld [vmem:[#allocation13 + $0x60] sm:$0xff]
        %v8272 = vld [vmem:[#allocation13 + $0x68] sm:$0xff]
        %v8273 = vld [vmem:[#allocation13 + $0x70] sm:$0xff]
        %v8274 = vld [vmem:[#allocation13 + $0x78] sm:$0xff]
        %v8275 = vpack.c.bf16 %v8267, %v8259
        %v8276 = vpack.c.bf16 %v8268, %v8260
        %v8277 = vpack.c.bf16 %v8269, %v8261
        %v8278 = vpack.c.bf16 %v8270, %v8262
        %v8279 = vpack.c.bf16 %v8271, %v8263
        %v8280 = vpack.c.bf16 %v8272, %v8264
        %v8281 = vpack.c.bf16 %v8273, %v8265
        %v8282 = vpack.c.bf16 %v8274, %v8266
        %8291 = vrot.lane.b32.xlu0 %v8275, 65
        %v8292 = vpop.permute.xlu0 %8291
        %8293 = vrot.lane.b32.xlu0 %v8276, 65
        %v8294 = vpop.permute.xlu0 %8293
        %8295 = vrot.lane.b32.xlu0 %v8277, 65
        %v8296 = vpop.permute.xlu0 %8295
        %8297 = vrot.lane.b32.xlu0 %v8278, 65
        %v8298 = vpop.permute.xlu0 %8297
        %8299 = vrot.lane.b32.xlu0 %v8279, 65
        %v8300 = vpop.permute.xlu0 %8299
        %8301 = vrot.lane.b32.xlu0 %v8280, 65
        %v8302 = vpop.permute.xlu0 %8301
        %8303 = vrot.lane.b32.xlu0 %v8281, 65
        %v8304 = vpop.permute.xlu0 %8303
        %8305 = vrot.lane.b32.xlu0 %v8282, 65
        %v8306 = vpop.permute.xlu0 %8305
        %v8307 = vsel %vm1946, %v8292, %v8294
        %v8308 = vsel %vm1946, %v8294, %v8296
        %v8309 = vsel %vm1946, %v8296, %v8298
        %v8310 = vsel %vm1946, %v8298, %v8300
        %v8311 = vsel %vm1946, %v8300, %v8302
        %v8312 = vsel %vm1946, %v8302, %v8304
        %v8313 = vsel %vm1946, %v8304, %v8306
        %8322 = vst [vmem:[#allocation14 + $0x200] sm:$0xff] %v8307
        %8323 = vst [vmem:[#allocation14 + $0x208] sm:$0xff] %v8308
        %8324 = vst [vmem:[#allocation14 + $0x210] sm:$0xff] %v8309
        %8325 = vst [vmem:[#allocation14 + $0x218] sm:$0xff] %v8310
        %8326 = vst [vmem:[#allocation14 + $0x220] sm:$0xff] %v8311
        %8327 = vst [vmem:[#allocation14 + $0x228] sm:$0xff] %v8312
        %8328 = vst [vmem:[#allocation14 + $0x230] sm:$0xff] %v8313
        %8329 = vst.msk [vmem:[#allocation14 + $0x238] sm:$0xff] %vm796, %v8306
        %v8330 = vld [vmem:[%s7] sm:$0x3]
        %v8331 = vld [vmem:[#allocation14] sm:$0xff]
        %v8332 = vld [vmem:[#allocation14 + $0x8] sm:$0xff]
        %v8333 = vld [vmem:[#allocation14 + $0x10] sm:$0xff]
        %v8334 = vld [vmem:[#allocation14 + $0x18] sm:$0xff]
        %v8335 = vld [vmem:[#allocation14 + $0x20] sm:$0xff]
        %v8336 = vld [vmem:[#allocation14 + $0x28] sm:$0xff]
        %v8337 = vld [vmem:[#allocation14 + $0x30] sm:$0xff]
        %v8338 = vld [vmem:[#allocation14 + $0x38] sm:$0xff]
        %v8339 = vld [vmem:[#allocation14 + $0x40] sm:$0xff]
        %v8340 = vld [vmem:[#allocation14 + $0x48] sm:$0xff]
        %v8341 = vld [vmem:[#allocation14 + $0x50] sm:$0xff]
        %v8342 = vld [vmem:[#allocation14 + $0x58] sm:$0xff]
        %v8343 = vld [vmem:[#allocation14 + $0x60] sm:$0xff]
        %v8344 = vld [vmem:[#allocation14 + $0x68] sm:$0xff]
        %v8345 = vld [vmem:[#allocation14 + $0x70] sm:$0xff]
        %v8346 = vld [vmem:[#allocation14 + $0x78] sm:$0xff]
        %v8347 = vld [vmem:[#allocation14 + $0x80] sm:$0xff]
        %v8348 = vld [vmem:[#allocation14 + $0x88] sm:$0xff]
        %v8349 = vld [vmem:[#allocation14 + $0x90] sm:$0xff]
        %v8350 = vld [vmem:[#allocation14 + $0x98] sm:$0xff]
        %v8351 = vld [vmem:[#allocation14 + $0xa0] sm:$0xff]
        %v8352 = vld [vmem:[#allocation14 + $0xa8] sm:$0xff]
        %v8353 = vld [vmem:[#allocation14 + $0xb0] sm:$0xff]
        %v8354 = vld [vmem:[#allocation14 + $0xb8] sm:$0xff]
        %v8355 = vld [vmem:[#allocation14 + $0xc0] sm:$0xff]
        %v8356 = vld [vmem:[#allocation14 + $0xc8] sm:$0xff]
        %v8357 = vld [vmem:[#allocation14 + $0xd0] sm:$0xff]
        %v8358 = vld [vmem:[#allocation14 + $0xd8] sm:$0xff]
        %v8359 = vld [vmem:[#allocation14 + $0xe0] sm:$0xff]
        %v8360 = vld [vmem:[#allocation14 + $0xe8] sm:$0xff]
        %v8361 = vld [vmem:[#allocation14 + $0xf0] sm:$0xff]
        %v8362 = vld [vmem:[#allocation14 + $0xf8] sm:$0xff]
        %v8363 = vld [vmem:[#allocation14 + $0x100] sm:$0xff]
        %v8364 = vld [vmem:[#allocation14 + $0x108] sm:$0xff]
        %v8365 = vld [vmem:[#allocation14 + $0x110] sm:$0xff]
        %v8366 = vld [vmem:[#allocation14 + $0x118] sm:$0xff]
        %v8367 = vld [vmem:[#allocation14 + $0x120] sm:$0xff]
        %v8368 = vld [vmem:[#allocation14 + $0x128] sm:$0xff]
        %v8369 = vld [vmem:[#allocation14 + $0x130] sm:$0xff]
        %v8370 = vld [vmem:[#allocation14 + $0x138] sm:$0xff]
        %v8371 = vld [vmem:[#allocation14 + $0x140] sm:$0xff]
        %v8372 = vld [vmem:[#allocation14 + $0x148] sm:$0xff]
        %v8373 = vld [vmem:[#allocation14 + $0x150] sm:$0xff]
        %v8374 = vld [vmem:[#allocation14 + $0x158] sm:$0xff]
        %v8375 = vld [vmem:[#allocation14 + $0x160] sm:$0xff]
        %v8376 = vld [vmem:[#allocation14 + $0x168] sm:$0xff]
        %v8377 = vld [vmem:[#allocation14 + $0x170] sm:$0xff]
        %v8378 = vld [vmem:[#allocation14 + $0x178] sm:$0xff]
        %v8379 = vld [vmem:[#allocation14 + $0x180] sm:$0xff]
        %v8380 = vld [vmem:[#allocation14 + $0x188] sm:$0xff]
        %v8381 = vld [vmem:[#allocation14 + $0x190] sm:$0xff]
        %v8382 = vld [vmem:[#allocation14 + $0x198] sm:$0xff]
        %v8383 = vld [vmem:[#allocation14 + $0x1a0] sm:$0xff]
        %v8384 = vld [vmem:[#allocation14 + $0x1a8] sm:$0xff]
        %v8385 = vld [vmem:[#allocation14 + $0x1b0] sm:$0xff]
        %v8386 = vld [vmem:[#allocation14 + $0x1b8] sm:$0xff]
        %v8387 = vld [vmem:[#allocation14 + $0x1c0] sm:$0xff]
        %v8388 = vld [vmem:[#allocation14 + $0x1c8] sm:$0xff]
        %v8389 = vld [vmem:[#allocation14 + $0x1d0] sm:$0xff]
        %v8390 = vld [vmem:[#allocation14 + $0x1d8] sm:$0xff]
        %v8391 = vld [vmem:[#allocation14 + $0x1e0] sm:$0xff]
        %v8392 = vld [vmem:[#allocation14 + $0x1e8] sm:$0xff]
        %v8393 = vld [vmem:[#allocation14 + $0x1f0] sm:$0xff]
        %v8394 = vld [vmem:[#allocation14 + $0x1f8] sm:$0xff]
        %v8395 = vld [vmem:[#allocation14 + $0x200] sm:$0xff]
        %v8396 = vld [vmem:[#allocation14 + $0x208] sm:$0xff]
        %v8397 = vld [vmem:[#allocation14 + $0x210] sm:$0xff]
        %v8398 = vld [vmem:[#allocation14 + $0x218] sm:$0xff]
        %v8399 = vld [vmem:[#allocation14 + $0x220] sm:$0xff]
        %v8400 = vld [vmem:[#allocation14 + $0x228] sm:$0xff]
        %v8401 = vld [vmem:[#allocation14 + $0x230] sm:$0xff]
        %v8402 = vld [vmem:[#allocation14 + $0x238] sm:$0xff]
        %v8403 = vld [vmem:[#allocation15] sm:$0x1]
        %8405 = vset.pattern.permute.xlu0 0
        %8406 = vperm.xlu0 %8405, %v8403
        %v8407 = vpop.permute.xlu0 %8406
        %v8409 = vlaneseq
        %v8410 = vshrl.u32 %v8409, 7
        %v8411 = vsub.s32 0, %v8410
        %v8412 = vrot.slane %v8407, %v8411
        %v8415 = vunpack.c.l.s4 1966171168
        %v8416 = vunpack.c.0.s8 %v8415
        %v8417 = vlaneseq
        %v8418 = vshrl.u32 %v8417, 7
        %v8419 = vsub.s32 %v8416, %v8418
        %v8420 = vrot.slane %v8330, %v8419
        %v8421 = vcombine.high %v8420, %v8420
        %v8423 = vunpack.c.l.s4 1966171168
        %v8424 = vunpack.c.0.s8 %v8423
        %v8425 = vlaneseq
        %v8426 = vshrl.u32 %v8425, 7
        %v8427 = vsub.s32 %v8424, %v8426
        %v8428 = vrot.slane %v8420, %v8427
        %v8430 = vunpack.c.l.s4 1966171168
        %v8431 = vunpack.c.0.s8 %v8430
        %v8432 = vlaneseq
        %v8433 = vshrl.u32 %v8432, 7
        %v8434 = vsub.s32 %v8431, %v8433
        %v8435 = vrot.slane %v8421, %v8434
        %v8438 = vsel %vm4439, %v8435, 0
        %8440 = vmatprep.subr.bf16.mxu0 %v8332
        %8441 = vmatpush1.bf16.msra.mxu0 %v8331
        %8442 = vmatprep.subr.bf16.mxu0 %v8340
        %8443 = vmatpush1.bf16.msra.mxu0 %v8339
        %8444 = vmatprep.subr.bf16.mxu0 %v8348
        %8445 = vmatpush1.bf16.msra.mxu0 %v8347
        %8446 = vmatprep.subr.bf16.mxu0 %v8356
        %8447 = vmatpush1.bf16.msra.mxu0 %v8355
        %8448 = vmatprep.subr.bf16.mxu0 %v8364
        %8449 = vmatpush1.bf16.msra.mxu0 %v8363
        %8450 = vmatprep.subr.bf16.mxu0 %v8372
        %8451 = vmatpush1.bf16.msra.mxu0 %v8371
        %8452 = vmatprep.subr.bf16.mxu0 %v8380
        %8453 = vmatpush1.bf16.msra.mxu0 %v8379
        %8454 = vmatprep.subr.bf16.mxu0 %v8388
        %8455 = vmatpush1.bf16.msra.mxu0 %v8387
        %8456 = vmatprep.subr.bf16.mxu0 %v8396
        %8457 = vmatpush1.bf16.msra.mxu0 %v8395
        %8458 = vmatprep.subr.bf16.mxu0 0
        %8459 = vmatpush1.bf16.msra.mxu0 0
        %8460 = vmatprep.subr.bf16.mxu0 0
        %8461 = vmatpush1.bf16.msra.mxu0 0
        %8462 = vmatprep.subr.bf16.mxu0 0
        %8463 = vmatpush1.bf16.msra.mxu0 0
        %8464 = vmatprep.subr.bf16.mxu0 0
        %8465 = vmatpush1.bf16.msra.mxu0 0
        %8466 = vmatprep.subr.bf16.mxu0 0
        %8467 = vmatpush1.bf16.msra.mxu0 0
        %8468 = vmatprep.subr.bf16.mxu0 0
        %8469 = vmatpush1.bf16.msra.mxu0 0
        %8470 = vmatprep.subr.bf16.mxu0 0
        %8471 = vmatpush1.bf16.msra.mxu0 0
        %8472 = vmatprep.mubr.bf16.mxu0 %v8438
        %8473 = vmatmul.mubr.bf16.gmra.mrb[0].mxu0 %v8428
        %v8474 = vpop.f32.mrb[0].mxu0
        %v8475 = vadd.f32 %v8412, %v8474
        %v8476 = vpop.f32.mrb[0].mxu0
        %v8477 = vadd.f32 %v8412, %v8476
        %v8478 = vpop.f32.mrb[0].mxu0
        %v8479 = vpop.f32.mrb[0].mxu0
        %8480 = vdwg.mxu0
        %8481 = vmatprep.subr.bf16.mxu0 %v8334
        %8482 = vmatpush1.bf16.msra.mxu0 %v8333
        %8483 = vmatprep.subr.bf16.mxu0 %v8342
        %8484 = vmatpush1.bf16.msra.mxu0 %v8341
        %8485 = vmatprep.subr.bf16.mxu0 %v8350
        %8486 = vmatpush1.bf16.msra.mxu0 %v8349
        %8487 = vmatprep.subr.bf16.mxu0 %v8358
        %8488 = vmatpush1.bf16.msra.mxu0 %v8357
        %8489 = vmatprep.subr.bf16.mxu0 %v8366
        %8490 = vmatpush1.bf16.msra.mxu0 %v8365
        %8491 = vmatprep.subr.bf16.mxu0 %v8374
        %8492 = vmatpush1.bf16.msra.mxu0 %v8373
        %8493 = vmatprep.subr.bf16.mxu0 %v8382
        %8494 = vmatpush1.bf16.msra.mxu0 %v8381
        %8495 = vmatprep.subr.bf16.mxu0 %v8390
        %8496 = vmatpush1.bf16.msra.mxu0 %v8389
        %8497 = vmatprep.subr.bf16.mxu0 %v8398
        %8498 = vmatpush1.bf16.msra.mxu0 %v8397
        %8499 = vmatprep.subr.bf16.mxu0 0
        %8500 = vmatpush1.bf16.msra.mxu0 0
        %8501 = vmatprep.subr.bf16.mxu0 0
        %8502 = vmatpush1.bf16.msra.mxu0 0
        %8503 = vmatprep.subr.bf16.mxu0 0
        %8504 = vmatpush1.bf16.msra.mxu0 0
        %8505 = vmatprep.subr.bf16.mxu0 0
        %8506 = vmatpush1.bf16.msra.mxu0 0
        %8507 = vmatprep.subr.bf16.mxu0 0
        %8508 = vmatpush1.bf16.msra.mxu0 0
        %8509 = vmatprep.subr.bf16.mxu0 0
        %8510 = vmatpush1.bf16.msra.mxu0 0
        %8511 = vmatprep.subr.bf16.mxu0 0
        %8512 = vmatpush1.bf16.msra.mxu0 0
        %8513 = vmatprep.mubr.bf16.mxu0 %v8438
        %8514 = vmatmul.mubr.bf16.gmra.mrb[0].mxu0 %v8428
        %v8515 = vpop.f32.mrb[0].mxu0
        %v8516 = vadd.f32 %v8412, %v8515
        %v8517 = vpop.f32.mrb[0].mxu0
        %v8518 = vadd.f32 %v8412, %v8517
        %v8519 = vpop.f32.mrb[0].mxu0
        %v8520 = vpop.f32.mrb[0].mxu0
        %8521 = vdwg.mxu0
        %8522 = vmatprep.subr.bf16.mxu0 %v8336
        %8523 = vmatpush1.bf16.msra.mxu0 %v8335
        %8524 = vmatprep.subr.bf16.mxu0 %v8344
        %8525 = vmatpush1.bf16.msra.mxu0 %v8343
        %8526 = vmatprep.subr.bf16.mxu0 %v8352
        %8527 = vmatpush1.bf16.msra.mxu0 %v8351
        %8528 = vmatprep.subr.bf16.mxu0 %v8360
        %8529 = vmatpush1.bf16.msra.mxu0 %v8359
        %8530 = vmatprep.subr.bf16.mxu0 %v8368
        %8531 = vmatpush1.bf16.msra.mxu0 %v8367
        %8532 = vmatprep.subr.bf16.mxu0 %v8376
        %8533 = vmatpush1.bf16.msra.mxu0 %v8375
        %8534 = vmatprep.subr.bf16.mxu0 %v8384
        %8535 = vmatpush1.bf16.msra.mxu0 %v8383
        %8536 = vmatprep.subr.bf16.mxu0 %v8392
        %8537 = vmatpush1.bf16.msra.mxu0 %v8391
        %8538 = vmatprep.subr.bf16.mxu0 %v8400
        %8539 = vmatpush1.bf16.msra.mxu0 %v8399
        %8540 = vmatprep.subr.bf16.mxu0 0
        %8541 = vmatpush1.bf16.msra.mxu0 0
        %8542 = vmatprep.subr.bf16.mxu0 0
        %8543 = vmatpush1.bf16.msra.mxu0 0
        %8544 = vmatprep.subr.bf16.mxu0 0
        %8545 = vmatpush1.bf16.msra.mxu0 0
        %8546 = vmatprep.subr.bf16.mxu0 0
        %8547 = vmatpush1.bf16.msra.mxu0 0
        %8548 = vmatprep.subr.bf16.mxu0 0
        %8549 = vmatpush1.bf16.msra.mxu0 0
        %8550 = vmatprep.subr.bf16.mxu0 0
        %8551 = vmatpush1.bf16.msra.mxu0 0
        %8552 = vmatprep.subr.bf16.mxu0 0
        %8553 = vmatpush1.bf16.msra.mxu0 0
        %8554 = vmatprep.mubr.bf16.mxu0 %v8438
        %8555 = vmatmul.mubr.bf16.gmra.mrb[0].mxu0 %v8428
        %v8556 = vpop.f32.mrb[0].mxu0
        %v8557 = vadd.f32 %v8412, %v8556
        %v8558 = vpop.f32.mrb[0].mxu0
        %v8559 = vadd.f32 %v8412, %v8558
        %v8560 = vpop.f32.mrb[0].mxu0
        %v8561 = vpop.f32.mrb[0].mxu0
        %8562 = vdwg.mxu0
        %8563 = vmatprep.subr.bf16.mxu0 %v8338
        %8564 = vmatpush1.bf16.msra.mxu0 %v8337
        %8565 = vmatprep.subr.bf16.mxu0 %v8346
        %8566 = vmatpush1.bf16.msra.mxu0 %v8345
        %8567 = vmatprep.subr.bf16.mxu0 %v8354
        %8568 = vmatpush1.bf16.msra.mxu0 %v8353
        %8569 = vmatprep.subr.bf16.mxu0 %v8362
        %8570 = vmatpush1.bf16.msra.mxu0 %v8361
        %8571 = vmatprep.subr.bf16.mxu0 %v8370
        %8572 = vmatpush1.bf16.msra.mxu0 %v8369
        %8573 = vmatprep.subr.bf16.mxu0 %v8378
        %8574 = vmatpush1.bf16.msra.mxu0 %v8377
        %8575 = vmatprep.subr.bf16.mxu0 %v8386
        %8576 = vmatpush1.bf16.msra.mxu0 %v8385
        %8577 = vmatprep.subr.bf16.mxu0 %v8394
        %8578 = vmatpush1.bf16.msra.mxu0 %v8393
        %8579 = vmatprep.subr.bf16.mxu0 %v8402
        %8580 = vmatpush1.bf16.msra.mxu0 %v8401
        %8581 = vmatprep.subr.bf16.mxu0 0
        %8582 = vmatpush1.bf16.msra.mxu0 0
        %8583 = vmatprep.subr.bf16.mxu0 0
        %8584 = vmatpush1.bf16.msra.mxu0 0
        %8585 = vmatprep.subr.bf16.mxu0 0
        %8586 = vmatpush1.bf16.msra.mxu0 0
        %8587 = vmatprep.subr.bf16.mxu0 0
        %8588 = vmatpush1.bf16.msra.mxu0 0
        %8589 = vmatprep.subr.bf16.mxu0 0
        %8590 = vmatpush1.bf16.msra.mxu0 0
        %8591 = vmatprep.subr.bf16.mxu0 0
        %8592 = vmatpush1.bf16.msra.mxu0 0
        %8593 = vmatprep.subr.bf16.mxu0 0
        %8594 = vmatpush1.bf16.msra.mxu0 0
        %8595 = vmatprep.mubr.bf16.mxu0 %v8438
        %8596 = vmatmul.mubr.bf16.gmra.mrb[0].mxu0 %v8428
        %v8597 = vpop.f32.mrb[0].mxu0
        %v8598 = vadd.f32 %v8412, %v8597
        %v8599 = vpop.f32.mrb[0].mxu0
        %v8600 = vadd.f32 %v8412, %v8599
        %v8601 = vpop.f32.mrb[0].mxu0
        %v8602 = vpop.f32.mrb[0].mxu0
        %8603 = vdwg.mxu0
        %v8604 = vsub.f32 0.0, %v8475
        %v8605 = vsub.f32 0.0, %v8477
        %v8606 = vsub.f32 0.0, %v8516
        %v8607 = vsub.f32 0.0, %v8518
        %v8608 = vsub.f32 0.0, %v8557
        %v8609 = vsub.f32 0.0, %v8559
        %v8610 = vsub.f32 0.0, %v8598
        %v8611 = vsub.f32 0.0, %v8600
        %v8612 = vmul.f32 %v8604, 1.442695
        %v8613 = vpow.pop %v8612
        %v8614 = vmul.f32 %v8605, 1.442695
        %v8615 = vpow.pop %v8614
        %v8616 = vmul.f32 %v8606, 1.442695
        %v8617 = vpow.pop %v8616
        %v8618 = vmul.f32 %v8607, 1.442695
        %v8619 = vpow.pop %v8618
        %v8620 = vmul.f32 %v8608, 1.442695
        %v8621 = vpow.pop %v8620
        %v8622 = vmul.f32 %v8609, 1.442695
        %v8623 = vpow.pop %v8622
        %v8624 = vmul.f32 %v8610, 1.442695
        %v8625 = vpow.pop %v8624
        %v8626 = vmul.f32 %v8611, 1.442695
        %v8627 = vpow.pop %v8626
        %v8628 = vadd.f32 %v8613, 1.0
        %v8629 = vadd.f32 %v8615, 1.0
        %v8630 = vadd.f32 %v8617, 1.0
        %v8631 = vadd.f32 %v8619, 1.0
        %v8632 = vadd.f32 %v8621, 1.0
        %v8633 = vadd.f32 %v8623, 1.0
        %v8634 = vadd.f32 %v8625, 1.0
        %v8635 = vadd.f32 %v8627, 1.0
        %v8636 = vrcp.pop %v8628
        %v8637 = vmul.f32 1.0, %v8636
        %v8638 = vrcp.pop %v8629
        %v8639 = vmul.f32 1.0, %v8638
        %v8640 = vrcp.pop %v8630
        %v8641 = vmul.f32 1.0, %v8640
        %v8642 = vrcp.pop %v8631
        %v8643 = vmul.f32 1.0, %v8642
        %v8644 = vrcp.pop %v8632
        %v8645 = vmul.f32 1.0, %v8644
        %v8646 = vrcp.pop %v8633
        %v8647 = vmul.f32 1.0, %v8646
        %v8648 = vrcp.pop %v8634
        %v8649 = vmul.f32 1.0, %v8648
        %v8650 = vrcp.pop %v8635
        %v8651 = vmul.f32 1.0, %v8650
        %v8660 = vcombine.low %v8637, %v8639
        %v8661 = vcombine.low %v8641, %v8643
        %v8662 = vcombine.low %v8645, %v8647
        %v8663 = vcombine.low %v8649, %v8651
        %v8665 = vunpack.c.l.s4 1966171168
        %v8666 = vunpack.c.0.s8 %v8665
        %v8667 = vlaneseq
        %v8668 = vshrl.u32 %v8667, 7
        %v8669 = vsub.s32 %v8666, %v8668
        %v8670 = vrot.slane %v8660, %v8669
        %v8672 = vunpack.c.l.s4 1966171168
        %v8673 = vunpack.c.0.s8 %v8672
        %v8674 = vlaneseq
        %v8675 = vshrl.u32 %v8674, 7
        %v8676 = vsub.s32 %v8673, %v8675
        %v8677 = vrot.slane %v8661, %v8676
        %v8679 = vunpack.c.l.s4 1966171168
        %v8680 = vunpack.c.0.s8 %v8679
        %v8681 = vlaneseq
        %v8682 = vshrl.u32 %v8681, 7
        %v8683 = vsub.s32 %v8680, %v8682
        %v8684 = vrot.slane %v8662, %v8683
        %v8686 = vunpack.c.l.s4 1966171168
        %v8687 = vunpack.c.0.s8 %v8686
        %v8688 = vlaneseq
        %v8689 = vshrl.u32 %v8688, 7
        %v8690 = vsub.s32 %v8687, %v8689
        %v8691 = vrot.slane %v8663, %v8690
        %v8692 = vcombine.low %v8670, %v8677
        %v8693 = vcombine.low %v8684, %v8691
        %v8695 = vunpack.c.l.s4 1966171168
        %v8696 = vunpack.c.0.s8 %v8695
        %v8697 = vlaneseq
        %v8698 = vshrl.u32 %v8697, 7
        %v8699 = vsub.s32 %v8696, %v8698
        %v8700 = vrot.slane %v8692, %v8699
        %v8702 = vunpack.c.l.s4 1966171168
        %v8703 = vunpack.c.0.s8 %v8702
        %v8704 = vlaneseq
        %v8705 = vshrl.u32 %v8704, 7
        %v8706 = vsub.s32 %v8703, %v8705
        %v8707 = vrot.slane %v8693, %v8706
        %v8708 = vcombine.low %v8700, %v8707
        %v8710 = vlaneseq
        %vm8711 = vcmp.ge.s32.totalorder %v8710, 0
        %vm8712 = vcmp.lt.s32.totalorder %v8710, 900
        %vm8713 = vmand %vm8711, %vm8712
        %8714 = vst.msk [vmem:[%s764] sm:$0xff] %vm8713, %v8708
        %p8715 = scmp.lt.s32.totalorder %s39, 1
        %s8716 = scalar_select %p8715, %s39, 1
        %s8717 = smul.addr %s8716, 8
        %s8718 = scalar_lea.vmem %s24, %s8717
        // Predicated region
        $region125: #{autoencoder_forward.1} parent=115 // pred_check
          %p8719 = pneg %p566
        $region126: #{autoencoder_forward.1} parent=115 // pred_check_branch
          %8721 = sbr.rel (%p8719) target = $region128
        $region127: #{autoencoder_forward.1} parent=115 // pred_region
          _
        $region128: #{autoencoder_forward.1} parent=115 // pred_fallthru
          _
      $region116: #{autoencoder_forward.1} parent=5 // pred_fallthru
        _
      %p8722 = scmp.le.s32.totalorder 2, %s34
      // Predicated region
      $region129: #{autoencoder_forward.1} parent=5 // pred_check
        %p8723 = pneg %p8722
      $region130: #{autoencoder_forward.1} parent=5 // pred_check_branch
        %8725 = sbr.rel (%p8723) target = $region132
      $region131: #{autoencoder_forward.1} parent=5 // pred_region
        %s8726 = ssub.s32 %s34, 2
        // Predicated region
        $region133: #{autoencoder_forward.1} parent=131 // pred_check
          %p8727 = pneg %p572
        $region134: #{autoencoder_forward.1} parent=131 // pred_check_branch
          %8729 = sbr.rel (%p8727) target = $region136
        $region135: #{autoencoder_forward.1} parent=131 // pred_region
          %p8730 = scmp.lt.s32.totalorder %s40, 1
          %s8731 = scalar_select %p8730, %s40, 1
          %s8732 = smul.addr %s8731, 8
          %s8733 = scalar_lea.vmem %s24, %s8732
        $region136: #{autoencoder_forward.1} parent=131 // pred_fallthru
          _
      $region132: #{autoencoder_forward.1} parent=5 // pred_fallthru
        _
    $region6: #{autoencoder_forward.1} parent=1 // loop_footer
      %s38 = sadd.s32 1, %s34
    $region7: #{autoencoder_forward.1} parent=1 // loop_footer_branch
      %33 = sbr.rel target = $region3
    $region8: #{autoencoder_forward.1} parent=1 // loop_exit
      _
    %8734 = vsyncpa [#allocation17], 1
    %s8735 = scalar_lea.sflag [#allocation17], 1
    %8736 = vsyncpa %s8735, 1
    %8737 = vsyncpa [#allocation19], 1

</llo_original>
